<compile_context>
chip_gen: v5e
topology: v5e:2x2
jax: 0.10.0
libtpu: 0.0.40
codegen_flags: <defaults>
</compile_context>

<pallas_src>
import jax
import jax.numpy as jnp
from jax import lax
from jax.experimental import pallas as pl
from jax.experimental.pallas import tpu as pltpu

# ---- small, module-consistent config -------------------------------------
B = 2
H_IN = 16            # input rows (time)
W_IN = 40            # input cols (freq)
C_MID = 32           # conv hidden channels (as in the module)
K1, K2 = 5, 3        # conv kernel widths (as in the module)
H_POOL = H_IN // 2                   # sequence length after pooling      (8)
W1 = W_IN - (K1 - 1)                 # width after conv1                  (36)
W2 = W1 // 2                         # width after 2x2 avg-pool           (18)
D_MODEL = W2 - (K2 - 1)              # width after conv2 = d_model        (16)
HEADS = 2
D_FF = 32                            # EncoderLayer passes dim_head = d_ff
DIM_HEAD = D_FF
OUTPUT_SIZE = 8
SCALE = DIM_HEAD ** -0.5
LN_EPS = 1e-5


# ---- elementwise helpers (traced inside the kernel) -----------------------
def _erf(x):
    # Abramowitz & Stegun 7.1.26 rational approximation (|err| < 1.5e-7)
    a1, a2, a3, a4, a5 = 0.254829592, -0.284496736, 1.421413741, -1.453152027, 1.061405429
    p = 0.3275911
    ax = jnp.abs(x)
    t = 1.0 / (1.0 + p * ax)
    poly = ((((a5 * t + a4) * t + a3) * t + a2) * t + a1) * t
    y = 1.0 - poly * jnp.exp(-ax * ax)
    return jnp.where(x >= 0.0, y, -y)


def _gelu(x):
    # exact GELU (PyTorch nn.GELU default, erf-based)
    return 0.5 * x * (1.0 + _erf(x * 0.7071067811865476))


def _sigmoid(x):
    return 1.0 / (1.0 + jnp.exp(-x))


def _layernorm(x, g, b):
    mu = jnp.mean(x, axis=-1, keepdims=True)
    xc = x - mu
    var = jnp.mean(xc * xc, axis=-1, keepdims=True)
    return xc * lax.rsqrt(var + LN_EPS) * g + b


# ---- the fused kernel ------------------------------------------------------
def _filter_attention_kernel(xe_ref, xo_ref, c1w_ref, c2w_ref, pw_ref,
                             wqkv_ref, wo_ref, bo_ref,
                             g1_ref, be1_ref, w1_ref, b1_ref, w2_ref, b2_ref,
                             g2_ref, be2_ref, wms_ref, bms_ref, out_ref):
    c1w = c1w_ref[...]              # [C_MID, K1]
    c2w = c2w_ref[...]              # [C_MID, K2]

    # --- Conv2d(1, 32, (1,5), bias=False) + GELU, channels on the sublane axis ---
    def conv1_gelu(xp):             # xp: [H_POOL, W_IN]  (time rows of one parity)
        acc = xp[:, None, 0:W1] * c1w[None, :, 0:1]
        for k in range(1, K1):
            acc = acc + xp[:, None, k:k + W1] * c1w[None, :, k:k + 1]
        return _gelu(acc)           # [H_POOL, C_MID, W1]

    # --- AvgPool2d(2,2): H-pool = sum of even/odd-row conv outputs (rows were
    #     pre-split in the wrapper); W-pool + 1/4 factor = dense [W1,W2] matmul ---
    yh = conv1_gelu(xe_ref[0]) + conv1_gelu(xo_ref[0])            # [H_POOL, C_MID, W1]
    p2 = jnp.dot(yh.reshape(H_POOL * C_MID, W1), pw_ref[...],
                 preferred_element_type=jnp.float32)              # [H_POOL*C_MID, W2]
    p3 = p2.reshape(H_POOL, C_MID, W2)                            # [H_POOL, C_MID, W2]

    # --- Conv2d(32, 1, (1,3), bias=False) + GELU ---
    z = jnp.sum(p3[:, :, 0:D_MODEL] * c2w[None, :, 0:1], axis=1)
    for k in range(1, K2):
        z = z + jnp.sum(p3[:, :, k:k + D_MODEL] * c2w[None, :, k:k + 1], axis=1)
    x0 = _gelu(z)                                                 # [H_POOL, D_MODEL]

    # --- EncoderLayer: multi-head self-attention (fused QKV / out-proj) ---
    qkv = jnp.dot(x0, wqkv_ref[...], preferred_element_type=jnp.float32)  # [H_POOL, 3*H*Dh]
    k_off = HEADS * DIM_HEAD
    v_off = 2 * HEADS * DIM_HEAD
    outs = []
    for h in range(HEADS):
        q_h = qkv[:, h * DIM_HEAD:(h + 1) * DIM_HEAD]
        k_h = qkv[:, k_off + h * DIM_HEAD: k_off + (h + 1) * DIM_HEAD]
        v_h = qkv[:, v_off + h * DIM_HEAD: v_off + (h + 1) * DIM_HEAD]
        dots = lax.dot_general(q_h, k_h, (((1,), (1,)), ((), ())),
                               preferred_element_type=jnp.float32) * SCALE
        dots = dots - jnp.max(dots, axis=-1, keepdims=True)
        e = jnp.exp(dots)
        p = e * pl.reciprocal(jnp.sum(e, axis=-1, keepdims=True), approx=True)
        outs.append(jnp.dot(p, v_h, preferred_element_type=jnp.float32))  # [H_POOL, Dh]
    attn = jnp.dot(jnp.concatenate(outs, axis=1), wo_ref[...],
                   preferred_element_type=jnp.float32) + bo_ref[...]
    x1 = _layernorm(x0 + attn, g1_ref[...], be1_ref[...])

    # --- EncoderLayer: position-wise feed-forward (ReLU) ---
    hmid = jnp.maximum(
        jnp.dot(x1, w1_ref[...], preferred_element_type=jnp.float32) + b1_ref[...], 0.0)
    ff = jnp.dot(hmid, w2_ref[...], preferred_element_type=jnp.float32) + b2_ref[...]
    x2 = _layernorm(x1 + ff, g2_ref[...], be2_ref[...])

    # --- mean over sequence, merged sigmoid heads:  [mean | std] ---
    m = jnp.mean(x2, axis=0, keepdims=True)                        # [1, D_MODEL]
    out_ref[0] = _sigmoid(
        jnp.dot(m, wms_ref[...], preferred_element_type=jnp.float32) + bms_ref[...])


# ---- wrapper ---------------------------------------------------------------
def filter_attention_forward(src_nchw, params):
    src = src_nchw[:, 0, :, :].astype(jnp.float32)          # [B, H_IN, W_IN]
    b = src.shape[0]

    # Layout plumbing (wrapper side): even/odd time rows for the 2x row pool,
    # dense 0.25 column-pool matrix, fused qkv / out-proj / head weights.
    x_even = src[:, 0::2, :]                                # [B, H_POOL, W_IN]
    x_odd = src[:, 1::2, :]                                 # [B, H_POOL, W_IN]
    pw = 0.25 * (jnp.arange(W1)[:, None] // 2 ==
                 jnp.arange(W2)[None, :]).astype(jnp.float32)        # [W1, W2]
    wqkv = jnp.concatenate(
        [jnp.concatenate([w[h] for h in range(HEADS)], axis=1)
         for w in (params["wq"], params["wk"], params["wv"])], axis=1)   # [D_MODEL, 3*H*Dh]
    wo_cat = params["wo"].reshape(HEADS * DIM_HEAD, D_MODEL)             # [H*Dh, D_MODEL]
    wms = jnp.concatenate([params["wm"], params["ws"]], axis=1)          # [D_MODEL, 2*OUT]
    bms = jnp.concatenate([params["bm"], params["bs"]], axis=1)          # [1, 2*OUT]

    operands = (x_even, x_odd,
                params["c1w"], params["c2w"], pw,
                wqkv, wo_cat, params["bo"],
                params["g1"], params["be1"],
                params["w1"], params["b1"], params["w2"], params["b2"],
                params["g2"], params["be2"], wms, bms)

    def _replicated_spec(shape):
        zero = (0,) * len(shape)
        return pl.BlockSpec(shape, lambda i, _z=zero: _z)    # whole array, every step

    in_specs = [pl.BlockSpec((1, H_POOL, W_IN), lambda i: (i, 0, 0)),
                pl.BlockSpec((1, H_POOL, W_IN), lambda i: (i, 0, 0))]
    in_specs += [_replicated_spec(a.shape) for a in operands[2:]]
    out_specs = pl.BlockSpec((1, 1, 2 * OUTPUT_SIZE), lambda i: (i, 0, 0))
    out_shape = jax.ShapeDtypeStruct((b, 1, 2 * OUTPUT_SIZE), jnp.float32)

    out = pl.pallas_call(
        _filter_attention_kernel,
        grid=(b,),
        in_specs=in_specs,
        out_specs=out_specs,
        out_shape=out_shape,
        compiler_params=pltpu.CompilerParams(dimension_semantics=("parallel",)),
    )(*operands)
    return out[:, 0, :OUTPUT_SIZE], out[:, 0, OUTPUT_SIZE:]


# ---- pure-JAX reference (numerical sanity check) ----------------------------
def _reference_forward(src_nchw, params):
    x = src_nchw[:, 0, :, :].astype(jnp.float32)            # [B, H, W]
    y = jnp.stack([sum(x[:, :, k:k + W1] * params["c1w"][c, k] for k in range(K1))
                   for c in range(C_MID)], axis=1)           # [B, C, H, W1]
    y = jax.nn.gelu(y, approximate=False)
    p = 0.25 * (y[:, :, 0::2, 0::2] + y[:, :, 0::2, 1::2] +
                y[:, :, 1::2, 0::2] + y[:, :, 1::2, 1::2])   # [B, C, H_POOL, W2]
    z = sum(p[:, c, :, k:k + D_MODEL] * params["c2w"][c, k]
            for c in range(C_MID) for k in range(K2))        # [B, H_POOL, D_MODEL]
    x0 = jax.nn.gelu(z, approximate=False)

    attn = jnp.zeros_like(x0)
    for h in range(HEADS):
        q = x0 @ params["wq"][h]
        kk = x0 @ params["wk"][h]
        v = x0 @ params["wv"][h]
        dots = jnp.einsum("bid,bjd->bij", q, kk) * SCALE
        pr = jax.nn.softmax(dots, axis=-1)
        attn = attn + jnp.einsum("bij,bjd->bid", pr, v) @ params["wo"][h]
    attn = attn + params["bo"]

    def ln(u, g, be):
        mu = u.mean(-1, keepdims=True)
        var = ((u - mu) ** 2).mean(-1, keepdims=True)
        return (u - mu) / jnp.sqrt(var + LN_EPS) * g + be

    x1 = ln(x0 + attn, params["g1"], params["be1"])
    ff = jnp.maximum(x1 @ params["w1"] + params["b1"], 0.0) @ params["w2"] + params["b2"]
    x2 = ln(x1 + ff, params["g2"], params["be2"])
    m = x2.mean(axis=1)
    mean = jax.nn.sigmoid(m @ params["wm"] + params["bm"])
    std = jax.nn.sigmoid(m @ params["ws"] + params["bs"])
    return mean, std


# ---- deterministic synthetic parameters ------------------------------------
def init_params(key):
    ks = jax.random.split(key, 10)
    s = 0.1
    z = lambda *sh: jnp.zeros(sh, jnp.float32)
    o = lambda *sh: jnp.ones(sh, jnp.float32)
    n = lambda k, *sh: s * jax.random.normal(k, sh, jnp.float32)
    return {
        "c1w": n(ks[0], C_MID, K1),                 # Conv2d(1,32,(1,5)) weights
        "c2w": n(ks[1], C_MID, K2),                 # Conv2d(32,1,(1,3)) weights
        "wq": n(ks[2], HEADS, D_MODEL, DIM_HEAD),   # to_qkv split per head
        "wk": n(ks[3], HEADS, D_MODEL, DIM_HEAD),
        "wv": n(ks[4], HEADS, D_MODEL, DIM_HEAD),
        "wo": n(ks[5], HEADS, DIM_HEAD, D_MODEL),   # to_out Linear (split per head)
        "bo": z(1, D_MODEL),
        "g1": o(1, D_MODEL), "be1": z(1, D_MODEL),  # LayerNorm 1
        "w1": n(ks[6], D_MODEL, D_FF), "b1": z(1, D_FF),       # FFN fc1
        "w2": n(ks[7], D_FF, D_MODEL), "b2": z(1, D_MODEL),    # FFN fc2
        "g2": o(1, D_MODEL), "be2": z(1, D_MODEL),  # LayerNorm 2
        "wm": n(ks[8], D_MODEL, OUTPUT_SIZE), "bm": z(1, OUTPUT_SIZE),  # fc_mean
        "ws": n(ks[9], D_MODEL, OUTPUT_SIZE), "bs": z(1, OUTPUT_SIZE),  # fc_std
    }
    # TODO(synk): nn.Dropout layers are identities here (inference semantics).


if __name__ == "__main__":
    key = jax.random.PRNGKey(0)
    k_src, k_par = jax.random.split(key)
    src = jax.random.normal(k_src, (B, 1, H_IN, W_IN), jnp.float32)  # NCHW like PyTorch
    params = init_params(k_par)

    mean, std = filter_attention_forward(src, params)
    mean, std = jax.block_until_ready((mean, std))

    assert mean.shape == (B, OUTPUT_SIZE) and std.shape == (B, OUTPUT_SIZE)
    assert bool(jnp.all((mean > 0) & (mean < 1))) and bool(jnp.all((std > 0) & (std < 1)))

    ref_mean, ref_std = _reference_forward(src, params)
    assert bool(jnp.allclose(mean, ref_mean, atol=2e-3, rtol=2e-3))
    assert bool(jnp.allclose(std, ref_std, atol=2e-3, rtol=2e-3))
    print("KERNEL_OK")
</pallas_src>

<mosaic_0001>
module attributes {stable_mosaic.version = 11 : i64} {
  func.func @_filter_attention_kernel(%arg0: i32, %arg1: memref<1x8x40xf32, #tpu.memory_space<vmem>>, %arg2: memref<1x8x40xf32, #tpu.memory_space<vmem>>, %arg3: memref<32x5xf32, #tpu.memory_space<vmem>>, %arg4: memref<32x3xf32, #tpu.memory_space<vmem>>, %arg5: memref<36x18xf32, #tpu.memory_space<vmem>>, %arg6: memref<16x192xf32, #tpu.memory_space<vmem>>, %arg7: memref<64x16xf32, #tpu.memory_space<vmem>>, %arg8: memref<1x16xf32, #tpu.memory_space<vmem>>, %arg9: memref<1x16xf32, #tpu.memory_space<vmem>>, %arg10: memref<1x16xf32, #tpu.memory_space<vmem>>, %arg11: memref<16x32xf32, #tpu.memory_space<vmem>>, %arg12: memref<1x32xf32, #tpu.memory_space<vmem>>, %arg13: memref<32x16xf32, #tpu.memory_space<vmem>>, %arg14: memref<1x16xf32, #tpu.memory_space<vmem>>, %arg15: memref<1x16xf32, #tpu.memory_space<vmem>>, %arg16: memref<1x16xf32, #tpu.memory_space<vmem>>, %arg17: memref<16x16xf32, #tpu.memory_space<vmem>>, %arg18: memref<1x16xf32, #tpu.memory_space<vmem>>, %arg19: memref<1x1x16xf32, #tpu.memory_space<vmem>>) attributes {dimension_semantics = [#tpu.dimension_semantics<parallel>], iteration_bounds = array<i64: 2>, scalar_prefetch = 0 : i64, scratch_operands = 0 : i64, tpu.core_type = #tpu.core_type<tc>, window_params = [{transform_indices = @transform_0, window_bounds = array<i64: 1, 8, 40>}, {transform_indices = @transform_1, window_bounds = array<i64: 1, 8, 40>}, {pipeline_mode = #tpu.pipeline_mode<synchronous>, transform_indices = @transform_2, window_bounds = array<i64: 32, 5>}, {pipeline_mode = #tpu.pipeline_mode<synchronous>, transform_indices = @transform_3, window_bounds = array<i64: 32, 3>}, {pipeline_mode = #tpu.pipeline_mode<synchronous>, transform_indices = @transform_4, window_bounds = array<i64: 36, 18>}, {pipeline_mode = #tpu.pipeline_mode<synchronous>, transform_indices = @transform_5, window_bounds = array<i64: 16, 192>}, {pipeline_mode = #tpu.pipeline_mode<synchronous>, transform_indices = @transform_6, window_bounds = array<i64: 64, 16>}, {pipeline_mode = #tpu.pipeline_mode<synchronous>, transform_indices = @transform_7, window_bounds = array<i64: 1, 16>}, {pipeline_mode = #tpu.pipeline_mode<synchronous>, transform_indices = @transform_8, window_bounds = array<i64: 1, 16>}, {pipeline_mode = #tpu.pipeline_mode<synchronous>, transform_indices = @transform_9, window_bounds = array<i64: 1, 16>}, {pipeline_mode = #tpu.pipeline_mode<synchronous>, transform_indices = @transform_10, window_bounds = array<i64: 16, 32>}, {pipeline_mode = #tpu.pipeline_mode<synchronous>, transform_indices = @transform_11, window_bounds = array<i64: 1, 32>}, {pipeline_mode = #tpu.pipeline_mode<synchronous>, transform_indices = @transform_12, window_bounds = array<i64: 32, 16>}, {pipeline_mode = #tpu.pipeline_mode<synchronous>, transform_indices = @transform_13, window_bounds = array<i64: 1, 16>}, {pipeline_mode = #tpu.pipeline_mode<synchronous>, transform_indices = @transform_14, window_bounds = array<i64: 1, 16>}, {pipeline_mode = #tpu.pipeline_mode<synchronous>, transform_indices = @transform_15, window_bounds = array<i64: 1, 16>}, {pipeline_mode = #tpu.pipeline_mode<synchronous>, transform_indices = @transform_16, window_bounds = array<i64: 16, 16>}, {pipeline_mode = #tpu.pipeline_mode<synchronous>, transform_indices = @transform_17, window_bounds = array<i64: 1, 16>}, {transform_indices = @transform_18, window_bounds = array<i64: 1, 1, 16>}]} {
    %c0 = arith.constant 0 : index
    %c0_0 = arith.constant 0 : index
    %0 = vector.load %arg3[%c0, %c0_0] : memref<32x5xf32, #tpu.memory_space<vmem>>, vector<32x5xf32>
    %c0_1 = arith.constant 0 : index
    %c0_2 = arith.constant 0 : index
    %1 = vector.load %arg4[%c0_1, %c0_2] : memref<32x3xf32, #tpu.memory_space<vmem>>, vector<32x3xf32>
    %c0_3 = arith.constant 0 : index
    %c0_4 = arith.constant 0 : index
    %c0_5 = arith.constant 0 : index
    %2 = vector.load %arg1[%c0_3, %c0_4, %c0_5] : memref<1x8x40xf32, #tpu.memory_space<vmem>>, vector<1x8x40xf32>
    %3 = vector.shape_cast %2 : vector<1x8x40xf32> to vector<8x40xf32>
    %4 = vector.extract_strided_slice %3 {offsets = [0, 0], sizes = [8, 36], strides = [1, 1]} : vector<8x40xf32> to vector<8x36xf32>
    %5 = vector.shape_cast %4 : vector<8x36xf32> to vector<8x1x36xf32>
    %6 = vector.extract_strided_slice %0 {offsets = [0, 0], sizes = [32, 1], strides = [1, 1]} : vector<32x5xf32> to vector<32x1xf32>
    %7 = vector.shape_cast %6 : vector<32x1xf32> to vector<1x32x1xf32>
    %8 = vector.broadcast %5 : vector<8x1x36xf32> to vector<8x32x36xf32>
    %9 = vector.broadcast %7 : vector<1x32x1xf32> to vector<8x32x36xf32>
    %10 = arith.mulf %8, %9 : vector<8x32x36xf32>
    %11 = vector.extract_strided_slice %3 {offsets = [0, 1], sizes = [8, 36], strides = [1, 1]} : vector<8x40xf32> to vector<8x36xf32>
    %12 = vector.shape_cast %11 : vector<8x36xf32> to vector<8x1x36xf32>
    %13 = vector.extract_strided_slice %0 {offsets = [0, 1], sizes = [32, 1], strides = [1, 1]} : vector<32x5xf32> to vector<32x1xf32>
    %14 = vector.shape_cast %13 : vector<32x1xf32> to vector<1x32x1xf32>
    %15 = vector.broadcast %12 : vector<8x1x36xf32> to vector<8x32x36xf32>
    %16 = vector.broadcast %14 : vector<1x32x1xf32> to vector<8x32x36xf32>
    %17 = arith.mulf %15, %16 : vector<8x32x36xf32>
    %18 = arith.addf %10, %17 : vector<8x32x36xf32>
    %19 = vector.extract_strided_slice %3 {offsets = [0, 2], sizes = [8, 36], strides = [1, 1]} : vector<8x40xf32> to vector<8x36xf32>
    %20 = vector.shape_cast %19 : vector<8x36xf32> to vector<8x1x36xf32>
    %21 = vector.extract_strided_slice %0 {offsets = [0, 2], sizes = [32, 1], strides = [1, 1]} : vector<32x5xf32> to vector<32x1xf32>
    %22 = vector.shape_cast %21 : vector<32x1xf32> to vector<1x32x1xf32>
    %23 = vector.broadcast %20 : vector<8x1x36xf32> to vector<8x32x36xf32>
    %24 = vector.broadcast %22 : vector<1x32x1xf32> to vector<8x32x36xf32>
    %25 = arith.mulf %23, %24 : vector<8x32x36xf32>
    %26 = arith.addf %18, %25 : vector<8x32x36xf32>
    %27 = vector.extract_strided_slice %3 {offsets = [0, 3], sizes = [8, 36], strides = [1, 1]} : vector<8x40xf32> to vector<8x36xf32>
    %28 = vector.shape_cast %27 : vector<8x36xf32> to vector<8x1x36xf32>
    %29 = vector.extract_strided_slice %0 {offsets = [0, 3], sizes = [32, 1], strides = [1, 1]} : vector<32x5xf32> to vector<32x1xf32>
    %30 = vector.shape_cast %29 : vector<32x1xf32> to vector<1x32x1xf32>
    %31 = vector.broadcast %28 : vector<8x1x36xf32> to vector<8x32x36xf32>
    %32 = vector.broadcast %30 : vector<1x32x1xf32> to vector<8x32x36xf32>
    %33 = arith.mulf %31, %32 : vector<8x32x36xf32>
    %34 = arith.addf %26, %33 : vector<8x32x36xf32>
    %35 = vector.extract_strided_slice %3 {offsets = [0, 4], sizes = [8, 36], strides = [1, 1]} : vector<8x40xf32> to vector<8x36xf32>
    %36 = vector.shape_cast %35 : vector<8x36xf32> to vector<8x1x36xf32>
    %37 = vector.extract_strided_slice %0 {offsets = [0, 4], sizes = [32, 1], strides = [1, 1]} : vector<32x5xf32> to vector<32x1xf32>
    %38 = vector.shape_cast %37 : vector<32x1xf32> to vector<1x32x1xf32>
    %39 = vector.broadcast %36 : vector<8x1x36xf32> to vector<8x32x36xf32>
    %40 = vector.broadcast %38 : vector<1x32x1xf32> to vector<8x32x36xf32>
    %41 = arith.mulf %39, %40 : vector<8x32x36xf32>
    %42 = arith.addf %34, %41 : vector<8x32x36xf32>
    %cst = arith.constant 5.000000e-01 : f32
    %43 = vector.broadcast %cst : f32 to vector<8x32x36xf32>
    %44 = arith.mulf %43, %42 : vector<8x32x36xf32>
    %cst_6 = arith.constant 0.707106769 : f32
    %45 = vector.broadcast %cst_6 : f32 to vector<8x32x36xf32>
    %46 = arith.mulf %42, %45 : vector<8x32x36xf32>
    %47 = math.absf %46 : vector<8x32x36xf32>
    %cst_7 = arith.constant 0.327591091 : f32
    %48 = vector.broadcast %cst_7 : f32 to vector<8x32x36xf32>
    %49 = arith.mulf %48, %47 : vector<8x32x36xf32>
    %cst_8 = arith.constant 1.000000e+00 : f32
    %50 = vector.broadcast %cst_8 : f32 to vector<8x32x36xf32>
    %51 = arith.addf %50, %49 : vector<8x32x36xf32>
    %cst_9 = arith.constant 1.000000e+00 : f32
    %52 = vector.broadcast %cst_9 : f32 to vector<8x32x36xf32>
    %53 = arith.divf %52, %51 : vector<8x32x36xf32>
    %cst_10 = arith.constant 1.06140542 : f32
    %54 = vector.broadcast %cst_10 : f32 to vector<8x32x36xf32>
    %55 = arith.mulf %54, %53 : vector<8x32x36xf32>
    %cst_11 = arith.constant -1.45315206 : f32
    %56 = vector.broadcast %cst_11 : f32 to vector<8x32x36xf32>
    %57 = arith.addf %55, %56 : vector<8x32x36xf32>
    %58 = arith.mulf %57, %53 : vector<8x32x36xf32>
    %cst_12 = arith.constant 1.42141378 : f32
    %59 = vector.broadcast %cst_12 : f32 to vector<8x32x36xf32>
    %60 = arith.addf %58, %59 : vector<8x32x36xf32>
    %61 = arith.mulf %60, %53 : vector<8x32x36xf32>
    %cst_13 = arith.constant -0.284496725 : f32
    %62 = vector.broadcast %cst_13 : f32 to vector<8x32x36xf32>
    %63 = arith.addf %61, %62 : vector<8x32x36xf32>
    %64 = arith.mulf %63, %53 : vector<8x32x36xf32>
    %cst_14 = arith.constant 0.254829586 : f32
    %65 = vector.broadcast %cst_14 : f32 to vector<8x32x36xf32>
    %66 = arith.addf %64, %65 : vector<8x32x36xf32>
    %67 = arith.mulf %66, %53 : vector<8x32x36xf32>
    %cst_15 = arith.constant 0.000000e+00 : f32
    %68 = vector.broadcast %cst_15 : f32 to vector<8x32x36xf32>
    %69 = arith.subf %68, %47 : vector<8x32x36xf32>
    %70 = arith.mulf %69, %47 : vector<8x32x36xf32>
    %71 = math.exp %70 : vector<8x32x36xf32>
    %72 = arith.mulf %67, %71 : vector<8x32x36xf32>
    %cst_16 = arith.constant 1.000000e+00 : f32
    %73 = vector.broadcast %cst_16 : f32 to vector<8x32x36xf32>
    %74 = arith.subf %73, %72 : vector<8x32x36xf32>
    %cst_17 = arith.constant 0.000000e+00 : f32
    %75 = vector.broadcast %cst_17 : f32 to vector<8x32x36xf32>
    %76 = arith.cmpf oge, %46, %75 : vector<8x32x36xf32>
    %cst_18 = arith.constant 0.000000e+00 : f32
    %77 = vector.broadcast %cst_18 : f32 to vector<8x32x36xf32>
    %78 = arith.subf %77, %74 : vector<8x32x36xf32>
    %79 = arith.select %76, %74, %78 : vector<8x32x36xi1>, vector<8x32x36xf32>
    %cst_19 = arith.constant 1.000000e+00 : f32
    %80 = vector.broadcast %cst_19 : f32 to vector<8x32x36xf32>
    %81 = arith.addf %80, %79 : vector<8x32x36xf32>
    %82 = arith.mulf %44, %81 : vector<8x32x36xf32>
    %c0_20 = arith.constant 0 : index
    %c0_21 = arith.constant 0 : index
    %c0_22 = arith.constant 0 : index
    %83 = vector.load %arg2[%c0_20, %c0_21, %c0_22] : memref<1x8x40xf32, #tpu.memory_space<vmem>>, vector<1x8x40xf32>
    %84 = vector.shape_cast %83 : vector<1x8x40xf32> to vector<8x40xf32>
    %85 = vector.extract_strided_slice %84 {offsets = [0, 0], sizes = [8, 36], strides = [1, 1]} : vector<8x40xf32> to vector<8x36xf32>
    %86 = vector.shape_cast %85 : vector<8x36xf32> to vector<8x1x36xf32>
    %87 = vector.extract_strided_slice %0 {offsets = [0, 0], sizes = [32, 1], strides = [1, 1]} : vector<32x5xf32> to vector<32x1xf32>
    %88 = vector.shape_cast %87 : vector<32x1xf32> to vector<1x32x1xf32>
    %89 = vector.broadcast %86 : vector<8x1x36xf32> to vector<8x32x36xf32>
    %90 = vector.broadcast %88 : vector<1x32x1xf32> to vector<8x32x36xf32>
    %91 = arith.mulf %89, %90 : vector<8x32x36xf32>
    %92 = vector.extract_strided_slice %84 {offsets = [0, 1], sizes = [8, 36], strides = [1, 1]} : vector<8x40xf32> to vector<8x36xf32>
    %93 = vector.shape_cast %92 : vector<8x36xf32> to vector<8x1x36xf32>
    %94 = vector.extract_strided_slice %0 {offsets = [0, 1], sizes = [32, 1], strides = [1, 1]} : vector<32x5xf32> to vector<32x1xf32>
    %95 = vector.shape_cast %94 : vector<32x1xf32> to vector<1x32x1xf32>
    %96 = vector.broadcast %93 : vector<8x1x36xf32> to vector<8x32x36xf32>
    %97 = vector.broadcast %95 : vector<1x32x1xf32> to vector<8x32x36xf32>
    %98 = arith.mulf %96, %97 : vector<8x32x36xf32>
    %99 = arith.addf %91, %98 : vector<8x32x36xf32>
    %100 = vector.extract_strided_slice %84 {offsets = [0, 2], sizes = [8, 36], strides = [1, 1]} : vector<8x40xf32> to vector<8x36xf32>
    %101 = vector.shape_cast %100 : vector<8x36xf32> to vector<8x1x36xf32>
    %102 = vector.extract_strided_slice %0 {offsets = [0, 2], sizes = [32, 1], strides = [1, 1]} : vector<32x5xf32> to vector<32x1xf32>
    %103 = vector.shape_cast %102 : vector<32x1xf32> to vector<1x32x1xf32>
    %104 = vector.broadcast %101 : vector<8x1x36xf32> to vector<8x32x36xf32>
    %105 = vector.broadcast %103 : vector<1x32x1xf32> to vector<8x32x36xf32>
    %106 = arith.mulf %104, %105 : vector<8x32x36xf32>
    %107 = arith.addf %99, %106 : vector<8x32x36xf32>
    %108 = vector.extract_strided_slice %84 {offsets = [0, 3], sizes = [8, 36], strides = [1, 1]} : vector<8x40xf32> to vector<8x36xf32>
    %109 = vector.shape_cast %108 : vector<8x36xf32> to vector<8x1x36xf32>
    %110 = vector.extract_strided_slice %0 {offsets = [0, 3], sizes = [32, 1], strides = [1, 1]} : vector<32x5xf32> to vector<32x1xf32>
    %111 = vector.shape_cast %110 : vector<32x1xf32> to vector<1x32x1xf32>
    %112 = vector.broadcast %109 : vector<8x1x36xf32> to vector<8x32x36xf32>
    %113 = vector.broadcast %111 : vector<1x32x1xf32> to vector<8x32x36xf32>
    %114 = arith.mulf %112, %113 : vector<8x32x36xf32>
    %115 = arith.addf %107, %114 : vector<8x32x36xf32>
    %116 = vector.extract_strided_slice %84 {offsets = [0, 4], sizes = [8, 36], strides = [1, 1]} : vector<8x40xf32> to vector<8x36xf32>
    %117 = vector.shape_cast %116 : vector<8x36xf32> to vector<8x1x36xf32>
    %118 = vector.extract_strided_slice %0 {offsets = [0, 4], sizes = [32, 1], strides = [1, 1]} : vector<32x5xf32> to vector<32x1xf32>
    %119 = vector.shape_cast %118 : vector<32x1xf32> to vector<1x32x1xf32>
    %120 = vector.broadcast %117 : vector<8x1x36xf32> to vector<8x32x36xf32>
    %121 = vector.broadcast %119 : vector<1x32x1xf32> to vector<8x32x36xf32>
    %122 = arith.mulf %120, %121 : vector<8x32x36xf32>
    %123 = arith.addf %115, %122 : vector<8x32x36xf32>
    %cst_23 = arith.constant 5.000000e-01 : f32
    %124 = vector.broadcast %cst_23 : f32 to vector<8x32x36xf32>
    %125 = arith.mulf %124, %123 : vector<8x32x36xf32>
    %cst_24 = arith.constant 0.707106769 : f32
    %126 = vector.broadcast %cst_24 : f32 to vector<8x32x36xf32>
    %127 = arith.mulf %123, %126 : vector<8x32x36xf32>
    %128 = math.absf %127 : vector<8x32x36xf32>
    %cst_25 = arith.constant 0.327591091 : f32
    %129 = vector.broadcast %cst_25 : f32 to vector<8x32x36xf32>
    %130 = arith.mulf %129, %128 : vector<8x32x36xf32>
    %cst_26 = arith.constant 1.000000e+00 : f32
    %131 = vector.broadcast %cst_26 : f32 to vector<8x32x36xf32>
    %132 = arith.addf %131, %130 : vector<8x32x36xf32>
    %cst_27 = arith.constant 1.000000e+00 : f32
    %133 = vector.broadcast %cst_27 : f32 to vector<8x32x36xf32>
    %134 = arith.divf %133, %132 : vector<8x32x36xf32>
    %cst_28 = arith.constant 1.06140542 : f32
    %135 = vector.broadcast %cst_28 : f32 to vector<8x32x36xf32>
    %136 = arith.mulf %135, %134 : vector<8x32x36xf32>
    %cst_29 = arith.constant -1.45315206 : f32
    %137 = vector.broadcast %cst_29 : f32 to vector<8x32x36xf32>
    %138 = arith.addf %136, %137 : vector<8x32x36xf32>
    %139 = arith.mulf %138, %134 : vector<8x32x36xf32>
    %cst_30 = arith.constant 1.42141378 : f32
    %140 = vector.broadcast %cst_30 : f32 to vector<8x32x36xf32>
    %141 = arith.addf %139, %140 : vector<8x32x36xf32>
    %142 = arith.mulf %141, %134 : vector<8x32x36xf32>
    %cst_31 = arith.constant -0.284496725 : f32
    %143 = vector.broadcast %cst_31 : f32 to vector<8x32x36xf32>
    %144 = arith.addf %142, %143 : vector<8x32x36xf32>
    %145 = arith.mulf %144, %134 : vector<8x32x36xf32>
    %cst_32 = arith.constant 0.254829586 : f32
    %146 = vector.broadcast %cst_32 : f32 to vector<8x32x36xf32>
    %147 = arith.addf %145, %146 : vector<8x32x36xf32>
    %148 = arith.mulf %147, %134 : vector<8x32x36xf32>
    %cst_33 = arith.constant 0.000000e+00 : f32
    %149 = vector.broadcast %cst_33 : f32 to vector<8x32x36xf32>
    %150 = arith.subf %149, %128 : vector<8x32x36xf32>
    %151 = arith.mulf %150, %128 : vector<8x32x36xf32>
    %152 = math.exp %151 : vector<8x32x36xf32>
    %153 = arith.mulf %148, %152 : vector<8x32x36xf32>
    %cst_34 = arith.constant 1.000000e+00 : f32
    %154 = vector.broadcast %cst_34 : f32 to vector<8x32x36xf32>
    %155 = arith.subf %154, %153 : vector<8x32x36xf32>
    %cst_35 = arith.constant 0.000000e+00 : f32
    %156 = vector.broadcast %cst_35 : f32 to vector<8x32x36xf32>
    %157 = arith.cmpf oge, %127, %156 : vector<8x32x36xf32>
    %cst_36 = arith.constant 0.000000e+00 : f32
    %158 = vector.broadcast %cst_36 : f32 to vector<8x32x36xf32>
    %159 = arith.subf %158, %155 : vector<8x32x36xf32>
    %160 = arith.select %157, %155, %159 : vector<8x32x36xi1>, vector<8x32x36xf32>
    %cst_37 = arith.constant 1.000000e+00 : f32
    %161 = vector.broadcast %cst_37 : f32 to vector<8x32x36xf32>
    %162 = arith.addf %161, %160 : vector<8x32x36xf32>
    %163 = arith.mulf %125, %162 : vector<8x32x36xf32>
    %164 = arith.addf %82, %163 : vector<8x32x36xf32>
    %165 = vector.shape_cast %164 : vector<8x32x36xf32> to vector<256x36xf32>
    %c0_38 = arith.constant 0 : index
    %c0_39 = arith.constant 0 : index
    %166 = vector.load %arg5[%c0_38, %c0_39] : memref<36x18xf32, #tpu.memory_space<vmem>>, vector<36x18xf32>
    %cst_40 = arith.constant dense<0.000000e+00> : vector<256x18xf32>
    %167 = tpu.matmul %165, %166, %cst_40 {dimension_numbers = #tpu.dot_dimension_numbers<[1], [0], [0], [1], [0, 0, 1, 1], [], []>} : vector<256x36xf32>, vector<36x18xf32>, vector<256x18xf32> -> vector<256x18xf32>
    %168 = vector.shape_cast %167 : vector<256x18xf32> to vector<8x32x18xf32>
    %169 = vector.extract_strided_slice %168 {offsets = [0, 0, 0], sizes = [8, 32, 16], strides = [1, 1, 1]} : vector<8x32x18xf32> to vector<8x32x16xf32>
    %170 = vector.extract_strided_slice %1 {offsets = [0, 0], sizes = [32, 1], strides = [1, 1]} : vector<32x3xf32> to vector<32x1xf32>
    %171 = vector.shape_cast %170 : vector<32x1xf32> to vector<1x32x1xf32>
    %172 = vector.broadcast %171 : vector<1x32x1xf32> to vector<8x32x16xf32>
    %173 = arith.mulf %169, %172 : vector<8x32x16xf32>
    %cst_41 = arith.constant dense<0.000000e+00> : vector<8x16xf32>
    %174 = vector.multi_reduction <add>, %173, %cst_41 [1] : vector<8x32x16xf32> to vector<8x16xf32>
    %175 = vector.extract_strided_slice %168 {offsets = [0, 0, 1], sizes = [8, 32, 16], strides = [1, 1, 1]} : vector<8x32x18xf32> to vector<8x32x16xf32>
    %176 = vector.extract_strided_slice %1 {offsets = [0, 1], sizes = [32, 1], strides = [1, 1]} : vector<32x3xf32> to vector<32x1xf32>
    %177 = vector.shape_cast %176 : vector<32x1xf32> to vector<1x32x1xf32>
    %178 = vector.broadcast %177 : vector<1x32x1xf32> to vector<8x32x16xf32>
    %179 = arith.mulf %175, %178 : vector<8x32x16xf32>
    %cst_42 = arith.constant dense<0.000000e+00> : vector<8x16xf32>
    %180 = vector.multi_reduction <add>, %179, %cst_42 [1] : vector<8x32x16xf32> to vector<8x16xf32>
    %181 = arith.addf %174, %180 : vector<8x16xf32>
    %182 = vector.extract_strided_slice %168 {offsets = [0, 0, 2], sizes = [8, 32, 16], strides = [1, 1, 1]} : vector<8x32x18xf32> to vector<8x32x16xf32>
    %183 = vector.extract_strided_slice %1 {offsets = [0, 2], sizes = [32, 1], strides = [1, 1]} : vector<32x3xf32> to vector<32x1xf32>
    %184 = vector.shape_cast %183 : vector<32x1xf32> to vector<1x32x1xf32>
    %185 = vector.broadcast %184 : vector<1x32x1xf32> to vector<8x32x16xf32>
    %186 = arith.mulf %182, %185 : vector<8x32x16xf32>
    %cst_43 = arith.constant dense<0.000000e+00> : vector<8x16xf32>
    %187 = vector.multi_reduction <add>, %186, %cst_43 [1] : vector<8x32x16xf32> to vector<8x16xf32>
    %188 = arith.addf %181, %187 : vector<8x16xf32>
    %cst_44 = arith.constant 5.000000e-01 : f32
    %189 = vector.broadcast %cst_44 : f32 to vector<8x16xf32>
    %190 = arith.mulf %189, %188 : vector<8x16xf32>
    %cst_45 = arith.constant 0.707106769 : f32
    %191 = vector.broadcast %cst_45 : f32 to vector<8x16xf32>
    %192 = arith.mulf %188, %191 : vector<8x16xf32>
    %193 = math.absf %192 : vector<8x16xf32>
    %cst_46 = arith.constant 0.327591091 : f32
    %194 = vector.broadcast %cst_46 : f32 to vector<8x16xf32>
    %195 = arith.mulf %194, %193 : vector<8x16xf32>
    %cst_47 = arith.constant 1.000000e+00 : f32
    %196 = vector.broadcast %cst_47 : f32 to vector<8x16xf32>
    %197 = arith.addf %196, %195 : vector<8x16xf32>
    %cst_48 = arith.constant 1.000000e+00 : f32
    %198 = vector.broadcast %cst_48 : f32 to vector<8x16xf32>
    %199 = arith.divf %198, %197 : vector<8x16xf32>
    %cst_49 = arith.constant 1.06140542 : f32
    %200 = vector.broadcast %cst_49 : f32 to vector<8x16xf32>
    %201 = arith.mulf %200, %199 : vector<8x16xf32>
    %cst_50 = arith.constant -1.45315206 : f32
    %202 = vector.broadcast %cst_50 : f32 to vector<8x16xf32>
    %203 = arith.addf %201, %202 : vector<8x16xf32>
    %204 = arith.mulf %203, %199 : vector<8x16xf32>
    %cst_51 = arith.constant 1.42141378 : f32
    %205 = vector.broadcast %cst_51 : f32 to vector<8x16xf32>
    %206 = arith.addf %204, %205 : vector<8x16xf32>
    %207 = arith.mulf %206, %199 : vector<8x16xf32>
    %cst_52 = arith.constant -0.284496725 : f32
    %208 = vector.broadcast %cst_52 : f32 to vector<8x16xf32>
    %209 = arith.addf %207, %208 : vector<8x16xf32>
    %210 = arith.mulf %209, %199 : vector<8x16xf32>
    %cst_53 = arith.constant 0.254829586 : f32
    %211 = vector.broadcast %cst_53 : f32 to vector<8x16xf32>
    %212 = arith.addf %210, %211 : vector<8x16xf32>
    %213 = arith.mulf %212, %199 : vector<8x16xf32>
    %cst_54 = arith.constant 0.000000e+00 : f32
    %214 = vector.broadcast %cst_54 : f32 to vector<8x16xf32>
    %215 = arith.subf %214, %193 : vector<8x16xf32>
    %216 = arith.mulf %215, %193 : vector<8x16xf32>
    %217 = math.exp %216 : vector<8x16xf32>
    %218 = arith.mulf %213, %217 : vector<8x16xf32>
    %cst_55 = arith.constant 1.000000e+00 : f32
    %219 = vector.broadcast %cst_55 : f32 to vector<8x16xf32>
    %220 = arith.subf %219, %218 : vector<8x16xf32>
    %cst_56 = arith.constant 0.000000e+00 : f32
    %221 = vector.broadcast %cst_56 : f32 to vector<8x16xf32>
    %222 = arith.cmpf oge, %192, %221 : vector<8x16xf32>
    %cst_57 = arith.constant 0.000000e+00 : f32
    %223 = vector.broadcast %cst_57 : f32 to vector<8x16xf32>
    %224 = arith.subf %223, %220 : vector<8x16xf32>
    %225 = arith.select %222, %220, %224 : vector<8x16xi1>, vector<8x16xf32>
    %cst_58 = arith.constant 1.000000e+00 : f32
    %226 = vector.broadcast %cst_58 : f32 to vector<8x16xf32>
    %227 = arith.addf %226, %225 : vector<8x16xf32>
    %228 = arith.mulf %190, %227 : vector<8x16xf32>
    %c0_59 = arith.constant 0 : index
    %c0_60 = arith.constant 0 : index
    %229 = vector.load %arg6[%c0_59, %c0_60] : memref<16x192xf32, #tpu.memory_space<vmem>>, vector<16x192xf32>
    %cst_61 = arith.constant dense<0.000000e+00> : vector<8x192xf32>
    %230 = tpu.matmul %228, %229, %cst_61 {dimension_numbers = #tpu.dot_dimension_numbers<[1], [0], [0], [1], [0, 0, 1, 1], [], []>} : vector<8x16xf32>, vector<16x192xf32>, vector<8x192xf32> -> vector<8x192xf32>
    %231 = vector.extract_strided_slice %230 {offsets = [0, 0], sizes = [8, 32], strides = [1, 1]} : vector<8x192xf32> to vector<8x32xf32>
    %232 = vector.extract_strided_slice %230 {offsets = [0, 64], sizes = [8, 32], strides = [1, 1]} : vector<8x192xf32> to vector<8x32xf32>
    %233 = vector.extract_strided_slice %230 {offsets = [0, 128], sizes = [8, 32], strides = [1, 1]} : vector<8x192xf32> to vector<8x32xf32>
    %cst_62 = arith.constant dense<0.000000e+00> : vector<8x8xf32>
    %234 = tpu.matmul %231, %232, %cst_62 {dimension_numbers = #tpu.dot_dimension_numbers<[1], [1], [0], [0], [0, 0, 1, 0], [], []>} : vector<8x32xf32>, vector<8x32xf32>, vector<8x8xf32> -> vector<8x8xf32>
    %cst_63 = arith.constant 0.176776692 : f32
    %235 = vector.broadcast %cst_63 : f32 to vector<8x8xf32>
    %236 = arith.mulf %234, %235 : vector<8x8xf32>
    %cst_64 = arith.constant dense<0xFF800000> : vector<8xf32>
    %237 = vector.multi_reduction <maximumf>, %236, %cst_64 [1] : vector<8x8xf32> to vector<8xf32>
    %238 = vector.shape_cast %237 : vector<8xf32> to vector<8x1xf32>
    %239 = vector.broadcast %238 : vector<8x1xf32> to vector<8x8xf32>
    %240 = arith.subf %236, %239 : vector<8x8xf32>
    %241 = math.exp %240 : vector<8x8xf32>
    %cst_65 = arith.constant dense<0.000000e+00> : vector<8xf32>
    %242 = vector.multi_reduction <add>, %241, %cst_65 [1] : vector<8x8xf32> to vector<8xf32>
    %243 = vector.shape_cast %242 : vector<8xf32> to vector<8x1xf32>
    %244 = tpu.reciprocal %243 {approx = true} : vector<8x1xf32> -> vector<8x1xf32>
    %245 = vector.broadcast %244 : vector<8x1xf32> to vector<8x8xf32>
    %246 = arith.mulf %241, %245 : vector<8x8xf32>
    %cst_66 = arith.constant dense<0.000000e+00> : vector<8x32xf32>
    %247 = tpu.matmul %246, %233, %cst_66 {dimension_numbers = #tpu.dot_dimension_numbers<[1], [0], [0], [1], [0, 0, 1, 1], [], []>} : vector<8x8xf32>, vector<8x32xf32>, vector<8x32xf32> -> vector<8x32xf32>
    %248 = vector.extract_strided_slice %230 {offsets = [0, 32], sizes = [8, 32], strides = [1, 1]} : vector<8x192xf32> to vector<8x32xf32>
    %249 = vector.extract_strided_slice %230 {offsets = [0, 96], sizes = [8, 32], strides = [1, 1]} : vector<8x192xf32> to vector<8x32xf32>
    %250 = vector.extract_strided_slice %230 {offsets = [0, 160], sizes = [8, 32], strides = [1, 1]} : vector<8x192xf32> to vector<8x32xf32>
    %cst_67 = arith.constant dense<0.000000e+00> : vector<8x8xf32>
    %251 = tpu.matmul %248, %249, %cst_67 {dimension_numbers = #tpu.dot_dimension_numbers<[1], [1], [0], [0], [0, 0, 1, 0], [], []>} : vector<8x32xf32>, vector<8x32xf32>, vector<8x8xf32> -> vector<8x8xf32>
    %cst_68 = arith.constant 0.176776692 : f32
    %252 = vector.broadcast %cst_68 : f32 to vector<8x8xf32>
    %253 = arith.mulf %251, %252 : vector<8x8xf32>
    %cst_69 = arith.constant dense<0xFF800000> : vector<8xf32>
    %254 = vector.multi_reduction <maximumf>, %253, %cst_69 [1] : vector<8x8xf32> to vector<8xf32>
    %255 = vector.shape_cast %254 : vector<8xf32> to vector<8x1xf32>
    %256 = vector.broadcast %255 : vector<8x1xf32> to vector<8x8xf32>
    %257 = arith.subf %253, %256 : vector<8x8xf32>
    %258 = math.exp %257 : vector<8x8xf32>
    %cst_70 = arith.constant dense<0.000000e+00> : vector<8xf32>
    %259 = vector.multi_reduction <add>, %258, %cst_70 [1] : vector<8x8xf32> to vector<8xf32>
    %260 = vector.shape_cast %259 : vector<8xf32> to vector<8x1xf32>
    %261 = tpu.reciprocal %260 {approx = true} : vector<8x1xf32> -> vector<8x1xf32>
    %262 = vector.broadcast %261 : vector<8x1xf32> to vector<8x8xf32>
    %263 = arith.mulf %258, %262 : vector<8x8xf32>
    %cst_71 = arith.constant dense<0.000000e+00> : vector<8x32xf32>
    %264 = tpu.matmul %263, %250, %cst_71 {dimension_numbers = #tpu.dot_dimension_numbers<[1], [0], [0], [1], [0, 0, 1, 1], [], []>} : vector<8x8xf32>, vector<8x32xf32>, vector<8x32xf32> -> vector<8x32xf32>
    %265 = tpu.concatenate %247, %264 in 1 : vector<8x32xf32>, vector<8x32xf32> -> vector<8x64xf32>
    %c0_72 = arith.constant 0 : index
    %c0_73 = arith.constant 0 : index
    %266 = vector.load %arg7[%c0_72, %c0_73] : memref<64x16xf32, #tpu.memory_space<vmem>>, vector<64x16xf32>
    %cst_74 = arith.constant dense<0.000000e+00> : vector<8x16xf32>
    %267 = tpu.matmul %265, %266, %cst_74 {dimension_numbers = #tpu.dot_dimension_numbers<[1], [0], [0], [1], [0, 0, 1, 1], [], []>} : vector<8x64xf32>, vector<64x16xf32>, vector<8x16xf32> -> vector<8x16xf32>
    %c0_75 = arith.constant 0 : index
    %c0_76 = arith.constant 0 : index
    %268 = vector.load %arg8[%c0_75, %c0_76] : memref<1x16xf32, #tpu.memory_space<vmem>>, vector<1x16xf32>
    %269 = vector.broadcast %268 : vector<1x16xf32> to vector<8x16xf32>
    %270 = arith.addf %267, %269 : vector<8x16xf32>
    %271 = arith.addf %228, %270 : vector<8x16xf32>
    %c0_77 = arith.constant 0 : index
    %c0_78 = arith.constant 0 : index
    %272 = vector.load %arg9[%c0_77, %c0_78] : memref<1x16xf32, #tpu.memory_space<vmem>>, vector<1x16xf32>
    %c0_79 = arith.constant 0 : index
    %c0_80 = arith.constant 0 : index
    %273 = vector.load %arg10[%c0_79, %c0_80] : memref<1x16xf32, #tpu.memory_space<vmem>>, vector<1x16xf32>
    %cst_81 = arith.constant dense<0.000000e+00> : vector<8xf32>
    %274 = vector.multi_reduction <add>, %271, %cst_81 [1] : vector<8x16xf32> to vector<8xf32>
    %275 = vector.shape_cast %274 : vector<8xf32> to vector<8x1xf32>
    %cst_82 = arith.constant 1.600000e+01 : f32
    %276 = vector.broadcast %cst_82 : f32 to vector<8x1xf32>
    %277 = arith.divf %275, %276 : vector<8x1xf32>
    %278 = vector.broadcast %277 : vector<8x1xf32> to vector<8x16xf32>
    %279 = arith.subf %271, %278 : vector<8x16xf32>
    %280 = arith.mulf %279, %279 : vector<8x16xf32>
    %cst_83 = arith.constant dense<0.000000e+00> : vector<8xf32>
    %281 = vector.multi_reduction <add>, %280, %cst_83 [1] : vector<8x16xf32> to vector<8xf32>
    %282 = vector.shape_cast %281 : vector<8xf32> to vector<8x1xf32>
    %cst_84 = arith.constant 1.600000e+01 : f32
    %283 = vector.broadcast %cst_84 : f32 to vector<8x1xf32>
    %284 = arith.divf %282, %283 : vector<8x1xf32>
    %cst_85 = arith.constant 9.99999974E-6 : f32
    %285 = vector.broadcast %cst_85 : f32 to vector<8x1xf32>
    %286 = arith.addf %284, %285 : vector<8x1xf32>
    %287 = math.rsqrt %286 : vector<8x1xf32>
    %288 = vector.broadcast %287 : vector<8x1xf32> to vector<8x16xf32>
    %289 = arith.mulf %279, %288 : vector<8x16xf32>
    %290 = vector.broadcast %272 : vector<1x16xf32> to vector<8x16xf32>
    %291 = arith.mulf %289, %290 : vector<8x16xf32>
    %292 = vector.broadcast %273 : vector<1x16xf32> to vector<8x16xf32>
    %293 = arith.addf %291, %292 : vector<8x16xf32>
    %c0_86 = arith.constant 0 : index
    %c0_87 = arith.constant 0 : index
    %294 = vector.load %arg11[%c0_86, %c0_87] : memref<16x32xf32, #tpu.memory_space<vmem>>, vector<16x32xf32>
    %cst_88 = arith.constant dense<0.000000e+00> : vector<8x32xf32>
    %295 = tpu.matmul %293, %294, %cst_88 {dimension_numbers = #tpu.dot_dimension_numbers<[1], [0], [0], [1], [0, 0, 1, 1], [], []>} : vector<8x16xf32>, vector<16x32xf32>, vector<8x32xf32> -> vector<8x32xf32>
    %c0_89 = arith.constant 0 : index
    %c0_90 = arith.constant 0 : index
    %296 = vector.load %arg12[%c0_89, %c0_90] : memref<1x32xf32, #tpu.memory_space<vmem>>, vector<1x32xf32>
    %297 = vector.broadcast %296 : vector<1x32xf32> to vector<8x32xf32>
    %298 = arith.addf %295, %297 : vector<8x32xf32>
    %cst_91 = arith.constant 0.000000e+00 : f32
    %299 = vector.broadcast %cst_91 : f32 to vector<8x32xf32>
    %300 = arith.maximumf %298, %299 : vector<8x32xf32>
    %c0_92 = arith.constant 0 : index
    %c0_93 = arith.constant 0 : index
    %301 = vector.load %arg13[%c0_92, %c0_93] : memref<32x16xf32, #tpu.memory_space<vmem>>, vector<32x16xf32>
    %cst_94 = arith.constant dense<0.000000e+00> : vector<8x16xf32>
    %302 = tpu.matmul %300, %301, %cst_94 {dimension_numbers = #tpu.dot_dimension_numbers<[1], [0], [0], [1], [0, 0, 1, 1], [], []>} : vector<8x32xf32>, vector<32x16xf32>, vector<8x16xf32> -> vector<8x16xf32>
    %c0_95 = arith.constant 0 : index
    %c0_96 = arith.constant 0 : index
    %303 = vector.load %arg14[%c0_95, %c0_96] : memref<1x16xf32, #tpu.memory_space<vmem>>, vector<1x16xf32>
    %304 = vector.broadcast %303 : vector<1x16xf32> to vector<8x16xf32>
    %305 = arith.addf %302, %304 : vector<8x16xf32>
    %306 = arith.addf %293, %305 : vector<8x16xf32>
    %c0_97 = arith.constant 0 : index
    %c0_98 = arith.constant 0 : index
    %307 = vector.load %arg15[%c0_97, %c0_98] : memref<1x16xf32, #tpu.memory_space<vmem>>, vector<1x16xf32>
    %c0_99 = arith.constant 0 : index
    %c0_100 = arith.constant 0 : index
    %308 = vector.load %arg16[%c0_99, %c0_100] : memref<1x16xf32, #tpu.memory_space<vmem>>, vector<1x16xf32>
    %cst_101 = arith.constant dense<0.000000e+00> : vector<8xf32>
    %309 = vector.multi_reduction <add>, %306, %cst_101 [1] : vector<8x16xf32> to vector<8xf32>
    %310 = vector.shape_cast %309 : vector<8xf32> to vector<8x1xf32>
    %cst_102 = arith.constant 1.600000e+01 : f32
    %311 = vector.broadcast %cst_102 : f32 to vector<8x1xf32>
    %312 = arith.divf %310, %311 : vector<8x1xf32>
    %313 = vector.broadcast %312 : vector<8x1xf32> to vector<8x16xf32>
    %314 = arith.subf %306, %313 : vector<8x16xf32>
    %315 = arith.mulf %314, %314 : vector<8x16xf32>
    %cst_103 = arith.constant dense<0.000000e+00> : vector<8xf32>
    %316 = vector.multi_reduction <add>, %315, %cst_103 [1] : vector<8x16xf32> to vector<8xf32>
    %317 = vector.shape_cast %316 : vector<8xf32> to vector<8x1xf32>
    %cst_104 = arith.constant 1.600000e+01 : f32
    %318 = vector.broadcast %cst_104 : f32 to vector<8x1xf32>
    %319 = arith.divf %317, %318 : vector<8x1xf32>
    %cst_105 = arith.constant 9.99999974E-6 : f32
    %320 = vector.broadcast %cst_105 : f32 to vector<8x1xf32>
    %321 = arith.addf %319, %320 : vector<8x1xf32>
    %322 = math.rsqrt %321 : vector<8x1xf32>
    %323 = vector.broadcast %322 : vector<8x1xf32> to vector<8x16xf32>
    %324 = arith.mulf %314, %323 : vector<8x16xf32>
    %325 = vector.broadcast %307 : vector<1x16xf32> to vector<8x16xf32>
    %326 = arith.mulf %324, %325 : vector<8x16xf32>
    %327 = vector.broadcast %308 : vector<1x16xf32> to vector<8x16xf32>
    %328 = arith.addf %326, %327 : vector<8x16xf32>
    %cst_106 = arith.constant dense<0.000000e+00> : vector<16xf32>
    %329 = vector.multi_reduction <add>, %328, %cst_106 [0] : vector<8x16xf32> to vector<16xf32>
    %330 = vector.shape_cast %329 : vector<16xf32> to vector<1x16xf32>
    %cst_107 = arith.constant 8.000000e+00 : f32
    %331 = vector.broadcast %cst_107 : f32 to vector<1x16xf32>
    %332 = arith.divf %330, %331 : vector<1x16xf32>
    %c0_108 = arith.constant 0 : index
    %c0_109 = arith.constant 0 : index
    %333 = vector.load %arg17[%c0_108, %c0_109] : memref<16x16xf32, #tpu.memory_space<vmem>>, vector<16x16xf32>
    %cst_110 = arith.constant dense<0.000000e+00> : vector<1x16xf32>
    %334 = tpu.matmul %332, %333, %cst_110 {dimension_numbers = #tpu.dot_dimension_numbers<[1], [0], [0], [1], [0, 0, 1, 1], [], []>} : vector<1x16xf32>, vector<16x16xf32>, vector<1x16xf32> -> vector<1x16xf32>
    %c0_111 = arith.constant 0 : index
    %c0_112 = arith.constant 0 : index
    %335 = vector.load %arg18[%c0_111, %c0_112] : memref<1x16xf32, #tpu.memory_space<vmem>>, vector<1x16xf32>
    %336 = arith.addf %334, %335 : vector<1x16xf32>
    %cst_113 = arith.constant 0.000000e+00 : f32
    %337 = vector.broadcast %cst_113 : f32 to vector<1x16xf32>
    %338 = arith.subf %337, %336 : vector<1x16xf32>
    %339 = math.exp %338 : vector<1x16xf32>
    %cst_114 = arith.constant 1.000000e+00 : f32
    %340 = vector.broadcast %cst_114 : f32 to vector<1x16xf32>
    %341 = arith.addf %340, %339 : vector<1x16xf32>
    %cst_115 = arith.constant 1.000000e+00 : f32
    %342 = vector.broadcast %cst_115 : f32 to vector<1x16xf32>
    %343 = arith.divf %342, %341 : vector<1x16xf32>
    %c0_116 = arith.constant 0 : index
    %c0_117 = arith.constant 0 : index
    %c0_118 = arith.constant 0 : index
    %344 = vector.load %arg19[%c0_116, %c0_117, %c0_118] : memref<1x1x16xf32, #tpu.memory_space<vmem>>, vector<1x1x16xf32>
    %345 = vector.shape_cast %344 : vector<1x1x16xf32> to vector<1x16xf32>
    %346 = vector.shape_cast %343 : vector<1x16xf32> to vector<1x1x16xf32>
    tpu.vector_store %arg19[%c0_116, %c0_117, %c0_118], %346 {strides = array<i32>} : memref<1x1x16xf32, #tpu.memory_space<vmem>>, vector<1x1x16xf32>,
    return
  }
  func.func @transform_0(%arg0: i32) -> (i32, i32, i32) {
    %c0_i32 = arith.constant 0 : i32
    %c0_i32_0 = arith.constant 0 : i32
    %c0_i32_1 = arith.constant 0 : i32
    return %arg0, %c0_i32, %c0_i32_0 : i32, i32, i32
  }
  func.func @transform_1(%arg0: i32) -> (i32, i32, i32) {
    %c0_i32 = arith.constant 0 : i32
    %c0_i32_0 = arith.constant 0 : i32
    %c0_i32_1 = arith.constant 0 : i32
    return %arg0, %c0_i32, %c0_i32_0 : i32, i32, i32
  }
  func.func @transform_2(%arg0: i32) -> (i32, i32) {
    %c0_i32 = arith.constant 0 : i32
    %c0_i32_0 = arith.constant 0 : i32
    %c0_i32_1 = arith.constant 0 : i32
    return %c0_i32, %c0_i32_0 : i32, i32
  }
  func.func @transform_3(%arg0: i32) -> (i32, i32) {
    %c0_i32 = arith.constant 0 : i32
    %c0_i32_0 = arith.constant 0 : i32
    %c0_i32_1 = arith.constant 0 : i32
    return %c0_i32, %c0_i32_0 : i32, i32
  }
  func.func @transform_4(%arg0: i32) -> (i32, i32) {
    %c0_i32 = arith.constant 0 : i32
    %c0_i32_0 = arith.constant 0 : i32
    %c0_i32_1 = arith.constant 0 : i32
    return %c0_i32, %c0_i32_0 : i32, i32
  }
  func.func @transform_5(%arg0: i32) -> (i32, i32) {
    %c0_i32 = arith.constant 0 : i32
    %c0_i32_0 = arith.constant 0 : i32
    %c0_i32_1 = arith.constant 0 : i32
    return %c0_i32, %c0_i32_0 : i32, i32
  }
  func.func @transform_6(%arg0: i32) -> (i32, i32) {
    %c0_i32 = arith.constant 0 : i32
    %c0_i32_0 = arith.constant 0 : i32
    %c0_i32_1 = arith.constant 0 : i32
    return %c0_i32, %c0_i32_0 : i32, i32
  }
  func.func @transform_7(%arg0: i32) -> (i32, i32) {
    %c0_i32 = arith.constant 0 : i32
    %c0_i32_0 = arith.constant 0 : i32
    %c0_i32_1 = arith.constant 0 : i32
    return %c0_i32, %c0_i32_0 : i32, i32
  }
  func.func @transform_8(%arg0: i32) -> (i32, i32) {
    %c0_i32 = arith.constant 0 : i32
    %c0_i32_0 = arith.constant 0 : i32
    %c0_i32_1 = arith.constant 0 : i32
    return %c0_i32, %c0_i32_0 : i32, i32
  }
  func.func @transform_9(%arg0: i32) -> (i32, i32) {
    %c0_i32 = arith.constant 0 : i32
    %c0_i32_0 = arith.constant 0 : i32
    %c0_i32_1 = arith.constant 0 : i32
    return %c0_i32, %c0_i32_0 : i32, i32
  }
  func.func @transform_10(%arg0: i32) -> (i32, i32) {
    %c0_i32 = arith.constant 0 : i32
    %c0_i32_0 = arith.constant 0 : i32
    %c0_i32_1 = arith.constant 0 : i32
    return %c0_i32, %c0_i32_0 : i32, i32
  }
  func.func @transform_11(%arg0: i32) -> (i32, i32) {
    %c0_i32 = arith.constant 0 : i32
    %c0_i32_0 = arith.constant 0 : i32
    %c0_i32_1 = arith.constant 0 : i32
    return %c0_i32, %c0_i32_0 : i32, i32
  }
  func.func @transform_12(%arg0: i32) -> (i32, i32) {
    %c0_i32 = arith.constant 0 : i32
    %c0_i32_0 = arith.constant 0 : i32
    %c0_i32_1 = arith.constant 0 : i32
    return %c0_i32, %c0_i32_0 : i32, i32
  }
  func.func @transform_13(%arg0: i32) -> (i32, i32) {
    %c0_i32 = arith.constant 0 : i32
    %c0_i32_0 = arith.constant 0 : i32
    %c0_i32_1 = arith.constant 0 : i32
    return %c0_i32, %c0_i32_0 : i32, i32
  }
  func.func @transform_14(%arg0: i32) -> (i32, i32) {
    %c0_i32 = arith.constant 0 : i32
    %c0_i32_0 = arith.constant 0 : i32
    %c0_i32_1 = arith.constant 0 : i32
    return %c0_i32, %c0_i32_0 : i32, i32
  }
  func.func @transform_15(%arg0: i32) -> (i32, i32) {
    %c0_i32 = arith.constant 0 : i32
    %c0_i32_0 = arith.constant 0 : i32
    %c0_i32_1 = arith.constant 0 : i32
    return %c0_i32, %c0_i32_0 : i32, i32
  }
  func.func @transform_16(%arg0: i32) -> (i32, i32) {
    %c0_i32 = arith.constant 0 : i32
    %c0_i32_0 = arith.constant 0 : i32
    %c0_i32_1 = arith.constant 0 : i32
    return %c0_i32, %c0_i32_0 : i32, i32
  }
  func.func @transform_17(%arg0: i32) -> (i32, i32) {
    %c0_i32 = arith.constant 0 : i32
    %c0_i32_0 = arith.constant 0 : i32
    %c0_i32_1 = arith.constant 0 : i32
    return %c0_i32, %c0_i32_0 : i32, i32
  }
  func.func @transform_18(%arg0: i32) -> (i32, i32, i32) {
    %c0_i32 = arith.constant 0 : i32
    %c0_i32_0 = arith.constant 0 : i32
    %c0_i32_1 = arith.constant 0 : i32
    return %arg0, %c0_i32, %c0_i32_0 : i32, i32, i32
  }
}

</mosaic_0001>

<llo_original>
// kernel: tpu_custom_call.1
$region0: #{tpu_custom_call.1}
  #allocation0 [shape = 'u32[]', space=smem, size = 0x4, offset = 0x4, fixed_abs, tag = 'smem constant byte address 0x4 - core index']
  #allocation1 [shape = 'u32[72,128]{1,0:T(1,128)}', space=vmem, size = 0x9000, scoped, tag = 'internal scratch']
  %s0 = inlined_call_operand.vmem [shape: f32[2,8,40], index: 0, kind: input, shape index: {}]
  %s1 = inlined_call_operand.vmem [shape: f32[2,8,40], index: 1, kind: input, shape index: {}]
  %s2 = inlined_call_operand.vmem [shape: f32[32,5], index: 2, kind: input, shape index: {}]
  %s3 = inlined_call_operand.vmem [shape: f32[32,3], index: 3, kind: input, shape index: {}]
  %s4 = inlined_call_operand.vmem [shape: f32[36,18], index: 4, kind: input, shape index: {}]
  %s5 = inlined_call_operand.vmem [shape: f32[16,192], index: 5, kind: input, shape index: {}]
  %s6 = inlined_call_operand.vmem [shape: f32[64,16], index: 6, kind: input, shape index: {}]
  %s7 = inlined_call_operand.vmem [shape: f32[1,16], index: 7, kind: input, shape index: {}]
  %s8 = inlined_call_operand.vmem [shape: f32[1,16], index: 8, kind: input, shape index: {}]
  %s9 = inlined_call_operand.vmem [shape: f32[1,16], index: 9, kind: input, shape index: {}]
  %s10 = inlined_call_operand.vmem [shape: f32[16,32], index: 10, kind: input, shape index: {}]
  %s11 = inlined_call_operand.vmem [shape: f32[1,32], index: 11, kind: input, shape index: {}]
  %s12 = inlined_call_operand.vmem [shape: f32[32,16], index: 12, kind: input, shape index: {}]
  %s13 = inlined_call_operand.vmem [shape: f32[1,16], index: 13, kind: input, shape index: {}]
  %s14 = inlined_call_operand.vmem [shape: f32[1,16], index: 14, kind: input, shape index: {}]
  %s15 = inlined_call_operand.vmem [shape: f32[1,16], index: 15, kind: input, shape index: {}]
  %s16 = inlined_call_operand.vmem [shape: f32[16,16], index: 16, kind: input, shape index: {}]
  %s17 = inlined_call_operand.vmem [shape: f32[1,16], index: 17, kind: input, shape index: {}]
  %s18 = inlined_call_operand.hbm [shape: f32[2,1,16], index: 18, kind: output, shape index: {}]
  %s19 = sld [smem:[#allocation0]]
  $region105: #{tpu_custom_call.1} parent=0
    _
  %s21 = ssub.s32 1, %s19
  %s22 = scalar_select 0, %s21, %s19
  $region1: #{tpu_custom_call.1} parent=0
    #allocation2 [shape = 'u8[1024]{0}', space=vmem, size = 0x400, scoped, tag = 'output window, operand 0']
    #allocation3 [shape = 's32[2]{0}', space=sflag, size = 0x8, scoped, tag = 'scoped memory for tpu_custom_call.1']
    %23 = vsyncpa [#allocation3], 0
    %s24 = scalar_lea.sflag [#allocation3], 1
    %25 = vsyncpa %s24, 0
    loop: start=0, step=1, limit=4
    $region2: #{tpu_custom_call.1} parent=1 // loop_pre_header
      _
    $region3: #{tpu_custom_call.1} parent=1 // loop_header
      %s27 = sphi 0, %s31
      %p28 = scmp.ge.s32.totalorder %s27, 4
      %s37 = sphi 0, %s39
      %s40 = sphi 0, %s37
      %s41 = sphi 0, %s40
      %s57 = sphi 0, %s41
      %s63 = sphi 0, %s65
      %s66 = sphi 0, %s63
      %s67 = sphi 0, %s66
      %s83 = sphi 0, %s67
      %s87 = sphi 0, %s87
      %s89 = sphi 0, %s87
      %s90 = sphi 0, %s89
      %s104 = sphi 0, %s90
      %s108 = sphi 0, %s108
      %s110 = sphi 0, %s108
      %s111 = sphi 0, %s110
      %s125 = sphi 0, %s111
      %s129 = sphi 0, %s129
      %s131 = sphi 0, %s129
      %s132 = sphi 0, %s131
      %s146 = sphi 0, %s132
      %s150 = sphi 0, %s150
      %s152 = sphi 0, %s150
      %s153 = sphi 0, %s152
      %s167 = sphi 0, %s153
      %s171 = sphi 0, %s171
      %s173 = sphi 0, %s171
      %s174 = sphi 0, %s173
      %s188 = sphi 0, %s174
      %s192 = sphi 0, %s192
      %s194 = sphi 0, %s192
      %s195 = sphi 0, %s194
      %s209 = sphi 0, %s195
      %s213 = sphi 0, %s213
      %s215 = sphi 0, %s213
      %s216 = sphi 0, %s215
      %s230 = sphi 0, %s216
      %s234 = sphi 0, %s234
      %s236 = sphi 0, %s234
      %s237 = sphi 0, %s236
      %s251 = sphi 0, %s237
      %s255 = sphi 0, %s255
      %s257 = sphi 0, %s255
      %s258 = sphi 0, %s257
      %s272 = sphi 0, %s258
      %s276 = sphi 0, %s276
      %s278 = sphi 0, %s276
      %s279 = sphi 0, %s278
      %s293 = sphi 0, %s279
      %s297 = sphi 0, %s297
      %s299 = sphi 0, %s297
      %s300 = sphi 0, %s299
      %s314 = sphi 0, %s300
      %s318 = sphi 0, %s318
      %s320 = sphi 0, %s318
      %s321 = sphi 0, %s320
      %s335 = sphi 0, %s321
      %s339 = sphi 0, %s339
      %s341 = sphi 0, %s339
      %s342 = sphi 0, %s341
      %s356 = sphi 0, %s342
      %s360 = sphi 0, %s360
      %s362 = sphi 0, %s360
      %s363 = sphi 0, %s362
      %s377 = sphi 0, %s363
      %s381 = sphi 0, %s381
      %s383 = sphi 0, %s381
      %s384 = sphi 0, %s383
      %s398 = sphi 0, %s384
      %s402 = sphi 0, %s402
      %s404 = sphi 0, %s402
      %s405 = sphi 0, %s404
      %s419 = sphi 0, %s405
      %s425 = sphi 0, %s427
      %s428 = sphi 0, %s425
      %s429 = sphi 0, %s428
      %s445 = sphi 0, %s429
    $region4: #{tpu_custom_call.1} parent=1 // loop_header_branch
      %30 = sbr.rel (%p28) target = $region8
    $region5: #{tpu_custom_call.1} parent=1 // loop_body
      %s32 = ssub.s32 %s27, 1
      %s33 = ssub.s32 %s27, 2
      %s34 = sadd.s32 %s27, 1
      %s35 = ssub.s32 %s27, %s34
      %p36 = scmp.eq.s32.totalorder %s35, 0
      %s38 = sadd.s32 %s37, 1
      %s39 = scalar_select %p36, %s37, %s38
      %p42 = pneg %p36
      %p43 = scmp.eq.s32.totalorder %s27, 1
      %p44 = por %p42, %p43
      %p45 = scmp.ne.s32.totalorder %s37, %s40
      %p46 = scmp.eq.s32.totalorder %s27, 0
      %p47 = por %p45, %p46
      %p48 = scmp.ne.s32.totalorder %s37, %s40
      %p49 = scmp.eq.s32.totalorder %s32, 1
      %p50 = por %p48, %p49
      %p51 = scmp.ne.s32.totalorder %s40, %s41
      %p52 = scmp.eq.s32.totalorder %s32, 0
      %p53 = por %p51, %p52
      %p54 = scmp.ne.s32.totalorder %s40, %s41
      %p55 = scmp.eq.s32.totalorder %s33, 1
      %p56 = por %p54, %p55
      %p58 = scmp.ne.s32.totalorder %s41, %s57
      %p59 = scmp.eq.s32.totalorder %s33, 0
      %p60 = por %p58, %p59
      %s61 = ssub.s32 %s27, %s34
      %p62 = scmp.eq.s32.totalorder %s61, 0
      %s64 = sadd.s32 %s63, 1
      %s65 = scalar_select %p62, %s63, %s64
      %p68 = pneg %p62
      %p69 = scmp.eq.s32.totalorder %s27, 1
      %p70 = por %p68, %p69
      %p71 = scmp.ne.s32.totalorder %s63, %s66
      %p72 = scmp.eq.s32.totalorder %s27, 0
      %p73 = por %p71, %p72
      %p74 = scmp.ne.s32.totalorder %s63, %s66
      %p75 = scmp.eq.s32.totalorder %s32, 1
      %p76 = por %p74, %p75
      %p77 = scmp.ne.s32.totalorder %s66, %s67
      %p78 = scmp.eq.s32.totalorder %s32, 0
      %p79 = por %p77, %p78
      %p80 = scmp.ne.s32.totalorder %s66, %s67
      %p81 = scmp.eq.s32.totalorder %s33, 1
      %p82 = por %p80, %p81
      %p84 = scmp.ne.s32.totalorder %s67, %s83
      %p85 = scmp.eq.s32.totalorder %s33, 0
      %p86 = por %p84, %p85
      %s88 = sadd.s32 %s87, 1
      %p91 = scmp.eq.s32.totalorder %s27, 1
      %p92 = scmp.ne.s32.totalorder %s87, %s89
      %p93 = scmp.eq.s32.totalorder %s27, 0
      %p94 = por %p92, %p93
      %p95 = scmp.ne.s32.totalorder %s87, %s89
      %p96 = scmp.eq.s32.totalorder %s32, 1
      %p97 = por %p95, %p96
      %p98 = scmp.ne.s32.totalorder %s89, %s90
      %p99 = scmp.eq.s32.totalorder %s32, 0
      %p100 = por %p98, %p99
      %p101 = scmp.ne.s32.totalorder %s89, %s90
      %p102 = scmp.eq.s32.totalorder %s33, 1
      %p103 = por %p101, %p102
      %p105 = scmp.ne.s32.totalorder %s90, %s104
      %p106 = scmp.eq.s32.totalorder %s33, 0
      %p107 = por %p105, %p106
      %s109 = sadd.s32 %s108, 1
      %p112 = scmp.eq.s32.totalorder %s27, 1
      %p113 = scmp.ne.s32.totalorder %s108, %s110
      %p114 = scmp.eq.s32.totalorder %s27, 0
      %p115 = por %p113, %p114
      %p116 = scmp.ne.s32.totalorder %s108, %s110
      %p117 = scmp.eq.s32.totalorder %s32, 1
      %p118 = por %p116, %p117
      %p119 = scmp.ne.s32.totalorder %s110, %s111
      %p120 = scmp.eq.s32.totalorder %s32, 0
      %p121 = por %p119, %p120
      %p122 = scmp.ne.s32.totalorder %s110, %s111
      %p123 = scmp.eq.s32.totalorder %s33, 1
      %p124 = por %p122, %p123
      %p126 = scmp.ne.s32.totalorder %s111, %s125
      %p127 = scmp.eq.s32.totalorder %s33, 0
      %p128 = por %p126, %p127
      %s130 = sadd.s32 %s129, 1
      %p133 = scmp.eq.s32.totalorder %s27, 1
      %p134 = scmp.ne.s32.totalorder %s129, %s131
      %p135 = scmp.eq.s32.totalorder %s27, 0
      %p136 = por %p134, %p135
      %p137 = scmp.ne.s32.totalorder %s129, %s131
      %p138 = scmp.eq.s32.totalorder %s32, 1
      %p139 = por %p137, %p138
      %p140 = scmp.ne.s32.totalorder %s131, %s132
      %p141 = scmp.eq.s32.totalorder %s32, 0
      %p142 = por %p140, %p141
      %p143 = scmp.ne.s32.totalorder %s131, %s132
      %p144 = scmp.eq.s32.totalorder %s33, 1
      %p145 = por %p143, %p144
      %p147 = scmp.ne.s32.totalorder %s132, %s146
      %p148 = scmp.eq.s32.totalorder %s33, 0
      %p149 = por %p147, %p148
      %s151 = sadd.s32 %s150, 1
      %p154 = scmp.eq.s32.totalorder %s27, 1
      %p155 = scmp.ne.s32.totalorder %s150, %s152
      %p156 = scmp.eq.s32.totalorder %s27, 0
      %p157 = por %p155, %p156
      %p158 = scmp.ne.s32.totalorder %s150, %s152
      %p159 = scmp.eq.s32.totalorder %s32, 1
      %p160 = por %p158, %p159
      %p161 = scmp.ne.s32.totalorder %s152, %s153
      %p162 = scmp.eq.s32.totalorder %s32, 0
      %p163 = por %p161, %p162
      %p164 = scmp.ne.s32.totalorder %s152, %s153
      %p165 = scmp.eq.s32.totalorder %s33, 1
      %p166 = por %p164, %p165
      %p168 = scmp.ne.s32.totalorder %s153, %s167
      %p169 = scmp.eq.s32.totalorder %s33, 0
      %p170 = por %p168, %p169
      %s172 = sadd.s32 %s171, 1
      %p175 = scmp.eq.s32.totalorder %s27, 1
      %p176 = scmp.ne.s32.totalorder %s171, %s173
      %p177 = scmp.eq.s32.totalorder %s27, 0
      %p178 = por %p176, %p177
      %p179 = scmp.ne.s32.totalorder %s171, %s173
      %p180 = scmp.eq.s32.totalorder %s32, 1
      %p181 = por %p179, %p180
      %p182 = scmp.ne.s32.totalorder %s173, %s174
      %p183 = scmp.eq.s32.totalorder %s32, 0
      %p184 = por %p182, %p183
      %p185 = scmp.ne.s32.totalorder %s173, %s174
      %p186 = scmp.eq.s32.totalorder %s33, 1
      %p187 = por %p185, %p186
      %p189 = scmp.ne.s32.totalorder %s174, %s188
      %p190 = scmp.eq.s32.totalorder %s33, 0
      %p191 = por %p189, %p190
      %s193 = sadd.s32 %s192, 1
      %p196 = scmp.eq.s32.totalorder %s27, 1
      %p197 = scmp.ne.s32.totalorder %s192, %s194
      %p198 = scmp.eq.s32.totalorder %s27, 0
      %p199 = por %p197, %p198
      %p200 = scmp.ne.s32.totalorder %s192, %s194
      %p201 = scmp.eq.s32.totalorder %s32, 1
      %p202 = por %p200, %p201
      %p203 = scmp.ne.s32.totalorder %s194, %s195
      %p204 = scmp.eq.s32.totalorder %s32, 0
      %p205 = por %p203, %p204
      %p206 = scmp.ne.s32.totalorder %s194, %s195
      %p207 = scmp.eq.s32.totalorder %s33, 1
      %p208 = por %p206, %p207
      %p210 = scmp.ne.s32.totalorder %s195, %s209
      %p211 = scmp.eq.s32.totalorder %s33, 0
      %p212 = por %p210, %p211
      %s214 = sadd.s32 %s213, 1
      %p217 = scmp.eq.s32.totalorder %s27, 1
      %p218 = scmp.ne.s32.totalorder %s213, %s215
      %p219 = scmp.eq.s32.totalorder %s27, 0
      %p220 = por %p218, %p219
      %p221 = scmp.ne.s32.totalorder %s213, %s215
      %p222 = scmp.eq.s32.totalorder %s32, 1
      %p223 = por %p221, %p222
      %p224 = scmp.ne.s32.totalorder %s215, %s216
      %p225 = scmp.eq.s32.totalorder %s32, 0
      %p226 = por %p224, %p225
      %p227 = scmp.ne.s32.totalorder %s215, %s216
      %p228 = scmp.eq.s32.totalorder %s33, 1
      %p229 = por %p227, %p228
      %p231 = scmp.ne.s32.totalorder %s216, %s230
      %p232 = scmp.eq.s32.totalorder %s33, 0
      %p233 = por %p231, %p232
      %s235 = sadd.s32 %s234, 1
      %p238 = scmp.eq.s32.totalorder %s27, 1
      %p239 = scmp.ne.s32.totalorder %s234, %s236
      %p240 = scmp.eq.s32.totalorder %s27, 0
      %p241 = por %p239, %p240
      %p242 = scmp.ne.s32.totalorder %s234, %s236
      %p243 = scmp.eq.s32.totalorder %s32, 1
      %p244 = por %p242, %p243
      %p245 = scmp.ne.s32.totalorder %s236, %s237
      %p246 = scmp.eq.s32.totalorder %s32, 0
      %p247 = por %p245, %p246
      %p248 = scmp.ne.s32.totalorder %s236, %s237
      %p249 = scmp.eq.s32.totalorder %s33, 1
      %p250 = por %p248, %p249
      %p252 = scmp.ne.s32.totalorder %s237, %s251
      %p253 = scmp.eq.s32.totalorder %s33, 0
      %p254 = por %p252, %p253
      %s256 = sadd.s32 %s255, 1
      %p259 = scmp.eq.s32.totalorder %s27, 1
      %p260 = scmp.ne.s32.totalorder %s255, %s257
      %p261 = scmp.eq.s32.totalorder %s27, 0
      %p262 = por %p260, %p261
      %p263 = scmp.ne.s32.totalorder %s255, %s257
      %p264 = scmp.eq.s32.totalorder %s32, 1
      %p265 = por %p263, %p264
      %p266 = scmp.ne.s32.totalorder %s257, %s258
      %p267 = scmp.eq.s32.totalorder %s32, 0
      %p268 = por %p266, %p267
      %p269 = scmp.ne.s32.totalorder %s257, %s258
      %p270 = scmp.eq.s32.totalorder %s33, 1
      %p271 = por %p269, %p270
      %p273 = scmp.ne.s32.totalorder %s258, %s272
      %p274 = scmp.eq.s32.totalorder %s33, 0
      %p275 = por %p273, %p274
      %s277 = sadd.s32 %s276, 1
      %p280 = scmp.eq.s32.totalorder %s27, 1
      %p281 = scmp.ne.s32.totalorder %s276, %s278
      %p282 = scmp.eq.s32.totalorder %s27, 0
      %p283 = por %p281, %p282
      %p284 = scmp.ne.s32.totalorder %s276, %s278
      %p285 = scmp.eq.s32.totalorder %s32, 1
      %p286 = por %p284, %p285
      %p287 = scmp.ne.s32.totalorder %s278, %s279
      %p288 = scmp.eq.s32.totalorder %s32, 0
      %p289 = por %p287, %p288
      %p290 = scmp.ne.s32.totalorder %s278, %s279
      %p291 = scmp.eq.s32.totalorder %s33, 1
      %p292 = por %p290, %p291
      %p294 = scmp.ne.s32.totalorder %s279, %s293
      %p295 = scmp.eq.s32.totalorder %s33, 0
      %p296 = por %p294, %p295
      %s298 = sadd.s32 %s297, 1
      %p301 = scmp.eq.s32.totalorder %s27, 1
      %p302 = scmp.ne.s32.totalorder %s297, %s299
      %p303 = scmp.eq.s32.totalorder %s27, 0
      %p304 = por %p302, %p303
      %p305 = scmp.ne.s32.totalorder %s297, %s299
      %p306 = scmp.eq.s32.totalorder %s32, 1
      %p307 = por %p305, %p306
      %p308 = scmp.ne.s32.totalorder %s299, %s300
      %p309 = scmp.eq.s32.totalorder %s32, 0
      %p310 = por %p308, %p309
      %p311 = scmp.ne.s32.totalorder %s299, %s300
      %p312 = scmp.eq.s32.totalorder %s33, 1
      %p313 = por %p311, %p312
      %p315 = scmp.ne.s32.totalorder %s300, %s314
      %p316 = scmp.eq.s32.totalorder %s33, 0
      %p317 = por %p315, %p316
      %s319 = sadd.s32 %s318, 1
      %p322 = scmp.eq.s32.totalorder %s27, 1
      %p323 = scmp.ne.s32.totalorder %s318, %s320
      %p324 = scmp.eq.s32.totalorder %s27, 0
      %p325 = por %p323, %p324
      %p326 = scmp.ne.s32.totalorder %s318, %s320
      %p327 = scmp.eq.s32.totalorder %s32, 1
      %p328 = por %p326, %p327
      %p329 = scmp.ne.s32.totalorder %s320, %s321
      %p330 = scmp.eq.s32.totalorder %s32, 0
      %p331 = por %p329, %p330
      %p332 = scmp.ne.s32.totalorder %s320, %s321
      %p333 = scmp.eq.s32.totalorder %s33, 1
      %p334 = por %p332, %p333
      %p336 = scmp.ne.s32.totalorder %s321, %s335
      %p337 = scmp.eq.s32.totalorder %s33, 0
      %p338 = por %p336, %p337
      %s340 = sadd.s32 %s339, 1
      %p343 = scmp.eq.s32.totalorder %s27, 1
      %p344 = scmp.ne.s32.totalorder %s339, %s341
      %p345 = scmp.eq.s32.totalorder %s27, 0
      %p346 = por %p344, %p345
      %p347 = scmp.ne.s32.totalorder %s339, %s341
      %p348 = scmp.eq.s32.totalorder %s32, 1
      %p349 = por %p347, %p348
      %p350 = scmp.ne.s32.totalorder %s341, %s342
      %p351 = scmp.eq.s32.totalorder %s32, 0
      %p352 = por %p350, %p351
      %p353 = scmp.ne.s32.totalorder %s341, %s342
      %p354 = scmp.eq.s32.totalorder %s33, 1
      %p355 = por %p353, %p354
      %p357 = scmp.ne.s32.totalorder %s342, %s356
      %p358 = scmp.eq.s32.totalorder %s33, 0
      %p359 = por %p357, %p358
      %s361 = sadd.s32 %s360, 1
      %p364 = scmp.eq.s32.totalorder %s27, 1
      %p365 = scmp.ne.s32.totalorder %s360, %s362
      %p366 = scmp.eq.s32.totalorder %s27, 0
      %p367 = por %p365, %p366
      %p368 = scmp.ne.s32.totalorder %s360, %s362
      %p369 = scmp.eq.s32.totalorder %s32, 1
      %p370 = por %p368, %p369
      %p371 = scmp.ne.s32.totalorder %s362, %s363
      %p372 = scmp.eq.s32.totalorder %s32, 0
      %p373 = por %p371, %p372
      %p374 = scmp.ne.s32.totalorder %s362, %s363
      %p375 = scmp.eq.s32.totalorder %s33, 1
      %p376 = por %p374, %p375
      %p378 = scmp.ne.s32.totalorder %s363, %s377
      %p379 = scmp.eq.s32.totalorder %s33, 0
      %p380 = por %p378, %p379
      %s382 = sadd.s32 %s381, 1
      %p385 = scmp.eq.s32.totalorder %s27, 1
      %p386 = scmp.ne.s32.totalorder %s381, %s383
      %p387 = scmp.eq.s32.totalorder %s27, 0
      %p388 = por %p386, %p387
      %p389 = scmp.ne.s32.totalorder %s381, %s383
      %p390 = scmp.eq.s32.totalorder %s32, 1
      %p391 = por %p389, %p390
      %p392 = scmp.ne.s32.totalorder %s383, %s384
      %p393 = scmp.eq.s32.totalorder %s32, 0
      %p394 = por %p392, %p393
      %p395 = scmp.ne.s32.totalorder %s383, %s384
      %p396 = scmp.eq.s32.totalorder %s33, 1
      %p397 = por %p395, %p396
      %p399 = scmp.ne.s32.totalorder %s384, %s398
      %p400 = scmp.eq.s32.totalorder %s33, 0
      %p401 = por %p399, %p400
      %s403 = sadd.s32 %s402, 1
      %p406 = scmp.eq.s32.totalorder %s27, 1
      %p407 = scmp.ne.s32.totalorder %s402, %s404
      %p408 = scmp.eq.s32.totalorder %s27, 0
      %p409 = por %p407, %p408
      %p410 = scmp.ne.s32.totalorder %s402, %s404
      %p411 = scmp.eq.s32.totalorder %s32, 1
      %p412 = por %p410, %p411
      %p413 = scmp.ne.s32.totalorder %s404, %s405
      %p414 = scmp.eq.s32.totalorder %s32, 0
      %p415 = por %p413, %p414
      %p416 = scmp.ne.s32.totalorder %s404, %s405
      %p417 = scmp.eq.s32.totalorder %s33, 1
      %p418 = por %p416, %p417
      %p420 = scmp.ne.s32.totalorder %s405, %s419
      %p421 = scmp.eq.s32.totalorder %s33, 0
      %p422 = por %p420, %p421
      %s423 = ssub.s32 %s27, %s34
      %p424 = scmp.eq.s32.totalorder %s423, 0
      %s426 = sadd.s32 %s425, 1
      %s427 = scalar_select %p424, %s425, %s426
      %p430 = pneg %p424
      %p431 = scmp.eq.s32.totalorder %s27, 1
      %p432 = por %p430, %p431
      %p433 = scmp.ne.s32.totalorder %s425, %s428
      %p434 = scmp.eq.s32.totalorder %s27, 0
      %p435 = por %p433, %p434
      %p436 = scmp.ne.s32.totalorder %s425, %s428
      %p437 = scmp.eq.s32.totalorder %s32, 1
      %p438 = por %p436, %p437
      %p439 = scmp.ne.s32.totalorder %s428, %s429
      %p440 = scmp.eq.s32.totalorder %s32, 0
      %p441 = por %p439, %p440
      %p442 = scmp.ne.s32.totalorder %s428, %s429
      %p443 = scmp.eq.s32.totalorder %s33, 1
      %p444 = por %p442, %p443
      %p446 = scmp.ne.s32.totalorder %s429, %s445
      %p447 = scmp.eq.s32.totalorder %s33, 0
      %p448 = por %p446, %p447
      %p449 = scmp.le.s32.totalorder 1, %s27
      %p450 = scmp.lt.s32.totalorder %s27, 3
      %p451 = pnand %p449, %p450
      %p452 = pneg %p451
      // Predicated region
      $region9: #{tpu_custom_call.1} parent=5 // pred_check
        _
      $region10: #{tpu_custom_call.1} parent=5 // pred_check_branch
        %454 = sbr.rel (%p451) target = $region12
      $region11: #{tpu_custom_call.1} parent=5 // pred_region
        %s455 = ssub.s32 %s27, 1
        // Predicated region
        $region13: #{tpu_custom_call.1} parent=11 // pred_check
          %p456 = pneg %p100
        $region14: #{tpu_custom_call.1} parent=11 // pred_check_branch
          %458 = sbr.rel (%p456) target = $region16
        $region15: #{tpu_custom_call.1} parent=11 // pred_region
          _
        $region16: #{tpu_custom_call.1} parent=11 // pred_fallthru
          _
        // Predicated region
        $region17: #{tpu_custom_call.1} parent=11 // pred_check
          %p459 = pneg %p121
        $region18: #{tpu_custom_call.1} parent=11 // pred_check_branch
          %461 = sbr.rel (%p459) target = $region20
        $region19: #{tpu_custom_call.1} parent=11 // pred_region
          _
        $region20: #{tpu_custom_call.1} parent=11 // pred_fallthru
          _
        // Predicated region
        $region21: #{tpu_custom_call.1} parent=11 // pred_check
          %p462 = pneg %p142
        $region22: #{tpu_custom_call.1} parent=11 // pred_check_branch
          %464 = sbr.rel (%p462) target = $region24
        $region23: #{tpu_custom_call.1} parent=11 // pred_region
          _
        $region24: #{tpu_custom_call.1} parent=11 // pred_fallthru
          _
        // Predicated region
        $region25: #{tpu_custom_call.1} parent=11 // pred_check
          %p465 = pneg %p163
        $region26: #{tpu_custom_call.1} parent=11 // pred_check_branch
          %467 = sbr.rel (%p465) target = $region28
        $region27: #{tpu_custom_call.1} parent=11 // pred_region
          _
        $region28: #{tpu_custom_call.1} parent=11 // pred_fallthru
          _
        // Predicated region
        $region29: #{tpu_custom_call.1} parent=11 // pred_check
          %p468 = pneg %p184
        $region30: #{tpu_custom_call.1} parent=11 // pred_check_branch
          %470 = sbr.rel (%p468) target = $region32
        $region31: #{tpu_custom_call.1} parent=11 // pred_region
          _
        $region32: #{tpu_custom_call.1} parent=11 // pred_fallthru
          _
        // Predicated region
        $region33: #{tpu_custom_call.1} parent=11 // pred_check
          %p471 = pneg %p205
        $region34: #{tpu_custom_call.1} parent=11 // pred_check_branch
          %473 = sbr.rel (%p471) target = $region36
        $region35: #{tpu_custom_call.1} parent=11 // pred_region
          _
        $region36: #{tpu_custom_call.1} parent=11 // pred_fallthru
          _
        // Predicated region
        $region37: #{tpu_custom_call.1} parent=11 // pred_check
          %p474 = pneg %p226
        $region38: #{tpu_custom_call.1} parent=11 // pred_check_branch
          %476 = sbr.rel (%p474) target = $region40
        $region39: #{tpu_custom_call.1} parent=11 // pred_region
          _
        $region40: #{tpu_custom_call.1} parent=11 // pred_fallthru
          _
        // Predicated region
        $region41: #{tpu_custom_call.1} parent=11 // pred_check
          %p477 = pneg %p247
        $region42: #{tpu_custom_call.1} parent=11 // pred_check_branch
          %479 = sbr.rel (%p477) target = $region44
        $region43: #{tpu_custom_call.1} parent=11 // pred_region
          _
        $region44: #{tpu_custom_call.1} parent=11 // pred_fallthru
          _
        // Predicated region
        $region45: #{tpu_custom_call.1} parent=11 // pred_check
          %p480 = pneg %p268
        $region46: #{tpu_custom_call.1} parent=11 // pred_check_branch
          %482 = sbr.rel (%p480) target = $region48
        $region47: #{tpu_custom_call.1} parent=11 // pred_region
          _
        $region48: #{tpu_custom_call.1} parent=11 // pred_fallthru
          _
        // Predicated region
        $region49: #{tpu_custom_call.1} parent=11 // pred_check
          %p483 = pneg %p289
        $region50: #{tpu_custom_call.1} parent=11 // pred_check_branch
          %485 = sbr.rel (%p483) target = $region52
        $region51: #{tpu_custom_call.1} parent=11 // pred_region
          _
        $region52: #{tpu_custom_call.1} parent=11 // pred_fallthru
          _
        // Predicated region
        $region53: #{tpu_custom_call.1} parent=11 // pred_check
          %p486 = pneg %p310
        $region54: #{tpu_custom_call.1} parent=11 // pred_check_branch
          %488 = sbr.rel (%p486) target = $region56
        $region55: #{tpu_custom_call.1} parent=11 // pred_region
          _
        $region56: #{tpu_custom_call.1} parent=11 // pred_fallthru
          _
        // Predicated region
        $region57: #{tpu_custom_call.1} parent=11 // pred_check
          %p489 = pneg %p331
        $region58: #{tpu_custom_call.1} parent=11 // pred_check_branch
          %491 = sbr.rel (%p489) target = $region60
        $region59: #{tpu_custom_call.1} parent=11 // pred_region
          _
        $region60: #{tpu_custom_call.1} parent=11 // pred_fallthru
          _
        // Predicated region
        $region61: #{tpu_custom_call.1} parent=11 // pred_check
          %p492 = pneg %p352
        $region62: #{tpu_custom_call.1} parent=11 // pred_check_branch
          %494 = sbr.rel (%p492) target = $region64
        $region63: #{tpu_custom_call.1} parent=11 // pred_region
          _
        $region64: #{tpu_custom_call.1} parent=11 // pred_fallthru
          _
        // Predicated region
        $region65: #{tpu_custom_call.1} parent=11 // pred_check
          %p495 = pneg %p373
        $region66: #{tpu_custom_call.1} parent=11 // pred_check_branch
          %497 = sbr.rel (%p495) target = $region68
        $region67: #{tpu_custom_call.1} parent=11 // pred_region
          _
        $region68: #{tpu_custom_call.1} parent=11 // pred_fallthru
          _
        // Predicated region
        $region69: #{tpu_custom_call.1} parent=11 // pred_check
          %p498 = pneg %p394
        $region70: #{tpu_custom_call.1} parent=11 // pred_check_branch
          %500 = sbr.rel (%p498) target = $region72
        $region71: #{tpu_custom_call.1} parent=11 // pred_region
          _
        $region72: #{tpu_custom_call.1} parent=11 // pred_fallthru
          _
        // Predicated region
        $region73: #{tpu_custom_call.1} parent=11 // pred_check
          %p501 = pneg %p415
        $region74: #{tpu_custom_call.1} parent=11 // pred_check_branch
          %503 = sbr.rel (%p501) target = $region76
        $region75: #{tpu_custom_call.1} parent=11 // pred_region
          _
        $region76: #{tpu_custom_call.1} parent=11 // pred_fallthru
          _
      $region12: #{tpu_custom_call.1} parent=5 // pred_fallthru
        _
      %p504 = scmp.lt.s32.totalorder %s27, 2
      // Predicated region
      $region77: #{tpu_custom_call.1} parent=5 // pred_check
        %p505 = pneg %p504
      $region78: #{tpu_custom_call.1} parent=5 // pred_check_branch
        %507 = sbr.rel (%p505) target = $region80
      $region79: #{tpu_custom_call.1} parent=5 // pred_region
        // Predicated region
        $region81: #{tpu_custom_call.1} parent=79 // pred_check
          %p508 = pneg %p47
        $region82: #{tpu_custom_call.1} parent=79 // pred_check_branch
          %510 = sbr.rel (%p508) target = $region84
        $region83: #{tpu_custom_call.1} parent=79 // pred_region
          %p511 = scmp.lt.s32.totalorder %s27, 1
          %s512 = scalar_select %p511, %s27, 1
          %s513 = smul.addr %s512, 8
          %s514 = scalar_lea.vmem %s0, %s513
        $region84: #{tpu_custom_call.1} parent=79 // pred_fallthru
          _
        // Predicated region
        $region85: #{tpu_custom_call.1} parent=79 // pred_check
          %p515 = pneg %p73
        $region86: #{tpu_custom_call.1} parent=79 // pred_check_branch
          %517 = sbr.rel (%p515) target = $region88
        $region87: #{tpu_custom_call.1} parent=79 // pred_region
          %p518 = scmp.lt.s32.totalorder %s27, 1
          %s519 = scalar_select %p518, %s27, 1
          %s520 = smul.addr %s519, 8
          %s521 = scalar_lea.vmem %s1, %s520
        $region88: #{tpu_custom_call.1} parent=79 // pred_fallthru
          _
      $region80: #{tpu_custom_call.1} parent=5 // pred_fallthru
        _
      %p522 = scmp.le.s32.totalorder 1, %s27
      %p523 = scmp.lt.s32.totalorder %s27, 3
      %p524 = pnand %p522, %p523
      %p525 = pneg %p524
      // Predicated region
      $region89: #{tpu_custom_call.1} parent=5 // pred_check
        _
      $region90: #{tpu_custom_call.1} parent=5 // pred_check_branch
        %527 = sbr.rel (%p524) target = $region92
      $region91: #{tpu_custom_call.1} parent=5 // pred_region
        %s528 = ssub.s32 %s27, 1
        %p529 = scmp.lt.s32.totalorder %s32, 1
        %s530 = scalar_select %p529, %s32, 1
        %s531 = smul.addr %s530, 8
        %s532 = scalar_lea.vmem %s0, %s531
        %p533 = pneg %p53
        %p534 = pneg %p50
        %p535 = scmp.lt.s32.totalorder %s32, 1
        %s536 = scalar_select %p535, %s32, 1
        %s537 = smul.addr %s536, 8
        %s538 = scalar_lea.vmem %s1, %s537
        %p539 = pneg %p79
        %p540 = pneg %p76
        %p541 = pneg %p100
        %p542 = pneg %p97
        %p543 = pneg %p121
        %p544 = pneg %p118
        %p545 = pneg %p142
        %p546 = pneg %p139
        %p547 = pneg %p163
        %p548 = pneg %p160
        %p549 = pneg %p184
        %p550 = pneg %p181
        %p551 = pneg %p205
        %p552 = pneg %p202
        %p553 = pneg %p226
        %p554 = pneg %p223
        %p555 = pneg %p247
        %p556 = pneg %p244
        %p557 = pneg %p268
        %p558 = pneg %p265
        %p559 = pneg %p289
        %p560 = pneg %p286
        %p561 = pneg %p310
        %p562 = pneg %p307
        %p563 = pneg %p331
        %p564 = pneg %p328
        %p565 = pneg %p352
        %p566 = pneg %p349
        %p567 = pneg %p373
        %p568 = pneg %p370
        %p569 = pneg %p394
        %p570 = pneg %p391
        %p571 = pneg %p415
        %p572 = pneg %p412
        %p573 = pneg %p441
        %p574 = pneg %p438
        %s575 = sand.u32 %s428, 1
        %s576 = scalar_lea.sflag [#allocation3], %s575
        %s577 = sand.u32 %s428, 1
        %s578 = scalar_lea.vmem [#allocation2], %s577
        %p579 = scmp.lt.s32.totalorder %s32, 1
        %s580 = scalar_select %p579, %s32, 1
        %s581 = smul.addr %s580, 8
        %s582 = scalar_lea.vmem %s0, %s581
        %p583 = scmp.lt.s32.totalorder %s32, 1
        %s584 = scalar_select %p583, %s32, 1
        %s585 = smul.addr %s584, 8
        %s586 = scalar_lea.vmem %s1, %s585
        %v587 = vld [vmem:[%s2] sm:$0xff]
        %v588 = vld [vmem:[%s2 + $0x8] sm:$0xff]
        %v589 = vld [vmem:[%s2 + $0x10] sm:$0xff]
        %v590 = vld [vmem:[%s2 + $0x18] sm:$0xff]
        %v591 = vld [vmem:[%s3] sm:$0xff]
        %v592 = vld [vmem:[%s3 + $0x8] sm:$0xff]
        %v593 = vld [vmem:[%s3 + $0x10] sm:$0xff]
        %v594 = vld [vmem:[%s3 + $0x18] sm:$0xff]
        %v595 = vld [vmem:[%s582] sm:$0xff]
        %v597 = vrot.slane %v595, 1
        %v598 = vrot.slane %v595, 2
        %v599 = vrot.slane %v595, 3
        %v600 = vrot.slane %v595, 4
        %v601 = vrot.slane %v595, 5
        %v602 = vrot.slane %v595, 6
        %v603 = vrot.slane %v595, 7
        %v604 = vperm.slane %v595, 0
        %v605 = vperm.slane %v597, 0
        %v606 = vperm.slane %v598, 0
        %v607 = vperm.slane %v599, 0
        %v608 = vperm.slane %v600, 0
        %v609 = vperm.slane %v601, 0
        %v610 = vperm.slane %v602, 0
        %v611 = vperm.slane %v603, 0
        %621 = vset.pattern.permute.xlu0 0
        %622 = vperm.xlu0 %621, %v587
        %v623 = vpop.permute.xlu0 %622
        %626 = vset.pattern.permute.xlu0 0
        %627 = vperm.xlu0 %626, %v588
        %v628 = vpop.permute.xlu0 %627
        %631 = vset.pattern.permute.xlu0 0
        %632 = vperm.xlu0 %631, %v589
        %v633 = vpop.permute.xlu0 %632
        %636 = vset.pattern.permute.xlu0 0
        %637 = vperm.xlu0 %636, %v590
        %v638 = vpop.permute.xlu0 %637
        %v640 = vmul.f32 %v604, %v623
        %v641 = vmul.f32 %v604, %v628
        %v642 = vmul.f32 %v604, %v633
        %v643 = vmul.f32 %v604, %v638
        %v644 = vmul.f32 %v605, %v623
        %v645 = vmul.f32 %v605, %v628
        %v646 = vmul.f32 %v605, %v633
        %v647 = vmul.f32 %v605, %v638
        %v648 = vmul.f32 %v606, %v623
        %v649 = vmul.f32 %v606, %v628
        %v650 = vmul.f32 %v606, %v633
        %v651 = vmul.f32 %v606, %v638
        %v652 = vmul.f32 %v607, %v623
        %v653 = vmul.f32 %v607, %v628
        %v654 = vmul.f32 %v607, %v633
        %v655 = vmul.f32 %v607, %v638
        %v656 = vmul.f32 %v608, %v623
        %v657 = vmul.f32 %v608, %v628
        %v658 = vmul.f32 %v608, %v633
        %v659 = vmul.f32 %v608, %v638
        %v660 = vmul.f32 %v609, %v623
        %v661 = vmul.f32 %v609, %v628
        %v662 = vmul.f32 %v609, %v633
        %v663 = vmul.f32 %v609, %v638
        %v664 = vmul.f32 %v610, %v623
        %v665 = vmul.f32 %v610, %v628
        %v666 = vmul.f32 %v610, %v633
        %v667 = vmul.f32 %v610, %v638
        %v668 = vmul.f32 %v611, %v623
        %v669 = vmul.f32 %v611, %v628
        %v670 = vmul.f32 %v611, %v633
        %v671 = vmul.f32 %v611, %v638
        %672 = vset.pattern.permute.xlu0 1
        %673 = vperm.xlu0 %672, %v587
        %v674 = vpop.permute.xlu0 %673
        %676 = vset.pattern.permute.xlu0 1
        %677 = vperm.xlu0 %676, %v588
        %v678 = vpop.permute.xlu0 %677
        %680 = vset.pattern.permute.xlu0 1
        %681 = vperm.xlu0 %680, %v589
        %v682 = vpop.permute.xlu0 %681
        %684 = vset.pattern.permute.xlu0 1
        %685 = vperm.xlu0 %684, %v590
        %v686 = vpop.permute.xlu0 %685
        %v688 = vmul.f32 %v604, %v674
        %v689 = vmul.f32 %v604, %v678
        %v690 = vmul.f32 %v604, %v682
        %v691 = vmul.f32 %v604, %v686
        %v692 = vmul.f32 %v605, %v674
        %v693 = vmul.f32 %v605, %v678
        %v694 = vmul.f32 %v605, %v682
        %v695 = vmul.f32 %v605, %v686
        %v696 = vmul.f32 %v606, %v674
        %v697 = vmul.f32 %v606, %v678
        %v698 = vmul.f32 %v606, %v682
        %v699 = vmul.f32 %v606, %v686
        %v700 = vmul.f32 %v607, %v674
        %v701 = vmul.f32 %v607, %v678
        %v702 = vmul.f32 %v607, %v682
        %v703 = vmul.f32 %v607, %v686
        %v704 = vmul.f32 %v608, %v674
        %v705 = vmul.f32 %v608, %v678
        %v706 = vmul.f32 %v608, %v682
        %v707 = vmul.f32 %v608, %v686
        %v708 = vmul.f32 %v609, %v674
        %v709 = vmul.f32 %v609, %v678
        %v710 = vmul.f32 %v609, %v682
        %v711 = vmul.f32 %v609, %v686
        %v712 = vmul.f32 %v610, %v674
        %v713 = vmul.f32 %v610, %v678
        %v714 = vmul.f32 %v610, %v682
        %v715 = vmul.f32 %v610, %v686
        %v716 = vmul.f32 %v611, %v674
        %v717 = vmul.f32 %v611, %v678
        %v718 = vmul.f32 %v611, %v682
        %v719 = vmul.f32 %v611, %v686
        %752 = vrot.lane.b32.xlu0 %v688, 127
        %v753 = vpop.permute.xlu0 %752
        %754 = vrot.lane.b32.xlu0 %v689, 127
        %v755 = vpop.permute.xlu0 %754
        %756 = vrot.lane.b32.xlu0 %v690, 127
        %v757 = vpop.permute.xlu0 %756
        %758 = vrot.lane.b32.xlu0 %v691, 127
        %v759 = vpop.permute.xlu0 %758
        %760 = vrot.lane.b32.xlu0 %v692, 127
        %v761 = vpop.permute.xlu0 %760
        %762 = vrot.lane.b32.xlu0 %v693, 127
        %v763 = vpop.permute.xlu0 %762
        %764 = vrot.lane.b32.xlu0 %v694, 127
        %v765 = vpop.permute.xlu0 %764
        %766 = vrot.lane.b32.xlu0 %v695, 127
        %v767 = vpop.permute.xlu0 %766
        %768 = vrot.lane.b32.xlu0 %v696, 127
        %v769 = vpop.permute.xlu0 %768
        %770 = vrot.lane.b32.xlu0 %v697, 127
        %v771 = vpop.permute.xlu0 %770
        %772 = vrot.lane.b32.xlu0 %v698, 127
        %v773 = vpop.permute.xlu0 %772
        %774 = vrot.lane.b32.xlu0 %v699, 127
        %v775 = vpop.permute.xlu0 %774
        %776 = vrot.lane.b32.xlu0 %v700, 127
        %v777 = vpop.permute.xlu0 %776
        %778 = vrot.lane.b32.xlu0 %v701, 127
        %v779 = vpop.permute.xlu0 %778
        %780 = vrot.lane.b32.xlu0 %v702, 127
        %v781 = vpop.permute.xlu0 %780
        %782 = vrot.lane.b32.xlu0 %v703, 127
        %v783 = vpop.permute.xlu0 %782
        %784 = vrot.lane.b32.xlu0 %v704, 127
        %v785 = vpop.permute.xlu0 %784
        %786 = vrot.lane.b32.xlu0 %v705, 127
        %v787 = vpop.permute.xlu0 %786
        %788 = vrot.lane.b32.xlu0 %v706, 127
        %v789 = vpop.permute.xlu0 %788
        %790 = vrot.lane.b32.xlu0 %v707, 127
        %v791 = vpop.permute.xlu0 %790
        %792 = vrot.lane.b32.xlu0 %v708, 127
        %v793 = vpop.permute.xlu0 %792
        %794 = vrot.lane.b32.xlu0 %v709, 127
        %v795 = vpop.permute.xlu0 %794
        %796 = vrot.lane.b32.xlu0 %v710, 127
        %v797 = vpop.permute.xlu0 %796
        %798 = vrot.lane.b32.xlu0 %v711, 127
        %v799 = vpop.permute.xlu0 %798
        %800 = vrot.lane.b32.xlu0 %v712, 127
        %v801 = vpop.permute.xlu0 %800
        %802 = vrot.lane.b32.xlu0 %v713, 127
        %v803 = vpop.permute.xlu0 %802
        %804 = vrot.lane.b32.xlu0 %v714, 127
        %v805 = vpop.permute.xlu0 %804
        %806 = vrot.lane.b32.xlu0 %v715, 127
        %v807 = vpop.permute.xlu0 %806
        %808 = vrot.lane.b32.xlu0 %v716, 127
        %v809 = vpop.permute.xlu0 %808
        %810 = vrot.lane.b32.xlu0 %v717, 127
        %v811 = vpop.permute.xlu0 %810
        %812 = vrot.lane.b32.xlu0 %v718, 127
        %v813 = vpop.permute.xlu0 %812
        %814 = vrot.lane.b32.xlu0 %v719, 127
        %v815 = vpop.permute.xlu0 %814
        %v848 = vadd.f32 %v640, %v753
        %v849 = vadd.f32 %v641, %v755
        %v850 = vadd.f32 %v642, %v757
        %v851 = vadd.f32 %v643, %v759
        %v852 = vadd.f32 %v644, %v761
        %v853 = vadd.f32 %v645, %v763
        %v854 = vadd.f32 %v646, %v765
        %v855 = vadd.f32 %v647, %v767
        %v856 = vadd.f32 %v648, %v769
        %v857 = vadd.f32 %v649, %v771
        %v858 = vadd.f32 %v650, %v773
        %v859 = vadd.f32 %v651, %v775
        %v860 = vadd.f32 %v652, %v777
        %v861 = vadd.f32 %v653, %v779
        %v862 = vadd.f32 %v654, %v781
        %v863 = vadd.f32 %v655, %v783
        %v864 = vadd.f32 %v656, %v785
        %v865 = vadd.f32 %v657, %v787
        %v866 = vadd.f32 %v658, %v789
        %v867 = vadd.f32 %v659, %v791
        %v868 = vadd.f32 %v660, %v793
        %v869 = vadd.f32 %v661, %v795
        %v870 = vadd.f32 %v662, %v797
        %v871 = vadd.f32 %v663, %v799
        %v872 = vadd.f32 %v664, %v801
        %v873 = vadd.f32 %v665, %v803
        %v874 = vadd.f32 %v666, %v805
        %v875 = vadd.f32 %v667, %v807
        %v876 = vadd.f32 %v668, %v809
        %v877 = vadd.f32 %v669, %v811
        %v878 = vadd.f32 %v670, %v813
        %v879 = vadd.f32 %v671, %v815
        %880 = vset.pattern.permute.xlu0 2
        %881 = vperm.xlu0 %880, %v587
        %v882 = vpop.permute.xlu0 %881
        %884 = vset.pattern.permute.xlu0 2
        %885 = vperm.xlu0 %884, %v588
        %v886 = vpop.permute.xlu0 %885
        %888 = vset.pattern.permute.xlu0 2
        %889 = vperm.xlu0 %888, %v589
        %v890 = vpop.permute.xlu0 %889
        %892 = vset.pattern.permute.xlu0 2
        %893 = vperm.xlu0 %892, %v590
        %v894 = vpop.permute.xlu0 %893
        %v896 = vmul.f32 %v604, %v882
        %v897 = vmul.f32 %v604, %v886
        %v898 = vmul.f32 %v604, %v890
        %v899 = vmul.f32 %v604, %v894
        %v900 = vmul.f32 %v605, %v882
        %v901 = vmul.f32 %v605, %v886
        %v902 = vmul.f32 %v605, %v890
        %v903 = vmul.f32 %v605, %v894
        %v904 = vmul.f32 %v606, %v882
        %v905 = vmul.f32 %v606, %v886
        %v906 = vmul.f32 %v606, %v890
        %v907 = vmul.f32 %v606, %v894
        %v908 = vmul.f32 %v607, %v882
        %v909 = vmul.f32 %v607, %v886
        %v910 = vmul.f32 %v607, %v890
        %v911 = vmul.f32 %v607, %v894
        %v912 = vmul.f32 %v608, %v882
        %v913 = vmul.f32 %v608, %v886
        %v914 = vmul.f32 %v608, %v890
        %v915 = vmul.f32 %v608, %v894
        %v916 = vmul.f32 %v609, %v882
        %v917 = vmul.f32 %v609, %v886
        %v918 = vmul.f32 %v609, %v890
        %v919 = vmul.f32 %v609, %v894
        %v920 = vmul.f32 %v610, %v882
        %v921 = vmul.f32 %v610, %v886
        %v922 = vmul.f32 %v610, %v890
        %v923 = vmul.f32 %v610, %v894
        %v924 = vmul.f32 %v611, %v882
        %v925 = vmul.f32 %v611, %v886
        %v926 = vmul.f32 %v611, %v890
        %v927 = vmul.f32 %v611, %v894
        %960 = vrot.lane.b32.xlu0 %v896, 126
        %v961 = vpop.permute.xlu0 %960
        %962 = vrot.lane.b32.xlu0 %v897, 126
        %v963 = vpop.permute.xlu0 %962
        %964 = vrot.lane.b32.xlu0 %v898, 126
        %v965 = vpop.permute.xlu0 %964
        %966 = vrot.lane.b32.xlu0 %v899, 126
        %v967 = vpop.permute.xlu0 %966
        %968 = vrot.lane.b32.xlu0 %v900, 126
        %v969 = vpop.permute.xlu0 %968
        %970 = vrot.lane.b32.xlu0 %v901, 126
        %v971 = vpop.permute.xlu0 %970
        %972 = vrot.lane.b32.xlu0 %v902, 126
        %v973 = vpop.permute.xlu0 %972
        %974 = vrot.lane.b32.xlu0 %v903, 126
        %v975 = vpop.permute.xlu0 %974
        %976 = vrot.lane.b32.xlu0 %v904, 126
        %v977 = vpop.permute.xlu0 %976
        %978 = vrot.lane.b32.xlu0 %v905, 126
        %v979 = vpop.permute.xlu0 %978
        %980 = vrot.lane.b32.xlu0 %v906, 126
        %v981 = vpop.permute.xlu0 %980
        %982 = vrot.lane.b32.xlu0 %v907, 126
        %v983 = vpop.permute.xlu0 %982
        %984 = vrot.lane.b32.xlu0 %v908, 126
        %v985 = vpop.permute.xlu0 %984
        %986 = vrot.lane.b32.xlu0 %v909, 126
        %v987 = vpop.permute.xlu0 %986
        %988 = vrot.lane.b32.xlu0 %v910, 126
        %v989 = vpop.permute.xlu0 %988
        %990 = vrot.lane.b32.xlu0 %v911, 126
        %v991 = vpop.permute.xlu0 %990
        %992 = vrot.lane.b32.xlu0 %v912, 126
        %v993 = vpop.permute.xlu0 %992
        %994 = vrot.lane.b32.xlu0 %v913, 126
        %v995 = vpop.permute.xlu0 %994
        %996 = vrot.lane.b32.xlu0 %v914, 126
        %v997 = vpop.permute.xlu0 %996
        %998 = vrot.lane.b32.xlu0 %v915, 126
        %v999 = vpop.permute.xlu0 %998
        %1000 = vrot.lane.b32.xlu0 %v916, 126
        %v1001 = vpop.permute.xlu0 %1000
        %1002 = vrot.lane.b32.xlu0 %v917, 126
        %v1003 = vpop.permute.xlu0 %1002
        %1004 = vrot.lane.b32.xlu0 %v918, 126
        %v1005 = vpop.permute.xlu0 %1004
        %1006 = vrot.lane.b32.xlu0 %v919, 126
        %v1007 = vpop.permute.xlu0 %1006
        %1008 = vrot.lane.b32.xlu0 %v920, 126
        %v1009 = vpop.permute.xlu0 %1008
        %1010 = vrot.lane.b32.xlu0 %v921, 126
        %v1011 = vpop.permute.xlu0 %1010
        %1012 = vrot.lane.b32.xlu0 %v922, 126
        %v1013 = vpop.permute.xlu0 %1012
        %1014 = vrot.lane.b32.xlu0 %v923, 126
        %v1015 = vpop.permute.xlu0 %1014
        %1016 = vrot.lane.b32.xlu0 %v924, 126
        %v1017 = vpop.permute.xlu0 %1016
        %1018 = vrot.lane.b32.xlu0 %v925, 126
        %v1019 = vpop.permute.xlu0 %1018
        %1020 = vrot.lane.b32.xlu0 %v926, 126
        %v1021 = vpop.permute.xlu0 %1020
        %1022 = vrot.lane.b32.xlu0 %v927, 126
        %v1023 = vpop.permute.xlu0 %1022
        %v1056 = vadd.f32 %v848, %v961
        %v1057 = vadd.f32 %v849, %v963
        %v1058 = vadd.f32 %v850, %v965
        %v1059 = vadd.f32 %v851, %v967
        %v1060 = vadd.f32 %v852, %v969
        %v1061 = vadd.f32 %v853, %v971
        %v1062 = vadd.f32 %v854, %v973
        %v1063 = vadd.f32 %v855, %v975
        %v1064 = vadd.f32 %v856, %v977
        %v1065 = vadd.f32 %v857, %v979
        %v1066 = vadd.f32 %v858, %v981
        %v1067 = vadd.f32 %v859, %v983
        %v1068 = vadd.f32 %v860, %v985
        %v1069 = vadd.f32 %v861, %v987
        %v1070 = vadd.f32 %v862, %v989
        %v1071 = vadd.f32 %v863, %v991
        %v1072 = vadd.f32 %v864, %v993
        %v1073 = vadd.f32 %v865, %v995
        %v1074 = vadd.f32 %v866, %v997
        %v1075 = vadd.f32 %v867, %v999
        %v1076 = vadd.f32 %v868, %v1001
        %v1077 = vadd.f32 %v869, %v1003
        %v1078 = vadd.f32 %v870, %v1005
        %v1079 = vadd.f32 %v871, %v1007
        %v1080 = vadd.f32 %v872, %v1009
        %v1081 = vadd.f32 %v873, %v1011
        %v1082 = vadd.f32 %v874, %v1013
        %v1083 = vadd.f32 %v875, %v1015
        %v1084 = vadd.f32 %v876, %v1017
        %v1085 = vadd.f32 %v877, %v1019
        %v1086 = vadd.f32 %v878, %v1021
        %v1087 = vadd.f32 %v879, %v1023
        %1088 = vset.pattern.permute.xlu0 3
        %1089 = vperm.xlu0 %1088, %v587
        %v1090 = vpop.permute.xlu0 %1089
        %1092 = vset.pattern.permute.xlu0 3
        %1093 = vperm.xlu0 %1092, %v588
        %v1094 = vpop.permute.xlu0 %1093
        %1096 = vset.pattern.permute.xlu0 3
        %1097 = vperm.xlu0 %1096, %v589
        %v1098 = vpop.permute.xlu0 %1097
        %1100 = vset.pattern.permute.xlu0 3
        %1101 = vperm.xlu0 %1100, %v590
        %v1102 = vpop.permute.xlu0 %1101
        %v1104 = vmul.f32 %v604, %v1090
        %v1105 = vmul.f32 %v604, %v1094
        %v1106 = vmul.f32 %v604, %v1098
        %v1107 = vmul.f32 %v604, %v1102
        %v1108 = vmul.f32 %v605, %v1090
        %v1109 = vmul.f32 %v605, %v1094
        %v1110 = vmul.f32 %v605, %v1098
        %v1111 = vmul.f32 %v605, %v1102
        %v1112 = vmul.f32 %v606, %v1090
        %v1113 = vmul.f32 %v606, %v1094
        %v1114 = vmul.f32 %v606, %v1098
        %v1115 = vmul.f32 %v606, %v1102
        %v1116 = vmul.f32 %v607, %v1090
        %v1117 = vmul.f32 %v607, %v1094
        %v1118 = vmul.f32 %v607, %v1098
        %v1119 = vmul.f32 %v607, %v1102
        %v1120 = vmul.f32 %v608, %v1090
        %v1121 = vmul.f32 %v608, %v1094
        %v1122 = vmul.f32 %v608, %v1098
        %v1123 = vmul.f32 %v608, %v1102
        %v1124 = vmul.f32 %v609, %v1090
        %v1125 = vmul.f32 %v609, %v1094
        %v1126 = vmul.f32 %v609, %v1098
        %v1127 = vmul.f32 %v609, %v1102
        %v1128 = vmul.f32 %v610, %v1090
        %v1129 = vmul.f32 %v610, %v1094
        %v1130 = vmul.f32 %v610, %v1098
        %v1131 = vmul.f32 %v610, %v1102
        %v1132 = vmul.f32 %v611, %v1090
        %v1133 = vmul.f32 %v611, %v1094
        %v1134 = vmul.f32 %v611, %v1098
        %v1135 = vmul.f32 %v611, %v1102
        %1168 = vrot.lane.b32.xlu0 %v1104, 125
        %v1169 = vpop.permute.xlu0 %1168
        %1170 = vrot.lane.b32.xlu0 %v1105, 125
        %v1171 = vpop.permute.xlu0 %1170
        %1172 = vrot.lane.b32.xlu0 %v1106, 125
        %v1173 = vpop.permute.xlu0 %1172
        %1174 = vrot.lane.b32.xlu0 %v1107, 125
        %v1175 = vpop.permute.xlu0 %1174
        %1176 = vrot.lane.b32.xlu0 %v1108, 125
        %v1177 = vpop.permute.xlu0 %1176
        %1178 = vrot.lane.b32.xlu0 %v1109, 125
        %v1179 = vpop.permute.xlu0 %1178
        %1180 = vrot.lane.b32.xlu0 %v1110, 125
        %v1181 = vpop.permute.xlu0 %1180
        %1182 = vrot.lane.b32.xlu0 %v1111, 125
        %v1183 = vpop.permute.xlu0 %1182
        %1184 = vrot.lane.b32.xlu0 %v1112, 125
        %v1185 = vpop.permute.xlu0 %1184
        %1186 = vrot.lane.b32.xlu0 %v1113, 125
        %v1187 = vpop.permute.xlu0 %1186
        %1188 = vrot.lane.b32.xlu0 %v1114, 125
        %v1189 = vpop.permute.xlu0 %1188
        %1190 = vrot.lane.b32.xlu0 %v1115, 125
        %v1191 = vpop.permute.xlu0 %1190
        %1192 = vrot.lane.b32.xlu0 %v1116, 125
        %v1193 = vpop.permute.xlu0 %1192
        %1194 = vrot.lane.b32.xlu0 %v1117, 125
        %v1195 = vpop.permute.xlu0 %1194
        %1196 = vrot.lane.b32.xlu0 %v1118, 125
        %v1197 = vpop.permute.xlu0 %1196
        %1198 = vrot.lane.b32.xlu0 %v1119, 125
        %v1199 = vpop.permute.xlu0 %1198
        %1200 = vrot.lane.b32.xlu0 %v1120, 125
        %v1201 = vpop.permute.xlu0 %1200
        %1202 = vrot.lane.b32.xlu0 %v1121, 125
        %v1203 = vpop.permute.xlu0 %1202
        %1204 = vrot.lane.b32.xlu0 %v1122, 125
        %v1205 = vpop.permute.xlu0 %1204
        %1206 = vrot.lane.b32.xlu0 %v1123, 125
        %v1207 = vpop.permute.xlu0 %1206
        %1208 = vrot.lane.b32.xlu0 %v1124, 125
        %v1209 = vpop.permute.xlu0 %1208
        %1210 = vrot.lane.b32.xlu0 %v1125, 125
        %v1211 = vpop.permute.xlu0 %1210
        %1212 = vrot.lane.b32.xlu0 %v1126, 125
        %v1213 = vpop.permute.xlu0 %1212
        %1214 = vrot.lane.b32.xlu0 %v1127, 125
        %v1215 = vpop.permute.xlu0 %1214
        %1216 = vrot.lane.b32.xlu0 %v1128, 125
        %v1217 = vpop.permute.xlu0 %1216
        %1218 = vrot.lane.b32.xlu0 %v1129, 125
        %v1219 = vpop.permute.xlu0 %1218
        %1220 = vrot.lane.b32.xlu0 %v1130, 125
        %v1221 = vpop.permute.xlu0 %1220
        %1222 = vrot.lane.b32.xlu0 %v1131, 125
        %v1223 = vpop.permute.xlu0 %1222
        %1224 = vrot.lane.b32.xlu0 %v1132, 125
        %v1225 = vpop.permute.xlu0 %1224
        %1226 = vrot.lane.b32.xlu0 %v1133, 125
        %v1227 = vpop.permute.xlu0 %1226
        %1228 = vrot.lane.b32.xlu0 %v1134, 125
        %v1229 = vpop.permute.xlu0 %1228
        %1230 = vrot.lane.b32.xlu0 %v1135, 125
        %v1231 = vpop.permute.xlu0 %1230
        %v1264 = vadd.f32 %v1056, %v1169
        %v1265 = vadd.f32 %v1057, %v1171
        %v1266 = vadd.f32 %v1058, %v1173
        %v1267 = vadd.f32 %v1059, %v1175
        %v1268 = vadd.f32 %v1060, %v1177
        %v1269 = vadd.f32 %v1061, %v1179
        %v1270 = vadd.f32 %v1062, %v1181
        %v1271 = vadd.f32 %v1063, %v1183
        %v1272 = vadd.f32 %v1064, %v1185
        %v1273 = vadd.f32 %v1065, %v1187
        %v1274 = vadd.f32 %v1066, %v1189
        %v1275 = vadd.f32 %v1067, %v1191
        %v1276 = vadd.f32 %v1068, %v1193
        %v1277 = vadd.f32 %v1069, %v1195
        %v1278 = vadd.f32 %v1070, %v1197
        %v1279 = vadd.f32 %v1071, %v1199
        %v1280 = vadd.f32 %v1072, %v1201
        %v1281 = vadd.f32 %v1073, %v1203
        %v1282 = vadd.f32 %v1074, %v1205
        %v1283 = vadd.f32 %v1075, %v1207
        %v1284 = vadd.f32 %v1076, %v1209
        %v1285 = vadd.f32 %v1077, %v1211
        %v1286 = vadd.f32 %v1078, %v1213
        %v1287 = vadd.f32 %v1079, %v1215
        %v1288 = vadd.f32 %v1080, %v1217
        %v1289 = vadd.f32 %v1081, %v1219
        %v1290 = vadd.f32 %v1082, %v1221
        %v1291 = vadd.f32 %v1083, %v1223
        %v1292 = vadd.f32 %v1084, %v1225
        %v1293 = vadd.f32 %v1085, %v1227
        %v1294 = vadd.f32 %v1086, %v1229
        %v1295 = vadd.f32 %v1087, %v1231
        %1296 = vset.pattern.permute.xlu0 4
        %1297 = vperm.xlu0 %1296, %v587
        %v1298 = vpop.permute.xlu0 %1297
        %1300 = vset.pattern.permute.xlu0 4
        %1301 = vperm.xlu0 %1300, %v588
        %v1302 = vpop.permute.xlu0 %1301
        %1304 = vset.pattern.permute.xlu0 4
        %1305 = vperm.xlu0 %1304, %v589
        %v1306 = vpop.permute.xlu0 %1305
        %1308 = vset.pattern.permute.xlu0 4
        %1309 = vperm.xlu0 %1308, %v590
        %v1310 = vpop.permute.xlu0 %1309
        %v1312 = vmul.f32 %v604, %v1298
        %v1313 = vmul.f32 %v604, %v1302
        %v1314 = vmul.f32 %v604, %v1306
        %v1315 = vmul.f32 %v604, %v1310
        %v1316 = vmul.f32 %v605, %v1298
        %v1317 = vmul.f32 %v605, %v1302
        %v1318 = vmul.f32 %v605, %v1306
        %v1319 = vmul.f32 %v605, %v1310
        %v1320 = vmul.f32 %v606, %v1298
        %v1321 = vmul.f32 %v606, %v1302
        %v1322 = vmul.f32 %v606, %v1306
        %v1323 = vmul.f32 %v606, %v1310
        %v1324 = vmul.f32 %v607, %v1298
        %v1325 = vmul.f32 %v607, %v1302
        %v1326 = vmul.f32 %v607, %v1306
        %v1327 = vmul.f32 %v607, %v1310
        %v1328 = vmul.f32 %v608, %v1298
        %v1329 = vmul.f32 %v608, %v1302
        %v1330 = vmul.f32 %v608, %v1306
        %v1331 = vmul.f32 %v608, %v1310
        %v1332 = vmul.f32 %v609, %v1298
        %v1333 = vmul.f32 %v609, %v1302
        %v1334 = vmul.f32 %v609, %v1306
        %v1335 = vmul.f32 %v609, %v1310
        %v1336 = vmul.f32 %v610, %v1298
        %v1337 = vmul.f32 %v610, %v1302
        %v1338 = vmul.f32 %v610, %v1306
        %v1339 = vmul.f32 %v610, %v1310
        %v1340 = vmul.f32 %v611, %v1298
        %v1341 = vmul.f32 %v611, %v1302
        %v1342 = vmul.f32 %v611, %v1306
        %v1343 = vmul.f32 %v611, %v1310
        %1376 = vrot.lane.b32.xlu0 %v1312, 124
        %v1377 = vpop.permute.xlu0 %1376
        %1378 = vrot.lane.b32.xlu0 %v1313, 124
        %v1379 = vpop.permute.xlu0 %1378
        %1380 = vrot.lane.b32.xlu0 %v1314, 124
        %v1381 = vpop.permute.xlu0 %1380
        %1382 = vrot.lane.b32.xlu0 %v1315, 124
        %v1383 = vpop.permute.xlu0 %1382
        %1384 = vrot.lane.b32.xlu0 %v1316, 124
        %v1385 = vpop.permute.xlu0 %1384
        %1386 = vrot.lane.b32.xlu0 %v1317, 124
        %v1387 = vpop.permute.xlu0 %1386
        %1388 = vrot.lane.b32.xlu0 %v1318, 124
        %v1389 = vpop.permute.xlu0 %1388
        %1390 = vrot.lane.b32.xlu0 %v1319, 124
        %v1391 = vpop.permute.xlu0 %1390
        %1392 = vrot.lane.b32.xlu0 %v1320, 124
        %v1393 = vpop.permute.xlu0 %1392
        %1394 = vrot.lane.b32.xlu0 %v1321, 124
        %v1395 = vpop.permute.xlu0 %1394
        %1396 = vrot.lane.b32.xlu0 %v1322, 124
        %v1397 = vpop.permute.xlu0 %1396
        %1398 = vrot.lane.b32.xlu0 %v1323, 124
        %v1399 = vpop.permute.xlu0 %1398
        %1400 = vrot.lane.b32.xlu0 %v1324, 124
        %v1401 = vpop.permute.xlu0 %1400
        %1402 = vrot.lane.b32.xlu0 %v1325, 124
        %v1403 = vpop.permute.xlu0 %1402
        %1404 = vrot.lane.b32.xlu0 %v1326, 124
        %v1405 = vpop.permute.xlu0 %1404
        %1406 = vrot.lane.b32.xlu0 %v1327, 124
        %v1407 = vpop.permute.xlu0 %1406
        %1408 = vrot.lane.b32.xlu0 %v1328, 124
        %v1409 = vpop.permute.xlu0 %1408
        %1410 = vrot.lane.b32.xlu0 %v1329, 124
        %v1411 = vpop.permute.xlu0 %1410
        %1412 = vrot.lane.b32.xlu0 %v1330, 124
        %v1413 = vpop.permute.xlu0 %1412
        %1414 = vrot.lane.b32.xlu0 %v1331, 124
        %v1415 = vpop.permute.xlu0 %1414
        %1416 = vrot.lane.b32.xlu0 %v1332, 124
        %v1417 = vpop.permute.xlu0 %1416
        %1418 = vrot.lane.b32.xlu0 %v1333, 124
        %v1419 = vpop.permute.xlu0 %1418
        %1420 = vrot.lane.b32.xlu0 %v1334, 124
        %v1421 = vpop.permute.xlu0 %1420
        %1422 = vrot.lane.b32.xlu0 %v1335, 124
        %v1423 = vpop.permute.xlu0 %1422
        %1424 = vrot.lane.b32.xlu0 %v1336, 124
        %v1425 = vpop.permute.xlu0 %1424
        %1426 = vrot.lane.b32.xlu0 %v1337, 124
        %v1427 = vpop.permute.xlu0 %1426
        %1428 = vrot.lane.b32.xlu0 %v1338, 124
        %v1429 = vpop.permute.xlu0 %1428
        %1430 = vrot.lane.b32.xlu0 %v1339, 124
        %v1431 = vpop.permute.xlu0 %1430
        %1432 = vrot.lane.b32.xlu0 %v1340, 124
        %v1433 = vpop.permute.xlu0 %1432
        %1434 = vrot.lane.b32.xlu0 %v1341, 124
        %v1435 = vpop.permute.xlu0 %1434
        %1436 = vrot.lane.b32.xlu0 %v1342, 124
        %v1437 = vpop.permute.xlu0 %1436
        %1438 = vrot.lane.b32.xlu0 %v1343, 124
        %v1439 = vpop.permute.xlu0 %1438
        %v1472 = vadd.f32 %v1264, %v1377
        %v1473 = vadd.f32 %v1265, %v1379
        %v1474 = vadd.f32 %v1266, %v1381
        %v1475 = vadd.f32 %v1267, %v1383
        %v1476 = vadd.f32 %v1268, %v1385
        %v1477 = vadd.f32 %v1269, %v1387
        %v1478 = vadd.f32 %v1270, %v1389
        %v1479 = vadd.f32 %v1271, %v1391
        %v1480 = vadd.f32 %v1272, %v1393
        %v1481 = vadd.f32 %v1273, %v1395
        %v1482 = vadd.f32 %v1274, %v1397
        %v1483 = vadd.f32 %v1275, %v1399
        %v1484 = vadd.f32 %v1276, %v1401
        %v1485 = vadd.f32 %v1277, %v1403
        %v1486 = vadd.f32 %v1278, %v1405
        %v1487 = vadd.f32 %v1279, %v1407
        %v1488 = vadd.f32 %v1280, %v1409
        %v1489 = vadd.f32 %v1281, %v1411
        %v1490 = vadd.f32 %v1282, %v1413
        %v1491 = vadd.f32 %v1283, %v1415
        %v1492 = vadd.f32 %v1284, %v1417
        %v1493 = vadd.f32 %v1285, %v1419
        %v1494 = vadd.f32 %v1286, %v1421
        %v1495 = vadd.f32 %v1287, %v1423
        %v1496 = vadd.f32 %v1288, %v1425
        %v1497 = vadd.f32 %v1289, %v1427
        %v1498 = vadd.f32 %v1290, %v1429
        %v1499 = vadd.f32 %v1291, %v1431
        %v1500 = vadd.f32 %v1292, %v1433
        %v1501 = vadd.f32 %v1293, %v1435
        %v1502 = vadd.f32 %v1294, %v1437
        %v1503 = vadd.f32 %v1295, %v1439
        %v1504 = vmul.f32 %v1472, 0.5
        %v1505 = vmul.f32 %v1473, 0.5
        %v1506 = vmul.f32 %v1474, 0.5
        %v1507 = vmul.f32 %v1475, 0.5
        %v1508 = vmul.f32 %v1476, 0.5
        %v1509 = vmul.f32 %v1477, 0.5
        %v1510 = vmul.f32 %v1478, 0.5
        %v1511 = vmul.f32 %v1479, 0.5
        %v1512 = vmul.f32 %v1480, 0.5
        %v1513 = vmul.f32 %v1481, 0.5
        %v1514 = vmul.f32 %v1482, 0.5
        %v1515 = vmul.f32 %v1483, 0.5
        %v1516 = vmul.f32 %v1484, 0.5
        %v1517 = vmul.f32 %v1485, 0.5
        %v1518 = vmul.f32 %v1486, 0.5
        %v1519 = vmul.f32 %v1487, 0.5
        %v1520 = vmul.f32 %v1488, 0.5
        %v1521 = vmul.f32 %v1489, 0.5
        %v1522 = vmul.f32 %v1490, 0.5
        %v1523 = vmul.f32 %v1491, 0.5
        %v1524 = vmul.f32 %v1492, 0.5
        %v1525 = vmul.f32 %v1493, 0.5
        %v1526 = vmul.f32 %v1494, 0.5
        %v1527 = vmul.f32 %v1495, 0.5
        %v1528 = vmul.f32 %v1496, 0.5
        %v1529 = vmul.f32 %v1497, 0.5
        %v1530 = vmul.f32 %v1498, 0.5
        %v1531 = vmul.f32 %v1499, 0.5
        %v1532 = vmul.f32 %v1500, 0.5
        %v1533 = vmul.f32 %v1501, 0.5
        %v1534 = vmul.f32 %v1502, 0.5
        %v1535 = vmul.f32 %v1503, 0.5
        %v1536 = vmul.f32 %v1472, 0.70710677
        %v1537 = vmul.f32 %v1473, 0.70710677
        %v1538 = vmul.f32 %v1474, 0.70710677
        %v1539 = vmul.f32 %v1475, 0.70710677
        %v1540 = vmul.f32 %v1476, 0.70710677
        %v1541 = vmul.f32 %v1477, 0.70710677
        %v1542 = vmul.f32 %v1478, 0.70710677
        %v1543 = vmul.f32 %v1479, 0.70710677
        %v1544 = vmul.f32 %v1480, 0.70710677
        %v1545 = vmul.f32 %v1481, 0.70710677
        %v1546 = vmul.f32 %v1482, 0.70710677
        %v1547 = vmul.f32 %v1483, 0.70710677
        %v1548 = vmul.f32 %v1484, 0.70710677
        %v1549 = vmul.f32 %v1485, 0.70710677
        %v1550 = vmul.f32 %v1486, 0.70710677
        %v1551 = vmul.f32 %v1487, 0.70710677
        %v1552 = vmul.f32 %v1488, 0.70710677
        %v1553 = vmul.f32 %v1489, 0.70710677
        %v1554 = vmul.f32 %v1490, 0.70710677
        %v1555 = vmul.f32 %v1491, 0.70710677
        %v1556 = vmul.f32 %v1492, 0.70710677
        %v1557 = vmul.f32 %v1493, 0.70710677
        %v1558 = vmul.f32 %v1494, 0.70710677
        %v1559 = vmul.f32 %v1495, 0.70710677
        %v1560 = vmul.f32 %v1496, 0.70710677
        %v1561 = vmul.f32 %v1497, 0.70710677
        %v1562 = vmul.f32 %v1498, 0.70710677
        %v1563 = vmul.f32 %v1499, 0.70710677
        %v1564 = vmul.f32 %v1500, 0.70710677
        %v1565 = vmul.f32 %v1501, 0.70710677
        %v1566 = vmul.f32 %v1502, 0.70710677
        %v1567 = vmul.f32 %v1503, 0.70710677
        %v1568 = vand.u32 2147483647, %v1536
        %v1569 = vand.u32 2147483647, %v1537
        %v1570 = vand.u32 2147483647, %v1538
        %v1571 = vand.u32 2147483647, %v1539
        %v1572 = vand.u32 2147483647, %v1540
        %v1573 = vand.u32 2147483647, %v1541
        %v1574 = vand.u32 2147483647, %v1542
        %v1575 = vand.u32 2147483647, %v1543
        %v1576 = vand.u32 2147483647, %v1544
        %v1577 = vand.u32 2147483647, %v1545
        %v1578 = vand.u32 2147483647, %v1546
        %v1579 = vand.u32 2147483647, %v1547
        %v1580 = vand.u32 2147483647, %v1548
        %v1581 = vand.u32 2147483647, %v1549
        %v1582 = vand.u32 2147483647, %v1550
        %v1583 = vand.u32 2147483647, %v1551
        %v1584 = vand.u32 2147483647, %v1552
        %v1585 = vand.u32 2147483647, %v1553
        %v1586 = vand.u32 2147483647, %v1554
        %v1587 = vand.u32 2147483647, %v1555
        %v1588 = vand.u32 2147483647, %v1556
        %v1589 = vand.u32 2147483647, %v1557
        %v1590 = vand.u32 2147483647, %v1558
        %v1591 = vand.u32 2147483647, %v1559
        %v1592 = vand.u32 2147483647, %v1560
        %v1593 = vand.u32 2147483647, %v1561
        %v1594 = vand.u32 2147483647, %v1562
        %v1595 = vand.u32 2147483647, %v1563
        %v1596 = vand.u32 2147483647, %v1564
        %v1597 = vand.u32 2147483647, %v1565
        %v1598 = vand.u32 2147483647, %v1566
        %v1599 = vand.u32 2147483647, %v1567
        %v1600 = vmul.f32 %v1568, 0.3275911
        %v1601 = vmul.f32 %v1569, 0.3275911
        %v1602 = vmul.f32 %v1570, 0.3275911
        %v1603 = vmul.f32 %v1571, 0.3275911
        %v1604 = vmul.f32 %v1572, 0.3275911
        %v1605 = vmul.f32 %v1573, 0.3275911
        %v1606 = vmul.f32 %v1574, 0.3275911
        %v1607 = vmul.f32 %v1575, 0.3275911
        %v1608 = vmul.f32 %v1576, 0.3275911
        %v1609 = vmul.f32 %v1577, 0.3275911
        %v1610 = vmul.f32 %v1578, 0.3275911
        %v1611 = vmul.f32 %v1579, 0.3275911
        %v1612 = vmul.f32 %v1580, 0.3275911
        %v1613 = vmul.f32 %v1581, 0.3275911
        %v1614 = vmul.f32 %v1582, 0.3275911
        %v1615 = vmul.f32 %v1583, 0.3275911
        %v1616 = vmul.f32 %v1584, 0.3275911
        %v1617 = vmul.f32 %v1585, 0.3275911
        %v1618 = vmul.f32 %v1586, 0.3275911
        %v1619 = vmul.f32 %v1587, 0.3275911
        %v1620 = vmul.f32 %v1588, 0.3275911
        %v1621 = vmul.f32 %v1589, 0.3275911
        %v1622 = vmul.f32 %v1590, 0.3275911
        %v1623 = vmul.f32 %v1591, 0.3275911
        %v1624 = vmul.f32 %v1592, 0.3275911
        %v1625 = vmul.f32 %v1593, 0.3275911
        %v1626 = vmul.f32 %v1594, 0.3275911
        %v1627 = vmul.f32 %v1595, 0.3275911
        %v1628 = vmul.f32 %v1596, 0.3275911
        %v1629 = vmul.f32 %v1597, 0.3275911
        %v1630 = vmul.f32 %v1598, 0.3275911
        %v1631 = vmul.f32 %v1599, 0.3275911
        %v1632 = vadd.f32 %v1600, 1.0
        %v1633 = vadd.f32 %v1601, 1.0
        %v1634 = vadd.f32 %v1602, 1.0
        %v1635 = vadd.f32 %v1603, 1.0
        %v1636 = vadd.f32 %v1604, 1.0
        %v1637 = vadd.f32 %v1605, 1.0
        %v1638 = vadd.f32 %v1606, 1.0
        %v1639 = vadd.f32 %v1607, 1.0
        %v1640 = vadd.f32 %v1608, 1.0
        %v1641 = vadd.f32 %v1609, 1.0
        %v1642 = vadd.f32 %v1610, 1.0
        %v1643 = vadd.f32 %v1611, 1.0
        %v1644 = vadd.f32 %v1612, 1.0
        %v1645 = vadd.f32 %v1613, 1.0
        %v1646 = vadd.f32 %v1614, 1.0
        %v1647 = vadd.f32 %v1615, 1.0
        %v1648 = vadd.f32 %v1616, 1.0
        %v1649 = vadd.f32 %v1617, 1.0
        %v1650 = vadd.f32 %v1618, 1.0
        %v1651 = vadd.f32 %v1619, 1.0
        %v1652 = vadd.f32 %v1620, 1.0
        %v1653 = vadd.f32 %v1621, 1.0
        %v1654 = vadd.f32 %v1622, 1.0
        %v1655 = vadd.f32 %v1623, 1.0
        %v1656 = vadd.f32 %v1624, 1.0
        %v1657 = vadd.f32 %v1625, 1.0
        %v1658 = vadd.f32 %v1626, 1.0
        %v1659 = vadd.f32 %v1627, 1.0
        %v1660 = vadd.f32 %v1628, 1.0
        %v1661 = vadd.f32 %v1629, 1.0
        %v1662 = vadd.f32 %v1630, 1.0
        %v1663 = vadd.f32 %v1631, 1.0
        %v1664 = vrcp.pop %v1632
        %v1665 = vmul.f32 %v1632, %v1664
        %v1666 = vsub.f32 1.0, %v1665
        %v1667 = vmul.f32 %v1664, %v1666
        %v1668 = vadd.f32 %v1664, %v1667
        %vm1669 = vweird.f32 %v1632
        %vm1670 = vweird.f32 %v1664
        %vm1671 = vmor %vm1669, %vm1670
        %v1672 = vsel %vm1671, %v1664, %v1668
        %v1673 = vand.u32 2147483647, %v1632
        %vm1674 = vcmp.eq.f32.partialorder %v1673, 8.507059e+37
        %v1675 = vand.u32 %v1632, 2147483648
        %v1676 = vor.u32 1.1754944e-38, %v1675
        %v1677 = vsel %vm1674, %v1676, %v1672
        %v1678 = vmul.f32 1.0, %v1677
        %v1679 = vrcp.pop %v1633
        %v1680 = vmul.f32 %v1633, %v1679
        %v1681 = vsub.f32 1.0, %v1680
        %v1682 = vmul.f32 %v1679, %v1681
        %v1683 = vadd.f32 %v1679, %v1682
        %vm1684 = vweird.f32 %v1633
        %vm1685 = vweird.f32 %v1679
        %vm1686 = vmor %vm1684, %vm1685
        %v1687 = vsel %vm1686, %v1679, %v1683
        %v1688 = vand.u32 2147483647, %v1633
        %vm1689 = vcmp.eq.f32.partialorder %v1688, 8.507059e+37
        %v1690 = vand.u32 %v1633, 2147483648
        %v1691 = vor.u32 1.1754944e-38, %v1690
        %v1692 = vsel %vm1689, %v1691, %v1687
        %v1693 = vmul.f32 1.0, %v1692
        %v1694 = vrcp.pop %v1634
        %v1695 = vmul.f32 %v1634, %v1694
        %v1696 = vsub.f32 1.0, %v1695
        %v1697 = vmul.f32 %v1694, %v1696
        %v1698 = vadd.f32 %v1694, %v1697
        %vm1699 = vweird.f32 %v1634
        %vm1700 = vweird.f32 %v1694
        %vm1701 = vmor %vm1699, %vm1700
        %v1702 = vsel %vm1701, %v1694, %v1698
        %v1703 = vand.u32 2147483647, %v1634
        %vm1704 = vcmp.eq.f32.partialorder %v1703, 8.507059e+37
        %v1705 = vand.u32 %v1634, 2147483648
        %v1706 = vor.u32 1.1754944e-38, %v1705
        %v1707 = vsel %vm1704, %v1706, %v1702
        %v1708 = vmul.f32 1.0, %v1707
        %v1709 = vrcp.pop %v1635
        %v1710 = vmul.f32 %v1635, %v1709
        %v1711 = vsub.f32 1.0, %v1710
        %v1712 = vmul.f32 %v1709, %v1711
        %v1713 = vadd.f32 %v1709, %v1712
        %vm1714 = vweird.f32 %v1635
        %vm1715 = vweird.f32 %v1709
        %vm1716 = vmor %vm1714, %vm1715
        %v1717 = vsel %vm1716, %v1709, %v1713
        %v1718 = vand.u32 2147483647, %v1635
        %vm1719 = vcmp.eq.f32.partialorder %v1718, 8.507059e+37
        %v1720 = vand.u32 %v1635, 2147483648
        %v1721 = vor.u32 1.1754944e-38, %v1720
        %v1722 = vsel %vm1719, %v1721, %v1717
        %v1723 = vmul.f32 1.0, %v1722
        %v1724 = vrcp.pop %v1636
        %v1725 = vmul.f32 %v1636, %v1724
        %v1726 = vsub.f32 1.0, %v1725
        %v1727 = vmul.f32 %v1724, %v1726
        %v1728 = vadd.f32 %v1724, %v1727
        %vm1729 = vweird.f32 %v1636
        %vm1730 = vweird.f32 %v1724
        %vm1731 = vmor %vm1729, %vm1730
        %v1732 = vsel %vm1731, %v1724, %v1728
        %v1733 = vand.u32 2147483647, %v1636
        %vm1734 = vcmp.eq.f32.partialorder %v1733, 8.507059e+37
        %v1735 = vand.u32 %v1636, 2147483648
        %v1736 = vor.u32 1.1754944e-38, %v1735
        %v1737 = vsel %vm1734, %v1736, %v1732
        %v1738 = vmul.f32 1.0, %v1737
        %v1739 = vrcp.pop %v1637
        %v1740 = vmul.f32 %v1637, %v1739
        %v1741 = vsub.f32 1.0, %v1740
        %v1742 = vmul.f32 %v1739, %v1741
        %v1743 = vadd.f32 %v1739, %v1742
        %vm1744 = vweird.f32 %v1637
        %vm1745 = vweird.f32 %v1739
        %vm1746 = vmor %vm1744, %vm1745
        %v1747 = vsel %vm1746, %v1739, %v1743
        %v1748 = vand.u32 2147483647, %v1637
        %vm1749 = vcmp.eq.f32.partialorder %v1748, 8.507059e+37
        %v1750 = vand.u32 %v1637, 2147483648
        %v1751 = vor.u32 1.1754944e-38, %v1750
        %v1752 = vsel %vm1749, %v1751, %v1747
        %v1753 = vmul.f32 1.0, %v1752
        %v1754 = vrcp.pop %v1638
        %v1755 = vmul.f32 %v1638, %v1754
        %v1756 = vsub.f32 1.0, %v1755
        %v1757 = vmul.f32 %v1754, %v1756
        %v1758 = vadd.f32 %v1754, %v1757
        %vm1759 = vweird.f32 %v1638
        %vm1760 = vweird.f32 %v1754
        %vm1761 = vmor %vm1759, %vm1760
        %v1762 = vsel %vm1761, %v1754, %v1758
        %v1763 = vand.u32 2147483647, %v1638
        %vm1764 = vcmp.eq.f32.partialorder %v1763, 8.507059e+37
        %v1765 = vand.u32 %v1638, 2147483648
        %v1766 = vor.u32 1.1754944e-38, %v1765
        %v1767 = vsel %vm1764, %v1766, %v1762
        %v1768 = vmul.f32 1.0, %v1767
        %v1769 = vrcp.pop %v1639
        %v1770 = vmul.f32 %v1639, %v1769
        %v1771 = vsub.f32 1.0, %v1770
        %v1772 = vmul.f32 %v1769, %v1771
        %v1773 = vadd.f32 %v1769, %v1772
        %vm1774 = vweird.f32 %v1639
        %vm1775 = vweird.f32 %v1769
        %vm1776 = vmor %vm1774, %vm1775
        %v1777 = vsel %vm1776, %v1769, %v1773
        %v1778 = vand.u32 2147483647, %v1639
        %vm1779 = vcmp.eq.f32.partialorder %v1778, 8.507059e+37
        %v1780 = vand.u32 %v1639, 2147483648
        %v1781 = vor.u32 1.1754944e-38, %v1780
        %v1782 = vsel %vm1779, %v1781, %v1777
        %v1783 = vmul.f32 1.0, %v1782
        %v1784 = vrcp.pop %v1640
        %v1785 = vmul.f32 %v1640, %v1784
        %v1786 = vsub.f32 1.0, %v1785
        %v1787 = vmul.f32 %v1784, %v1786
        %v1788 = vadd.f32 %v1784, %v1787
        %vm1789 = vweird.f32 %v1640
        %vm1790 = vweird.f32 %v1784
        %vm1791 = vmor %vm1789, %vm1790
        %v1792 = vsel %vm1791, %v1784, %v1788
        %v1793 = vand.u32 2147483647, %v1640
        %vm1794 = vcmp.eq.f32.partialorder %v1793, 8.507059e+37
        %v1795 = vand.u32 %v1640, 2147483648
        %v1796 = vor.u32 1.1754944e-38, %v1795
        %v1797 = vsel %vm1794, %v1796, %v1792
        %v1798 = vmul.f32 1.0, %v1797
        %v1799 = vrcp.pop %v1641
        %v1800 = vmul.f32 %v1641, %v1799
        %v1801 = vsub.f32 1.0, %v1800
        %v1802 = vmul.f32 %v1799, %v1801
        %v1803 = vadd.f32 %v1799, %v1802
        %vm1804 = vweird.f32 %v1641
        %vm1805 = vweird.f32 %v1799
        %vm1806 = vmor %vm1804, %vm1805
        %v1807 = vsel %vm1806, %v1799, %v1803
        %v1808 = vand.u32 2147483647, %v1641
        %vm1809 = vcmp.eq.f32.partialorder %v1808, 8.507059e+37
        %v1810 = vand.u32 %v1641, 2147483648
        %v1811 = vor.u32 1.1754944e-38, %v1810
        %v1812 = vsel %vm1809, %v1811, %v1807
        %v1813 = vmul.f32 1.0, %v1812
        %v1814 = vrcp.pop %v1642
        %v1815 = vmul.f32 %v1642, %v1814
        %v1816 = vsub.f32 1.0, %v1815
        %v1817 = vmul.f32 %v1814, %v1816
        %v1818 = vadd.f32 %v1814, %v1817
        %vm1819 = vweird.f32 %v1642
        %vm1820 = vweird.f32 %v1814
        %vm1821 = vmor %vm1819, %vm1820
        %v1822 = vsel %vm1821, %v1814, %v1818
        %v1823 = vand.u32 2147483647, %v1642
        %vm1824 = vcmp.eq.f32.partialorder %v1823, 8.507059e+37
        %v1825 = vand.u32 %v1642, 2147483648
        %v1826 = vor.u32 1.1754944e-38, %v1825
        %v1827 = vsel %vm1824, %v1826, %v1822
        %v1828 = vmul.f32 1.0, %v1827
        %v1829 = vrcp.pop %v1643
        %v1830 = vmul.f32 %v1643, %v1829
        %v1831 = vsub.f32 1.0, %v1830
        %v1832 = vmul.f32 %v1829, %v1831
        %v1833 = vadd.f32 %v1829, %v1832
        %vm1834 = vweird.f32 %v1643
        %vm1835 = vweird.f32 %v1829
        %vm1836 = vmor %vm1834, %vm1835
        %v1837 = vsel %vm1836, %v1829, %v1833
        %v1838 = vand.u32 2147483647, %v1643
        %vm1839 = vcmp.eq.f32.partialorder %v1838, 8.507059e+37
        %v1840 = vand.u32 %v1643, 2147483648
        %v1841 = vor.u32 1.1754944e-38, %v1840
        %v1842 = vsel %vm1839, %v1841, %v1837
        %v1843 = vmul.f32 1.0, %v1842
        %v1844 = vrcp.pop %v1644
        %v1845 = vmul.f32 %v1644, %v1844
        %v1846 = vsub.f32 1.0, %v1845
        %v1847 = vmul.f32 %v1844, %v1846
        %v1848 = vadd.f32 %v1844, %v1847
        %vm1849 = vweird.f32 %v1644
        %vm1850 = vweird.f32 %v1844
        %vm1851 = vmor %vm1849, %vm1850
        %v1852 = vsel %vm1851, %v1844, %v1848
        %v1853 = vand.u32 2147483647, %v1644
        %vm1854 = vcmp.eq.f32.partialorder %v1853, 8.507059e+37
        %v1855 = vand.u32 %v1644, 2147483648
        %v1856 = vor.u32 1.1754944e-38, %v1855
        %v1857 = vsel %vm1854, %v1856, %v1852
        %v1858 = vmul.f32 1.0, %v1857
        %v1859 = vrcp.pop %v1645
        %v1860 = vmul.f32 %v1645, %v1859
        %v1861 = vsub.f32 1.0, %v1860
        %v1862 = vmul.f32 %v1859, %v1861
        %v1863 = vadd.f32 %v1859, %v1862
        %vm1864 = vweird.f32 %v1645
        %vm1865 = vweird.f32 %v1859
        %vm1866 = vmor %vm1864, %vm1865
        %v1867 = vsel %vm1866, %v1859, %v1863
        %v1868 = vand.u32 2147483647, %v1645
        %vm1869 = vcmp.eq.f32.partialorder %v1868, 8.507059e+37
        %v1870 = vand.u32 %v1645, 2147483648
        %v1871 = vor.u32 1.1754944e-38, %v1870
        %v1872 = vsel %vm1869, %v1871, %v1867
        %v1873 = vmul.f32 1.0, %v1872
        %v1874 = vrcp.pop %v1646
        %v1875 = vmul.f32 %v1646, %v1874
        %v1876 = vsub.f32 1.0, %v1875
        %v1877 = vmul.f32 %v1874, %v1876
        %v1878 = vadd.f32 %v1874, %v1877
        %vm1879 = vweird.f32 %v1646
        %vm1880 = vweird.f32 %v1874
        %vm1881 = vmor %vm1879, %vm1880
        %v1882 = vsel %vm1881, %v1874, %v1878
        %v1883 = vand.u32 2147483647, %v1646
        %vm1884 = vcmp.eq.f32.partialorder %v1883, 8.507059e+37
        %v1885 = vand.u32 %v1646, 2147483648
        %v1886 = vor.u32 1.1754944e-38, %v1885
        %v1887 = vsel %vm1884, %v1886, %v1882
        %v1888 = vmul.f32 1.0, %v1887
        %v1889 = vrcp.pop %v1647
        %v1890 = vmul.f32 %v1647, %v1889
        %v1891 = vsub.f32 1.0, %v1890
        %v1892 = vmul.f32 %v1889, %v1891
        %v1893 = vadd.f32 %v1889, %v1892
        %vm1894 = vweird.f32 %v1647
        %vm1895 = vweird.f32 %v1889
        %vm1896 = vmor %vm1894, %vm1895
        %v1897 = vsel %vm1896, %v1889, %v1893
        %v1898 = vand.u32 2147483647, %v1647
        %vm1899 = vcmp.eq.f32.partialorder %v1898, 8.507059e+37
        %v1900 = vand.u32 %v1647, 2147483648
        %v1901 = vor.u32 1.1754944e-38, %v1900
        %v1902 = vsel %vm1899, %v1901, %v1897
        %v1903 = vmul.f32 1.0, %v1902
        %v1904 = vrcp.pop %v1648
        %v1905 = vmul.f32 %v1648, %v1904
        %v1906 = vsub.f32 1.0, %v1905
        %v1907 = vmul.f32 %v1904, %v1906
        %v1908 = vadd.f32 %v1904, %v1907
        %vm1909 = vweird.f32 %v1648
        %vm1910 = vweird.f32 %v1904
        %vm1911 = vmor %vm1909, %vm1910
        %v1912 = vsel %vm1911, %v1904, %v1908
        %v1913 = vand.u32 2147483647, %v1648
        %vm1914 = vcmp.eq.f32.partialorder %v1913, 8.507059e+37
        %v1915 = vand.u32 %v1648, 2147483648
        %v1916 = vor.u32 1.1754944e-38, %v1915
        %v1917 = vsel %vm1914, %v1916, %v1912
        %v1918 = vmul.f32 1.0, %v1917
        %v1919 = vrcp.pop %v1649
        %v1920 = vmul.f32 %v1649, %v1919
        %v1921 = vsub.f32 1.0, %v1920
        %v1922 = vmul.f32 %v1919, %v1921
        %v1923 = vadd.f32 %v1919, %v1922
        %vm1924 = vweird.f32 %v1649
        %vm1925 = vweird.f32 %v1919
        %vm1926 = vmor %vm1924, %vm1925
        %v1927 = vsel %vm1926, %v1919, %v1923
        %v1928 = vand.u32 2147483647, %v1649
        %vm1929 = vcmp.eq.f32.partialorder %v1928, 8.507059e+37
        %v1930 = vand.u32 %v1649, 2147483648
        %v1931 = vor.u32 1.1754944e-38, %v1930
        %v1932 = vsel %vm1929, %v1931, %v1927
        %v1933 = vmul.f32 1.0, %v1932
        %v1934 = vrcp.pop %v1650
        %v1935 = vmul.f32 %v1650, %v1934
        %v1936 = vsub.f32 1.0, %v1935
        %v1937 = vmul.f32 %v1934, %v1936
        %v1938 = vadd.f32 %v1934, %v1937
        %vm1939 = vweird.f32 %v1650
        %vm1940 = vweird.f32 %v1934
        %vm1941 = vmor %vm1939, %vm1940
        %v1942 = vsel %vm1941, %v1934, %v1938
        %v1943 = vand.u32 2147483647, %v1650
        %vm1944 = vcmp.eq.f32.partialorder %v1943, 8.507059e+37
        %v1945 = vand.u32 %v1650, 2147483648
        %v1946 = vor.u32 1.1754944e-38, %v1945
        %v1947 = vsel %vm1944, %v1946, %v1942
        %v1948 = vmul.f32 1.0, %v1947
        %v1949 = vrcp.pop %v1651
        %v1950 = vmul.f32 %v1651, %v1949
        %v1951 = vsub.f32 1.0, %v1950
        %v1952 = vmul.f32 %v1949, %v1951
        %v1953 = vadd.f32 %v1949, %v1952
        %vm1954 = vweird.f32 %v1651
        %vm1955 = vweird.f32 %v1949
        %vm1956 = vmor %vm1954, %vm1955
        %v1957 = vsel %vm1956, %v1949, %v1953
        %v1958 = vand.u32 2147483647, %v1651
        %vm1959 = vcmp.eq.f32.partialorder %v1958, 8.507059e+37
        %v1960 = vand.u32 %v1651, 2147483648
        %v1961 = vor.u32 1.1754944e-38, %v1960
        %v1962 = vsel %vm1959, %v1961, %v1957
        %v1963 = vmul.f32 1.0, %v1962
        %v1964 = vrcp.pop %v1652
        %v1965 = vmul.f32 %v1652, %v1964
        %v1966 = vsub.f32 1.0, %v1965
        %v1967 = vmul.f32 %v1964, %v1966
        %v1968 = vadd.f32 %v1964, %v1967
        %vm1969 = vweird.f32 %v1652
        %vm1970 = vweird.f32 %v1964
        %vm1971 = vmor %vm1969, %vm1970
        %v1972 = vsel %vm1971, %v1964, %v1968
        %v1973 = vand.u32 2147483647, %v1652
        %vm1974 = vcmp.eq.f32.partialorder %v1973, 8.507059e+37
        %v1975 = vand.u32 %v1652, 2147483648
        %v1976 = vor.u32 1.1754944e-38, %v1975
        %v1977 = vsel %vm1974, %v1976, %v1972
        %v1978 = vmul.f32 1.0, %v1977
        %v1979 = vrcp.pop %v1653
        %v1980 = vmul.f32 %v1653, %v1979
        %v1981 = vsub.f32 1.0, %v1980
        %v1982 = vmul.f32 %v1979, %v1981
        %v1983 = vadd.f32 %v1979, %v1982
        %vm1984 = vweird.f32 %v1653
        %vm1985 = vweird.f32 %v1979
        %vm1986 = vmor %vm1984, %vm1985
        %v1987 = vsel %vm1986, %v1979, %v1983
        %v1988 = vand.u32 2147483647, %v1653
        %vm1989 = vcmp.eq.f32.partialorder %v1988, 8.507059e+37
        %v1990 = vand.u32 %v1653, 2147483648
        %v1991 = vor.u32 1.1754944e-38, %v1990
        %v1992 = vsel %vm1989, %v1991, %v1987
        %v1993 = vmul.f32 1.0, %v1992
        %v1994 = vrcp.pop %v1654
        %v1995 = vmul.f32 %v1654, %v1994
        %v1996 = vsub.f32 1.0, %v1995
        %v1997 = vmul.f32 %v1994, %v1996
        %v1998 = vadd.f32 %v1994, %v1997
        %vm1999 = vweird.f32 %v1654
        %vm2000 = vweird.f32 %v1994
        %vm2001 = vmor %vm1999, %vm2000
        %v2002 = vsel %vm2001, %v1994, %v1998
        %v2003 = vand.u32 2147483647, %v1654
        %vm2004 = vcmp.eq.f32.partialorder %v2003, 8.507059e+37
        %v2005 = vand.u32 %v1654, 2147483648
        %v2006 = vor.u32 1.1754944e-38, %v2005
        %v2007 = vsel %vm2004, %v2006, %v2002
        %v2008 = vmul.f32 1.0, %v2007
        %v2009 = vrcp.pop %v1655
        %v2010 = vmul.f32 %v1655, %v2009
        %v2011 = vsub.f32 1.0, %v2010
        %v2012 = vmul.f32 %v2009, %v2011
        %v2013 = vadd.f32 %v2009, %v2012
        %vm2014 = vweird.f32 %v1655
        %vm2015 = vweird.f32 %v2009
        %vm2016 = vmor %vm2014, %vm2015
        %v2017 = vsel %vm2016, %v2009, %v2013
        %v2018 = vand.u32 2147483647, %v1655
        %vm2019 = vcmp.eq.f32.partialorder %v2018, 8.507059e+37
        %v2020 = vand.u32 %v1655, 2147483648
        %v2021 = vor.u32 1.1754944e-38, %v2020
        %v2022 = vsel %vm2019, %v2021, %v2017
        %v2023 = vmul.f32 1.0, %v2022
        %v2024 = vrcp.pop %v1656
        %v2025 = vmul.f32 %v1656, %v2024
        %v2026 = vsub.f32 1.0, %v2025
        %v2027 = vmul.f32 %v2024, %v2026
        %v2028 = vadd.f32 %v2024, %v2027
        %vm2029 = vweird.f32 %v1656
        %vm2030 = vweird.f32 %v2024
        %vm2031 = vmor %vm2029, %vm2030
        %v2032 = vsel %vm2031, %v2024, %v2028
        %v2033 = vand.u32 2147483647, %v1656
        %vm2034 = vcmp.eq.f32.partialorder %v2033, 8.507059e+37
        %v2035 = vand.u32 %v1656, 2147483648
        %v2036 = vor.u32 1.1754944e-38, %v2035
        %v2037 = vsel %vm2034, %v2036, %v2032
        %v2038 = vmul.f32 1.0, %v2037
        %v2039 = vrcp.pop %v1657
        %v2040 = vmul.f32 %v1657, %v2039
        %v2041 = vsub.f32 1.0, %v2040
        %v2042 = vmul.f32 %v2039, %v2041
        %v2043 = vadd.f32 %v2039, %v2042
        %vm2044 = vweird.f32 %v1657
        %vm2045 = vweird.f32 %v2039
        %vm2046 = vmor %vm2044, %vm2045
        %v2047 = vsel %vm2046, %v2039, %v2043
        %v2048 = vand.u32 2147483647, %v1657
        %vm2049 = vcmp.eq.f32.partialorder %v2048, 8.507059e+37
        %v2050 = vand.u32 %v1657, 2147483648
        %v2051 = vor.u32 1.1754944e-38, %v2050
        %v2052 = vsel %vm2049, %v2051, %v2047
        %v2053 = vmul.f32 1.0, %v2052
        %v2054 = vrcp.pop %v1658
        %v2055 = vmul.f32 %v1658, %v2054
        %v2056 = vsub.f32 1.0, %v2055
        %v2057 = vmul.f32 %v2054, %v2056
        %v2058 = vadd.f32 %v2054, %v2057
        %vm2059 = vweird.f32 %v1658
        %vm2060 = vweird.f32 %v2054
        %vm2061 = vmor %vm2059, %vm2060
        %v2062 = vsel %vm2061, %v2054, %v2058
        %v2063 = vand.u32 2147483647, %v1658
        %vm2064 = vcmp.eq.f32.partialorder %v2063, 8.507059e+37
        %v2065 = vand.u32 %v1658, 2147483648
        %v2066 = vor.u32 1.1754944e-38, %v2065
        %v2067 = vsel %vm2064, %v2066, %v2062
        %v2068 = vmul.f32 1.0, %v2067
        %v2069 = vrcp.pop %v1659
        %v2070 = vmul.f32 %v1659, %v2069
        %v2071 = vsub.f32 1.0, %v2070
        %v2072 = vmul.f32 %v2069, %v2071
        %v2073 = vadd.f32 %v2069, %v2072
        %vm2074 = vweird.f32 %v1659
        %vm2075 = vweird.f32 %v2069
        %vm2076 = vmor %vm2074, %vm2075
        %v2077 = vsel %vm2076, %v2069, %v2073
        %v2078 = vand.u32 2147483647, %v1659
        %vm2079 = vcmp.eq.f32.partialorder %v2078, 8.507059e+37
        %v2080 = vand.u32 %v1659, 2147483648
        %v2081 = vor.u32 1.1754944e-38, %v2080
        %v2082 = vsel %vm2079, %v2081, %v2077
        %v2083 = vmul.f32 1.0, %v2082
        %v2084 = vrcp.pop %v1660
        %v2085 = vmul.f32 %v1660, %v2084
        %v2086 = vsub.f32 1.0, %v2085
        %v2087 = vmul.f32 %v2084, %v2086
        %v2088 = vadd.f32 %v2084, %v2087
        %vm2089 = vweird.f32 %v1660
        %vm2090 = vweird.f32 %v2084
        %vm2091 = vmor %vm2089, %vm2090
        %v2092 = vsel %vm2091, %v2084, %v2088
        %v2093 = vand.u32 2147483647, %v1660
        %vm2094 = vcmp.eq.f32.partialorder %v2093, 8.507059e+37
        %v2095 = vand.u32 %v1660, 2147483648
        %v2096 = vor.u32 1.1754944e-38, %v2095
        %v2097 = vsel %vm2094, %v2096, %v2092
        %v2098 = vmul.f32 1.0, %v2097
        %v2099 = vrcp.pop %v1661
        %v2100 = vmul.f32 %v1661, %v2099
        %v2101 = vsub.f32 1.0, %v2100
        %v2102 = vmul.f32 %v2099, %v2101
        %v2103 = vadd.f32 %v2099, %v2102
        %vm2104 = vweird.f32 %v1661
        %vm2105 = vweird.f32 %v2099
        %vm2106 = vmor %vm2104, %vm2105
        %v2107 = vsel %vm2106, %v2099, %v2103
        %v2108 = vand.u32 2147483647, %v1661
        %vm2109 = vcmp.eq.f32.partialorder %v2108, 8.507059e+37
        %v2110 = vand.u32 %v1661, 2147483648
        %v2111 = vor.u32 1.1754944e-38, %v2110
        %v2112 = vsel %vm2109, %v2111, %v2107
        %v2113 = vmul.f32 1.0, %v2112
        %v2114 = vrcp.pop %v1662
        %v2115 = vmul.f32 %v1662, %v2114
        %v2116 = vsub.f32 1.0, %v2115
        %v2117 = vmul.f32 %v2114, %v2116
        %v2118 = vadd.f32 %v2114, %v2117
        %vm2119 = vweird.f32 %v1662
        %vm2120 = vweird.f32 %v2114
        %vm2121 = vmor %vm2119, %vm2120
        %v2122 = vsel %vm2121, %v2114, %v2118
        %v2123 = vand.u32 2147483647, %v1662
        %vm2124 = vcmp.eq.f32.partialorder %v2123, 8.507059e+37
        %v2125 = vand.u32 %v1662, 2147483648
        %v2126 = vor.u32 1.1754944e-38, %v2125
        %v2127 = vsel %vm2124, %v2126, %v2122
        %v2128 = vmul.f32 1.0, %v2127
        %v2129 = vrcp.pop %v1663
        %v2130 = vmul.f32 %v1663, %v2129
        %v2131 = vsub.f32 1.0, %v2130
        %v2132 = vmul.f32 %v2129, %v2131
        %v2133 = vadd.f32 %v2129, %v2132
        %vm2134 = vweird.f32 %v1663
        %vm2135 = vweird.f32 %v2129
        %vm2136 = vmor %vm2134, %vm2135
        %v2137 = vsel %vm2136, %v2129, %v2133
        %v2138 = vand.u32 2147483647, %v1663
        %vm2139 = vcmp.eq.f32.partialorder %v2138, 8.507059e+37
        %v2140 = vand.u32 %v1663, 2147483648
        %v2141 = vor.u32 1.1754944e-38, %v2140
        %v2142 = vsel %vm2139, %v2141, %v2137
        %v2143 = vmul.f32 1.0, %v2142
        %v2144 = vmul.f32 %v1678, 1.0614054
        %v2145 = vmul.f32 %v1693, 1.0614054
        %v2146 = vmul.f32 %v1708, 1.0614054
        %v2147 = vmul.f32 %v1723, 1.0614054
        %v2148 = vmul.f32 %v1738, 1.0614054
        %v2149 = vmul.f32 %v1753, 1.0614054
        %v2150 = vmul.f32 %v1768, 1.0614054
        %v2151 = vmul.f32 %v1783, 1.0614054
        %v2152 = vmul.f32 %v1798, 1.0614054
        %v2153 = vmul.f32 %v1813, 1.0614054
        %v2154 = vmul.f32 %v1828, 1.0614054
        %v2155 = vmul.f32 %v1843, 1.0614054
        %v2156 = vmul.f32 %v1858, 1.0614054
        %v2157 = vmul.f32 %v1873, 1.0614054
        %v2158 = vmul.f32 %v1888, 1.0614054
        %v2159 = vmul.f32 %v1903, 1.0614054
        %v2160 = vmul.f32 %v1918, 1.0614054
        %v2161 = vmul.f32 %v1933, 1.0614054
        %v2162 = vmul.f32 %v1948, 1.0614054
        %v2163 = vmul.f32 %v1963, 1.0614054
        %v2164 = vmul.f32 %v1978, 1.0614054
        %v2165 = vmul.f32 %v1993, 1.0614054
        %v2166 = vmul.f32 %v2008, 1.0614054
        %v2167 = vmul.f32 %v2023, 1.0614054
        %v2168 = vmul.f32 %v2038, 1.0614054
        %v2169 = vmul.f32 %v2053, 1.0614054
        %v2170 = vmul.f32 %v2068, 1.0614054
        %v2171 = vmul.f32 %v2083, 1.0614054
        %v2172 = vmul.f32 %v2098, 1.0614054
        %v2173 = vmul.f32 %v2113, 1.0614054
        %v2174 = vmul.f32 %v2128, 1.0614054
        %v2175 = vmul.f32 %v2143, 1.0614054
        %v2176 = vadd.f32 %v2144, -1.4531521
        %v2177 = vadd.f32 %v2145, -1.4531521
        %v2178 = vadd.f32 %v2146, -1.4531521
        %v2179 = vadd.f32 %v2147, -1.4531521
        %v2180 = vadd.f32 %v2148, -1.4531521
        %v2181 = vadd.f32 %v2149, -1.4531521
        %v2182 = vadd.f32 %v2150, -1.4531521
        %v2183 = vadd.f32 %v2151, -1.4531521
        %v2184 = vadd.f32 %v2152, -1.4531521
        %v2185 = vadd.f32 %v2153, -1.4531521
        %v2186 = vadd.f32 %v2154, -1.4531521
        %v2187 = vadd.f32 %v2155, -1.4531521
        %v2188 = vadd.f32 %v2156, -1.4531521
        %v2189 = vadd.f32 %v2157, -1.4531521
        %v2190 = vadd.f32 %v2158, -1.4531521
        %v2191 = vadd.f32 %v2159, -1.4531521
        %v2192 = vadd.f32 %v2160, -1.4531521
        %v2193 = vadd.f32 %v2161, -1.4531521
        %v2194 = vadd.f32 %v2162, -1.4531521
        %v2195 = vadd.f32 %v2163, -1.4531521
        %v2196 = vadd.f32 %v2164, -1.4531521
        %v2197 = vadd.f32 %v2165, -1.4531521
        %v2198 = vadd.f32 %v2166, -1.4531521
        %v2199 = vadd.f32 %v2167, -1.4531521
        %v2200 = vadd.f32 %v2168, -1.4531521
        %v2201 = vadd.f32 %v2169, -1.4531521
        %v2202 = vadd.f32 %v2170, -1.4531521
        %v2203 = vadd.f32 %v2171, -1.4531521
        %v2204 = vadd.f32 %v2172, -1.4531521
        %v2205 = vadd.f32 %v2173, -1.4531521
        %v2206 = vadd.f32 %v2174, -1.4531521
        %v2207 = vadd.f32 %v2175, -1.4531521
        %v2208 = vmul.f32 %v2176, %v1678
        %v2209 = vmul.f32 %v2177, %v1693
        %v2210 = vmul.f32 %v2178, %v1708
        %v2211 = vmul.f32 %v2179, %v1723
        %v2212 = vmul.f32 %v2180, %v1738
        %v2213 = vmul.f32 %v2181, %v1753
        %v2214 = vmul.f32 %v2182, %v1768
        %v2215 = vmul.f32 %v2183, %v1783
        %v2216 = vmul.f32 %v2184, %v1798
        %v2217 = vmul.f32 %v2185, %v1813
        %v2218 = vmul.f32 %v2186, %v1828
        %v2219 = vmul.f32 %v2187, %v1843
        %v2220 = vmul.f32 %v2188, %v1858
        %v2221 = vmul.f32 %v2189, %v1873
        %v2222 = vmul.f32 %v2190, %v1888
        %v2223 = vmul.f32 %v2191, %v1903
        %v2224 = vmul.f32 %v2192, %v1918
        %v2225 = vmul.f32 %v2193, %v1933
        %v2226 = vmul.f32 %v2194, %v1948
        %v2227 = vmul.f32 %v2195, %v1963
        %v2228 = vmul.f32 %v2196, %v1978
        %v2229 = vmul.f32 %v2197, %v1993
        %v2230 = vmul.f32 %v2198, %v2008
        %v2231 = vmul.f32 %v2199, %v2023
        %v2232 = vmul.f32 %v2200, %v2038
        %v2233 = vmul.f32 %v2201, %v2053
        %v2234 = vmul.f32 %v2202, %v2068
        %v2235 = vmul.f32 %v2203, %v2083
        %v2236 = vmul.f32 %v2204, %v2098
        %v2237 = vmul.f32 %v2205, %v2113
        %v2238 = vmul.f32 %v2206, %v2128
        %v2239 = vmul.f32 %v2207, %v2143
        %v2240 = vadd.f32 %v2208, 1.4214138
        %v2241 = vadd.f32 %v2209, 1.4214138
        %v2242 = vadd.f32 %v2210, 1.4214138
        %v2243 = vadd.f32 %v2211, 1.4214138
        %v2244 = vadd.f32 %v2212, 1.4214138
        %v2245 = vadd.f32 %v2213, 1.4214138
        %v2246 = vadd.f32 %v2214, 1.4214138
        %v2247 = vadd.f32 %v2215, 1.4214138
        %v2248 = vadd.f32 %v2216, 1.4214138
        %v2249 = vadd.f32 %v2217, 1.4214138
        %v2250 = vadd.f32 %v2218, 1.4214138
        %v2251 = vadd.f32 %v2219, 1.4214138
        %v2252 = vadd.f32 %v2220, 1.4214138
        %v2253 = vadd.f32 %v2221, 1.4214138
        %v2254 = vadd.f32 %v2222, 1.4214138
        %v2255 = vadd.f32 %v2223, 1.4214138
        %v2256 = vadd.f32 %v2224, 1.4214138
        %v2257 = vadd.f32 %v2225, 1.4214138
        %v2258 = vadd.f32 %v2226, 1.4214138
        %v2259 = vadd.f32 %v2227, 1.4214138
        %v2260 = vadd.f32 %v2228, 1.4214138
        %v2261 = vadd.f32 %v2229, 1.4214138
        %v2262 = vadd.f32 %v2230, 1.4214138
        %v2263 = vadd.f32 %v2231, 1.4214138
        %v2264 = vadd.f32 %v2232, 1.4214138
        %v2265 = vadd.f32 %v2233, 1.4214138
        %v2266 = vadd.f32 %v2234, 1.4214138
        %v2267 = vadd.f32 %v2235, 1.4214138
        %v2268 = vadd.f32 %v2236, 1.4214138
        %v2269 = vadd.f32 %v2237, 1.4214138
        %v2270 = vadd.f32 %v2238, 1.4214138
        %v2271 = vadd.f32 %v2239, 1.4214138
        %v2272 = vmul.f32 %v2240, %v1678
        %v2273 = vmul.f32 %v2241, %v1693
        %v2274 = vmul.f32 %v2242, %v1708
        %v2275 = vmul.f32 %v2243, %v1723
        %v2276 = vmul.f32 %v2244, %v1738
        %v2277 = vmul.f32 %v2245, %v1753
        %v2278 = vmul.f32 %v2246, %v1768
        %v2279 = vmul.f32 %v2247, %v1783
        %v2280 = vmul.f32 %v2248, %v1798
        %v2281 = vmul.f32 %v2249, %v1813
        %v2282 = vmul.f32 %v2250, %v1828
        %v2283 = vmul.f32 %v2251, %v1843
        %v2284 = vmul.f32 %v2252, %v1858
        %v2285 = vmul.f32 %v2253, %v1873
        %v2286 = vmul.f32 %v2254, %v1888
        %v2287 = vmul.f32 %v2255, %v1903
        %v2288 = vmul.f32 %v2256, %v1918
        %v2289 = vmul.f32 %v2257, %v1933
        %v2290 = vmul.f32 %v2258, %v1948
        %v2291 = vmul.f32 %v2259, %v1963
        %v2292 = vmul.f32 %v2260, %v1978
        %v2293 = vmul.f32 %v2261, %v1993
        %v2294 = vmul.f32 %v2262, %v2008
        %v2295 = vmul.f32 %v2263, %v2023
        %v2296 = vmul.f32 %v2264, %v2038
        %v2297 = vmul.f32 %v2265, %v2053
        %v2298 = vmul.f32 %v2266, %v2068
        %v2299 = vmul.f32 %v2267, %v2083
        %v2300 = vmul.f32 %v2268, %v2098
        %v2301 = vmul.f32 %v2269, %v2113
        %v2302 = vmul.f32 %v2270, %v2128
        %v2303 = vmul.f32 %v2271, %v2143
        %v2304 = vadd.f32 %v2272, -0.28449672
        %v2305 = vadd.f32 %v2273, -0.28449672
        %v2306 = vadd.f32 %v2274, -0.28449672
        %v2307 = vadd.f32 %v2275, -0.28449672
        %v2308 = vadd.f32 %v2276, -0.28449672
        %v2309 = vadd.f32 %v2277, -0.28449672
        %v2310 = vadd.f32 %v2278, -0.28449672
        %v2311 = vadd.f32 %v2279, -0.28449672
        %v2312 = vadd.f32 %v2280, -0.28449672
        %v2313 = vadd.f32 %v2281, -0.28449672
        %v2314 = vadd.f32 %v2282, -0.28449672
        %v2315 = vadd.f32 %v2283, -0.28449672
        %v2316 = vadd.f32 %v2284, -0.28449672
        %v2317 = vadd.f32 %v2285, -0.28449672
        %v2318 = vadd.f32 %v2286, -0.28449672
        %v2319 = vadd.f32 %v2287, -0.28449672
        %v2320 = vadd.f32 %v2288, -0.28449672
        %v2321 = vadd.f32 %v2289, -0.28449672
        %v2322 = vadd.f32 %v2290, -0.28449672
        %v2323 = vadd.f32 %v2291, -0.28449672
        %v2324 = vadd.f32 %v2292, -0.28449672
        %v2325 = vadd.f32 %v2293, -0.28449672
        %v2326 = vadd.f32 %v2294, -0.28449672
        %v2327 = vadd.f32 %v2295, -0.28449672
        %v2328 = vadd.f32 %v2296, -0.28449672
        %v2329 = vadd.f32 %v2297, -0.28449672
        %v2330 = vadd.f32 %v2298, -0.28449672
        %v2331 = vadd.f32 %v2299, -0.28449672
        %v2332 = vadd.f32 %v2300, -0.28449672
        %v2333 = vadd.f32 %v2301, -0.28449672
        %v2334 = vadd.f32 %v2302, -0.28449672
        %v2335 = vadd.f32 %v2303, -0.28449672
        %v2336 = vmul.f32 %v2304, %v1678
        %v2337 = vmul.f32 %v2305, %v1693
        %v2338 = vmul.f32 %v2306, %v1708
        %v2339 = vmul.f32 %v2307, %v1723
        %v2340 = vmul.f32 %v2308, %v1738
        %v2341 = vmul.f32 %v2309, %v1753
        %v2342 = vmul.f32 %v2310, %v1768
        %v2343 = vmul.f32 %v2311, %v1783
        %v2344 = vmul.f32 %v2312, %v1798
        %v2345 = vmul.f32 %v2313, %v1813
        %v2346 = vmul.f32 %v2314, %v1828
        %v2347 = vmul.f32 %v2315, %v1843
        %v2348 = vmul.f32 %v2316, %v1858
        %v2349 = vmul.f32 %v2317, %v1873
        %v2350 = vmul.f32 %v2318, %v1888
        %v2351 = vmul.f32 %v2319, %v1903
        %v2352 = vmul.f32 %v2320, %v1918
        %v2353 = vmul.f32 %v2321, %v1933
        %v2354 = vmul.f32 %v2322, %v1948
        %v2355 = vmul.f32 %v2323, %v1963
        %v2356 = vmul.f32 %v2324, %v1978
        %v2357 = vmul.f32 %v2325, %v1993
        %v2358 = vmul.f32 %v2326, %v2008
        %v2359 = vmul.f32 %v2327, %v2023
        %v2360 = vmul.f32 %v2328, %v2038
        %v2361 = vmul.f32 %v2329, %v2053
        %v2362 = vmul.f32 %v2330, %v2068
        %v2363 = vmul.f32 %v2331, %v2083
        %v2364 = vmul.f32 %v2332, %v2098
        %v2365 = vmul.f32 %v2333, %v2113
        %v2366 = vmul.f32 %v2334, %v2128
        %v2367 = vmul.f32 %v2335, %v2143
        %v2368 = vadd.f32 %v2336, 0.2548296
        %v2369 = vadd.f32 %v2337, 0.2548296
        %v2370 = vadd.f32 %v2338, 0.2548296
        %v2371 = vadd.f32 %v2339, 0.2548296
        %v2372 = vadd.f32 %v2340, 0.2548296
        %v2373 = vadd.f32 %v2341, 0.2548296
        %v2374 = vadd.f32 %v2342, 0.2548296
        %v2375 = vadd.f32 %v2343, 0.2548296
        %v2376 = vadd.f32 %v2344, 0.2548296
        %v2377 = vadd.f32 %v2345, 0.2548296
        %v2378 = vadd.f32 %v2346, 0.2548296
        %v2379 = vadd.f32 %v2347, 0.2548296
        %v2380 = vadd.f32 %v2348, 0.2548296
        %v2381 = vadd.f32 %v2349, 0.2548296
        %v2382 = vadd.f32 %v2350, 0.2548296
        %v2383 = vadd.f32 %v2351, 0.2548296
        %v2384 = vadd.f32 %v2352, 0.2548296
        %v2385 = vadd.f32 %v2353, 0.2548296
        %v2386 = vadd.f32 %v2354, 0.2548296
        %v2387 = vadd.f32 %v2355, 0.2548296
        %v2388 = vadd.f32 %v2356, 0.2548296
        %v2389 = vadd.f32 %v2357, 0.2548296
        %v2390 = vadd.f32 %v2358, 0.2548296
        %v2391 = vadd.f32 %v2359, 0.2548296
        %v2392 = vadd.f32 %v2360, 0.2548296
        %v2393 = vadd.f32 %v2361, 0.2548296
        %v2394 = vadd.f32 %v2362, 0.2548296
        %v2395 = vadd.f32 %v2363, 0.2548296
        %v2396 = vadd.f32 %v2364, 0.2548296
        %v2397 = vadd.f32 %v2365, 0.2548296
        %v2398 = vadd.f32 %v2366, 0.2548296
        %v2399 = vadd.f32 %v2367, 0.2548296
        %v2400 = vmul.f32 %v2368, %v1678
        %v2401 = vmul.f32 %v2369, %v1693
        %v2402 = vmul.f32 %v2370, %v1708
        %v2403 = vmul.f32 %v2371, %v1723
        %v2404 = vmul.f32 %v2372, %v1738
        %v2405 = vmul.f32 %v2373, %v1753
        %v2406 = vmul.f32 %v2374, %v1768
        %v2407 = vmul.f32 %v2375, %v1783
        %v2408 = vmul.f32 %v2376, %v1798
        %v2409 = vmul.f32 %v2377, %v1813
        %v2410 = vmul.f32 %v2378, %v1828
        %v2411 = vmul.f32 %v2379, %v1843
        %v2412 = vmul.f32 %v2380, %v1858
        %v2413 = vmul.f32 %v2381, %v1873
        %v2414 = vmul.f32 %v2382, %v1888
        %v2415 = vmul.f32 %v2383, %v1903
        %v2416 = vmul.f32 %v2384, %v1918
        %v2417 = vmul.f32 %v2385, %v1933
        %v2418 = vmul.f32 %v2386, %v1948
        %v2419 = vmul.f32 %v2387, %v1963
        %v2420 = vmul.f32 %v2388, %v1978
        %v2421 = vmul.f32 %v2389, %v1993
        %v2422 = vmul.f32 %v2390, %v2008
        %v2423 = vmul.f32 %v2391, %v2023
        %v2424 = vmul.f32 %v2392, %v2038
        %v2425 = vmul.f32 %v2393, %v2053
        %v2426 = vmul.f32 %v2394, %v2068
        %v2427 = vmul.f32 %v2395, %v2083
        %v2428 = vmul.f32 %v2396, %v2098
        %v2429 = vmul.f32 %v2397, %v2113
        %v2430 = vmul.f32 %v2398, %v2128
        %v2431 = vmul.f32 %v2399, %v2143
        %v2432 = vsub.f32 0.0, %v1568
        %v2433 = vsub.f32 0.0, %v1569
        %v2434 = vsub.f32 0.0, %v1570
        %v2435 = vsub.f32 0.0, %v1571
        %v2436 = vsub.f32 0.0, %v1572
        %v2437 = vsub.f32 0.0, %v1573
        %v2438 = vsub.f32 0.0, %v1574
        %v2439 = vsub.f32 0.0, %v1575
        %v2440 = vsub.f32 0.0, %v1576
        %v2441 = vsub.f32 0.0, %v1577
        %v2442 = vsub.f32 0.0, %v1578
        %v2443 = vsub.f32 0.0, %v1579
        %v2444 = vsub.f32 0.0, %v1580
        %v2445 = vsub.f32 0.0, %v1581
        %v2446 = vsub.f32 0.0, %v1582
        %v2447 = vsub.f32 0.0, %v1583
        %v2448 = vsub.f32 0.0, %v1584
        %v2449 = vsub.f32 0.0, %v1585
        %v2450 = vsub.f32 0.0, %v1586
        %v2451 = vsub.f32 0.0, %v1587
        %v2452 = vsub.f32 0.0, %v1588
        %v2453 = vsub.f32 0.0, %v1589
        %v2454 = vsub.f32 0.0, %v1590
        %v2455 = vsub.f32 0.0, %v1591
        %v2456 = vsub.f32 0.0, %v1592
        %v2457 = vsub.f32 0.0, %v1593
        %v2458 = vsub.f32 0.0, %v1594
        %v2459 = vsub.f32 0.0, %v1595
        %v2460 = vsub.f32 0.0, %v1596
        %v2461 = vsub.f32 0.0, %v1597
        %v2462 = vsub.f32 0.0, %v1598
        %v2463 = vsub.f32 0.0, %v1599
        %v2464 = vmul.f32 %v2432, %v1568
        %v2465 = vmul.f32 %v2433, %v1569
        %v2466 = vmul.f32 %v2434, %v1570
        %v2467 = vmul.f32 %v2435, %v1571
        %v2468 = vmul.f32 %v2436, %v1572
        %v2469 = vmul.f32 %v2437, %v1573
        %v2470 = vmul.f32 %v2438, %v1574
        %v2471 = vmul.f32 %v2439, %v1575
        %v2472 = vmul.f32 %v2440, %v1576
        %v2473 = vmul.f32 %v2441, %v1577
        %v2474 = vmul.f32 %v2442, %v1578
        %v2475 = vmul.f32 %v2443, %v1579
        %v2476 = vmul.f32 %v2444, %v1580
        %v2477 = vmul.f32 %v2445, %v1581
        %v2478 = vmul.f32 %v2446, %v1582
        %v2479 = vmul.f32 %v2447, %v1583
        %v2480 = vmul.f32 %v2448, %v1584
        %v2481 = vmul.f32 %v2449, %v1585
        %v2482 = vmul.f32 %v2450, %v1586
        %v2483 = vmul.f32 %v2451, %v1587
        %v2484 = vmul.f32 %v2452, %v1588
        %v2485 = vmul.f32 %v2453, %v1589
        %v2486 = vmul.f32 %v2454, %v1590
        %v2487 = vmul.f32 %v2455, %v1591
        %v2488 = vmul.f32 %v2456, %v1592
        %v2489 = vmul.f32 %v2457, %v1593
        %v2490 = vmul.f32 %v2458, %v1594
        %v2491 = vmul.f32 %v2459, %v1595
        %v2492 = vmul.f32 %v2460, %v1596
        %v2493 = vmul.f32 %v2461, %v1597
        %v2494 = vmul.f32 %v2462, %v1598
        %v2495 = vmul.f32 %v2463, %v1599
        %v2496 = vmul.f32 %v2464, 1.442695
        %v2497 = vpow.pop %v2496
        %v2498 = vmul.f32 %v2465, 1.442695
        %v2499 = vpow.pop %v2498
        %v2500 = vmul.f32 %v2466, 1.442695
        %v2501 = vpow.pop %v2500
        %v2502 = vmul.f32 %v2467, 1.442695
        %v2503 = vpow.pop %v2502
        %v2504 = vmul.f32 %v2468, 1.442695
        %v2505 = vpow.pop %v2504
        %v2506 = vmul.f32 %v2469, 1.442695
        %v2507 = vpow.pop %v2506
        %v2508 = vmul.f32 %v2470, 1.442695
        %v2509 = vpow.pop %v2508
        %v2510 = vmul.f32 %v2471, 1.442695
        %v2511 = vpow.pop %v2510
        %v2512 = vmul.f32 %v2472, 1.442695
        %v2513 = vpow.pop %v2512
        %v2514 = vmul.f32 %v2473, 1.442695
        %v2515 = vpow.pop %v2514
        %v2516 = vmul.f32 %v2474, 1.442695
        %v2517 = vpow.pop %v2516
        %v2518 = vmul.f32 %v2475, 1.442695
        %v2519 = vpow.pop %v2518
        %v2520 = vmul.f32 %v2476, 1.442695
        %v2521 = vpow.pop %v2520
        %v2522 = vmul.f32 %v2477, 1.442695
        %v2523 = vpow.pop %v2522
        %v2524 = vmul.f32 %v2478, 1.442695
        %v2525 = vpow.pop %v2524
        %v2526 = vmul.f32 %v2479, 1.442695
        %v2527 = vpow.pop %v2526
        %v2528 = vmul.f32 %v2480, 1.442695
        %v2529 = vpow.pop %v2528
        %v2530 = vmul.f32 %v2481, 1.442695
        %v2531 = vpow.pop %v2530
        %v2532 = vmul.f32 %v2482, 1.442695
        %v2533 = vpow.pop %v2532
        %v2534 = vmul.f32 %v2483, 1.442695
        %v2535 = vpow.pop %v2534
        %v2536 = vmul.f32 %v2484, 1.442695
        %v2537 = vpow.pop %v2536
        %v2538 = vmul.f32 %v2485, 1.442695
        %v2539 = vpow.pop %v2538
        %v2540 = vmul.f32 %v2486, 1.442695
        %v2541 = vpow.pop %v2540
        %v2542 = vmul.f32 %v2487, 1.442695
        %v2543 = vpow.pop %v2542
        %v2544 = vmul.f32 %v2488, 1.442695
        %v2545 = vpow.pop %v2544
        %v2546 = vmul.f32 %v2489, 1.442695
        %v2547 = vpow.pop %v2546
        %v2548 = vmul.f32 %v2490, 1.442695
        %v2549 = vpow.pop %v2548
        %v2550 = vmul.f32 %v2491, 1.442695
        %v2551 = vpow.pop %v2550
        %v2552 = vmul.f32 %v2492, 1.442695
        %v2553 = vpow.pop %v2552
        %v2554 = vmul.f32 %v2493, 1.442695
        %v2555 = vpow.pop %v2554
        %v2556 = vmul.f32 %v2494, 1.442695
        %v2557 = vpow.pop %v2556
        %v2558 = vmul.f32 %v2495, 1.442695
        %v2559 = vpow.pop %v2558
        %v2560 = vmul.f32 %v2400, %v2497
        %v2561 = vmul.f32 %v2401, %v2499
        %v2562 = vmul.f32 %v2402, %v2501
        %v2563 = vmul.f32 %v2403, %v2503
        %v2564 = vmul.f32 %v2404, %v2505
        %v2565 = vmul.f32 %v2405, %v2507
        %v2566 = vmul.f32 %v2406, %v2509
        %v2567 = vmul.f32 %v2407, %v2511
        %v2568 = vmul.f32 %v2408, %v2513
        %v2569 = vmul.f32 %v2409, %v2515
        %v2570 = vmul.f32 %v2410, %v2517
        %v2571 = vmul.f32 %v2411, %v2519
        %v2572 = vmul.f32 %v2412, %v2521
        %v2573 = vmul.f32 %v2413, %v2523
        %v2574 = vmul.f32 %v2414, %v2525
        %v2575 = vmul.f32 %v2415, %v2527
        %v2576 = vmul.f32 %v2416, %v2529
        %v2577 = vmul.f32 %v2417, %v2531
        %v2578 = vmul.f32 %v2418, %v2533
        %v2579 = vmul.f32 %v2419, %v2535
        %v2580 = vmul.f32 %v2420, %v2537
        %v2581 = vmul.f32 %v2421, %v2539
        %v2582 = vmul.f32 %v2422, %v2541
        %v2583 = vmul.f32 %v2423, %v2543
        %v2584 = vmul.f32 %v2424, %v2545
        %v2585 = vmul.f32 %v2425, %v2547
        %v2586 = vmul.f32 %v2426, %v2549
        %v2587 = vmul.f32 %v2427, %v2551
        %v2588 = vmul.f32 %v2428, %v2553
        %v2589 = vmul.f32 %v2429, %v2555
        %v2590 = vmul.f32 %v2430, %v2557
        %v2591 = vmul.f32 %v2431, %v2559
        %v2592 = vsub.f32 1.0, %v2560
        %v2593 = vsub.f32 1.0, %v2561
        %v2594 = vsub.f32 1.0, %v2562
        %v2595 = vsub.f32 1.0, %v2563
        %v2596 = vsub.f32 1.0, %v2564
        %v2597 = vsub.f32 1.0, %v2565
        %v2598 = vsub.f32 1.0, %v2566
        %v2599 = vsub.f32 1.0, %v2567
        %v2600 = vsub.f32 1.0, %v2568
        %v2601 = vsub.f32 1.0, %v2569
        %v2602 = vsub.f32 1.0, %v2570
        %v2603 = vsub.f32 1.0, %v2571
        %v2604 = vsub.f32 1.0, %v2572
        %v2605 = vsub.f32 1.0, %v2573
        %v2606 = vsub.f32 1.0, %v2574
        %v2607 = vsub.f32 1.0, %v2575
        %v2608 = vsub.f32 1.0, %v2576
        %v2609 = vsub.f32 1.0, %v2577
        %v2610 = vsub.f32 1.0, %v2578
        %v2611 = vsub.f32 1.0, %v2579
        %v2612 = vsub.f32 1.0, %v2580
        %v2613 = vsub.f32 1.0, %v2581
        %v2614 = vsub.f32 1.0, %v2582
        %v2615 = vsub.f32 1.0, %v2583
        %v2616 = vsub.f32 1.0, %v2584
        %v2617 = vsub.f32 1.0, %v2585
        %v2618 = vsub.f32 1.0, %v2586
        %v2619 = vsub.f32 1.0, %v2587
        %v2620 = vsub.f32 1.0, %v2588
        %v2621 = vsub.f32 1.0, %v2589
        %v2622 = vsub.f32 1.0, %v2590
        %v2623 = vsub.f32 1.0, %v2591
        %vm2624 = vcmp.ge.f32.partialorder %v1536, 0.0
        %vm2625 = vcmp.ge.f32.partialorder %v1537, 0.0
        %vm2626 = vcmp.ge.f32.partialorder %v1538, 0.0
        %vm2627 = vcmp.ge.f32.partialorder %v1539, 0.0
        %vm2628 = vcmp.ge.f32.partialorder %v1540, 0.0
        %vm2629 = vcmp.ge.f32.partialorder %v1541, 0.0
        %vm2630 = vcmp.ge.f32.partialorder %v1542, 0.0
        %vm2631 = vcmp.ge.f32.partialorder %v1543, 0.0
        %vm2632 = vcmp.ge.f32.partialorder %v1544, 0.0
        %vm2633 = vcmp.ge.f32.partialorder %v1545, 0.0
        %vm2634 = vcmp.ge.f32.partialorder %v1546, 0.0
        %vm2635 = vcmp.ge.f32.partialorder %v1547, 0.0
        %vm2636 = vcmp.ge.f32.partialorder %v1548, 0.0
        %vm2637 = vcmp.ge.f32.partialorder %v1549, 0.0
        %vm2638 = vcmp.ge.f32.partialorder %v1550, 0.0
        %vm2639 = vcmp.ge.f32.partialorder %v1551, 0.0
        %vm2640 = vcmp.ge.f32.partialorder %v1552, 0.0
        %vm2641 = vcmp.ge.f32.partialorder %v1553, 0.0
        %vm2642 = vcmp.ge.f32.partialorder %v1554, 0.0
        %vm2643 = vcmp.ge.f32.partialorder %v1555, 0.0
        %vm2644 = vcmp.ge.f32.partialorder %v1556, 0.0
        %vm2645 = vcmp.ge.f32.partialorder %v1557, 0.0
        %vm2646 = vcmp.ge.f32.partialorder %v1558, 0.0
        %vm2647 = vcmp.ge.f32.partialorder %v1559, 0.0
        %vm2648 = vcmp.ge.f32.partialorder %v1560, 0.0
        %vm2649 = vcmp.ge.f32.partialorder %v1561, 0.0
        %vm2650 = vcmp.ge.f32.partialorder %v1562, 0.0
        %vm2651 = vcmp.ge.f32.partialorder %v1563, 0.0
        %vm2652 = vcmp.ge.f32.partialorder %v1564, 0.0
        %vm2653 = vcmp.ge.f32.partialorder %v1565, 0.0
        %vm2654 = vcmp.ge.f32.partialorder %v1566, 0.0
        %vm2655 = vcmp.ge.f32.partialorder %v1567, 0.0
        %v2656 = vsub.f32 0.0, %v2592
        %v2657 = vsub.f32 0.0, %v2593
        %v2658 = vsub.f32 0.0, %v2594
        %v2659 = vsub.f32 0.0, %v2595
        %v2660 = vsub.f32 0.0, %v2596
        %v2661 = vsub.f32 0.0, %v2597
        %v2662 = vsub.f32 0.0, %v2598
        %v2663 = vsub.f32 0.0, %v2599
        %v2664 = vsub.f32 0.0, %v2600
        %v2665 = vsub.f32 0.0, %v2601
        %v2666 = vsub.f32 0.0, %v2602
        %v2667 = vsub.f32 0.0, %v2603
        %v2668 = vsub.f32 0.0, %v2604
        %v2669 = vsub.f32 0.0, %v2605
        %v2670 = vsub.f32 0.0, %v2606
        %v2671 = vsub.f32 0.0, %v2607
        %v2672 = vsub.f32 0.0, %v2608
        %v2673 = vsub.f32 0.0, %v2609
        %v2674 = vsub.f32 0.0, %v2610
        %v2675 = vsub.f32 0.0, %v2611
        %v2676 = vsub.f32 0.0, %v2612
        %v2677 = vsub.f32 0.0, %v2613
        %v2678 = vsub.f32 0.0, %v2614
        %v2679 = vsub.f32 0.0, %v2615
        %v2680 = vsub.f32 0.0, %v2616
        %v2681 = vsub.f32 0.0, %v2617
        %v2682 = vsub.f32 0.0, %v2618
        %v2683 = vsub.f32 0.0, %v2619
        %v2684 = vsub.f32 0.0, %v2620
        %v2685 = vsub.f32 0.0, %v2621
        %v2686 = vsub.f32 0.0, %v2622
        %v2687 = vsub.f32 0.0, %v2623
        %v2688 = vsel %vm2624, %v2592, %v2656
        %v2689 = vsel %vm2625, %v2593, %v2657
        %v2690 = vsel %vm2626, %v2594, %v2658
        %v2691 = vsel %vm2627, %v2595, %v2659
        %v2692 = vsel %vm2628, %v2596, %v2660
        %v2693 = vsel %vm2629, %v2597, %v2661
        %v2694 = vsel %vm2630, %v2598, %v2662
        %v2695 = vsel %vm2631, %v2599, %v2663
        %v2696 = vsel %vm2632, %v2600, %v2664
        %v2697 = vsel %vm2633, %v2601, %v2665
        %v2698 = vsel %vm2634, %v2602, %v2666
        %v2699 = vsel %vm2635, %v2603, %v2667
        %v2700 = vsel %vm2636, %v2604, %v2668
        %v2701 = vsel %vm2637, %v2605, %v2669
        %v2702 = vsel %vm2638, %v2606, %v2670
        %v2703 = vsel %vm2639, %v2607, %v2671
        %v2704 = vsel %vm2640, %v2608, %v2672
        %v2705 = vsel %vm2641, %v2609, %v2673
        %v2706 = vsel %vm2642, %v2610, %v2674
        %v2707 = vsel %vm2643, %v2611, %v2675
        %v2708 = vsel %vm2644, %v2612, %v2676
        %v2709 = vsel %vm2645, %v2613, %v2677
        %v2710 = vsel %vm2646, %v2614, %v2678
        %v2711 = vsel %vm2647, %v2615, %v2679
        %v2712 = vsel %vm2648, %v2616, %v2680
        %v2713 = vsel %vm2649, %v2617, %v2681
        %v2714 = vsel %vm2650, %v2618, %v2682
        %v2715 = vsel %vm2651, %v2619, %v2683
        %v2716 = vsel %vm2652, %v2620, %v2684
        %v2717 = vsel %vm2653, %v2621, %v2685
        %v2718 = vsel %vm2654, %v2622, %v2686
        %v2719 = vsel %vm2655, %v2623, %v2687
        %v2720 = vadd.f32 %v2688, 1.0
        %v2721 = vadd.f32 %v2689, 1.0
        %v2722 = vadd.f32 %v2690, 1.0
        %v2723 = vadd.f32 %v2691, 1.0
        %v2724 = vadd.f32 %v2692, 1.0
        %v2725 = vadd.f32 %v2693, 1.0
        %v2726 = vadd.f32 %v2694, 1.0
        %v2727 = vadd.f32 %v2695, 1.0
        %v2728 = vadd.f32 %v2696, 1.0
        %v2729 = vadd.f32 %v2697, 1.0
        %v2730 = vadd.f32 %v2698, 1.0
        %v2731 = vadd.f32 %v2699, 1.0
        %v2732 = vadd.f32 %v2700, 1.0
        %v2733 = vadd.f32 %v2701, 1.0
        %v2734 = vadd.f32 %v2702, 1.0
        %v2735 = vadd.f32 %v2703, 1.0
        %v2736 = vadd.f32 %v2704, 1.0
        %v2737 = vadd.f32 %v2705, 1.0
        %v2738 = vadd.f32 %v2706, 1.0
        %v2739 = vadd.f32 %v2707, 1.0
        %v2740 = vadd.f32 %v2708, 1.0
        %v2741 = vadd.f32 %v2709, 1.0
        %v2742 = vadd.f32 %v2710, 1.0
        %v2743 = vadd.f32 %v2711, 1.0
        %v2744 = vadd.f32 %v2712, 1.0
        %v2745 = vadd.f32 %v2713, 1.0
        %v2746 = vadd.f32 %v2714, 1.0
        %v2747 = vadd.f32 %v2715, 1.0
        %v2748 = vadd.f32 %v2716, 1.0
        %v2749 = vadd.f32 %v2717, 1.0
        %v2750 = vadd.f32 %v2718, 1.0
        %v2751 = vadd.f32 %v2719, 1.0
        %v2752 = vmul.f32 %v1504, %v2720
        %v2753 = vmul.f32 %v1505, %v2721
        %v2754 = vmul.f32 %v1506, %v2722
        %v2755 = vmul.f32 %v1507, %v2723
        %v2756 = vmul.f32 %v1508, %v2724
        %v2757 = vmul.f32 %v1509, %v2725
        %v2758 = vmul.f32 %v1510, %v2726
        %v2759 = vmul.f32 %v1511, %v2727
        %v2760 = vmul.f32 %v1512, %v2728
        %v2761 = vmul.f32 %v1513, %v2729
        %v2762 = vmul.f32 %v1514, %v2730
        %v2763 = vmul.f32 %v1515, %v2731
        %v2764 = vmul.f32 %v1516, %v2732
        %v2765 = vmul.f32 %v1517, %v2733
        %v2766 = vmul.f32 %v1518, %v2734
        %v2767 = vmul.f32 %v1519, %v2735
        %v2768 = vmul.f32 %v1520, %v2736
        %v2769 = vmul.f32 %v1521, %v2737
        %v2770 = vmul.f32 %v1522, %v2738
        %v2771 = vmul.f32 %v1523, %v2739
        %v2772 = vmul.f32 %v1524, %v2740
        %v2773 = vmul.f32 %v1525, %v2741
        %v2774 = vmul.f32 %v1526, %v2742
        %v2775 = vmul.f32 %v1527, %v2743
        %v2776 = vmul.f32 %v1528, %v2744
        %v2777 = vmul.f32 %v1529, %v2745
        %v2778 = vmul.f32 %v1530, %v2746
        %v2779 = vmul.f32 %v1531, %v2747
        %v2780 = vmul.f32 %v1532, %v2748
        %v2781 = vmul.f32 %v1533, %v2749
        %v2782 = vmul.f32 %v1534, %v2750
        %v2783 = vmul.f32 %v1535, %v2751
        %v2784 = vld [vmem:[%s586] sm:$0xff]
        %v2786 = vrot.slane %v2784, 1
        %v2787 = vrot.slane %v2784, 2
        %v2788 = vrot.slane %v2784, 3
        %v2789 = vrot.slane %v2784, 4
        %v2790 = vrot.slane %v2784, 5
        %v2791 = vrot.slane %v2784, 6
        %v2792 = vrot.slane %v2784, 7
        %v2793 = vperm.slane %v2784, 0
        %v2794 = vperm.slane %v2786, 0
        %v2795 = vperm.slane %v2787, 0
        %v2796 = vperm.slane %v2788, 0
        %v2797 = vperm.slane %v2789, 0
        %v2798 = vperm.slane %v2790, 0
        %v2799 = vperm.slane %v2791, 0
        %v2800 = vperm.slane %v2792, 0
        %v2809 = vmul.f32 %v2793, %v623
        %v2810 = vmul.f32 %v2793, %v628
        %v2811 = vmul.f32 %v2793, %v633
        %v2812 = vmul.f32 %v2793, %v638
        %v2813 = vmul.f32 %v2794, %v623
        %v2814 = vmul.f32 %v2794, %v628
        %v2815 = vmul.f32 %v2794, %v633
        %v2816 = vmul.f32 %v2794, %v638
        %v2817 = vmul.f32 %v2795, %v623
        %v2818 = vmul.f32 %v2795, %v628
        %v2819 = vmul.f32 %v2795, %v633
        %v2820 = vmul.f32 %v2795, %v638
        %v2821 = vmul.f32 %v2796, %v623
        %v2822 = vmul.f32 %v2796, %v628
        %v2823 = vmul.f32 %v2796, %v633
        %v2824 = vmul.f32 %v2796, %v638
        %v2825 = vmul.f32 %v2797, %v623
        %v2826 = vmul.f32 %v2797, %v628
        %v2827 = vmul.f32 %v2797, %v633
        %v2828 = vmul.f32 %v2797, %v638
        %v2829 = vmul.f32 %v2798, %v623
        %v2830 = vmul.f32 %v2798, %v628
        %v2831 = vmul.f32 %v2798, %v633
        %v2832 = vmul.f32 %v2798, %v638
        %v2833 = vmul.f32 %v2799, %v623
        %v2834 = vmul.f32 %v2799, %v628
        %v2835 = vmul.f32 %v2799, %v633
        %v2836 = vmul.f32 %v2799, %v638
        %v2837 = vmul.f32 %v2800, %v623
        %v2838 = vmul.f32 %v2800, %v628
        %v2839 = vmul.f32 %v2800, %v633
        %v2840 = vmul.f32 %v2800, %v638
        %v2841 = vmul.f32 %v2793, %v674
        %v2842 = vmul.f32 %v2793, %v678
        %v2843 = vmul.f32 %v2793, %v682
        %v2844 = vmul.f32 %v2793, %v686
        %v2845 = vmul.f32 %v2794, %v674
        %v2846 = vmul.f32 %v2794, %v678
        %v2847 = vmul.f32 %v2794, %v682
        %v2848 = vmul.f32 %v2794, %v686
        %v2849 = vmul.f32 %v2795, %v674
        %v2850 = vmul.f32 %v2795, %v678
        %v2851 = vmul.f32 %v2795, %v682
        %v2852 = vmul.f32 %v2795, %v686
        %v2853 = vmul.f32 %v2796, %v674
        %v2854 = vmul.f32 %v2796, %v678
        %v2855 = vmul.f32 %v2796, %v682
        %v2856 = vmul.f32 %v2796, %v686
        %v2857 = vmul.f32 %v2797, %v674
        %v2858 = vmul.f32 %v2797, %v678
        %v2859 = vmul.f32 %v2797, %v682
        %v2860 = vmul.f32 %v2797, %v686
        %v2861 = vmul.f32 %v2798, %v674
        %v2862 = vmul.f32 %v2798, %v678
        %v2863 = vmul.f32 %v2798, %v682
        %v2864 = vmul.f32 %v2798, %v686
        %v2865 = vmul.f32 %v2799, %v674
        %v2866 = vmul.f32 %v2799, %v678
        %v2867 = vmul.f32 %v2799, %v682
        %v2868 = vmul.f32 %v2799, %v686
        %v2869 = vmul.f32 %v2800, %v674
        %v2870 = vmul.f32 %v2800, %v678
        %v2871 = vmul.f32 %v2800, %v682
        %v2872 = vmul.f32 %v2800, %v686
        %2905 = vrot.lane.b32.xlu0 %v2841, 127
        %v2906 = vpop.permute.xlu0 %2905
        %2907 = vrot.lane.b32.xlu0 %v2842, 127
        %v2908 = vpop.permute.xlu0 %2907
        %2909 = vrot.lane.b32.xlu0 %v2843, 127
        %v2910 = vpop.permute.xlu0 %2909
        %2911 = vrot.lane.b32.xlu0 %v2844, 127
        %v2912 = vpop.permute.xlu0 %2911
        %2913 = vrot.lane.b32.xlu0 %v2845, 127
        %v2914 = vpop.permute.xlu0 %2913
        %2915 = vrot.lane.b32.xlu0 %v2846, 127
        %v2916 = vpop.permute.xlu0 %2915
        %2917 = vrot.lane.b32.xlu0 %v2847, 127
        %v2918 = vpop.permute.xlu0 %2917
        %2919 = vrot.lane.b32.xlu0 %v2848, 127
        %v2920 = vpop.permute.xlu0 %2919
        %2921 = vrot.lane.b32.xlu0 %v2849, 127
        %v2922 = vpop.permute.xlu0 %2921
        %2923 = vrot.lane.b32.xlu0 %v2850, 127
        %v2924 = vpop.permute.xlu0 %2923
        %2925 = vrot.lane.b32.xlu0 %v2851, 127
        %v2926 = vpop.permute.xlu0 %2925
        %2927 = vrot.lane.b32.xlu0 %v2852, 127
        %v2928 = vpop.permute.xlu0 %2927
        %2929 = vrot.lane.b32.xlu0 %v2853, 127
        %v2930 = vpop.permute.xlu0 %2929
        %2931 = vrot.lane.b32.xlu0 %v2854, 127
        %v2932 = vpop.permute.xlu0 %2931
        %2933 = vrot.lane.b32.xlu0 %v2855, 127
        %v2934 = vpop.permute.xlu0 %2933
        %2935 = vrot.lane.b32.xlu0 %v2856, 127
        %v2936 = vpop.permute.xlu0 %2935
        %2937 = vrot.lane.b32.xlu0 %v2857, 127
        %v2938 = vpop.permute.xlu0 %2937
        %2939 = vrot.lane.b32.xlu0 %v2858, 127
        %v2940 = vpop.permute.xlu0 %2939
        %2941 = vrot.lane.b32.xlu0 %v2859, 127
        %v2942 = vpop.permute.xlu0 %2941
        %2943 = vrot.lane.b32.xlu0 %v2860, 127
        %v2944 = vpop.permute.xlu0 %2943
        %2945 = vrot.lane.b32.xlu0 %v2861, 127
        %v2946 = vpop.permute.xlu0 %2945
        %2947 = vrot.lane.b32.xlu0 %v2862, 127
        %v2948 = vpop.permute.xlu0 %2947
        %2949 = vrot.lane.b32.xlu0 %v2863, 127
        %v2950 = vpop.permute.xlu0 %2949
        %2951 = vrot.lane.b32.xlu0 %v2864, 127
        %v2952 = vpop.permute.xlu0 %2951
        %2953 = vrot.lane.b32.xlu0 %v2865, 127
        %v2954 = vpop.permute.xlu0 %2953
        %2955 = vrot.lane.b32.xlu0 %v2866, 127
        %v2956 = vpop.permute.xlu0 %2955
        %2957 = vrot.lane.b32.xlu0 %v2867, 127
        %v2958 = vpop.permute.xlu0 %2957
        %2959 = vrot.lane.b32.xlu0 %v2868, 127
        %v2960 = vpop.permute.xlu0 %2959
        %2961 = vrot.lane.b32.xlu0 %v2869, 127
        %v2962 = vpop.permute.xlu0 %2961
        %2963 = vrot.lane.b32.xlu0 %v2870, 127
        %v2964 = vpop.permute.xlu0 %2963
        %2965 = vrot.lane.b32.xlu0 %v2871, 127
        %v2966 = vpop.permute.xlu0 %2965
        %2967 = vrot.lane.b32.xlu0 %v2872, 127
        %v2968 = vpop.permute.xlu0 %2967
        %v3001 = vadd.f32 %v2809, %v2906
        %v3002 = vadd.f32 %v2810, %v2908
        %v3003 = vadd.f32 %v2811, %v2910
        %v3004 = vadd.f32 %v2812, %v2912
        %v3005 = vadd.f32 %v2813, %v2914
        %v3006 = vadd.f32 %v2814, %v2916
        %v3007 = vadd.f32 %v2815, %v2918
        %v3008 = vadd.f32 %v2816, %v2920
        %v3009 = vadd.f32 %v2817, %v2922
        %v3010 = vadd.f32 %v2818, %v2924
        %v3011 = vadd.f32 %v2819, %v2926
        %v3012 = vadd.f32 %v2820, %v2928
        %v3013 = vadd.f32 %v2821, %v2930
        %v3014 = vadd.f32 %v2822, %v2932
        %v3015 = vadd.f32 %v2823, %v2934
        %v3016 = vadd.f32 %v2824, %v2936
        %v3017 = vadd.f32 %v2825, %v2938
        %v3018 = vadd.f32 %v2826, %v2940
        %v3019 = vadd.f32 %v2827, %v2942
        %v3020 = vadd.f32 %v2828, %v2944
        %v3021 = vadd.f32 %v2829, %v2946
        %v3022 = vadd.f32 %v2830, %v2948
        %v3023 = vadd.f32 %v2831, %v2950
        %v3024 = vadd.f32 %v2832, %v2952
        %v3025 = vadd.f32 %v2833, %v2954
        %v3026 = vadd.f32 %v2834, %v2956
        %v3027 = vadd.f32 %v2835, %v2958
        %v3028 = vadd.f32 %v2836, %v2960
        %v3029 = vadd.f32 %v2837, %v2962
        %v3030 = vadd.f32 %v2838, %v2964
        %v3031 = vadd.f32 %v2839, %v2966
        %v3032 = vadd.f32 %v2840, %v2968
        %v3033 = vmul.f32 %v2793, %v882
        %v3034 = vmul.f32 %v2793, %v886
        %v3035 = vmul.f32 %v2793, %v890
        %v3036 = vmul.f32 %v2793, %v894
        %v3037 = vmul.f32 %v2794, %v882
        %v3038 = vmul.f32 %v2794, %v886
        %v3039 = vmul.f32 %v2794, %v890
        %v3040 = vmul.f32 %v2794, %v894
        %v3041 = vmul.f32 %v2795, %v882
        %v3042 = vmul.f32 %v2795, %v886
        %v3043 = vmul.f32 %v2795, %v890
        %v3044 = vmul.f32 %v2795, %v894
        %v3045 = vmul.f32 %v2796, %v882
        %v3046 = vmul.f32 %v2796, %v886
        %v3047 = vmul.f32 %v2796, %v890
        %v3048 = vmul.f32 %v2796, %v894
        %v3049 = vmul.f32 %v2797, %v882
        %v3050 = vmul.f32 %v2797, %v886
        %v3051 = vmul.f32 %v2797, %v890
        %v3052 = vmul.f32 %v2797, %v894
        %v3053 = vmul.f32 %v2798, %v882
        %v3054 = vmul.f32 %v2798, %v886
        %v3055 = vmul.f32 %v2798, %v890
        %v3056 = vmul.f32 %v2798, %v894
        %v3057 = vmul.f32 %v2799, %v882
        %v3058 = vmul.f32 %v2799, %v886
        %v3059 = vmul.f32 %v2799, %v890
        %v3060 = vmul.f32 %v2799, %v894
        %v3061 = vmul.f32 %v2800, %v882
        %v3062 = vmul.f32 %v2800, %v886
        %v3063 = vmul.f32 %v2800, %v890
        %v3064 = vmul.f32 %v2800, %v894
        %3097 = vrot.lane.b32.xlu0 %v3033, 126
        %v3098 = vpop.permute.xlu0 %3097
        %3099 = vrot.lane.b32.xlu0 %v3034, 126
        %v3100 = vpop.permute.xlu0 %3099
        %3101 = vrot.lane.b32.xlu0 %v3035, 126
        %v3102 = vpop.permute.xlu0 %3101
        %3103 = vrot.lane.b32.xlu0 %v3036, 126
        %v3104 = vpop.permute.xlu0 %3103
        %3105 = vrot.lane.b32.xlu0 %v3037, 126
        %v3106 = vpop.permute.xlu0 %3105
        %3107 = vrot.lane.b32.xlu0 %v3038, 126
        %v3108 = vpop.permute.xlu0 %3107
        %3109 = vrot.lane.b32.xlu0 %v3039, 126
        %v3110 = vpop.permute.xlu0 %3109
        %3111 = vrot.lane.b32.xlu0 %v3040, 126
        %v3112 = vpop.permute.xlu0 %3111
        %3113 = vrot.lane.b32.xlu0 %v3041, 126
        %v3114 = vpop.permute.xlu0 %3113
        %3115 = vrot.lane.b32.xlu0 %v3042, 126
        %v3116 = vpop.permute.xlu0 %3115
        %3117 = vrot.lane.b32.xlu0 %v3043, 126
        %v3118 = vpop.permute.xlu0 %3117
        %3119 = vrot.lane.b32.xlu0 %v3044, 126
        %v3120 = vpop.permute.xlu0 %3119
        %3121 = vrot.lane.b32.xlu0 %v3045, 126
        %v3122 = vpop.permute.xlu0 %3121
        %3123 = vrot.lane.b32.xlu0 %v3046, 126
        %v3124 = vpop.permute.xlu0 %3123
        %3125 = vrot.lane.b32.xlu0 %v3047, 126
        %v3126 = vpop.permute.xlu0 %3125
        %3127 = vrot.lane.b32.xlu0 %v3048, 126
        %v3128 = vpop.permute.xlu0 %3127
        %3129 = vrot.lane.b32.xlu0 %v3049, 126
        %v3130 = vpop.permute.xlu0 %3129
        %3131 = vrot.lane.b32.xlu0 %v3050, 126
        %v3132 = vpop.permute.xlu0 %3131
        %3133 = vrot.lane.b32.xlu0 %v3051, 126
        %v3134 = vpop.permute.xlu0 %3133
        %3135 = vrot.lane.b32.xlu0 %v3052, 126
        %v3136 = vpop.permute.xlu0 %3135
        %3137 = vrot.lane.b32.xlu0 %v3053, 126
        %v3138 = vpop.permute.xlu0 %3137
        %3139 = vrot.lane.b32.xlu0 %v3054, 126
        %v3140 = vpop.permute.xlu0 %3139
        %3141 = vrot.lane.b32.xlu0 %v3055, 126
        %v3142 = vpop.permute.xlu0 %3141
        %3143 = vrot.lane.b32.xlu0 %v3056, 126
        %v3144 = vpop.permute.xlu0 %3143
        %3145 = vrot.lane.b32.xlu0 %v3057, 126
        %v3146 = vpop.permute.xlu0 %3145
        %3147 = vrot.lane.b32.xlu0 %v3058, 126
        %v3148 = vpop.permute.xlu0 %3147
        %3149 = vrot.lane.b32.xlu0 %v3059, 126
        %v3150 = vpop.permute.xlu0 %3149
        %3151 = vrot.lane.b32.xlu0 %v3060, 126
        %v3152 = vpop.permute.xlu0 %3151
        %3153 = vrot.lane.b32.xlu0 %v3061, 126
        %v3154 = vpop.permute.xlu0 %3153
        %3155 = vrot.lane.b32.xlu0 %v3062, 126
        %v3156 = vpop.permute.xlu0 %3155
        %3157 = vrot.lane.b32.xlu0 %v3063, 126
        %v3158 = vpop.permute.xlu0 %3157
        %3159 = vrot.lane.b32.xlu0 %v3064, 126
        %v3160 = vpop.permute.xlu0 %3159
        %v3193 = vadd.f32 %v3001, %v3098
        %v3194 = vadd.f32 %v3002, %v3100
        %v3195 = vadd.f32 %v3003, %v3102
        %v3196 = vadd.f32 %v3004, %v3104
        %v3197 = vadd.f32 %v3005, %v3106
        %v3198 = vadd.f32 %v3006, %v3108
        %v3199 = vadd.f32 %v3007, %v3110
        %v3200 = vadd.f32 %v3008, %v3112
        %v3201 = vadd.f32 %v3009, %v3114
        %v3202 = vadd.f32 %v3010, %v3116
        %v3203 = vadd.f32 %v3011, %v3118
        %v3204 = vadd.f32 %v3012, %v3120
        %v3205 = vadd.f32 %v3013, %v3122
        %v3206 = vadd.f32 %v3014, %v3124
        %v3207 = vadd.f32 %v3015, %v3126
        %v3208 = vadd.f32 %v3016, %v3128
        %v3209 = vadd.f32 %v3017, %v3130
        %v3210 = vadd.f32 %v3018, %v3132
        %v3211 = vadd.f32 %v3019, %v3134
        %v3212 = vadd.f32 %v3020, %v3136
        %v3213 = vadd.f32 %v3021, %v3138
        %v3214 = vadd.f32 %v3022, %v3140
        %v3215 = vadd.f32 %v3023, %v3142
        %v3216 = vadd.f32 %v3024, %v3144
        %v3217 = vadd.f32 %v3025, %v3146
        %v3218 = vadd.f32 %v3026, %v3148
        %v3219 = vadd.f32 %v3027, %v3150
        %v3220 = vadd.f32 %v3028, %v3152
        %v3221 = vadd.f32 %v3029, %v3154
        %v3222 = vadd.f32 %v3030, %v3156
        %v3223 = vadd.f32 %v3031, %v3158
        %v3224 = vadd.f32 %v3032, %v3160
        %v3225 = vmul.f32 %v2793, %v1090
        %v3226 = vmul.f32 %v2793, %v1094
        %v3227 = vmul.f32 %v2793, %v1098
        %v3228 = vmul.f32 %v2793, %v1102
        %v3229 = vmul.f32 %v2794, %v1090
        %v3230 = vmul.f32 %v2794, %v1094
        %v3231 = vmul.f32 %v2794, %v1098
        %v3232 = vmul.f32 %v2794, %v1102
        %v3233 = vmul.f32 %v2795, %v1090
        %v3234 = vmul.f32 %v2795, %v1094
        %v3235 = vmul.f32 %v2795, %v1098
        %v3236 = vmul.f32 %v2795, %v1102
        %v3237 = vmul.f32 %v2796, %v1090
        %v3238 = vmul.f32 %v2796, %v1094
        %v3239 = vmul.f32 %v2796, %v1098
        %v3240 = vmul.f32 %v2796, %v1102
        %v3241 = vmul.f32 %v2797, %v1090
        %v3242 = vmul.f32 %v2797, %v1094
        %v3243 = vmul.f32 %v2797, %v1098
        %v3244 = vmul.f32 %v2797, %v1102
        %v3245 = vmul.f32 %v2798, %v1090
        %v3246 = vmul.f32 %v2798, %v1094
        %v3247 = vmul.f32 %v2798, %v1098
        %v3248 = vmul.f32 %v2798, %v1102
        %v3249 = vmul.f32 %v2799, %v1090
        %v3250 = vmul.f32 %v2799, %v1094
        %v3251 = vmul.f32 %v2799, %v1098
        %v3252 = vmul.f32 %v2799, %v1102
        %v3253 = vmul.f32 %v2800, %v1090
        %v3254 = vmul.f32 %v2800, %v1094
        %v3255 = vmul.f32 %v2800, %v1098
        %v3256 = vmul.f32 %v2800, %v1102
        %3289 = vrot.lane.b32.xlu0 %v3225, 125
        %v3290 = vpop.permute.xlu0 %3289
        %3291 = vrot.lane.b32.xlu0 %v3226, 125
        %v3292 = vpop.permute.xlu0 %3291
        %3293 = vrot.lane.b32.xlu0 %v3227, 125
        %v3294 = vpop.permute.xlu0 %3293
        %3295 = vrot.lane.b32.xlu0 %v3228, 125
        %v3296 = vpop.permute.xlu0 %3295
        %3297 = vrot.lane.b32.xlu0 %v3229, 125
        %v3298 = vpop.permute.xlu0 %3297
        %3299 = vrot.lane.b32.xlu0 %v3230, 125
        %v3300 = vpop.permute.xlu0 %3299
        %3301 = vrot.lane.b32.xlu0 %v3231, 125
        %v3302 = vpop.permute.xlu0 %3301
        %3303 = vrot.lane.b32.xlu0 %v3232, 125
        %v3304 = vpop.permute.xlu0 %3303
        %3305 = vrot.lane.b32.xlu0 %v3233, 125
        %v3306 = vpop.permute.xlu0 %3305
        %3307 = vrot.lane.b32.xlu0 %v3234, 125
        %v3308 = vpop.permute.xlu0 %3307
        %3309 = vrot.lane.b32.xlu0 %v3235, 125
        %v3310 = vpop.permute.xlu0 %3309
        %3311 = vrot.lane.b32.xlu0 %v3236, 125
        %v3312 = vpop.permute.xlu0 %3311
        %3313 = vrot.lane.b32.xlu0 %v3237, 125
        %v3314 = vpop.permute.xlu0 %3313
        %3315 = vrot.lane.b32.xlu0 %v3238, 125
        %v3316 = vpop.permute.xlu0 %3315
        %3317 = vrot.lane.b32.xlu0 %v3239, 125
        %v3318 = vpop.permute.xlu0 %3317
        %3319 = vrot.lane.b32.xlu0 %v3240, 125
        %v3320 = vpop.permute.xlu0 %3319
        %3321 = vrot.lane.b32.xlu0 %v3241, 125
        %v3322 = vpop.permute.xlu0 %3321
        %3323 = vrot.lane.b32.xlu0 %v3242, 125
        %v3324 = vpop.permute.xlu0 %3323
        %3325 = vrot.lane.b32.xlu0 %v3243, 125
        %v3326 = vpop.permute.xlu0 %3325
        %3327 = vrot.lane.b32.xlu0 %v3244, 125
        %v3328 = vpop.permute.xlu0 %3327
        %3329 = vrot.lane.b32.xlu0 %v3245, 125
        %v3330 = vpop.permute.xlu0 %3329
        %3331 = vrot.lane.b32.xlu0 %v3246, 125
        %v3332 = vpop.permute.xlu0 %3331
        %3333 = vrot.lane.b32.xlu0 %v3247, 125
        %v3334 = vpop.permute.xlu0 %3333
        %3335 = vrot.lane.b32.xlu0 %v3248, 125
        %v3336 = vpop.permute.xlu0 %3335
        %3337 = vrot.lane.b32.xlu0 %v3249, 125
        %v3338 = vpop.permute.xlu0 %3337
        %3339 = vrot.lane.b32.xlu0 %v3250, 125
        %v3340 = vpop.permute.xlu0 %3339
        %3341 = vrot.lane.b32.xlu0 %v3251, 125
        %v3342 = vpop.permute.xlu0 %3341
        %3343 = vrot.lane.b32.xlu0 %v3252, 125
        %v3344 = vpop.permute.xlu0 %3343
        %3345 = vrot.lane.b32.xlu0 %v3253, 125
        %v3346 = vpop.permute.xlu0 %3345
        %3347 = vrot.lane.b32.xlu0 %v3254, 125
        %v3348 = vpop.permute.xlu0 %3347
        %3349 = vrot.lane.b32.xlu0 %v3255, 125
        %v3350 = vpop.permute.xlu0 %3349
        %3351 = vrot.lane.b32.xlu0 %v3256, 125
        %v3352 = vpop.permute.xlu0 %3351
        %v3385 = vadd.f32 %v3193, %v3290
        %v3386 = vadd.f32 %v3194, %v3292
        %v3387 = vadd.f32 %v3195, %v3294
        %v3388 = vadd.f32 %v3196, %v3296
        %v3389 = vadd.f32 %v3197, %v3298
        %v3390 = vadd.f32 %v3198, %v3300
        %v3391 = vadd.f32 %v3199, %v3302
        %v3392 = vadd.f32 %v3200, %v3304
        %v3393 = vadd.f32 %v3201, %v3306
        %v3394 = vadd.f32 %v3202, %v3308
        %v3395 = vadd.f32 %v3203, %v3310
        %v3396 = vadd.f32 %v3204, %v3312
        %v3397 = vadd.f32 %v3205, %v3314
        %v3398 = vadd.f32 %v3206, %v3316
        %v3399 = vadd.f32 %v3207, %v3318
        %v3400 = vadd.f32 %v3208, %v3320
        %v3401 = vadd.f32 %v3209, %v3322
        %v3402 = vadd.f32 %v3210, %v3324
        %v3403 = vadd.f32 %v3211, %v3326
        %v3404 = vadd.f32 %v3212, %v3328
        %v3405 = vadd.f32 %v3213, %v3330
        %v3406 = vadd.f32 %v3214, %v3332
        %v3407 = vadd.f32 %v3215, %v3334
        %v3408 = vadd.f32 %v3216, %v3336
        %v3409 = vadd.f32 %v3217, %v3338
        %v3410 = vadd.f32 %v3218, %v3340
        %v3411 = vadd.f32 %v3219, %v3342
        %v3412 = vadd.f32 %v3220, %v3344
        %v3413 = vadd.f32 %v3221, %v3346
        %v3414 = vadd.f32 %v3222, %v3348
        %v3415 = vadd.f32 %v3223, %v3350
        %v3416 = vadd.f32 %v3224, %v3352
        %v3417 = vmul.f32 %v2793, %v1298
        %v3418 = vmul.f32 %v2793, %v1302
        %v3419 = vmul.f32 %v2793, %v1306
        %v3420 = vmul.f32 %v2793, %v1310
        %v3421 = vmul.f32 %v2794, %v1298
        %v3422 = vmul.f32 %v2794, %v1302
        %v3423 = vmul.f32 %v2794, %v1306
        %v3424 = vmul.f32 %v2794, %v1310
        %v3425 = vmul.f32 %v2795, %v1298
        %v3426 = vmul.f32 %v2795, %v1302
        %v3427 = vmul.f32 %v2795, %v1306
        %v3428 = vmul.f32 %v2795, %v1310
        %v3429 = vmul.f32 %v2796, %v1298
        %v3430 = vmul.f32 %v2796, %v1302
        %v3431 = vmul.f32 %v2796, %v1306
        %v3432 = vmul.f32 %v2796, %v1310
        %v3433 = vmul.f32 %v2797, %v1298
        %v3434 = vmul.f32 %v2797, %v1302
        %v3435 = vmul.f32 %v2797, %v1306
        %v3436 = vmul.f32 %v2797, %v1310
        %v3437 = vmul.f32 %v2798, %v1298
        %v3438 = vmul.f32 %v2798, %v1302
        %v3439 = vmul.f32 %v2798, %v1306
        %v3440 = vmul.f32 %v2798, %v1310
        %v3441 = vmul.f32 %v2799, %v1298
        %v3442 = vmul.f32 %v2799, %v1302
        %v3443 = vmul.f32 %v2799, %v1306
        %v3444 = vmul.f32 %v2799, %v1310
        %v3445 = vmul.f32 %v2800, %v1298
        %v3446 = vmul.f32 %v2800, %v1302
        %v3447 = vmul.f32 %v2800, %v1306
        %v3448 = vmul.f32 %v2800, %v1310
        %3481 = vrot.lane.b32.xlu0 %v3417, 124
        %v3482 = vpop.permute.xlu0 %3481
        %3483 = vrot.lane.b32.xlu0 %v3418, 124
        %v3484 = vpop.permute.xlu0 %3483
        %3485 = vrot.lane.b32.xlu0 %v3419, 124
        %v3486 = vpop.permute.xlu0 %3485
        %3487 = vrot.lane.b32.xlu0 %v3420, 124
        %v3488 = vpop.permute.xlu0 %3487
        %3489 = vrot.lane.b32.xlu0 %v3421, 124
        %v3490 = vpop.permute.xlu0 %3489
        %3491 = vrot.lane.b32.xlu0 %v3422, 124
        %v3492 = vpop.permute.xlu0 %3491
        %3493 = vrot.lane.b32.xlu0 %v3423, 124
        %v3494 = vpop.permute.xlu0 %3493
        %3495 = vrot.lane.b32.xlu0 %v3424, 124
        %v3496 = vpop.permute.xlu0 %3495
        %3497 = vrot.lane.b32.xlu0 %v3425, 124
        %v3498 = vpop.permute.xlu0 %3497
        %3499 = vrot.lane.b32.xlu0 %v3426, 124
        %v3500 = vpop.permute.xlu0 %3499
        %3501 = vrot.lane.b32.xlu0 %v3427, 124
        %v3502 = vpop.permute.xlu0 %3501
        %3503 = vrot.lane.b32.xlu0 %v3428, 124
        %v3504 = vpop.permute.xlu0 %3503
        %3505 = vrot.lane.b32.xlu0 %v3429, 124
        %v3506 = vpop.permute.xlu0 %3505
        %3507 = vrot.lane.b32.xlu0 %v3430, 124
        %v3508 = vpop.permute.xlu0 %3507
        %3509 = vrot.lane.b32.xlu0 %v3431, 124
        %v3510 = vpop.permute.xlu0 %3509
        %3511 = vrot.lane.b32.xlu0 %v3432, 124
        %v3512 = vpop.permute.xlu0 %3511
        %3513 = vrot.lane.b32.xlu0 %v3433, 124
        %v3514 = vpop.permute.xlu0 %3513
        %3515 = vrot.lane.b32.xlu0 %v3434, 124
        %v3516 = vpop.permute.xlu0 %3515
        %3517 = vrot.lane.b32.xlu0 %v3435, 124
        %v3518 = vpop.permute.xlu0 %3517
        %3519 = vrot.lane.b32.xlu0 %v3436, 124
        %v3520 = vpop.permute.xlu0 %3519
        %3521 = vrot.lane.b32.xlu0 %v3437, 124
        %v3522 = vpop.permute.xlu0 %3521
        %3523 = vrot.lane.b32.xlu0 %v3438, 124
        %v3524 = vpop.permute.xlu0 %3523
        %3525 = vrot.lane.b32.xlu0 %v3439, 124
        %v3526 = vpop.permute.xlu0 %3525
        %3527 = vrot.lane.b32.xlu0 %v3440, 124
        %v3528 = vpop.permute.xlu0 %3527
        %3529 = vrot.lane.b32.xlu0 %v3441, 124
        %v3530 = vpop.permute.xlu0 %3529
        %3531 = vrot.lane.b32.xlu0 %v3442, 124
        %v3532 = vpop.permute.xlu0 %3531
        %3533 = vrot.lane.b32.xlu0 %v3443, 124
        %v3534 = vpop.permute.xlu0 %3533
        %3535 = vrot.lane.b32.xlu0 %v3444, 124
        %v3536 = vpop.permute.xlu0 %3535
        %3537 = vrot.lane.b32.xlu0 %v3445, 124
        %v3538 = vpop.permute.xlu0 %3537
        %3539 = vrot.lane.b32.xlu0 %v3446, 124
        %v3540 = vpop.permute.xlu0 %3539
        %3541 = vrot.lane.b32.xlu0 %v3447, 124
        %v3542 = vpop.permute.xlu0 %3541
        %3543 = vrot.lane.b32.xlu0 %v3448, 124
        %v3544 = vpop.permute.xlu0 %3543
        %v3577 = vadd.f32 %v3385, %v3482
        %v3578 = vadd.f32 %v3386, %v3484
        %v3579 = vadd.f32 %v3387, %v3486
        %v3580 = vadd.f32 %v3388, %v3488
        %v3581 = vadd.f32 %v3389, %v3490
        %v3582 = vadd.f32 %v3390, %v3492
        %v3583 = vadd.f32 %v3391, %v3494
        %v3584 = vadd.f32 %v3392, %v3496
        %v3585 = vadd.f32 %v3393, %v3498
        %v3586 = vadd.f32 %v3394, %v3500
        %v3587 = vadd.f32 %v3395, %v3502
        %v3588 = vadd.f32 %v3396, %v3504
        %v3589 = vadd.f32 %v3397, %v3506
        %v3590 = vadd.f32 %v3398, %v3508
        %v3591 = vadd.f32 %v3399, %v3510
        %v3592 = vadd.f32 %v3400, %v3512
        %v3593 = vadd.f32 %v3401, %v3514
        %v3594 = vadd.f32 %v3402, %v3516
        %v3595 = vadd.f32 %v3403, %v3518
        %v3596 = vadd.f32 %v3404, %v3520
        %v3597 = vadd.f32 %v3405, %v3522
        %v3598 = vadd.f32 %v3406, %v3524
        %v3599 = vadd.f32 %v3407, %v3526
        %v3600 = vadd.f32 %v3408, %v3528
        %v3601 = vadd.f32 %v3409, %v3530
        %v3602 = vadd.f32 %v3410, %v3532
        %v3603 = vadd.f32 %v3411, %v3534
        %v3604 = vadd.f32 %v3412, %v3536
        %v3605 = vadd.f32 %v3413, %v3538
        %v3606 = vadd.f32 %v3414, %v3540
        %v3607 = vadd.f32 %v3415, %v3542
        %v3608 = vadd.f32 %v3416, %v3544
        %v3609 = vmul.f32 %v3577, 0.5
        %v3610 = vmul.f32 %v3578, 0.5
        %v3611 = vmul.f32 %v3579, 0.5
        %v3612 = vmul.f32 %v3580, 0.5
        %v3613 = vmul.f32 %v3581, 0.5
        %v3614 = vmul.f32 %v3582, 0.5
        %v3615 = vmul.f32 %v3583, 0.5
        %v3616 = vmul.f32 %v3584, 0.5
        %v3617 = vmul.f32 %v3585, 0.5
        %v3618 = vmul.f32 %v3586, 0.5
        %v3619 = vmul.f32 %v3587, 0.5
        %v3620 = vmul.f32 %v3588, 0.5
        %v3621 = vmul.f32 %v3589, 0.5
        %v3622 = vmul.f32 %v3590, 0.5
        %v3623 = vmul.f32 %v3591, 0.5
        %v3624 = vmul.f32 %v3592, 0.5
        %v3625 = vmul.f32 %v3593, 0.5
        %v3626 = vmul.f32 %v3594, 0.5
        %v3627 = vmul.f32 %v3595, 0.5
        %v3628 = vmul.f32 %v3596, 0.5
        %v3629 = vmul.f32 %v3597, 0.5
        %v3630 = vmul.f32 %v3598, 0.5
        %v3631 = vmul.f32 %v3599, 0.5
        %v3632 = vmul.f32 %v3600, 0.5
        %v3633 = vmul.f32 %v3601, 0.5
        %v3634 = vmul.f32 %v3602, 0.5
        %v3635 = vmul.f32 %v3603, 0.5
        %v3636 = vmul.f32 %v3604, 0.5
        %v3637 = vmul.f32 %v3605, 0.5
        %v3638 = vmul.f32 %v3606, 0.5
        %v3639 = vmul.f32 %v3607, 0.5
        %v3640 = vmul.f32 %v3608, 0.5
        %v3641 = vmul.f32 %v3577, 0.70710677
        %v3642 = vmul.f32 %v3578, 0.70710677
        %v3643 = vmul.f32 %v3579, 0.70710677
        %v3644 = vmul.f32 %v3580, 0.70710677
        %v3645 = vmul.f32 %v3581, 0.70710677
        %v3646 = vmul.f32 %v3582, 0.70710677
        %v3647 = vmul.f32 %v3583, 0.70710677
        %v3648 = vmul.f32 %v3584, 0.70710677
        %v3649 = vmul.f32 %v3585, 0.70710677
        %v3650 = vmul.f32 %v3586, 0.70710677
        %v3651 = vmul.f32 %v3587, 0.70710677
        %v3652 = vmul.f32 %v3588, 0.70710677
        %v3653 = vmul.f32 %v3589, 0.70710677
        %v3654 = vmul.f32 %v3590, 0.70710677
        %v3655 = vmul.f32 %v3591, 0.70710677
        %v3656 = vmul.f32 %v3592, 0.70710677
        %v3657 = vmul.f32 %v3593, 0.70710677
        %v3658 = vmul.f32 %v3594, 0.70710677
        %v3659 = vmul.f32 %v3595, 0.70710677
        %v3660 = vmul.f32 %v3596, 0.70710677
        %v3661 = vmul.f32 %v3597, 0.70710677
        %v3662 = vmul.f32 %v3598, 0.70710677
        %v3663 = vmul.f32 %v3599, 0.70710677
        %v3664 = vmul.f32 %v3600, 0.70710677
        %v3665 = vmul.f32 %v3601, 0.70710677
        %v3666 = vmul.f32 %v3602, 0.70710677
        %v3667 = vmul.f32 %v3603, 0.70710677
        %v3668 = vmul.f32 %v3604, 0.70710677
        %v3669 = vmul.f32 %v3605, 0.70710677
        %v3670 = vmul.f32 %v3606, 0.70710677
        %v3671 = vmul.f32 %v3607, 0.70710677
        %v3672 = vmul.f32 %v3608, 0.70710677
        %v3673 = vand.u32 2147483647, %v3641
        %v3674 = vand.u32 2147483647, %v3642
        %v3675 = vand.u32 2147483647, %v3643
        %v3676 = vand.u32 2147483647, %v3644
        %v3677 = vand.u32 2147483647, %v3645
        %v3678 = vand.u32 2147483647, %v3646
        %v3679 = vand.u32 2147483647, %v3647
        %v3680 = vand.u32 2147483647, %v3648
        %v3681 = vand.u32 2147483647, %v3649
        %v3682 = vand.u32 2147483647, %v3650
        %v3683 = vand.u32 2147483647, %v3651
        %v3684 = vand.u32 2147483647, %v3652
        %v3685 = vand.u32 2147483647, %v3653
        %v3686 = vand.u32 2147483647, %v3654
        %v3687 = vand.u32 2147483647, %v3655
        %v3688 = vand.u32 2147483647, %v3656
        %v3689 = vand.u32 2147483647, %v3657
        %v3690 = vand.u32 2147483647, %v3658
        %v3691 = vand.u32 2147483647, %v3659
        %v3692 = vand.u32 2147483647, %v3660
        %v3693 = vand.u32 2147483647, %v3661
        %v3694 = vand.u32 2147483647, %v3662
        %v3695 = vand.u32 2147483647, %v3663
        %v3696 = vand.u32 2147483647, %v3664
        %v3697 = vand.u32 2147483647, %v3665
        %v3698 = vand.u32 2147483647, %v3666
        %v3699 = vand.u32 2147483647, %v3667
        %v3700 = vand.u32 2147483647, %v3668
        %v3701 = vand.u32 2147483647, %v3669
        %v3702 = vand.u32 2147483647, %v3670
        %v3703 = vand.u32 2147483647, %v3671
        %v3704 = vand.u32 2147483647, %v3672
        %v3705 = vmul.f32 %v3673, 0.3275911
        %v3706 = vmul.f32 %v3674, 0.3275911
        %v3707 = vmul.f32 %v3675, 0.3275911
        %v3708 = vmul.f32 %v3676, 0.3275911
        %v3709 = vmul.f32 %v3677, 0.3275911
        %v3710 = vmul.f32 %v3678, 0.3275911
        %v3711 = vmul.f32 %v3679, 0.3275911
        %v3712 = vmul.f32 %v3680, 0.3275911
        %v3713 = vmul.f32 %v3681, 0.3275911
        %v3714 = vmul.f32 %v3682, 0.3275911
        %v3715 = vmul.f32 %v3683, 0.3275911
        %v3716 = vmul.f32 %v3684, 0.3275911
        %v3717 = vmul.f32 %v3685, 0.3275911
        %v3718 = vmul.f32 %v3686, 0.3275911
        %v3719 = vmul.f32 %v3687, 0.3275911
        %v3720 = vmul.f32 %v3688, 0.3275911
        %v3721 = vmul.f32 %v3689, 0.3275911
        %v3722 = vmul.f32 %v3690, 0.3275911
        %v3723 = vmul.f32 %v3691, 0.3275911
        %v3724 = vmul.f32 %v3692, 0.3275911
        %v3725 = vmul.f32 %v3693, 0.3275911
        %v3726 = vmul.f32 %v3694, 0.3275911
        %v3727 = vmul.f32 %v3695, 0.3275911
        %v3728 = vmul.f32 %v3696, 0.3275911
        %v3729 = vmul.f32 %v3697, 0.3275911
        %v3730 = vmul.f32 %v3698, 0.3275911
        %v3731 = vmul.f32 %v3699, 0.3275911
        %v3732 = vmul.f32 %v3700, 0.3275911
        %v3733 = vmul.f32 %v3701, 0.3275911
        %v3734 = vmul.f32 %v3702, 0.3275911
        %v3735 = vmul.f32 %v3703, 0.3275911
        %v3736 = vmul.f32 %v3704, 0.3275911
        %v3737 = vadd.f32 %v3705, 1.0
        %v3738 = vadd.f32 %v3706, 1.0
        %v3739 = vadd.f32 %v3707, 1.0
        %v3740 = vadd.f32 %v3708, 1.0
        %v3741 = vadd.f32 %v3709, 1.0
        %v3742 = vadd.f32 %v3710, 1.0
        %v3743 = vadd.f32 %v3711, 1.0
        %v3744 = vadd.f32 %v3712, 1.0
        %v3745 = vadd.f32 %v3713, 1.0
        %v3746 = vadd.f32 %v3714, 1.0
        %v3747 = vadd.f32 %v3715, 1.0
        %v3748 = vadd.f32 %v3716, 1.0
        %v3749 = vadd.f32 %v3717, 1.0
        %v3750 = vadd.f32 %v3718, 1.0
        %v3751 = vadd.f32 %v3719, 1.0
        %v3752 = vadd.f32 %v3720, 1.0
        %v3753 = vadd.f32 %v3721, 1.0
        %v3754 = vadd.f32 %v3722, 1.0
        %v3755 = vadd.f32 %v3723, 1.0
        %v3756 = vadd.f32 %v3724, 1.0
        %v3757 = vadd.f32 %v3725, 1.0
        %v3758 = vadd.f32 %v3726, 1.0
        %v3759 = vadd.f32 %v3727, 1.0
        %v3760 = vadd.f32 %v3728, 1.0
        %v3761 = vadd.f32 %v3729, 1.0
        %v3762 = vadd.f32 %v3730, 1.0
        %v3763 = vadd.f32 %v3731, 1.0
        %v3764 = vadd.f32 %v3732, 1.0
        %v3765 = vadd.f32 %v3733, 1.0
        %v3766 = vadd.f32 %v3734, 1.0
        %v3767 = vadd.f32 %v3735, 1.0
        %v3768 = vadd.f32 %v3736, 1.0
        %v3769 = vrcp.pop %v3737
        %v3770 = vmul.f32 %v3737, %v3769
        %v3771 = vsub.f32 1.0, %v3770
        %v3772 = vmul.f32 %v3769, %v3771
        %v3773 = vadd.f32 %v3769, %v3772
        %vm3774 = vweird.f32 %v3737
        %vm3775 = vweird.f32 %v3769
        %vm3776 = vmor %vm3774, %vm3775
        %v3777 = vsel %vm3776, %v3769, %v3773
        %v3778 = vand.u32 2147483647, %v3737
        %vm3779 = vcmp.eq.f32.partialorder %v3778, 8.507059e+37
        %v3780 = vand.u32 %v3737, 2147483648
        %v3781 = vor.u32 1.1754944e-38, %v3780
        %v3782 = vsel %vm3779, %v3781, %v3777
        %v3783 = vmul.f32 1.0, %v3782
        %v3784 = vrcp.pop %v3738
        %v3785 = vmul.f32 %v3738, %v3784
        %v3786 = vsub.f32 1.0, %v3785
        %v3787 = vmul.f32 %v3784, %v3786
        %v3788 = vadd.f32 %v3784, %v3787
        %vm3789 = vweird.f32 %v3738
        %vm3790 = vweird.f32 %v3784
        %vm3791 = vmor %vm3789, %vm3790
        %v3792 = vsel %vm3791, %v3784, %v3788
        %v3793 = vand.u32 2147483647, %v3738
        %vm3794 = vcmp.eq.f32.partialorder %v3793, 8.507059e+37
        %v3795 = vand.u32 %v3738, 2147483648
        %v3796 = vor.u32 1.1754944e-38, %v3795
        %v3797 = vsel %vm3794, %v3796, %v3792
        %v3798 = vmul.f32 1.0, %v3797
        %v3799 = vrcp.pop %v3739
        %v3800 = vmul.f32 %v3739, %v3799
        %v3801 = vsub.f32 1.0, %v3800
        %v3802 = vmul.f32 %v3799, %v3801
        %v3803 = vadd.f32 %v3799, %v3802
        %vm3804 = vweird.f32 %v3739
        %vm3805 = vweird.f32 %v3799
        %vm3806 = vmor %vm3804, %vm3805
        %v3807 = vsel %vm3806, %v3799, %v3803
        %v3808 = vand.u32 2147483647, %v3739
        %vm3809 = vcmp.eq.f32.partialorder %v3808, 8.507059e+37
        %v3810 = vand.u32 %v3739, 2147483648
        %v3811 = vor.u32 1.1754944e-38, %v3810
        %v3812 = vsel %vm3809, %v3811, %v3807
        %v3813 = vmul.f32 1.0, %v3812
        %v3814 = vrcp.pop %v3740
        %v3815 = vmul.f32 %v3740, %v3814
        %v3816 = vsub.f32 1.0, %v3815
        %v3817 = vmul.f32 %v3814, %v3816
        %v3818 = vadd.f32 %v3814, %v3817
        %vm3819 = vweird.f32 %v3740
        %vm3820 = vweird.f32 %v3814
        %vm3821 = vmor %vm3819, %vm3820
        %v3822 = vsel %vm3821, %v3814, %v3818
        %v3823 = vand.u32 2147483647, %v3740
        %vm3824 = vcmp.eq.f32.partialorder %v3823, 8.507059e+37
        %v3825 = vand.u32 %v3740, 2147483648
        %v3826 = vor.u32 1.1754944e-38, %v3825
        %v3827 = vsel %vm3824, %v3826, %v3822
        %v3828 = vmul.f32 1.0, %v3827
        %v3829 = vrcp.pop %v3741
        %v3830 = vmul.f32 %v3741, %v3829
        %v3831 = vsub.f32 1.0, %v3830
        %v3832 = vmul.f32 %v3829, %v3831
        %v3833 = vadd.f32 %v3829, %v3832
        %vm3834 = vweird.f32 %v3741
        %vm3835 = vweird.f32 %v3829
        %vm3836 = vmor %vm3834, %vm3835
        %v3837 = vsel %vm3836, %v3829, %v3833
        %v3838 = vand.u32 2147483647, %v3741
        %vm3839 = vcmp.eq.f32.partialorder %v3838, 8.507059e+37
        %v3840 = vand.u32 %v3741, 2147483648
        %v3841 = vor.u32 1.1754944e-38, %v3840
        %v3842 = vsel %vm3839, %v3841, %v3837
        %v3843 = vmul.f32 1.0, %v3842
        %v3844 = vrcp.pop %v3742
        %v3845 = vmul.f32 %v3742, %v3844
        %v3846 = vsub.f32 1.0, %v3845
        %v3847 = vmul.f32 %v3844, %v3846
        %v3848 = vadd.f32 %v3844, %v3847
        %vm3849 = vweird.f32 %v3742
        %vm3850 = vweird.f32 %v3844
        %vm3851 = vmor %vm3849, %vm3850
        %v3852 = vsel %vm3851, %v3844, %v3848
        %v3853 = vand.u32 2147483647, %v3742
        %vm3854 = vcmp.eq.f32.partialorder %v3853, 8.507059e+37
        %v3855 = vand.u32 %v3742, 2147483648
        %v3856 = vor.u32 1.1754944e-38, %v3855
        %v3857 = vsel %vm3854, %v3856, %v3852
        %v3858 = vmul.f32 1.0, %v3857
        %v3859 = vrcp.pop %v3743
        %v3860 = vmul.f32 %v3743, %v3859
        %v3861 = vsub.f32 1.0, %v3860
        %v3862 = vmul.f32 %v3859, %v3861
        %v3863 = vadd.f32 %v3859, %v3862
        %vm3864 = vweird.f32 %v3743
        %vm3865 = vweird.f32 %v3859
        %vm3866 = vmor %vm3864, %vm3865
        %v3867 = vsel %vm3866, %v3859, %v3863
        %v3868 = vand.u32 2147483647, %v3743
        %vm3869 = vcmp.eq.f32.partialorder %v3868, 8.507059e+37
        %v3870 = vand.u32 %v3743, 2147483648
        %v3871 = vor.u32 1.1754944e-38, %v3870
        %v3872 = vsel %vm3869, %v3871, %v3867
        %v3873 = vmul.f32 1.0, %v3872
        %v3874 = vrcp.pop %v3744
        %v3875 = vmul.f32 %v3744, %v3874
        %v3876 = vsub.f32 1.0, %v3875
        %v3877 = vmul.f32 %v3874, %v3876
        %v3878 = vadd.f32 %v3874, %v3877
        %vm3879 = vweird.f32 %v3744
        %vm3880 = vweird.f32 %v3874
        %vm3881 = vmor %vm3879, %vm3880
        %v3882 = vsel %vm3881, %v3874, %v3878
        %v3883 = vand.u32 2147483647, %v3744
        %vm3884 = vcmp.eq.f32.partialorder %v3883, 8.507059e+37
        %v3885 = vand.u32 %v3744, 2147483648
        %v3886 = vor.u32 1.1754944e-38, %v3885
        %v3887 = vsel %vm3884, %v3886, %v3882
        %v3888 = vmul.f32 1.0, %v3887
        %v3889 = vrcp.pop %v3745
        %v3890 = vmul.f32 %v3745, %v3889
        %v3891 = vsub.f32 1.0, %v3890
        %v3892 = vmul.f32 %v3889, %v3891
        %v3893 = vadd.f32 %v3889, %v3892
        %vm3894 = vweird.f32 %v3745
        %vm3895 = vweird.f32 %v3889
        %vm3896 = vmor %vm3894, %vm3895
        %v3897 = vsel %vm3896, %v3889, %v3893
        %v3898 = vand.u32 2147483647, %v3745
        %vm3899 = vcmp.eq.f32.partialorder %v3898, 8.507059e+37
        %v3900 = vand.u32 %v3745, 2147483648
        %v3901 = vor.u32 1.1754944e-38, %v3900
        %v3902 = vsel %vm3899, %v3901, %v3897
        %v3903 = vmul.f32 1.0, %v3902
        %v3904 = vrcp.pop %v3746
        %v3905 = vmul.f32 %v3746, %v3904
        %v3906 = vsub.f32 1.0, %v3905
        %v3907 = vmul.f32 %v3904, %v3906
        %v3908 = vadd.f32 %v3904, %v3907
        %vm3909 = vweird.f32 %v3746
        %vm3910 = vweird.f32 %v3904
        %vm3911 = vmor %vm3909, %vm3910
        %v3912 = vsel %vm3911, %v3904, %v3908
        %v3913 = vand.u32 2147483647, %v3746
        %vm3914 = vcmp.eq.f32.partialorder %v3913, 8.507059e+37
        %v3915 = vand.u32 %v3746, 2147483648
        %v3916 = vor.u32 1.1754944e-38, %v3915
        %v3917 = vsel %vm3914, %v3916, %v3912
        %v3918 = vmul.f32 1.0, %v3917
        %v3919 = vrcp.pop %v3747
        %v3920 = vmul.f32 %v3747, %v3919
        %v3921 = vsub.f32 1.0, %v3920
        %v3922 = vmul.f32 %v3919, %v3921
        %v3923 = vadd.f32 %v3919, %v3922
        %vm3924 = vweird.f32 %v3747
        %vm3925 = vweird.f32 %v3919
        %vm3926 = vmor %vm3924, %vm3925
        %v3927 = vsel %vm3926, %v3919, %v3923
        %v3928 = vand.u32 2147483647, %v3747
        %vm3929 = vcmp.eq.f32.partialorder %v3928, 8.507059e+37
        %v3930 = vand.u32 %v3747, 2147483648
        %v3931 = vor.u32 1.1754944e-38, %v3930
        %v3932 = vsel %vm3929, %v3931, %v3927
        %v3933 = vmul.f32 1.0, %v3932
        %v3934 = vrcp.pop %v3748
        %v3935 = vmul.f32 %v3748, %v3934
        %v3936 = vsub.f32 1.0, %v3935
        %v3937 = vmul.f32 %v3934, %v3936
        %v3938 = vadd.f32 %v3934, %v3937
        %vm3939 = vweird.f32 %v3748
        %vm3940 = vweird.f32 %v3934
        %vm3941 = vmor %vm3939, %vm3940
        %v3942 = vsel %vm3941, %v3934, %v3938
        %v3943 = vand.u32 2147483647, %v3748
        %vm3944 = vcmp.eq.f32.partialorder %v3943, 8.507059e+37
        %v3945 = vand.u32 %v3748, 2147483648
        %v3946 = vor.u32 1.1754944e-38, %v3945
        %v3947 = vsel %vm3944, %v3946, %v3942
        %v3948 = vmul.f32 1.0, %v3947
        %v3949 = vrcp.pop %v3749
        %v3950 = vmul.f32 %v3749, %v3949
        %v3951 = vsub.f32 1.0, %v3950
        %v3952 = vmul.f32 %v3949, %v3951
        %v3953 = vadd.f32 %v3949, %v3952
        %vm3954 = vweird.f32 %v3749
        %vm3955 = vweird.f32 %v3949
        %vm3956 = vmor %vm3954, %vm3955
        %v3957 = vsel %vm3956, %v3949, %v3953
        %v3958 = vand.u32 2147483647, %v3749
        %vm3959 = vcmp.eq.f32.partialorder %v3958, 8.507059e+37
        %v3960 = vand.u32 %v3749, 2147483648
        %v3961 = vor.u32 1.1754944e-38, %v3960
        %v3962 = vsel %vm3959, %v3961, %v3957
        %v3963 = vmul.f32 1.0, %v3962
        %v3964 = vrcp.pop %v3750
        %v3965 = vmul.f32 %v3750, %v3964
        %v3966 = vsub.f32 1.0, %v3965
        %v3967 = vmul.f32 %v3964, %v3966
        %v3968 = vadd.f32 %v3964, %v3967
        %vm3969 = vweird.f32 %v3750
        %vm3970 = vweird.f32 %v3964
        %vm3971 = vmor %vm3969, %vm3970
        %v3972 = vsel %vm3971, %v3964, %v3968
        %v3973 = vand.u32 2147483647, %v3750
        %vm3974 = vcmp.eq.f32.partialorder %v3973, 8.507059e+37
        %v3975 = vand.u32 %v3750, 2147483648
        %v3976 = vor.u32 1.1754944e-38, %v3975
        %v3977 = vsel %vm3974, %v3976, %v3972
        %v3978 = vmul.f32 1.0, %v3977
        %v3979 = vrcp.pop %v3751
        %v3980 = vmul.f32 %v3751, %v3979
        %v3981 = vsub.f32 1.0, %v3980
        %v3982 = vmul.f32 %v3979, %v3981
        %v3983 = vadd.f32 %v3979, %v3982
        %vm3984 = vweird.f32 %v3751
        %vm3985 = vweird.f32 %v3979
        %vm3986 = vmor %vm3984, %vm3985
        %v3987 = vsel %vm3986, %v3979, %v3983
        %v3988 = vand.u32 2147483647, %v3751
        %vm3989 = vcmp.eq.f32.partialorder %v3988, 8.507059e+37
        %v3990 = vand.u32 %v3751, 2147483648
        %v3991 = vor.u32 1.1754944e-38, %v3990
        %v3992 = vsel %vm3989, %v3991, %v3987
        %v3993 = vmul.f32 1.0, %v3992
        %v3994 = vrcp.pop %v3752
        %v3995 = vmul.f32 %v3752, %v3994
        %v3996 = vsub.f32 1.0, %v3995
        %v3997 = vmul.f32 %v3994, %v3996
        %v3998 = vadd.f32 %v3994, %v3997
        %vm3999 = vweird.f32 %v3752
        %vm4000 = vweird.f32 %v3994
        %vm4001 = vmor %vm3999, %vm4000
        %v4002 = vsel %vm4001, %v3994, %v3998
        %v4003 = vand.u32 2147483647, %v3752
        %vm4004 = vcmp.eq.f32.partialorder %v4003, 8.507059e+37
        %v4005 = vand.u32 %v3752, 2147483648
        %v4006 = vor.u32 1.1754944e-38, %v4005
        %v4007 = vsel %vm4004, %v4006, %v4002
        %v4008 = vmul.f32 1.0, %v4007
        %v4009 = vrcp.pop %v3753
        %v4010 = vmul.f32 %v3753, %v4009
        %v4011 = vsub.f32 1.0, %v4010
        %v4012 = vmul.f32 %v4009, %v4011
        %v4013 = vadd.f32 %v4009, %v4012
        %vm4014 = vweird.f32 %v3753
        %vm4015 = vweird.f32 %v4009
        %vm4016 = vmor %vm4014, %vm4015
        %v4017 = vsel %vm4016, %v4009, %v4013
        %v4018 = vand.u32 2147483647, %v3753
        %vm4019 = vcmp.eq.f32.partialorder %v4018, 8.507059e+37
        %v4020 = vand.u32 %v3753, 2147483648
        %v4021 = vor.u32 1.1754944e-38, %v4020
        %v4022 = vsel %vm4019, %v4021, %v4017
        %v4023 = vmul.f32 1.0, %v4022
        %v4024 = vrcp.pop %v3754
        %v4025 = vmul.f32 %v3754, %v4024
        %v4026 = vsub.f32 1.0, %v4025
        %v4027 = vmul.f32 %v4024, %v4026
        %v4028 = vadd.f32 %v4024, %v4027
        %vm4029 = vweird.f32 %v3754
        %vm4030 = vweird.f32 %v4024
        %vm4031 = vmor %vm4029, %vm4030
        %v4032 = vsel %vm4031, %v4024, %v4028
        %v4033 = vand.u32 2147483647, %v3754
        %vm4034 = vcmp.eq.f32.partialorder %v4033, 8.507059e+37
        %v4035 = vand.u32 %v3754, 2147483648
        %v4036 = vor.u32 1.1754944e-38, %v4035
        %v4037 = vsel %vm4034, %v4036, %v4032
        %v4038 = vmul.f32 1.0, %v4037
        %v4039 = vrcp.pop %v3755
        %v4040 = vmul.f32 %v3755, %v4039
        %v4041 = vsub.f32 1.0, %v4040
        %v4042 = vmul.f32 %v4039, %v4041
        %v4043 = vadd.f32 %v4039, %v4042
        %vm4044 = vweird.f32 %v3755
        %vm4045 = vweird.f32 %v4039
        %vm4046 = vmor %vm4044, %vm4045
        %v4047 = vsel %vm4046, %v4039, %v4043
        %v4048 = vand.u32 2147483647, %v3755
        %vm4049 = vcmp.eq.f32.partialorder %v4048, 8.507059e+37
        %v4050 = vand.u32 %v3755, 2147483648
        %v4051 = vor.u32 1.1754944e-38, %v4050
        %v4052 = vsel %vm4049, %v4051, %v4047
        %v4053 = vmul.f32 1.0, %v4052
        %v4054 = vrcp.pop %v3756
        %v4055 = vmul.f32 %v3756, %v4054
        %v4056 = vsub.f32 1.0, %v4055
        %v4057 = vmul.f32 %v4054, %v4056
        %v4058 = vadd.f32 %v4054, %v4057
        %vm4059 = vweird.f32 %v3756
        %vm4060 = vweird.f32 %v4054
        %vm4061 = vmor %vm4059, %vm4060
        %v4062 = vsel %vm4061, %v4054, %v4058
        %v4063 = vand.u32 2147483647, %v3756
        %vm4064 = vcmp.eq.f32.partialorder %v4063, 8.507059e+37
        %v4065 = vand.u32 %v3756, 2147483648
        %v4066 = vor.u32 1.1754944e-38, %v4065
        %v4067 = vsel %vm4064, %v4066, %v4062
        %v4068 = vmul.f32 1.0, %v4067
        %v4069 = vrcp.pop %v3757
        %v4070 = vmul.f32 %v3757, %v4069
        %v4071 = vsub.f32 1.0, %v4070
        %v4072 = vmul.f32 %v4069, %v4071
        %v4073 = vadd.f32 %v4069, %v4072
        %vm4074 = vweird.f32 %v3757
        %vm4075 = vweird.f32 %v4069
        %vm4076 = vmor %vm4074, %vm4075
        %v4077 = vsel %vm4076, %v4069, %v4073
        %v4078 = vand.u32 2147483647, %v3757
        %vm4079 = vcmp.eq.f32.partialorder %v4078, 8.507059e+37
        %v4080 = vand.u32 %v3757, 2147483648
        %v4081 = vor.u32 1.1754944e-38, %v4080
        %v4082 = vsel %vm4079, %v4081, %v4077
        %v4083 = vmul.f32 1.0, %v4082
        %v4084 = vrcp.pop %v3758
        %v4085 = vmul.f32 %v3758, %v4084
        %v4086 = vsub.f32 1.0, %v4085
        %v4087 = vmul.f32 %v4084, %v4086
        %v4088 = vadd.f32 %v4084, %v4087
        %vm4089 = vweird.f32 %v3758
        %vm4090 = vweird.f32 %v4084
        %vm4091 = vmor %vm4089, %vm4090
        %v4092 = vsel %vm4091, %v4084, %v4088
        %v4093 = vand.u32 2147483647, %v3758
        %vm4094 = vcmp.eq.f32.partialorder %v4093, 8.507059e+37
        %v4095 = vand.u32 %v3758, 2147483648
        %v4096 = vor.u32 1.1754944e-38, %v4095
        %v4097 = vsel %vm4094, %v4096, %v4092
        %v4098 = vmul.f32 1.0, %v4097
        %v4099 = vrcp.pop %v3759
        %v4100 = vmul.f32 %v3759, %v4099
        %v4101 = vsub.f32 1.0, %v4100
        %v4102 = vmul.f32 %v4099, %v4101
        %v4103 = vadd.f32 %v4099, %v4102
        %vm4104 = vweird.f32 %v3759
        %vm4105 = vweird.f32 %v4099
        %vm4106 = vmor %vm4104, %vm4105
        %v4107 = vsel %vm4106, %v4099, %v4103
        %v4108 = vand.u32 2147483647, %v3759
        %vm4109 = vcmp.eq.f32.partialorder %v4108, 8.507059e+37
        %v4110 = vand.u32 %v3759, 2147483648
        %v4111 = vor.u32 1.1754944e-38, %v4110
        %v4112 = vsel %vm4109, %v4111, %v4107
        %v4113 = vmul.f32 1.0, %v4112
        %v4114 = vrcp.pop %v3760
        %v4115 = vmul.f32 %v3760, %v4114
        %v4116 = vsub.f32 1.0, %v4115
        %v4117 = vmul.f32 %v4114, %v4116
        %v4118 = vadd.f32 %v4114, %v4117
        %vm4119 = vweird.f32 %v3760
        %vm4120 = vweird.f32 %v4114
        %vm4121 = vmor %vm4119, %vm4120
        %v4122 = vsel %vm4121, %v4114, %v4118
        %v4123 = vand.u32 2147483647, %v3760
        %vm4124 = vcmp.eq.f32.partialorder %v4123, 8.507059e+37
        %v4125 = vand.u32 %v3760, 2147483648
        %v4126 = vor.u32 1.1754944e-38, %v4125
        %v4127 = vsel %vm4124, %v4126, %v4122
        %v4128 = vmul.f32 1.0, %v4127
        %v4129 = vrcp.pop %v3761
        %v4130 = vmul.f32 %v3761, %v4129
        %v4131 = vsub.f32 1.0, %v4130
        %v4132 = vmul.f32 %v4129, %v4131
        %v4133 = vadd.f32 %v4129, %v4132
        %vm4134 = vweird.f32 %v3761
        %vm4135 = vweird.f32 %v4129
        %vm4136 = vmor %vm4134, %vm4135
        %v4137 = vsel %vm4136, %v4129, %v4133
        %v4138 = vand.u32 2147483647, %v3761
        %vm4139 = vcmp.eq.f32.partialorder %v4138, 8.507059e+37
        %v4140 = vand.u32 %v3761, 2147483648
        %v4141 = vor.u32 1.1754944e-38, %v4140
        %v4142 = vsel %vm4139, %v4141, %v4137
        %v4143 = vmul.f32 1.0, %v4142
        %v4144 = vrcp.pop %v3762
        %v4145 = vmul.f32 %v3762, %v4144
        %v4146 = vsub.f32 1.0, %v4145
        %v4147 = vmul.f32 %v4144, %v4146
        %v4148 = vadd.f32 %v4144, %v4147
        %vm4149 = vweird.f32 %v3762
        %vm4150 = vweird.f32 %v4144
        %vm4151 = vmor %vm4149, %vm4150
        %v4152 = vsel %vm4151, %v4144, %v4148
        %v4153 = vand.u32 2147483647, %v3762
        %vm4154 = vcmp.eq.f32.partialorder %v4153, 8.507059e+37
        %v4155 = vand.u32 %v3762, 2147483648
        %v4156 = vor.u32 1.1754944e-38, %v4155
        %v4157 = vsel %vm4154, %v4156, %v4152
        %v4158 = vmul.f32 1.0, %v4157
        %v4159 = vrcp.pop %v3763
        %v4160 = vmul.f32 %v3763, %v4159
        %v4161 = vsub.f32 1.0, %v4160
        %v4162 = vmul.f32 %v4159, %v4161
        %v4163 = vadd.f32 %v4159, %v4162
        %vm4164 = vweird.f32 %v3763
        %vm4165 = vweird.f32 %v4159
        %vm4166 = vmor %vm4164, %vm4165
        %v4167 = vsel %vm4166, %v4159, %v4163
        %v4168 = vand.u32 2147483647, %v3763
        %vm4169 = vcmp.eq.f32.partialorder %v4168, 8.507059e+37
        %v4170 = vand.u32 %v3763, 2147483648
        %v4171 = vor.u32 1.1754944e-38, %v4170
        %v4172 = vsel %vm4169, %v4171, %v4167
        %v4173 = vmul.f32 1.0, %v4172
        %v4174 = vrcp.pop %v3764
        %v4175 = vmul.f32 %v3764, %v4174
        %v4176 = vsub.f32 1.0, %v4175
        %v4177 = vmul.f32 %v4174, %v4176
        %v4178 = vadd.f32 %v4174, %v4177
        %vm4179 = vweird.f32 %v3764
        %vm4180 = vweird.f32 %v4174
        %vm4181 = vmor %vm4179, %vm4180
        %v4182 = vsel %vm4181, %v4174, %v4178
        %v4183 = vand.u32 2147483647, %v3764
        %vm4184 = vcmp.eq.f32.partialorder %v4183, 8.507059e+37
        %v4185 = vand.u32 %v3764, 2147483648
        %v4186 = vor.u32 1.1754944e-38, %v4185
        %v4187 = vsel %vm4184, %v4186, %v4182
        %v4188 = vmul.f32 1.0, %v4187
        %v4189 = vrcp.pop %v3765
        %v4190 = vmul.f32 %v3765, %v4189
        %v4191 = vsub.f32 1.0, %v4190
        %v4192 = vmul.f32 %v4189, %v4191
        %v4193 = vadd.f32 %v4189, %v4192
        %vm4194 = vweird.f32 %v3765
        %vm4195 = vweird.f32 %v4189
        %vm4196 = vmor %vm4194, %vm4195
        %v4197 = vsel %vm4196, %v4189, %v4193
        %v4198 = vand.u32 2147483647, %v3765
        %vm4199 = vcmp.eq.f32.partialorder %v4198, 8.507059e+37
        %v4200 = vand.u32 %v3765, 2147483648
        %v4201 = vor.u32 1.1754944e-38, %v4200
        %v4202 = vsel %vm4199, %v4201, %v4197
        %v4203 = vmul.f32 1.0, %v4202
        %v4204 = vrcp.pop %v3766
        %v4205 = vmul.f32 %v3766, %v4204
        %v4206 = vsub.f32 1.0, %v4205
        %v4207 = vmul.f32 %v4204, %v4206
        %v4208 = vadd.f32 %v4204, %v4207
        %vm4209 = vweird.f32 %v3766
        %vm4210 = vweird.f32 %v4204
        %vm4211 = vmor %vm4209, %vm4210
        %v4212 = vsel %vm4211, %v4204, %v4208
        %v4213 = vand.u32 2147483647, %v3766
        %vm4214 = vcmp.eq.f32.partialorder %v4213, 8.507059e+37
        %v4215 = vand.u32 %v3766, 2147483648
        %v4216 = vor.u32 1.1754944e-38, %v4215
        %v4217 = vsel %vm4214, %v4216, %v4212
        %v4218 = vmul.f32 1.0, %v4217
        %v4219 = vrcp.pop %v3767
        %v4220 = vmul.f32 %v3767, %v4219
        %v4221 = vsub.f32 1.0, %v4220
        %v4222 = vmul.f32 %v4219, %v4221
        %v4223 = vadd.f32 %v4219, %v4222
        %vm4224 = vweird.f32 %v3767
        %vm4225 = vweird.f32 %v4219
        %vm4226 = vmor %vm4224, %vm4225
        %v4227 = vsel %vm4226, %v4219, %v4223
        %v4228 = vand.u32 2147483647, %v3767
        %vm4229 = vcmp.eq.f32.partialorder %v4228, 8.507059e+37
        %v4230 = vand.u32 %v3767, 2147483648
        %v4231 = vor.u32 1.1754944e-38, %v4230
        %v4232 = vsel %vm4229, %v4231, %v4227
        %v4233 = vmul.f32 1.0, %v4232
        %v4234 = vrcp.pop %v3768
        %v4235 = vmul.f32 %v3768, %v4234
        %v4236 = vsub.f32 1.0, %v4235
        %v4237 = vmul.f32 %v4234, %v4236
        %v4238 = vadd.f32 %v4234, %v4237
        %vm4239 = vweird.f32 %v3768
        %vm4240 = vweird.f32 %v4234
        %vm4241 = vmor %vm4239, %vm4240
        %v4242 = vsel %vm4241, %v4234, %v4238
        %v4243 = vand.u32 2147483647, %v3768
        %vm4244 = vcmp.eq.f32.partialorder %v4243, 8.507059e+37
        %v4245 = vand.u32 %v3768, 2147483648
        %v4246 = vor.u32 1.1754944e-38, %v4245
        %v4247 = vsel %vm4244, %v4246, %v4242
        %v4248 = vmul.f32 1.0, %v4247
        %v4249 = vmul.f32 %v3783, 1.0614054
        %v4250 = vmul.f32 %v3798, 1.0614054
        %v4251 = vmul.f32 %v3813, 1.0614054
        %v4252 = vmul.f32 %v3828, 1.0614054
        %v4253 = vmul.f32 %v3843, 1.0614054
        %v4254 = vmul.f32 %v3858, 1.0614054
        %v4255 = vmul.f32 %v3873, 1.0614054
        %v4256 = vmul.f32 %v3888, 1.0614054
        %v4257 = vmul.f32 %v3903, 1.0614054
        %v4258 = vmul.f32 %v3918, 1.0614054
        %v4259 = vmul.f32 %v3933, 1.0614054
        %v4260 = vmul.f32 %v3948, 1.0614054
        %v4261 = vmul.f32 %v3963, 1.0614054
        %v4262 = vmul.f32 %v3978, 1.0614054
        %v4263 = vmul.f32 %v3993, 1.0614054
        %v4264 = vmul.f32 %v4008, 1.0614054
        %v4265 = vmul.f32 %v4023, 1.0614054
        %v4266 = vmul.f32 %v4038, 1.0614054
        %v4267 = vmul.f32 %v4053, 1.0614054
        %v4268 = vmul.f32 %v4068, 1.0614054
        %v4269 = vmul.f32 %v4083, 1.0614054
        %v4270 = vmul.f32 %v4098, 1.0614054
        %v4271 = vmul.f32 %v4113, 1.0614054
        %v4272 = vmul.f32 %v4128, 1.0614054
        %v4273 = vmul.f32 %v4143, 1.0614054
        %v4274 = vmul.f32 %v4158, 1.0614054
        %v4275 = vmul.f32 %v4173, 1.0614054
        %v4276 = vmul.f32 %v4188, 1.0614054
        %v4277 = vmul.f32 %v4203, 1.0614054
        %v4278 = vmul.f32 %v4218, 1.0614054
        %v4279 = vmul.f32 %v4233, 1.0614054
        %v4280 = vmul.f32 %v4248, 1.0614054
        %v4281 = vadd.f32 %v4249, -1.4531521
        %v4282 = vadd.f32 %v4250, -1.4531521
        %v4283 = vadd.f32 %v4251, -1.4531521
        %v4284 = vadd.f32 %v4252, -1.4531521
        %v4285 = vadd.f32 %v4253, -1.4531521
        %v4286 = vadd.f32 %v4254, -1.4531521
        %v4287 = vadd.f32 %v4255, -1.4531521
        %v4288 = vadd.f32 %v4256, -1.4531521
        %v4289 = vadd.f32 %v4257, -1.4531521
        %v4290 = vadd.f32 %v4258, -1.4531521
        %v4291 = vadd.f32 %v4259, -1.4531521
        %v4292 = vadd.f32 %v4260, -1.4531521
        %v4293 = vadd.f32 %v4261, -1.4531521
        %v4294 = vadd.f32 %v4262, -1.4531521
        %v4295 = vadd.f32 %v4263, -1.4531521
        %v4296 = vadd.f32 %v4264, -1.4531521
        %v4297 = vadd.f32 %v4265, -1.4531521
        %v4298 = vadd.f32 %v4266, -1.4531521
        %v4299 = vadd.f32 %v4267, -1.4531521
        %v4300 = vadd.f32 %v4268, -1.4531521
        %v4301 = vadd.f32 %v4269, -1.4531521
        %v4302 = vadd.f32 %v4270, -1.4531521
        %v4303 = vadd.f32 %v4271, -1.4531521
        %v4304 = vadd.f32 %v4272, -1.4531521
        %v4305 = vadd.f32 %v4273, -1.4531521
        %v4306 = vadd.f32 %v4274, -1.4531521
        %v4307 = vadd.f32 %v4275, -1.4531521
        %v4308 = vadd.f32 %v4276, -1.4531521
        %v4309 = vadd.f32 %v4277, -1.4531521
        %v4310 = vadd.f32 %v4278, -1.4531521
        %v4311 = vadd.f32 %v4279, -1.4531521
        %v4312 = vadd.f32 %v4280, -1.4531521
        %v4313 = vmul.f32 %v4281, %v3783
        %v4314 = vmul.f32 %v4282, %v3798
        %v4315 = vmul.f32 %v4283, %v3813
        %v4316 = vmul.f32 %v4284, %v3828
        %v4317 = vmul.f32 %v4285, %v3843
        %v4318 = vmul.f32 %v4286, %v3858
        %v4319 = vmul.f32 %v4287, %v3873
        %v4320 = vmul.f32 %v4288, %v3888
        %v4321 = vmul.f32 %v4289, %v3903
        %v4322 = vmul.f32 %v4290, %v3918
        %v4323 = vmul.f32 %v4291, %v3933
        %v4324 = vmul.f32 %v4292, %v3948
        %v4325 = vmul.f32 %v4293, %v3963
        %v4326 = vmul.f32 %v4294, %v3978
        %v4327 = vmul.f32 %v4295, %v3993
        %v4328 = vmul.f32 %v4296, %v4008
        %v4329 = vmul.f32 %v4297, %v4023
        %v4330 = vmul.f32 %v4298, %v4038
        %v4331 = vmul.f32 %v4299, %v4053
        %v4332 = vmul.f32 %v4300, %v4068
        %v4333 = vmul.f32 %v4301, %v4083
        %v4334 = vmul.f32 %v4302, %v4098
        %v4335 = vmul.f32 %v4303, %v4113
        %v4336 = vmul.f32 %v4304, %v4128
        %v4337 = vmul.f32 %v4305, %v4143
        %v4338 = vmul.f32 %v4306, %v4158
        %v4339 = vmul.f32 %v4307, %v4173
        %v4340 = vmul.f32 %v4308, %v4188
        %v4341 = vmul.f32 %v4309, %v4203
        %v4342 = vmul.f32 %v4310, %v4218
        %v4343 = vmul.f32 %v4311, %v4233
        %v4344 = vmul.f32 %v4312, %v4248
        %v4345 = vadd.f32 %v4313, 1.4214138
        %v4346 = vadd.f32 %v4314, 1.4214138
        %v4347 = vadd.f32 %v4315, 1.4214138
        %v4348 = vadd.f32 %v4316, 1.4214138
        %v4349 = vadd.f32 %v4317, 1.4214138
        %v4350 = vadd.f32 %v4318, 1.4214138
        %v4351 = vadd.f32 %v4319, 1.4214138
        %v4352 = vadd.f32 %v4320, 1.4214138
        %v4353 = vadd.f32 %v4321, 1.4214138
        %v4354 = vadd.f32 %v4322, 1.4214138
        %v4355 = vadd.f32 %v4323, 1.4214138
        %v4356 = vadd.f32 %v4324, 1.4214138
        %v4357 = vadd.f32 %v4325, 1.4214138
        %v4358 = vadd.f32 %v4326, 1.4214138
        %v4359 = vadd.f32 %v4327, 1.4214138
        %v4360 = vadd.f32 %v4328, 1.4214138
        %v4361 = vadd.f32 %v4329, 1.4214138
        %v4362 = vadd.f32 %v4330, 1.4214138
        %v4363 = vadd.f32 %v4331, 1.4214138
        %v4364 = vadd.f32 %v4332, 1.4214138
        %v4365 = vadd.f32 %v4333, 1.4214138
        %v4366 = vadd.f32 %v4334, 1.4214138
        %v4367 = vadd.f32 %v4335, 1.4214138
        %v4368 = vadd.f32 %v4336, 1.4214138
        %v4369 = vadd.f32 %v4337, 1.4214138
        %v4370 = vadd.f32 %v4338, 1.4214138
        %v4371 = vadd.f32 %v4339, 1.4214138
        %v4372 = vadd.f32 %v4340, 1.4214138
        %v4373 = vadd.f32 %v4341, 1.4214138
        %v4374 = vadd.f32 %v4342, 1.4214138
        %v4375 = vadd.f32 %v4343, 1.4214138
        %v4376 = vadd.f32 %v4344, 1.4214138
        %v4377 = vmul.f32 %v4345, %v3783
        %v4378 = vmul.f32 %v4346, %v3798
        %v4379 = vmul.f32 %v4347, %v3813
        %v4380 = vmul.f32 %v4348, %v3828
        %v4381 = vmul.f32 %v4349, %v3843
        %v4382 = vmul.f32 %v4350, %v3858
        %v4383 = vmul.f32 %v4351, %v3873
        %v4384 = vmul.f32 %v4352, %v3888
        %v4385 = vmul.f32 %v4353, %v3903
        %v4386 = vmul.f32 %v4354, %v3918
        %v4387 = vmul.f32 %v4355, %v3933
        %v4388 = vmul.f32 %v4356, %v3948
        %v4389 = vmul.f32 %v4357, %v3963
        %v4390 = vmul.f32 %v4358, %v3978
        %v4391 = vmul.f32 %v4359, %v3993
        %v4392 = vmul.f32 %v4360, %v4008
        %v4393 = vmul.f32 %v4361, %v4023
        %v4394 = vmul.f32 %v4362, %v4038
        %v4395 = vmul.f32 %v4363, %v4053
        %v4396 = vmul.f32 %v4364, %v4068
        %v4397 = vmul.f32 %v4365, %v4083
        %v4398 = vmul.f32 %v4366, %v4098
        %v4399 = vmul.f32 %v4367, %v4113
        %v4400 = vmul.f32 %v4368, %v4128
        %v4401 = vmul.f32 %v4369, %v4143
        %v4402 = vmul.f32 %v4370, %v4158
        %v4403 = vmul.f32 %v4371, %v4173
        %v4404 = vmul.f32 %v4372, %v4188
        %v4405 = vmul.f32 %v4373, %v4203
        %v4406 = vmul.f32 %v4374, %v4218
        %v4407 = vmul.f32 %v4375, %v4233
        %v4408 = vmul.f32 %v4376, %v4248
        %v4409 = vadd.f32 %v4377, -0.28449672
        %v4410 = vadd.f32 %v4378, -0.28449672
        %v4411 = vadd.f32 %v4379, -0.28449672
        %v4412 = vadd.f32 %v4380, -0.28449672
        %v4413 = vadd.f32 %v4381, -0.28449672
        %v4414 = vadd.f32 %v4382, -0.28449672
        %v4415 = vadd.f32 %v4383, -0.28449672
        %v4416 = vadd.f32 %v4384, -0.28449672
        %v4417 = vadd.f32 %v4385, -0.28449672
        %v4418 = vadd.f32 %v4386, -0.28449672
        %v4419 = vadd.f32 %v4387, -0.28449672
        %v4420 = vadd.f32 %v4388, -0.28449672
        %v4421 = vadd.f32 %v4389, -0.28449672
        %v4422 = vadd.f32 %v4390, -0.28449672
        %v4423 = vadd.f32 %v4391, -0.28449672
        %v4424 = vadd.f32 %v4392, -0.28449672
        %v4425 = vadd.f32 %v4393, -0.28449672
        %v4426 = vadd.f32 %v4394, -0.28449672
        %v4427 = vadd.f32 %v4395, -0.28449672
        %v4428 = vadd.f32 %v4396, -0.28449672
        %v4429 = vadd.f32 %v4397, -0.28449672
        %v4430 = vadd.f32 %v4398, -0.28449672
        %v4431 = vadd.f32 %v4399, -0.28449672
        %v4432 = vadd.f32 %v4400, -0.28449672
        %v4433 = vadd.f32 %v4401, -0.28449672
        %v4434 = vadd.f32 %v4402, -0.28449672
        %v4435 = vadd.f32 %v4403, -0.28449672
        %v4436 = vadd.f32 %v4404, -0.28449672
        %v4437 = vadd.f32 %v4405, -0.28449672
        %v4438 = vadd.f32 %v4406, -0.28449672
        %v4439 = vadd.f32 %v4407, -0.28449672
        %v4440 = vadd.f32 %v4408, -0.28449672
        %v4441 = vmul.f32 %v4409, %v3783
        %v4442 = vmul.f32 %v4410, %v3798
        %v4443 = vmul.f32 %v4411, %v3813
        %v4444 = vmul.f32 %v4412, %v3828
        %v4445 = vmul.f32 %v4413, %v3843
        %v4446 = vmul.f32 %v4414, %v3858
        %v4447 = vmul.f32 %v4415, %v3873
        %v4448 = vmul.f32 %v4416, %v3888
        %v4449 = vmul.f32 %v4417, %v3903
        %v4450 = vmul.f32 %v4418, %v3918
        %v4451 = vmul.f32 %v4419, %v3933
        %v4452 = vmul.f32 %v4420, %v3948
        %v4453 = vmul.f32 %v4421, %v3963
        %v4454 = vmul.f32 %v4422, %v3978
        %v4455 = vmul.f32 %v4423, %v3993
        %v4456 = vmul.f32 %v4424, %v4008
        %v4457 = vmul.f32 %v4425, %v4023
        %v4458 = vmul.f32 %v4426, %v4038
        %v4459 = vmul.f32 %v4427, %v4053
        %v4460 = vmul.f32 %v4428, %v4068
        %v4461 = vmul.f32 %v4429, %v4083
        %v4462 = vmul.f32 %v4430, %v4098
        %v4463 = vmul.f32 %v4431, %v4113
        %v4464 = vmul.f32 %v4432, %v4128
        %v4465 = vmul.f32 %v4433, %v4143
        %v4466 = vmul.f32 %v4434, %v4158
        %v4467 = vmul.f32 %v4435, %v4173
        %v4468 = vmul.f32 %v4436, %v4188
        %v4469 = vmul.f32 %v4437, %v4203
        %v4470 = vmul.f32 %v4438, %v4218
        %v4471 = vmul.f32 %v4439, %v4233
        %v4472 = vmul.f32 %v4440, %v4248
        %v4473 = vadd.f32 %v4441, 0.2548296
        %v4474 = vadd.f32 %v4442, 0.2548296
        %v4475 = vadd.f32 %v4443, 0.2548296
        %v4476 = vadd.f32 %v4444, 0.2548296
        %v4477 = vadd.f32 %v4445, 0.2548296
        %v4478 = vadd.f32 %v4446, 0.2548296
        %v4479 = vadd.f32 %v4447, 0.2548296
        %v4480 = vadd.f32 %v4448, 0.2548296
        %v4481 = vadd.f32 %v4449, 0.2548296
        %v4482 = vadd.f32 %v4450, 0.2548296
        %v4483 = vadd.f32 %v4451, 0.2548296
        %v4484 = vadd.f32 %v4452, 0.2548296
        %v4485 = vadd.f32 %v4453, 0.2548296
        %v4486 = vadd.f32 %v4454, 0.2548296
        %v4487 = vadd.f32 %v4455, 0.2548296
        %v4488 = vadd.f32 %v4456, 0.2548296
        %v4489 = vadd.f32 %v4457, 0.2548296
        %v4490 = vadd.f32 %v4458, 0.2548296
        %v4491 = vadd.f32 %v4459, 0.2548296
        %v4492 = vadd.f32 %v4460, 0.2548296
        %v4493 = vadd.f32 %v4461, 0.2548296
        %v4494 = vadd.f32 %v4462, 0.2548296
        %v4495 = vadd.f32 %v4463, 0.2548296
        %v4496 = vadd.f32 %v4464, 0.2548296
        %v4497 = vadd.f32 %v4465, 0.2548296
        %v4498 = vadd.f32 %v4466, 0.2548296
        %v4499 = vadd.f32 %v4467, 0.2548296
        %v4500 = vadd.f32 %v4468, 0.2548296
        %v4501 = vadd.f32 %v4469, 0.2548296
        %v4502 = vadd.f32 %v4470, 0.2548296
        %v4503 = vadd.f32 %v4471, 0.2548296
        %v4504 = vadd.f32 %v4472, 0.2548296
        %v4505 = vmul.f32 %v4473, %v3783
        %v4506 = vmul.f32 %v4474, %v3798
        %v4507 = vmul.f32 %v4475, %v3813
        %v4508 = vmul.f32 %v4476, %v3828
        %v4509 = vmul.f32 %v4477, %v3843
        %v4510 = vmul.f32 %v4478, %v3858
        %v4511 = vmul.f32 %v4479, %v3873
        %v4512 = vmul.f32 %v4480, %v3888
        %v4513 = vmul.f32 %v4481, %v3903
        %v4514 = vmul.f32 %v4482, %v3918
        %v4515 = vmul.f32 %v4483, %v3933
        %v4516 = vmul.f32 %v4484, %v3948
        %v4517 = vmul.f32 %v4485, %v3963
        %v4518 = vmul.f32 %v4486, %v3978
        %v4519 = vmul.f32 %v4487, %v3993
        %v4520 = vmul.f32 %v4488, %v4008
        %v4521 = vmul.f32 %v4489, %v4023
        %v4522 = vmul.f32 %v4490, %v4038
        %v4523 = vmul.f32 %v4491, %v4053
        %v4524 = vmul.f32 %v4492, %v4068
        %v4525 = vmul.f32 %v4493, %v4083
        %v4526 = vmul.f32 %v4494, %v4098
        %v4527 = vmul.f32 %v4495, %v4113
        %v4528 = vmul.f32 %v4496, %v4128
        %v4529 = vmul.f32 %v4497, %v4143
        %v4530 = vmul.f32 %v4498, %v4158
        %v4531 = vmul.f32 %v4499, %v4173
        %v4532 = vmul.f32 %v4500, %v4188
        %v4533 = vmul.f32 %v4501, %v4203
        %v4534 = vmul.f32 %v4502, %v4218
        %v4535 = vmul.f32 %v4503, %v4233
        %v4536 = vmul.f32 %v4504, %v4248
        %v4537 = vsub.f32 0.0, %v3673
        %v4538 = vsub.f32 0.0, %v3674
        %v4539 = vsub.f32 0.0, %v3675
        %v4540 = vsub.f32 0.0, %v3676
        %v4541 = vsub.f32 0.0, %v3677
        %v4542 = vsub.f32 0.0, %v3678
        %v4543 = vsub.f32 0.0, %v3679
        %v4544 = vsub.f32 0.0, %v3680
        %v4545 = vsub.f32 0.0, %v3681
        %v4546 = vsub.f32 0.0, %v3682
        %v4547 = vsub.f32 0.0, %v3683
        %v4548 = vsub.f32 0.0, %v3684
        %v4549 = vsub.f32 0.0, %v3685
        %v4550 = vsub.f32 0.0, %v3686
        %v4551 = vsub.f32 0.0, %v3687
        %v4552 = vsub.f32 0.0, %v3688
        %v4553 = vsub.f32 0.0, %v3689
        %v4554 = vsub.f32 0.0, %v3690
        %v4555 = vsub.f32 0.0, %v3691
        %v4556 = vsub.f32 0.0, %v3692
        %v4557 = vsub.f32 0.0, %v3693
        %v4558 = vsub.f32 0.0, %v3694
        %v4559 = vsub.f32 0.0, %v3695
        %v4560 = vsub.f32 0.0, %v3696
        %v4561 = vsub.f32 0.0, %v3697
        %v4562 = vsub.f32 0.0, %v3698
        %v4563 = vsub.f32 0.0, %v3699
        %v4564 = vsub.f32 0.0, %v3700
        %v4565 = vsub.f32 0.0, %v3701
        %v4566 = vsub.f32 0.0, %v3702
        %v4567 = vsub.f32 0.0, %v3703
        %v4568 = vsub.f32 0.0, %v3704
        %v4569 = vmul.f32 %v4537, %v3673
        %v4570 = vmul.f32 %v4538, %v3674
        %v4571 = vmul.f32 %v4539, %v3675
        %v4572 = vmul.f32 %v4540, %v3676
        %v4573 = vmul.f32 %v4541, %v3677
        %v4574 = vmul.f32 %v4542, %v3678
        %v4575 = vmul.f32 %v4543, %v3679
        %v4576 = vmul.f32 %v4544, %v3680
        %v4577 = vmul.f32 %v4545, %v3681
        %v4578 = vmul.f32 %v4546, %v3682
        %v4579 = vmul.f32 %v4547, %v3683
        %v4580 = vmul.f32 %v4548, %v3684
        %v4581 = vmul.f32 %v4549, %v3685
        %v4582 = vmul.f32 %v4550, %v3686
        %v4583 = vmul.f32 %v4551, %v3687
        %v4584 = vmul.f32 %v4552, %v3688
        %v4585 = vmul.f32 %v4553, %v3689
        %v4586 = vmul.f32 %v4554, %v3690
        %v4587 = vmul.f32 %v4555, %v3691
        %v4588 = vmul.f32 %v4556, %v3692
        %v4589 = vmul.f32 %v4557, %v3693
        %v4590 = vmul.f32 %v4558, %v3694
        %v4591 = vmul.f32 %v4559, %v3695
        %v4592 = vmul.f32 %v4560, %v3696
        %v4593 = vmul.f32 %v4561, %v3697
        %v4594 = vmul.f32 %v4562, %v3698
        %v4595 = vmul.f32 %v4563, %v3699
        %v4596 = vmul.f32 %v4564, %v3700
        %v4597 = vmul.f32 %v4565, %v3701
        %v4598 = vmul.f32 %v4566, %v3702
        %v4599 = vmul.f32 %v4567, %v3703
        %v4600 = vmul.f32 %v4568, %v3704
        %v4601 = vmul.f32 %v4569, 1.442695
        %v4602 = vpow.pop %v4601
        %v4603 = vmul.f32 %v4570, 1.442695
        %v4604 = vpow.pop %v4603
        %v4605 = vmul.f32 %v4571, 1.442695
        %v4606 = vpow.pop %v4605
        %v4607 = vmul.f32 %v4572, 1.442695
        %v4608 = vpow.pop %v4607
        %v4609 = vmul.f32 %v4573, 1.442695
        %v4610 = vpow.pop %v4609
        %v4611 = vmul.f32 %v4574, 1.442695
        %v4612 = vpow.pop %v4611
        %v4613 = vmul.f32 %v4575, 1.442695
        %v4614 = vpow.pop %v4613
        %v4615 = vmul.f32 %v4576, 1.442695
        %v4616 = vpow.pop %v4615
        %v4617 = vmul.f32 %v4577, 1.442695
        %v4618 = vpow.pop %v4617
        %v4619 = vmul.f32 %v4578, 1.442695
        %v4620 = vpow.pop %v4619
        %v4621 = vmul.f32 %v4579, 1.442695
        %v4622 = vpow.pop %v4621
        %v4623 = vmul.f32 %v4580, 1.442695
        %v4624 = vpow.pop %v4623
        %v4625 = vmul.f32 %v4581, 1.442695
        %v4626 = vpow.pop %v4625
        %v4627 = vmul.f32 %v4582, 1.442695
        %v4628 = vpow.pop %v4627
        %v4629 = vmul.f32 %v4583, 1.442695
        %v4630 = vpow.pop %v4629
        %v4631 = vmul.f32 %v4584, 1.442695
        %v4632 = vpow.pop %v4631
        %v4633 = vmul.f32 %v4585, 1.442695
        %v4634 = vpow.pop %v4633
        %v4635 = vmul.f32 %v4586, 1.442695
        %v4636 = vpow.pop %v4635
        %v4637 = vmul.f32 %v4587, 1.442695
        %v4638 = vpow.pop %v4637
        %v4639 = vmul.f32 %v4588, 1.442695
        %v4640 = vpow.pop %v4639
        %v4641 = vmul.f32 %v4589, 1.442695
        %v4642 = vpow.pop %v4641
        %v4643 = vmul.f32 %v4590, 1.442695
        %v4644 = vpow.pop %v4643
        %v4645 = vmul.f32 %v4591, 1.442695
        %v4646 = vpow.pop %v4645
        %v4647 = vmul.f32 %v4592, 1.442695
        %v4648 = vpow.pop %v4647
        %v4649 = vmul.f32 %v4593, 1.442695
        %v4650 = vpow.pop %v4649
        %v4651 = vmul.f32 %v4594, 1.442695
        %v4652 = vpow.pop %v4651
        %v4653 = vmul.f32 %v4595, 1.442695
        %v4654 = vpow.pop %v4653
        %v4655 = vmul.f32 %v4596, 1.442695
        %v4656 = vpow.pop %v4655
        %v4657 = vmul.f32 %v4597, 1.442695
        %v4658 = vpow.pop %v4657
        %v4659 = vmul.f32 %v4598, 1.442695
        %v4660 = vpow.pop %v4659
        %v4661 = vmul.f32 %v4599, 1.442695
        %v4662 = vpow.pop %v4661
        %v4663 = vmul.f32 %v4600, 1.442695
        %v4664 = vpow.pop %v4663
        %v4665 = vmul.f32 %v4505, %v4602
        %v4666 = vmul.f32 %v4506, %v4604
        %v4667 = vmul.f32 %v4507, %v4606
        %v4668 = vmul.f32 %v4508, %v4608
        %v4669 = vmul.f32 %v4509, %v4610
        %v4670 = vmul.f32 %v4510, %v4612
        %v4671 = vmul.f32 %v4511, %v4614
        %v4672 = vmul.f32 %v4512, %v4616
        %v4673 = vmul.f32 %v4513, %v4618
        %v4674 = vmul.f32 %v4514, %v4620
        %v4675 = vmul.f32 %v4515, %v4622
        %v4676 = vmul.f32 %v4516, %v4624
        %v4677 = vmul.f32 %v4517, %v4626
        %v4678 = vmul.f32 %v4518, %v4628
        %v4679 = vmul.f32 %v4519, %v4630
        %v4680 = vmul.f32 %v4520, %v4632
        %v4681 = vmul.f32 %v4521, %v4634
        %v4682 = vmul.f32 %v4522, %v4636
        %v4683 = vmul.f32 %v4523, %v4638
        %v4684 = vmul.f32 %v4524, %v4640
        %v4685 = vmul.f32 %v4525, %v4642
        %v4686 = vmul.f32 %v4526, %v4644
        %v4687 = vmul.f32 %v4527, %v4646
        %v4688 = vmul.f32 %v4528, %v4648
        %v4689 = vmul.f32 %v4529, %v4650
        %v4690 = vmul.f32 %v4530, %v4652
        %v4691 = vmul.f32 %v4531, %v4654
        %v4692 = vmul.f32 %v4532, %v4656
        %v4693 = vmul.f32 %v4533, %v4658
        %v4694 = vmul.f32 %v4534, %v4660
        %v4695 = vmul.f32 %v4535, %v4662
        %v4696 = vmul.f32 %v4536, %v4664
        %v4697 = vsub.f32 1.0, %v4665
        %v4698 = vsub.f32 1.0, %v4666
        %v4699 = vsub.f32 1.0, %v4667
        %v4700 = vsub.f32 1.0, %v4668
        %v4701 = vsub.f32 1.0, %v4669
        %v4702 = vsub.f32 1.0, %v4670
        %v4703 = vsub.f32 1.0, %v4671
        %v4704 = vsub.f32 1.0, %v4672
        %v4705 = vsub.f32 1.0, %v4673
        %v4706 = vsub.f32 1.0, %v4674
        %v4707 = vsub.f32 1.0, %v4675
        %v4708 = vsub.f32 1.0, %v4676
        %v4709 = vsub.f32 1.0, %v4677
        %v4710 = vsub.f32 1.0, %v4678
        %v4711 = vsub.f32 1.0, %v4679
        %v4712 = vsub.f32 1.0, %v4680
        %v4713 = vsub.f32 1.0, %v4681
        %v4714 = vsub.f32 1.0, %v4682
        %v4715 = vsub.f32 1.0, %v4683
        %v4716 = vsub.f32 1.0, %v4684
        %v4717 = vsub.f32 1.0, %v4685
        %v4718 = vsub.f32 1.0, %v4686
        %v4719 = vsub.f32 1.0, %v4687
        %v4720 = vsub.f32 1.0, %v4688
        %v4721 = vsub.f32 1.0, %v4689
        %v4722 = vsub.f32 1.0, %v4690
        %v4723 = vsub.f32 1.0, %v4691
        %v4724 = vsub.f32 1.0, %v4692
        %v4725 = vsub.f32 1.0, %v4693
        %v4726 = vsub.f32 1.0, %v4694
        %v4727 = vsub.f32 1.0, %v4695
        %v4728 = vsub.f32 1.0, %v4696
        %vm4729 = vcmp.ge.f32.partialorder %v3641, 0.0
        %vm4730 = vcmp.ge.f32.partialorder %v3642, 0.0
        %vm4731 = vcmp.ge.f32.partialorder %v3643, 0.0
        %vm4732 = vcmp.ge.f32.partialorder %v3644, 0.0
        %vm4733 = vcmp.ge.f32.partialorder %v3645, 0.0
        %vm4734 = vcmp.ge.f32.partialorder %v3646, 0.0
        %vm4735 = vcmp.ge.f32.partialorder %v3647, 0.0
        %vm4736 = vcmp.ge.f32.partialorder %v3648, 0.0
        %vm4737 = vcmp.ge.f32.partialorder %v3649, 0.0
        %vm4738 = vcmp.ge.f32.partialorder %v3650, 0.0
        %vm4739 = vcmp.ge.f32.partialorder %v3651, 0.0
        %vm4740 = vcmp.ge.f32.partialorder %v3652, 0.0
        %vm4741 = vcmp.ge.f32.partialorder %v3653, 0.0
        %vm4742 = vcmp.ge.f32.partialorder %v3654, 0.0
        %vm4743 = vcmp.ge.f32.partialorder %v3655, 0.0
        %vm4744 = vcmp.ge.f32.partialorder %v3656, 0.0
        %vm4745 = vcmp.ge.f32.partialorder %v3657, 0.0
        %vm4746 = vcmp.ge.f32.partialorder %v3658, 0.0
        %vm4747 = vcmp.ge.f32.partialorder %v3659, 0.0
        %vm4748 = vcmp.ge.f32.partialorder %v3660, 0.0
        %vm4749 = vcmp.ge.f32.partialorder %v3661, 0.0
        %vm4750 = vcmp.ge.f32.partialorder %v3662, 0.0
        %vm4751 = vcmp.ge.f32.partialorder %v3663, 0.0
        %vm4752 = vcmp.ge.f32.partialorder %v3664, 0.0
        %vm4753 = vcmp.ge.f32.partialorder %v3665, 0.0
        %vm4754 = vcmp.ge.f32.partialorder %v3666, 0.0
        %vm4755 = vcmp.ge.f32.partialorder %v3667, 0.0
        %vm4756 = vcmp.ge.f32.partialorder %v3668, 0.0
        %vm4757 = vcmp.ge.f32.partialorder %v3669, 0.0
        %vm4758 = vcmp.ge.f32.partialorder %v3670, 0.0
        %vm4759 = vcmp.ge.f32.partialorder %v3671, 0.0
        %vm4760 = vcmp.ge.f32.partialorder %v3672, 0.0
        %v4761 = vsub.f32 0.0, %v4697
        %v4762 = vsub.f32 0.0, %v4698
        %v4763 = vsub.f32 0.0, %v4699
        %v4764 = vsub.f32 0.0, %v4700
        %v4765 = vsub.f32 0.0, %v4701
        %v4766 = vsub.f32 0.0, %v4702
        %v4767 = vsub.f32 0.0, %v4703
        %v4768 = vsub.f32 0.0, %v4704
        %v4769 = vsub.f32 0.0, %v4705
        %v4770 = vsub.f32 0.0, %v4706
        %v4771 = vsub.f32 0.0, %v4707
        %v4772 = vsub.f32 0.0, %v4708
        %v4773 = vsub.f32 0.0, %v4709
        %v4774 = vsub.f32 0.0, %v4710
        %v4775 = vsub.f32 0.0, %v4711
        %v4776 = vsub.f32 0.0, %v4712
        %v4777 = vsub.f32 0.0, %v4713
        %v4778 = vsub.f32 0.0, %v4714
        %v4779 = vsub.f32 0.0, %v4715
        %v4780 = vsub.f32 0.0, %v4716
        %v4781 = vsub.f32 0.0, %v4717
        %v4782 = vsub.f32 0.0, %v4718
        %v4783 = vsub.f32 0.0, %v4719
        %v4784 = vsub.f32 0.0, %v4720
        %v4785 = vsub.f32 0.0, %v4721
        %v4786 = vsub.f32 0.0, %v4722
        %v4787 = vsub.f32 0.0, %v4723
        %v4788 = vsub.f32 0.0, %v4724
        %v4789 = vsub.f32 0.0, %v4725
        %v4790 = vsub.f32 0.0, %v4726
        %v4791 = vsub.f32 0.0, %v4727
        %v4792 = vsub.f32 0.0, %v4728
        %v4793 = vsel %vm4729, %v4697, %v4761
        %v4794 = vsel %vm4730, %v4698, %v4762
        %v4795 = vsel %vm4731, %v4699, %v4763
        %v4796 = vsel %vm4732, %v4700, %v4764
        %v4797 = vsel %vm4733, %v4701, %v4765
        %v4798 = vsel %vm4734, %v4702, %v4766
        %v4799 = vsel %vm4735, %v4703, %v4767
        %v4800 = vsel %vm4736, %v4704, %v4768
        %v4801 = vsel %vm4737, %v4705, %v4769
        %v4802 = vsel %vm4738, %v4706, %v4770
        %v4803 = vsel %vm4739, %v4707, %v4771
        %v4804 = vsel %vm4740, %v4708, %v4772
        %v4805 = vsel %vm4741, %v4709, %v4773
        %v4806 = vsel %vm4742, %v4710, %v4774
        %v4807 = vsel %vm4743, %v4711, %v4775
        %v4808 = vsel %vm4744, %v4712, %v4776
        %v4809 = vsel %vm4745, %v4713, %v4777
        %v4810 = vsel %vm4746, %v4714, %v4778
        %v4811 = vsel %vm4747, %v4715, %v4779
        %v4812 = vsel %vm4748, %v4716, %v4780
        %v4813 = vsel %vm4749, %v4717, %v4781
        %v4814 = vsel %vm4750, %v4718, %v4782
        %v4815 = vsel %vm4751, %v4719, %v4783
        %v4816 = vsel %vm4752, %v4720, %v4784
        %v4817 = vsel %vm4753, %v4721, %v4785
        %v4818 = vsel %vm4754, %v4722, %v4786
        %v4819 = vsel %vm4755, %v4723, %v4787
        %v4820 = vsel %vm4756, %v4724, %v4788
        %v4821 = vsel %vm4757, %v4725, %v4789
        %v4822 = vsel %vm4758, %v4726, %v4790
        %v4823 = vsel %vm4759, %v4727, %v4791
        %v4824 = vsel %vm4760, %v4728, %v4792
        %v4825 = vadd.f32 %v4793, 1.0
        %v4826 = vadd.f32 %v4794, 1.0
        %v4827 = vadd.f32 %v4795, 1.0
        %v4828 = vadd.f32 %v4796, 1.0
        %v4829 = vadd.f32 %v4797, 1.0
        %v4830 = vadd.f32 %v4798, 1.0
        %v4831 = vadd.f32 %v4799, 1.0
        %v4832 = vadd.f32 %v4800, 1.0
        %v4833 = vadd.f32 %v4801, 1.0
        %v4834 = vadd.f32 %v4802, 1.0
        %v4835 = vadd.f32 %v4803, 1.0
        %v4836 = vadd.f32 %v4804, 1.0
        %v4837 = vadd.f32 %v4805, 1.0
        %v4838 = vadd.f32 %v4806, 1.0
        %v4839 = vadd.f32 %v4807, 1.0
        %v4840 = vadd.f32 %v4808, 1.0
        %v4841 = vadd.f32 %v4809, 1.0
        %v4842 = vadd.f32 %v4810, 1.0
        %v4843 = vadd.f32 %v4811, 1.0
        %v4844 = vadd.f32 %v4812, 1.0
        %v4845 = vadd.f32 %v4813, 1.0
        %v4846 = vadd.f32 %v4814, 1.0
        %v4847 = vadd.f32 %v4815, 1.0
        %v4848 = vadd.f32 %v4816, 1.0
        %v4849 = vadd.f32 %v4817, 1.0
        %v4850 = vadd.f32 %v4818, 1.0
        %v4851 = vadd.f32 %v4819, 1.0
        %v4852 = vadd.f32 %v4820, 1.0
        %v4853 = vadd.f32 %v4821, 1.0
        %v4854 = vadd.f32 %v4822, 1.0
        %v4855 = vadd.f32 %v4823, 1.0
        %v4856 = vadd.f32 %v4824, 1.0
        %v4857 = vmul.f32 %v3609, %v4825
        %v4858 = vmul.f32 %v3610, %v4826
        %v4859 = vmul.f32 %v3611, %v4827
        %v4860 = vmul.f32 %v3612, %v4828
        %v4861 = vmul.f32 %v3613, %v4829
        %v4862 = vmul.f32 %v3614, %v4830
        %v4863 = vmul.f32 %v3615, %v4831
        %v4864 = vmul.f32 %v3616, %v4832
        %v4865 = vmul.f32 %v3617, %v4833
        %v4866 = vmul.f32 %v3618, %v4834
        %v4867 = vmul.f32 %v3619, %v4835
        %v4868 = vmul.f32 %v3620, %v4836
        %v4869 = vmul.f32 %v3621, %v4837
        %v4870 = vmul.f32 %v3622, %v4838
        %v4871 = vmul.f32 %v3623, %v4839
        %v4872 = vmul.f32 %v3624, %v4840
        %v4873 = vmul.f32 %v3625, %v4841
        %v4874 = vmul.f32 %v3626, %v4842
        %v4875 = vmul.f32 %v3627, %v4843
        %v4876 = vmul.f32 %v3628, %v4844
        %v4877 = vmul.f32 %v3629, %v4845
        %v4878 = vmul.f32 %v3630, %v4846
        %v4879 = vmul.f32 %v3631, %v4847
        %v4880 = vmul.f32 %v3632, %v4848
        %v4881 = vmul.f32 %v3633, %v4849
        %v4882 = vmul.f32 %v3634, %v4850
        %v4883 = vmul.f32 %v3635, %v4851
        %v4884 = vmul.f32 %v3636, %v4852
        %v4885 = vmul.f32 %v3637, %v4853
        %v4886 = vmul.f32 %v3638, %v4854
        %v4887 = vmul.f32 %v3639, %v4855
        %v4888 = vmul.f32 %v3640, %v4856
        %v4889 = vadd.f32 %v2752, %v4857
        %v4890 = vadd.f32 %v2753, %v4858
        %v4891 = vadd.f32 %v2754, %v4859
        %v4892 = vadd.f32 %v2755, %v4860
        %v4893 = vadd.f32 %v2756, %v4861
        %v4894 = vadd.f32 %v2757, %v4862
        %v4895 = vadd.f32 %v2758, %v4863
        %v4896 = vadd.f32 %v2759, %v4864
        %v4897 = vadd.f32 %v2760, %v4865
        %v4898 = vadd.f32 %v2761, %v4866
        %v4899 = vadd.f32 %v2762, %v4867
        %v4900 = vadd.f32 %v2763, %v4868
        %v4901 = vadd.f32 %v2764, %v4869
        %v4902 = vadd.f32 %v2765, %v4870
        %v4903 = vadd.f32 %v2766, %v4871
        %v4904 = vadd.f32 %v2767, %v4872
        %v4905 = vadd.f32 %v2768, %v4873
        %v4906 = vadd.f32 %v2769, %v4874
        %v4907 = vadd.f32 %v2770, %v4875
        %v4908 = vadd.f32 %v2771, %v4876
        %v4909 = vadd.f32 %v2772, %v4877
        %v4910 = vadd.f32 %v2773, %v4878
        %v4911 = vadd.f32 %v2774, %v4879
        %v4912 = vadd.f32 %v2775, %v4880
        %v4913 = vadd.f32 %v2776, %v4881
        %v4914 = vadd.f32 %v2777, %v4882
        %v4915 = vadd.f32 %v2778, %v4883
        %v4916 = vadd.f32 %v2779, %v4884
        %v4917 = vadd.f32 %v2780, %v4885
        %v4918 = vadd.f32 %v2781, %v4886
        %v4919 = vadd.f32 %v2782, %v4887
        %v4920 = vadd.f32 %v2783, %v4888
        %v4921 = vld [vmem:[%s4] sm:$0xff]
        %v4922 = vld [vmem:[%s4 + $0x8] sm:$0xff]
        %v4923 = vld [vmem:[%s4 + $0x10] sm:$0xff]
        %v4924 = vld [vmem:[%s4 + $0x18] sm:$0xff]
        %v4925 = vld [vmem:[%s4 + $0x20] sm:$0xf]
        %vm4926 = vcmask 293888
        %v4928 = vsel %vm4926, %v4889, 0
        %v4931 = vsel %vm4926, %v4890, 0
        %v4934 = vsel %vm4926, %v4891, 0
        %v4937 = vsel %vm4926, %v4892, 0
        %v4940 = vsel %vm4926, %v4893, 0
        %v4943 = vsel %vm4926, %v4894, 0
        %v4946 = vsel %vm4926, %v4895, 0
        %v4949 = vsel %vm4926, %v4896, 0
        %v4952 = vsel %vm4926, %v4897, 0
        %v4955 = vsel %vm4926, %v4898, 0
        %v4958 = vsel %vm4926, %v4899, 0
        %v4961 = vsel %vm4926, %v4900, 0
        %v4964 = vsel %vm4926, %v4901, 0
        %v4967 = vsel %vm4926, %v4902, 0
        %v4970 = vsel %vm4926, %v4903, 0
        %v4973 = vsel %vm4926, %v4904, 0
        %v4976 = vsel %vm4926, %v4905, 0
        %v4979 = vsel %vm4926, %v4906, 0
        %v4982 = vsel %vm4926, %v4907, 0
        %v4985 = vsel %vm4926, %v4908, 0
        %v4988 = vsel %vm4926, %v4909, 0
        %v4991 = vsel %vm4926, %v4910, 0
        %v4994 = vsel %vm4926, %v4911, 0
        %v4997 = vsel %vm4926, %v4912, 0
        %v5000 = vsel %vm4926, %v4913, 0
        %v5003 = vsel %vm4926, %v4914, 0
        %v5006 = vsel %vm4926, %v4915, 0
        %v5009 = vsel %vm4926, %v4916, 0
        %v5012 = vsel %vm4926, %v4917, 0
        %v5015 = vsel %vm4926, %v4918, 0
        %v5018 = vsel %vm4926, %v4919, 0
        %v5021 = vsel %vm4926, %v4920, 0
        %vm5023 = vcmask 1043456
        %v5025 = vsel %vm5023, %v4925, 0
        %5027 = vmatpush.msra.mxu0 0.0
        %5028 = vmatpush.msra.mxu0 0.0
        %5029 = vmatpush.msra.mxu0 0.0
        %5030 = vmatpush.msra.mxu0 0.0
        %5031 = vmatpush.msra.mxu0 0.0
        %5032 = vmatpush.msra.mxu0 0.0
        %5033 = vmatpush.msra.mxu0 0.0
        %5034 = vmatpush.msra.mxu0 0.0
        %5035 = vmatpush.msra.mxu0 0.0
        %5036 = vmatpush.msra.mxu0 0.0
        %5037 = vmatpush.msra.mxu0 0.0
        %5038 = vmatpush.msra.mxu0 %v5025
        %5039 = vmatpush.msra.mxu0 %v4924
        %5040 = vmatpush.msra.mxu0 %v4923
        %5041 = vmatpush.msra.mxu0 %v4922
        %5042 = vmatpush.msra.mxu0 %v4921
        %5043 = vmatmul.f32.gmra.mxu0 %v4928
        %v5044 = vpop.f32.mrf.mxu0
        %v5045 = vadd.f32 0.0, %v5044
        %5046 = vmatmul.f32.gmra.mxu0 %v4931
        %v5047 = vpop.f32.mrf.mxu0
        %v5048 = vadd.f32 0.0, %v5047
        %5049 = vmatmul.f32.gmra.mxu0 %v4934
        %v5050 = vpop.f32.mrf.mxu0
        %v5051 = vadd.f32 0.0, %v5050
        %5052 = vmatmul.f32.gmra.mxu0 %v4937
        %v5053 = vpop.f32.mrf.mxu0
        %v5054 = vadd.f32 0.0, %v5053
        %5055 = vmatmul.f32.gmra.mxu0 %v4940
        %v5056 = vpop.f32.mrf.mxu0
        %v5057 = vadd.f32 0.0, %v5056
        %5058 = vmatmul.f32.gmra.mxu0 %v4943
        %v5059 = vpop.f32.mrf.mxu0
        %v5060 = vadd.f32 0.0, %v5059
        %5061 = vmatmul.f32.gmra.mxu0 %v4946
        %v5062 = vpop.f32.mrf.mxu0
        %v5063 = vadd.f32 0.0, %v5062
        %5064 = vmatmul.f32.gmra.mxu0 %v4949
        %v5065 = vpop.f32.mrf.mxu0
        %v5066 = vadd.f32 0.0, %v5065
        %5067 = vmatmul.f32.gmra.mxu0 %v4952
        %v5068 = vpop.f32.mrf.mxu0
        %v5069 = vadd.f32 0.0, %v5068
        %5070 = vmatmul.f32.gmra.mxu0 %v4955
        %v5071 = vpop.f32.mrf.mxu0
        %v5072 = vadd.f32 0.0, %v5071
        %5073 = vmatmul.f32.gmra.mxu0 %v4958
        %v5074 = vpop.f32.mrf.mxu0
        %v5075 = vadd.f32 0.0, %v5074
        %5076 = vmatmul.f32.gmra.mxu0 %v4961
        %v5077 = vpop.f32.mrf.mxu0
        %v5078 = vadd.f32 0.0, %v5077
        %5079 = vmatmul.f32.gmra.mxu0 %v4964
        %v5080 = vpop.f32.mrf.mxu0
        %v5081 = vadd.f32 0.0, %v5080
        %5082 = vmatmul.f32.gmra.mxu0 %v4967
        %v5083 = vpop.f32.mrf.mxu0
        %v5084 = vadd.f32 0.0, %v5083
        %5085 = vmatmul.f32.gmra.mxu0 %v4970
        %v5086 = vpop.f32.mrf.mxu0
        %v5087 = vadd.f32 0.0, %v5086
        %5088 = vmatmul.f32.gmra.mxu0 %v4973
        %v5089 = vpop.f32.mrf.mxu0
        %v5090 = vadd.f32 0.0, %v5089
        %5091 = vmatmul.f32.gmra.mxu0 %v4976
        %v5092 = vpop.f32.mrf.mxu0
        %v5093 = vadd.f32 0.0, %v5092
        %5094 = vmatmul.f32.gmra.mxu0 %v4979
        %v5095 = vpop.f32.mrf.mxu0
        %v5096 = vadd.f32 0.0, %v5095
        %5097 = vmatmul.f32.gmra.mxu0 %v4982
        %v5098 = vpop.f32.mrf.mxu0
        %v5099 = vadd.f32 0.0, %v5098
        %5100 = vmatmul.f32.gmra.mxu0 %v4985
        %v5101 = vpop.f32.mrf.mxu0
        %v5102 = vadd.f32 0.0, %v5101
        %5103 = vmatmul.f32.gmra.mxu0 %v4988
        %v5104 = vpop.f32.mrf.mxu0
        %v5105 = vadd.f32 0.0, %v5104
        %5106 = vmatmul.f32.gmra.mxu0 %v4991
        %v5107 = vpop.f32.mrf.mxu0
        %v5108 = vadd.f32 0.0, %v5107
        %5109 = vmatmul.f32.gmra.mxu0 %v4994
        %v5110 = vpop.f32.mrf.mxu0
        %v5111 = vadd.f32 0.0, %v5110
        %5112 = vmatmul.f32.gmra.mxu0 %v4997
        %v5113 = vpop.f32.mrf.mxu0
        %v5114 = vadd.f32 0.0, %v5113
        %5115 = vmatmul.f32.gmra.mxu0 %v5000
        %v5116 = vpop.f32.mrf.mxu0
        %v5117 = vadd.f32 0.0, %v5116
        %5118 = vmatmul.f32.gmra.mxu0 %v5003
        %v5119 = vpop.f32.mrf.mxu0
        %v5120 = vadd.f32 0.0, %v5119
        %5121 = vmatmul.f32.gmra.mxu0 %v5006
        %v5122 = vpop.f32.mrf.mxu0
        %v5123 = vadd.f32 0.0, %v5122
        %5124 = vmatmul.f32.gmra.mxu0 %v5009
        %v5125 = vpop.f32.mrf.mxu0
        %v5126 = vadd.f32 0.0, %v5125
        %5127 = vmatmul.f32.gmra.mxu0 %v5012
        %v5128 = vpop.f32.mrf.mxu0
        %v5129 = vadd.f32 0.0, %v5128
        %5130 = vmatmul.f32.gmra.mxu0 %v5015
        %v5131 = vpop.f32.mrf.mxu0
        %v5132 = vadd.f32 0.0, %v5131
        %5133 = vmatmul.f32.gmra.mxu0 %v5018
        %v5134 = vpop.f32.mrf.mxu0
        %v5135 = vadd.f32 0.0, %v5134
        %5136 = vmatmul.f32.gmra.mxu0 %v5021
        %v5137 = vpop.f32.mrf.mxu0
        %v5138 = vadd.f32 0.0, %v5137
        %5139 = vdwg.mxu0
        %5141 = vset.pattern.permute.xlu0 0
        %5142 = vperm.xlu0 %5141, %v591
        %v5143 = vpop.permute.xlu0 %5142
        %5146 = vset.pattern.permute.xlu0 0
        %5147 = vperm.xlu0 %5146, %v592
        %v5148 = vpop.permute.xlu0 %5147
        %5151 = vset.pattern.permute.xlu0 0
        %5152 = vperm.xlu0 %5151, %v593
        %v5153 = vpop.permute.xlu0 %5152
        %5156 = vset.pattern.permute.xlu0 0
        %5157 = vperm.xlu0 %5156, %v594
        %v5158 = vpop.permute.xlu0 %5157
        %v5160 = vmul.f32 %v5045, %v5143
        %v5161 = vmul.f32 %v5048, %v5148
        %v5162 = vmul.f32 %v5051, %v5153
        %v5163 = vmul.f32 %v5054, %v5158
        %v5164 = vmul.f32 %v5057, %v5143
        %v5165 = vmul.f32 %v5060, %v5148
        %v5166 = vmul.f32 %v5063, %v5153
        %v5167 = vmul.f32 %v5066, %v5158
        %v5168 = vmul.f32 %v5069, %v5143
        %v5169 = vmul.f32 %v5072, %v5148
        %v5170 = vmul.f32 %v5075, %v5153
        %v5171 = vmul.f32 %v5078, %v5158
        %v5172 = vmul.f32 %v5081, %v5143
        %v5173 = vmul.f32 %v5084, %v5148
        %v5174 = vmul.f32 %v5087, %v5153
        %v5175 = vmul.f32 %v5090, %v5158
        %v5176 = vmul.f32 %v5093, %v5143
        %v5177 = vmul.f32 %v5096, %v5148
        %v5178 = vmul.f32 %v5099, %v5153
        %v5179 = vmul.f32 %v5102, %v5158
        %v5180 = vmul.f32 %v5105, %v5143
        %v5181 = vmul.f32 %v5108, %v5148
        %v5182 = vmul.f32 %v5111, %v5153
        %v5183 = vmul.f32 %v5114, %v5158
        %v5184 = vmul.f32 %v5117, %v5143
        %v5185 = vmul.f32 %v5120, %v5148
        %v5186 = vmul.f32 %v5123, %v5153
        %v5187 = vmul.f32 %v5126, %v5158
        %v5188 = vmul.f32 %v5129, %v5143
        %v5189 = vmul.f32 %v5132, %v5148
        %v5190 = vmul.f32 %v5135, %v5153
        %v5191 = vmul.f32 %v5138, %v5158
        %vm5192 = vcmask 130048
        %v5193 = vsel %vm5192, %v5160, 0.0
        %v5194 = vsel %vm5192, %v5161, 0.0
        %v5195 = vadd.f32 %v5193, %v5194
        %v5196 = vsel %vm5192, %v5162, 0.0
        %v5197 = vadd.f32 %v5195, %v5196
        %v5198 = vsel %vm5192, %v5163, 0.0
        %v5199 = vadd.f32 %v5197, %v5198
        %v5200 = vrot.slane %v5199, 4
        %v5201 = vadd.f32 %v5199, %v5200
        %v5202 = vrot.slane %v5201, 2
        %v5203 = vadd.f32 %v5201, %v5202
        %v5204 = vrot.slane %v5203, 1
        %v5205 = vadd.f32 %v5203, %v5204
        %v5206 = vsel %vm5192, %v5164, 0.0
        %v5207 = vsel %vm5192, %v5165, 0.0
        %v5208 = vadd.f32 %v5206, %v5207
        %v5209 = vsel %vm5192, %v5166, 0.0
        %v5210 = vadd.f32 %v5208, %v5209
        %v5211 = vsel %vm5192, %v5167, 0.0
        %v5212 = vadd.f32 %v5210, %v5211
        %v5213 = vrot.slane %v5212, 4
        %v5214 = vadd.f32 %v5212, %v5213
        %v5215 = vrot.slane %v5214, 2
        %v5216 = vadd.f32 %v5214, %v5215
        %v5217 = vrot.slane %v5216, 1
        %v5218 = vadd.f32 %v5216, %v5217
        %v5219 = vsel %vm5192, %v5168, 0.0
        %v5220 = vsel %vm5192, %v5169, 0.0
        %v5221 = vadd.f32 %v5219, %v5220
        %v5222 = vsel %vm5192, %v5170, 0.0
        %v5223 = vadd.f32 %v5221, %v5222
        %v5224 = vsel %vm5192, %v5171, 0.0
        %v5225 = vadd.f32 %v5223, %v5224
        %v5226 = vrot.slane %v5225, 4
        %v5227 = vadd.f32 %v5225, %v5226
        %v5228 = vrot.slane %v5227, 2
        %v5229 = vadd.f32 %v5227, %v5228
        %v5230 = vrot.slane %v5229, 1
        %v5231 = vadd.f32 %v5229, %v5230
        %v5232 = vsel %vm5192, %v5172, 0.0
        %v5233 = vsel %vm5192, %v5173, 0.0
        %v5234 = vadd.f32 %v5232, %v5233
        %v5235 = vsel %vm5192, %v5174, 0.0
        %v5236 = vadd.f32 %v5234, %v5235
        %v5237 = vsel %vm5192, %v5175, 0.0
        %v5238 = vadd.f32 %v5236, %v5237
        %v5239 = vrot.slane %v5238, 4
        %v5240 = vadd.f32 %v5238, %v5239
        %v5241 = vrot.slane %v5240, 2
        %v5242 = vadd.f32 %v5240, %v5241
        %v5243 = vrot.slane %v5242, 1
        %v5244 = vadd.f32 %v5242, %v5243
        %v5245 = vsel %vm5192, %v5176, 0.0
        %v5246 = vsel %vm5192, %v5177, 0.0
        %v5247 = vadd.f32 %v5245, %v5246
        %v5248 = vsel %vm5192, %v5178, 0.0
        %v5249 = vadd.f32 %v5247, %v5248
        %v5250 = vsel %vm5192, %v5179, 0.0
        %v5251 = vadd.f32 %v5249, %v5250
        %v5252 = vrot.slane %v5251, 4
        %v5253 = vadd.f32 %v5251, %v5252
        %v5254 = vrot.slane %v5253, 2
        %v5255 = vadd.f32 %v5253, %v5254
        %v5256 = vrot.slane %v5255, 1
        %v5257 = vadd.f32 %v5255, %v5256
        %v5258 = vsel %vm5192, %v5180, 0.0
        %v5259 = vsel %vm5192, %v5181, 0.0
        %v5260 = vadd.f32 %v5258, %v5259
        %v5261 = vsel %vm5192, %v5182, 0.0
        %v5262 = vadd.f32 %v5260, %v5261
        %v5263 = vsel %vm5192, %v5183, 0.0
        %v5264 = vadd.f32 %v5262, %v5263
        %v5265 = vrot.slane %v5264, 4
        %v5266 = vadd.f32 %v5264, %v5265
        %v5267 = vrot.slane %v5266, 2
        %v5268 = vadd.f32 %v5266, %v5267
        %v5269 = vrot.slane %v5268, 1
        %v5270 = vadd.f32 %v5268, %v5269
        %v5271 = vsel %vm5192, %v5184, 0.0
        %v5272 = vsel %vm5192, %v5185, 0.0
        %v5273 = vadd.f32 %v5271, %v5272
        %v5274 = vsel %vm5192, %v5186, 0.0
        %v5275 = vadd.f32 %v5273, %v5274
        %v5276 = vsel %vm5192, %v5187, 0.0
        %v5277 = vadd.f32 %v5275, %v5276
        %v5278 = vrot.slane %v5277, 4
        %v5279 = vadd.f32 %v5277, %v5278
        %v5280 = vrot.slane %v5279, 2
        %v5281 = vadd.f32 %v5279, %v5280
        %v5282 = vrot.slane %v5281, 1
        %v5283 = vadd.f32 %v5281, %v5282
        %v5284 = vsel %vm5192, %v5188, 0.0
        %v5285 = vsel %vm5192, %v5189, 0.0
        %v5286 = vadd.f32 %v5284, %v5285
        %v5287 = vsel %vm5192, %v5190, 0.0
        %v5288 = vadd.f32 %v5286, %v5287
        %v5289 = vsel %vm5192, %v5191, 0.0
        %v5290 = vadd.f32 %v5288, %v5289
        %v5291 = vrot.slane %v5290, 4
        %v5292 = vadd.f32 %v5290, %v5291
        %v5293 = vrot.slane %v5292, 2
        %v5294 = vadd.f32 %v5292, %v5293
        %v5295 = vrot.slane %v5294, 1
        %v5296 = vadd.f32 %v5294, %v5295
        %5297 = vset.pattern.permute.xlu0 1
        %5298 = vperm.xlu0 %5297, %v591
        %v5299 = vpop.permute.xlu0 %5298
        %5301 = vset.pattern.permute.xlu0 1
        %5302 = vperm.xlu0 %5301, %v592
        %v5303 = vpop.permute.xlu0 %5302
        %5305 = vset.pattern.permute.xlu0 1
        %5306 = vperm.xlu0 %5305, %v593
        %v5307 = vpop.permute.xlu0 %5306
        %5309 = vset.pattern.permute.xlu0 1
        %5310 = vperm.xlu0 %5309, %v594
        %v5311 = vpop.permute.xlu0 %5310
        %v5313 = vmul.f32 %v5045, %v5299
        %v5314 = vmul.f32 %v5048, %v5303
        %v5315 = vmul.f32 %v5051, %v5307
        %v5316 = vmul.f32 %v5054, %v5311
        %v5317 = vmul.f32 %v5057, %v5299
        %v5318 = vmul.f32 %v5060, %v5303
        %v5319 = vmul.f32 %v5063, %v5307
        %v5320 = vmul.f32 %v5066, %v5311
        %v5321 = vmul.f32 %v5069, %v5299
        %v5322 = vmul.f32 %v5072, %v5303
        %v5323 = vmul.f32 %v5075, %v5307
        %v5324 = vmul.f32 %v5078, %v5311
        %v5325 = vmul.f32 %v5081, %v5299
        %v5326 = vmul.f32 %v5084, %v5303
        %v5327 = vmul.f32 %v5087, %v5307
        %v5328 = vmul.f32 %v5090, %v5311
        %v5329 = vmul.f32 %v5093, %v5299
        %v5330 = vmul.f32 %v5096, %v5303
        %v5331 = vmul.f32 %v5099, %v5307
        %v5332 = vmul.f32 %v5102, %v5311
        %v5333 = vmul.f32 %v5105, %v5299
        %v5334 = vmul.f32 %v5108, %v5303
        %v5335 = vmul.f32 %v5111, %v5307
        %v5336 = vmul.f32 %v5114, %v5311
        %v5337 = vmul.f32 %v5117, %v5299
        %v5338 = vmul.f32 %v5120, %v5303
        %v5339 = vmul.f32 %v5123, %v5307
        %v5340 = vmul.f32 %v5126, %v5311
        %v5341 = vmul.f32 %v5129, %v5299
        %v5342 = vmul.f32 %v5132, %v5303
        %v5343 = vmul.f32 %v5135, %v5307
        %v5344 = vmul.f32 %v5138, %v5311
        %vm5345 = vcmask 138248
        %v5346 = vsel %vm5345, %v5313, 0.0
        %v5347 = vsel %vm5345, %v5314, 0.0
        %v5348 = vadd.f32 %v5346, %v5347
        %v5349 = vsel %vm5345, %v5315, 0.0
        %v5350 = vadd.f32 %v5348, %v5349
        %v5351 = vsel %vm5345, %v5316, 0.0
        %v5352 = vadd.f32 %v5350, %v5351
        %v5353 = vrot.slane %v5352, 4
        %v5354 = vadd.f32 %v5352, %v5353
        %v5355 = vrot.slane %v5354, 2
        %v5356 = vadd.f32 %v5354, %v5355
        %v5357 = vrot.slane %v5356, 1
        %v5358 = vadd.f32 %v5356, %v5357
        %v5359 = vsel %vm5345, %v5317, 0.0
        %v5360 = vsel %vm5345, %v5318, 0.0
        %v5361 = vadd.f32 %v5359, %v5360
        %v5362 = vsel %vm5345, %v5319, 0.0
        %v5363 = vadd.f32 %v5361, %v5362
        %v5364 = vsel %vm5345, %v5320, 0.0
        %v5365 = vadd.f32 %v5363, %v5364
        %v5366 = vrot.slane %v5365, 4
        %v5367 = vadd.f32 %v5365, %v5366
        %v5368 = vrot.slane %v5367, 2
        %v5369 = vadd.f32 %v5367, %v5368
        %v5370 = vrot.slane %v5369, 1
        %v5371 = vadd.f32 %v5369, %v5370
        %v5372 = vsel %vm5345, %v5321, 0.0
        %v5373 = vsel %vm5345, %v5322, 0.0
        %v5374 = vadd.f32 %v5372, %v5373
        %v5375 = vsel %vm5345, %v5323, 0.0
        %v5376 = vadd.f32 %v5374, %v5375
        %v5377 = vsel %vm5345, %v5324, 0.0
        %v5378 = vadd.f32 %v5376, %v5377
        %v5379 = vrot.slane %v5378, 4
        %v5380 = vadd.f32 %v5378, %v5379
        %v5381 = vrot.slane %v5380, 2
        %v5382 = vadd.f32 %v5380, %v5381
        %v5383 = vrot.slane %v5382, 1
        %v5384 = vadd.f32 %v5382, %v5383
        %v5385 = vsel %vm5345, %v5325, 0.0
        %v5386 = vsel %vm5345, %v5326, 0.0
        %v5387 = vadd.f32 %v5385, %v5386
        %v5388 = vsel %vm5345, %v5327, 0.0
        %v5389 = vadd.f32 %v5387, %v5388
        %v5390 = vsel %vm5345, %v5328, 0.0
        %v5391 = vadd.f32 %v5389, %v5390
        %v5392 = vrot.slane %v5391, 4
        %v5393 = vadd.f32 %v5391, %v5392
        %v5394 = vrot.slane %v5393, 2
        %v5395 = vadd.f32 %v5393, %v5394
        %v5396 = vrot.slane %v5395, 1
        %v5397 = vadd.f32 %v5395, %v5396
        %v5398 = vsel %vm5345, %v5329, 0.0
        %v5399 = vsel %vm5345, %v5330, 0.0
        %v5400 = vadd.f32 %v5398, %v5399
        %v5401 = vsel %vm5345, %v5331, 0.0
        %v5402 = vadd.f32 %v5400, %v5401
        %v5403 = vsel %vm5345, %v5332, 0.0
        %v5404 = vadd.f32 %v5402, %v5403
        %v5405 = vrot.slane %v5404, 4
        %v5406 = vadd.f32 %v5404, %v5405
        %v5407 = vrot.slane %v5406, 2
        %v5408 = vadd.f32 %v5406, %v5407
        %v5409 = vrot.slane %v5408, 1
        %v5410 = vadd.f32 %v5408, %v5409
        %v5411 = vsel %vm5345, %v5333, 0.0
        %v5412 = vsel %vm5345, %v5334, 0.0
        %v5413 = vadd.f32 %v5411, %v5412
        %v5414 = vsel %vm5345, %v5335, 0.0
        %v5415 = vadd.f32 %v5413, %v5414
        %v5416 = vsel %vm5345, %v5336, 0.0
        %v5417 = vadd.f32 %v5415, %v5416
        %v5418 = vrot.slane %v5417, 4
        %v5419 = vadd.f32 %v5417, %v5418
        %v5420 = vrot.slane %v5419, 2
        %v5421 = vadd.f32 %v5419, %v5420
        %v5422 = vrot.slane %v5421, 1
        %v5423 = vadd.f32 %v5421, %v5422
        %v5424 = vsel %vm5345, %v5337, 0.0
        %v5425 = vsel %vm5345, %v5338, 0.0
        %v5426 = vadd.f32 %v5424, %v5425
        %v5427 = vsel %vm5345, %v5339, 0.0
        %v5428 = vadd.f32 %v5426, %v5427
        %v5429 = vsel %vm5345, %v5340, 0.0
        %v5430 = vadd.f32 %v5428, %v5429
        %v5431 = vrot.slane %v5430, 4
        %v5432 = vadd.f32 %v5430, %v5431
        %v5433 = vrot.slane %v5432, 2
        %v5434 = vadd.f32 %v5432, %v5433
        %v5435 = vrot.slane %v5434, 1
        %v5436 = vadd.f32 %v5434, %v5435
        %v5437 = vsel %vm5345, %v5341, 0.0
        %v5438 = vsel %vm5345, %v5342, 0.0
        %v5439 = vadd.f32 %v5437, %v5438
        %v5440 = vsel %vm5345, %v5343, 0.0
        %v5441 = vadd.f32 %v5439, %v5440
        %v5442 = vsel %vm5345, %v5344, 0.0
        %v5443 = vadd.f32 %v5441, %v5442
        %v5444 = vrot.slane %v5443, 4
        %v5445 = vadd.f32 %v5443, %v5444
        %v5446 = vrot.slane %v5445, 2
        %v5447 = vadd.f32 %v5445, %v5446
        %v5448 = vrot.slane %v5447, 1
        %v5449 = vadd.f32 %v5447, %v5448
        %5458 = vrot.lane.b32.xlu0 %v5358, 127
        %v5459 = vpop.permute.xlu0 %5458
        %5460 = vrot.lane.b32.xlu0 %v5371, 127
        %v5461 = vpop.permute.xlu0 %5460
        %5462 = vrot.lane.b32.xlu0 %v5384, 127
        %v5463 = vpop.permute.xlu0 %5462
        %5464 = vrot.lane.b32.xlu0 %v5397, 127
        %v5465 = vpop.permute.xlu0 %5464
        %5466 = vrot.lane.b32.xlu0 %v5410, 127
        %v5467 = vpop.permute.xlu0 %5466
        %5468 = vrot.lane.b32.xlu0 %v5423, 127
        %v5469 = vpop.permute.xlu0 %5468
        %5470 = vrot.lane.b32.xlu0 %v5436, 127
        %v5471 = vpop.permute.xlu0 %5470
        %5472 = vrot.lane.b32.xlu0 %v5449, 127
        %v5473 = vpop.permute.xlu0 %5472
        %v5482 = vadd.f32 %v5205, %v5459
        %v5483 = vadd.f32 %v5218, %v5461
        %v5484 = vadd.f32 %v5231, %v5463
        %v5485 = vadd.f32 %v5244, %v5465
        %v5486 = vadd.f32 %v5257, %v5467
        %v5487 = vadd.f32 %v5270, %v5469
        %v5488 = vadd.f32 %v5283, %v5471
        %v5489 = vadd.f32 %v5296, %v5473
        %5490 = vset.pattern.permute.xlu0 2
        %5491 = vperm.xlu0 %5490, %v591
        %v5492 = vpop.permute.xlu0 %5491
        %5494 = vset.pattern.permute.xlu0 2
        %5495 = vperm.xlu0 %5494, %v592
        %v5496 = vpop.permute.xlu0 %5495
        %5498 = vset.pattern.permute.xlu0 2
        %5499 = vperm.xlu0 %5498, %v593
        %v5500 = vpop.permute.xlu0 %5499
        %5502 = vset.pattern.permute.xlu0 2
        %5503 = vperm.xlu0 %5502, %v594
        %v5504 = vpop.permute.xlu0 %5503
        %v5506 = vmul.f32 %v5045, %v5492
        %v5507 = vmul.f32 %v5048, %v5496
        %v5508 = vmul.f32 %v5051, %v5500
        %v5509 = vmul.f32 %v5054, %v5504
        %v5510 = vmul.f32 %v5057, %v5492
        %v5511 = vmul.f32 %v5060, %v5496
        %v5512 = vmul.f32 %v5063, %v5500
        %v5513 = vmul.f32 %v5066, %v5504
        %v5514 = vmul.f32 %v5069, %v5492
        %v5515 = vmul.f32 %v5072, %v5496
        %v5516 = vmul.f32 %v5075, %v5500
        %v5517 = vmul.f32 %v5078, %v5504
        %v5518 = vmul.f32 %v5081, %v5492
        %v5519 = vmul.f32 %v5084, %v5496
        %v5520 = vmul.f32 %v5087, %v5500
        %v5521 = vmul.f32 %v5090, %v5504
        %v5522 = vmul.f32 %v5093, %v5492
        %v5523 = vmul.f32 %v5096, %v5496
        %v5524 = vmul.f32 %v5099, %v5500
        %v5525 = vmul.f32 %v5102, %v5504
        %v5526 = vmul.f32 %v5105, %v5492
        %v5527 = vmul.f32 %v5108, %v5496
        %v5528 = vmul.f32 %v5111, %v5500
        %v5529 = vmul.f32 %v5114, %v5504
        %v5530 = vmul.f32 %v5117, %v5492
        %v5531 = vmul.f32 %v5120, %v5496
        %v5532 = vmul.f32 %v5123, %v5500
        %v5533 = vmul.f32 %v5126, %v5504
        %v5534 = vmul.f32 %v5129, %v5492
        %v5535 = vmul.f32 %v5132, %v5496
        %v5536 = vmul.f32 %v5135, %v5500
        %v5537 = vmul.f32 %v5138, %v5504
        %vm5538 = vcmask 146448
        %v5539 = vsel %vm5538, %v5506, 0.0
        %v5540 = vsel %vm5538, %v5507, 0.0
        %v5541 = vadd.f32 %v5539, %v5540
        %v5542 = vsel %vm5538, %v5508, 0.0
        %v5543 = vadd.f32 %v5541, %v5542
        %v5544 = vsel %vm5538, %v5509, 0.0
        %v5545 = vadd.f32 %v5543, %v5544
        %v5546 = vrot.slane %v5545, 4
        %v5547 = vadd.f32 %v5545, %v5546
        %v5548 = vrot.slane %v5547, 2
        %v5549 = vadd.f32 %v5547, %v5548
        %v5550 = vrot.slane %v5549, 1
        %v5551 = vadd.f32 %v5549, %v5550
        %v5552 = vsel %vm5538, %v5510, 0.0
        %v5553 = vsel %vm5538, %v5511, 0.0
        %v5554 = vadd.f32 %v5552, %v5553
        %v5555 = vsel %vm5538, %v5512, 0.0
        %v5556 = vadd.f32 %v5554, %v5555
        %v5557 = vsel %vm5538, %v5513, 0.0
        %v5558 = vadd.f32 %v5556, %v5557
        %v5559 = vrot.slane %v5558, 4
        %v5560 = vadd.f32 %v5558, %v5559
        %v5561 = vrot.slane %v5560, 2
        %v5562 = vadd.f32 %v5560, %v5561
        %v5563 = vrot.slane %v5562, 1
        %v5564 = vadd.f32 %v5562, %v5563
        %v5565 = vsel %vm5538, %v5514, 0.0
        %v5566 = vsel %vm5538, %v5515, 0.0
        %v5567 = vadd.f32 %v5565, %v5566
        %v5568 = vsel %vm5538, %v5516, 0.0
        %v5569 = vadd.f32 %v5567, %v5568
        %v5570 = vsel %vm5538, %v5517, 0.0
        %v5571 = vadd.f32 %v5569, %v5570
        %v5572 = vrot.slane %v5571, 4
        %v5573 = vadd.f32 %v5571, %v5572
        %v5574 = vrot.slane %v5573, 2
        %v5575 = vadd.f32 %v5573, %v5574
        %v5576 = vrot.slane %v5575, 1
        %v5577 = vadd.f32 %v5575, %v5576
        %v5578 = vsel %vm5538, %v5518, 0.0
        %v5579 = vsel %vm5538, %v5519, 0.0
        %v5580 = vadd.f32 %v5578, %v5579
        %v5581 = vsel %vm5538, %v5520, 0.0
        %v5582 = vadd.f32 %v5580, %v5581
        %v5583 = vsel %vm5538, %v5521, 0.0
        %v5584 = vadd.f32 %v5582, %v5583
        %v5585 = vrot.slane %v5584, 4
        %v5586 = vadd.f32 %v5584, %v5585
        %v5587 = vrot.slane %v5586, 2
        %v5588 = vadd.f32 %v5586, %v5587
        %v5589 = vrot.slane %v5588, 1
        %v5590 = vadd.f32 %v5588, %v5589
        %v5591 = vsel %vm5538, %v5522, 0.0
        %v5592 = vsel %vm5538, %v5523, 0.0
        %v5593 = vadd.f32 %v5591, %v5592
        %v5594 = vsel %vm5538, %v5524, 0.0
        %v5595 = vadd.f32 %v5593, %v5594
        %v5596 = vsel %vm5538, %v5525, 0.0
        %v5597 = vadd.f32 %v5595, %v5596
        %v5598 = vrot.slane %v5597, 4
        %v5599 = vadd.f32 %v5597, %v5598
        %v5600 = vrot.slane %v5599, 2
        %v5601 = vadd.f32 %v5599, %v5600
        %v5602 = vrot.slane %v5601, 1
        %v5603 = vadd.f32 %v5601, %v5602
        %v5604 = vsel %vm5538, %v5526, 0.0
        %v5605 = vsel %vm5538, %v5527, 0.0
        %v5606 = vadd.f32 %v5604, %v5605
        %v5607 = vsel %vm5538, %v5528, 0.0
        %v5608 = vadd.f32 %v5606, %v5607
        %v5609 = vsel %vm5538, %v5529, 0.0
        %v5610 = vadd.f32 %v5608, %v5609
        %v5611 = vrot.slane %v5610, 4
        %v5612 = vadd.f32 %v5610, %v5611
        %v5613 = vrot.slane %v5612, 2
        %v5614 = vadd.f32 %v5612, %v5613
        %v5615 = vrot.slane %v5614, 1
        %v5616 = vadd.f32 %v5614, %v5615
        %v5617 = vsel %vm5538, %v5530, 0.0
        %v5618 = vsel %vm5538, %v5531, 0.0
        %v5619 = vadd.f32 %v5617, %v5618
        %v5620 = vsel %vm5538, %v5532, 0.0
        %v5621 = vadd.f32 %v5619, %v5620
        %v5622 = vsel %vm5538, %v5533, 0.0
        %v5623 = vadd.f32 %v5621, %v5622
        %v5624 = vrot.slane %v5623, 4
        %v5625 = vadd.f32 %v5623, %v5624
        %v5626 = vrot.slane %v5625, 2
        %v5627 = vadd.f32 %v5625, %v5626
        %v5628 = vrot.slane %v5627, 1
        %v5629 = vadd.f32 %v5627, %v5628
        %v5630 = vsel %vm5538, %v5534, 0.0
        %v5631 = vsel %vm5538, %v5535, 0.0
        %v5632 = vadd.f32 %v5630, %v5631
        %v5633 = vsel %vm5538, %v5536, 0.0
        %v5634 = vadd.f32 %v5632, %v5633
        %v5635 = vsel %vm5538, %v5537, 0.0
        %v5636 = vadd.f32 %v5634, %v5635
        %v5637 = vrot.slane %v5636, 4
        %v5638 = vadd.f32 %v5636, %v5637
        %v5639 = vrot.slane %v5638, 2
        %v5640 = vadd.f32 %v5638, %v5639
        %v5641 = vrot.slane %v5640, 1
        %v5642 = vadd.f32 %v5640, %v5641
        %5651 = vrot.lane.b32.xlu0 %v5551, 126
        %v5652 = vpop.permute.xlu0 %5651
        %5653 = vrot.lane.b32.xlu0 %v5564, 126
        %v5654 = vpop.permute.xlu0 %5653
        %5655 = vrot.lane.b32.xlu0 %v5577, 126
        %v5656 = vpop.permute.xlu0 %5655
        %5657 = vrot.lane.b32.xlu0 %v5590, 126
        %v5658 = vpop.permute.xlu0 %5657
        %5659 = vrot.lane.b32.xlu0 %v5603, 126
        %v5660 = vpop.permute.xlu0 %5659
        %5661 = vrot.lane.b32.xlu0 %v5616, 126
        %v5662 = vpop.permute.xlu0 %5661
        %5663 = vrot.lane.b32.xlu0 %v5629, 126
        %v5664 = vpop.permute.xlu0 %5663
        %5665 = vrot.lane.b32.xlu0 %v5642, 126
        %v5666 = vpop.permute.xlu0 %5665
        %v5675 = vadd.f32 %v5482, %v5652
        %v5676 = vadd.f32 %v5483, %v5654
        %v5677 = vadd.f32 %v5484, %v5656
        %v5678 = vadd.f32 %v5485, %v5658
        %v5679 = vadd.f32 %v5486, %v5660
        %v5680 = vadd.f32 %v5487, %v5662
        %v5681 = vadd.f32 %v5488, %v5664
        %v5682 = vadd.f32 %v5489, %v5666
        %v5683 = vmul.f32 %v5675, 0.5
        %v5684 = vmul.f32 %v5676, 0.5
        %v5685 = vmul.f32 %v5677, 0.5
        %v5686 = vmul.f32 %v5678, 0.5
        %v5687 = vmul.f32 %v5679, 0.5
        %v5688 = vmul.f32 %v5680, 0.5
        %v5689 = vmul.f32 %v5681, 0.5
        %v5690 = vmul.f32 %v5682, 0.5
        %v5691 = vmul.f32 %v5675, 0.70710677
        %v5692 = vmul.f32 %v5676, 0.70710677
        %v5693 = vmul.f32 %v5677, 0.70710677
        %v5694 = vmul.f32 %v5678, 0.70710677
        %v5695 = vmul.f32 %v5679, 0.70710677
        %v5696 = vmul.f32 %v5680, 0.70710677
        %v5697 = vmul.f32 %v5681, 0.70710677
        %v5698 = vmul.f32 %v5682, 0.70710677
        %v5699 = vand.u32 2147483647, %v5691
        %v5700 = vand.u32 2147483647, %v5692
        %v5701 = vand.u32 2147483647, %v5693
        %v5702 = vand.u32 2147483647, %v5694
        %v5703 = vand.u32 2147483647, %v5695
        %v5704 = vand.u32 2147483647, %v5696
        %v5705 = vand.u32 2147483647, %v5697
        %v5706 = vand.u32 2147483647, %v5698
        %v5707 = vmul.f32 %v5699, 0.3275911
        %v5708 = vmul.f32 %v5700, 0.3275911
        %v5709 = vmul.f32 %v5701, 0.3275911
        %v5710 = vmul.f32 %v5702, 0.3275911
        %v5711 = vmul.f32 %v5703, 0.3275911
        %v5712 = vmul.f32 %v5704, 0.3275911
        %v5713 = vmul.f32 %v5705, 0.3275911
        %v5714 = vmul.f32 %v5706, 0.3275911
        %v5715 = vadd.f32 %v5707, 1.0
        %v5716 = vadd.f32 %v5708, 1.0
        %v5717 = vadd.f32 %v5709, 1.0
        %v5718 = vadd.f32 %v5710, 1.0
        %v5719 = vadd.f32 %v5711, 1.0
        %v5720 = vadd.f32 %v5712, 1.0
        %v5721 = vadd.f32 %v5713, 1.0
        %v5722 = vadd.f32 %v5714, 1.0
        %v5723 = vrcp.pop %v5715
        %v5724 = vmul.f32 %v5715, %v5723
        %v5725 = vsub.f32 1.0, %v5724
        %v5726 = vmul.f32 %v5723, %v5725
        %v5727 = vadd.f32 %v5723, %v5726
        %vm5728 = vweird.f32 %v5715
        %vm5729 = vweird.f32 %v5723
        %vm5730 = vmor %vm5728, %vm5729
        %v5731 = vsel %vm5730, %v5723, %v5727
        %v5732 = vand.u32 2147483647, %v5715
        %vm5733 = vcmp.eq.f32.partialorder %v5732, 8.507059e+37
        %v5734 = vand.u32 %v5715, 2147483648
        %v5735 = vor.u32 1.1754944e-38, %v5734
        %v5736 = vsel %vm5733, %v5735, %v5731
        %v5737 = vmul.f32 1.0, %v5736
        %v5738 = vrcp.pop %v5716
        %v5739 = vmul.f32 %v5716, %v5738
        %v5740 = vsub.f32 1.0, %v5739
        %v5741 = vmul.f32 %v5738, %v5740
        %v5742 = vadd.f32 %v5738, %v5741
        %vm5743 = vweird.f32 %v5716
        %vm5744 = vweird.f32 %v5738
        %vm5745 = vmor %vm5743, %vm5744
        %v5746 = vsel %vm5745, %v5738, %v5742
        %v5747 = vand.u32 2147483647, %v5716
        %vm5748 = vcmp.eq.f32.partialorder %v5747, 8.507059e+37
        %v5749 = vand.u32 %v5716, 2147483648
        %v5750 = vor.u32 1.1754944e-38, %v5749
        %v5751 = vsel %vm5748, %v5750, %v5746
        %v5752 = vmul.f32 1.0, %v5751
        %v5753 = vrcp.pop %v5717
        %v5754 = vmul.f32 %v5717, %v5753
        %v5755 = vsub.f32 1.0, %v5754
        %v5756 = vmul.f32 %v5753, %v5755
        %v5757 = vadd.f32 %v5753, %v5756
        %vm5758 = vweird.f32 %v5717
        %vm5759 = vweird.f32 %v5753
        %vm5760 = vmor %vm5758, %vm5759
        %v5761 = vsel %vm5760, %v5753, %v5757
        %v5762 = vand.u32 2147483647, %v5717
        %vm5763 = vcmp.eq.f32.partialorder %v5762, 8.507059e+37
        %v5764 = vand.u32 %v5717, 2147483648
        %v5765 = vor.u32 1.1754944e-38, %v5764
        %v5766 = vsel %vm5763, %v5765, %v5761
        %v5767 = vmul.f32 1.0, %v5766
        %v5768 = vrcp.pop %v5718
        %v5769 = vmul.f32 %v5718, %v5768
        %v5770 = vsub.f32 1.0, %v5769
        %v5771 = vmul.f32 %v5768, %v5770
        %v5772 = vadd.f32 %v5768, %v5771
        %vm5773 = vweird.f32 %v5718
        %vm5774 = vweird.f32 %v5768
        %vm5775 = vmor %vm5773, %vm5774
        %v5776 = vsel %vm5775, %v5768, %v5772
        %v5777 = vand.u32 2147483647, %v5718
        %vm5778 = vcmp.eq.f32.partialorder %v5777, 8.507059e+37
        %v5779 = vand.u32 %v5718, 2147483648
        %v5780 = vor.u32 1.1754944e-38, %v5779
        %v5781 = vsel %vm5778, %v5780, %v5776
        %v5782 = vmul.f32 1.0, %v5781
        %v5783 = vrcp.pop %v5719
        %v5784 = vmul.f32 %v5719, %v5783
        %v5785 = vsub.f32 1.0, %v5784
        %v5786 = vmul.f32 %v5783, %v5785
        %v5787 = vadd.f32 %v5783, %v5786
        %vm5788 = vweird.f32 %v5719
        %vm5789 = vweird.f32 %v5783
        %vm5790 = vmor %vm5788, %vm5789
        %v5791 = vsel %vm5790, %v5783, %v5787
        %v5792 = vand.u32 2147483647, %v5719
        %vm5793 = vcmp.eq.f32.partialorder %v5792, 8.507059e+37
        %v5794 = vand.u32 %v5719, 2147483648
        %v5795 = vor.u32 1.1754944e-38, %v5794
        %v5796 = vsel %vm5793, %v5795, %v5791
        %v5797 = vmul.f32 1.0, %v5796
        %v5798 = vrcp.pop %v5720
        %v5799 = vmul.f32 %v5720, %v5798
        %v5800 = vsub.f32 1.0, %v5799
        %v5801 = vmul.f32 %v5798, %v5800
        %v5802 = vadd.f32 %v5798, %v5801
        %vm5803 = vweird.f32 %v5720
        %vm5804 = vweird.f32 %v5798
        %vm5805 = vmor %vm5803, %vm5804
        %v5806 = vsel %vm5805, %v5798, %v5802
        %v5807 = vand.u32 2147483647, %v5720
        %vm5808 = vcmp.eq.f32.partialorder %v5807, 8.507059e+37
        %v5809 = vand.u32 %v5720, 2147483648
        %v5810 = vor.u32 1.1754944e-38, %v5809
        %v5811 = vsel %vm5808, %v5810, %v5806
        %v5812 = vmul.f32 1.0, %v5811
        %v5813 = vrcp.pop %v5721
        %v5814 = vmul.f32 %v5721, %v5813
        %v5815 = vsub.f32 1.0, %v5814
        %v5816 = vmul.f32 %v5813, %v5815
        %v5817 = vadd.f32 %v5813, %v5816
        %vm5818 = vweird.f32 %v5721
        %vm5819 = vweird.f32 %v5813
        %vm5820 = vmor %vm5818, %vm5819
        %v5821 = vsel %vm5820, %v5813, %v5817
        %v5822 = vand.u32 2147483647, %v5721
        %vm5823 = vcmp.eq.f32.partialorder %v5822, 8.507059e+37
        %v5824 = vand.u32 %v5721, 2147483648
        %v5825 = vor.u32 1.1754944e-38, %v5824
        %v5826 = vsel %vm5823, %v5825, %v5821
        %v5827 = vmul.f32 1.0, %v5826
        %v5828 = vrcp.pop %v5722
        %v5829 = vmul.f32 %v5722, %v5828
        %v5830 = vsub.f32 1.0, %v5829
        %v5831 = vmul.f32 %v5828, %v5830
        %v5832 = vadd.f32 %v5828, %v5831
        %vm5833 = vweird.f32 %v5722
        %vm5834 = vweird.f32 %v5828
        %vm5835 = vmor %vm5833, %vm5834
        %v5836 = vsel %vm5835, %v5828, %v5832
        %v5837 = vand.u32 2147483647, %v5722
        %vm5838 = vcmp.eq.f32.partialorder %v5837, 8.507059e+37
        %v5839 = vand.u32 %v5722, 2147483648
        %v5840 = vor.u32 1.1754944e-38, %v5839
        %v5841 = vsel %vm5838, %v5840, %v5836
        %v5842 = vmul.f32 1.0, %v5841
        %v5843 = vmul.f32 %v5737, 1.0614054
        %v5844 = vmul.f32 %v5752, 1.0614054
        %v5845 = vmul.f32 %v5767, 1.0614054
        %v5846 = vmul.f32 %v5782, 1.0614054
        %v5847 = vmul.f32 %v5797, 1.0614054
        %v5848 = vmul.f32 %v5812, 1.0614054
        %v5849 = vmul.f32 %v5827, 1.0614054
        %v5850 = vmul.f32 %v5842, 1.0614054
        %v5851 = vadd.f32 %v5843, -1.4531521
        %v5852 = vadd.f32 %v5844, -1.4531521
        %v5853 = vadd.f32 %v5845, -1.4531521
        %v5854 = vadd.f32 %v5846, -1.4531521
        %v5855 = vadd.f32 %v5847, -1.4531521
        %v5856 = vadd.f32 %v5848, -1.4531521
        %v5857 = vadd.f32 %v5849, -1.4531521
        %v5858 = vadd.f32 %v5850, -1.4531521
        %v5859 = vmul.f32 %v5851, %v5737
        %v5860 = vmul.f32 %v5852, %v5752
        %v5861 = vmul.f32 %v5853, %v5767
        %v5862 = vmul.f32 %v5854, %v5782
        %v5863 = vmul.f32 %v5855, %v5797
        %v5864 = vmul.f32 %v5856, %v5812
        %v5865 = vmul.f32 %v5857, %v5827
        %v5866 = vmul.f32 %v5858, %v5842
        %v5867 = vadd.f32 %v5859, 1.4214138
        %v5868 = vadd.f32 %v5860, 1.4214138
        %v5869 = vadd.f32 %v5861, 1.4214138
        %v5870 = vadd.f32 %v5862, 1.4214138
        %v5871 = vadd.f32 %v5863, 1.4214138
        %v5872 = vadd.f32 %v5864, 1.4214138
        %v5873 = vadd.f32 %v5865, 1.4214138
        %v5874 = vadd.f32 %v5866, 1.4214138
        %v5875 = vmul.f32 %v5867, %v5737
        %v5876 = vmul.f32 %v5868, %v5752
        %v5877 = vmul.f32 %v5869, %v5767
        %v5878 = vmul.f32 %v5870, %v5782
        %v5879 = vmul.f32 %v5871, %v5797
        %v5880 = vmul.f32 %v5872, %v5812
        %v5881 = vmul.f32 %v5873, %v5827
        %v5882 = vmul.f32 %v5874, %v5842
        %v5883 = vadd.f32 %v5875, -0.28449672
        %v5884 = vadd.f32 %v5876, -0.28449672
        %v5885 = vadd.f32 %v5877, -0.28449672
        %v5886 = vadd.f32 %v5878, -0.28449672
        %v5887 = vadd.f32 %v5879, -0.28449672
        %v5888 = vadd.f32 %v5880, -0.28449672
        %v5889 = vadd.f32 %v5881, -0.28449672
        %v5890 = vadd.f32 %v5882, -0.28449672
        %v5891 = vmul.f32 %v5883, %v5737
        %v5892 = vmul.f32 %v5884, %v5752
        %v5893 = vmul.f32 %v5885, %v5767
        %v5894 = vmul.f32 %v5886, %v5782
        %v5895 = vmul.f32 %v5887, %v5797
        %v5896 = vmul.f32 %v5888, %v5812
        %v5897 = vmul.f32 %v5889, %v5827
        %v5898 = vmul.f32 %v5890, %v5842
        %v5899 = vadd.f32 %v5891, 0.2548296
        %v5900 = vadd.f32 %v5892, 0.2548296
        %v5901 = vadd.f32 %v5893, 0.2548296
        %v5902 = vadd.f32 %v5894, 0.2548296
        %v5903 = vadd.f32 %v5895, 0.2548296
        %v5904 = vadd.f32 %v5896, 0.2548296
        %v5905 = vadd.f32 %v5897, 0.2548296
        %v5906 = vadd.f32 %v5898, 0.2548296
        %v5907 = vmul.f32 %v5899, %v5737
        %v5908 = vmul.f32 %v5900, %v5752
        %v5909 = vmul.f32 %v5901, %v5767
        %v5910 = vmul.f32 %v5902, %v5782
        %v5911 = vmul.f32 %v5903, %v5797
        %v5912 = vmul.f32 %v5904, %v5812
        %v5913 = vmul.f32 %v5905, %v5827
        %v5914 = vmul.f32 %v5906, %v5842
        %v5915 = vsub.f32 0.0, %v5699
        %v5916 = vsub.f32 0.0, %v5700
        %v5917 = vsub.f32 0.0, %v5701
        %v5918 = vsub.f32 0.0, %v5702
        %v5919 = vsub.f32 0.0, %v5703
        %v5920 = vsub.f32 0.0, %v5704
        %v5921 = vsub.f32 0.0, %v5705
        %v5922 = vsub.f32 0.0, %v5706
        %v5923 = vmul.f32 %v5915, %v5699
        %v5924 = vmul.f32 %v5916, %v5700
        %v5925 = vmul.f32 %v5917, %v5701
        %v5926 = vmul.f32 %v5918, %v5702
        %v5927 = vmul.f32 %v5919, %v5703
        %v5928 = vmul.f32 %v5920, %v5704
        %v5929 = vmul.f32 %v5921, %v5705
        %v5930 = vmul.f32 %v5922, %v5706
        %v5931 = vmul.f32 %v5923, 1.442695
        %v5932 = vpow.pop %v5931
        %v5933 = vmul.f32 %v5924, 1.442695
        %v5934 = vpow.pop %v5933
        %v5935 = vmul.f32 %v5925, 1.442695
        %v5936 = vpow.pop %v5935
        %v5937 = vmul.f32 %v5926, 1.442695
        %v5938 = vpow.pop %v5937
        %v5939 = vmul.f32 %v5927, 1.442695
        %v5940 = vpow.pop %v5939
        %v5941 = vmul.f32 %v5928, 1.442695
        %v5942 = vpow.pop %v5941
        %v5943 = vmul.f32 %v5929, 1.442695
        %v5944 = vpow.pop %v5943
        %v5945 = vmul.f32 %v5930, 1.442695
        %v5946 = vpow.pop %v5945
        %v5947 = vmul.f32 %v5907, %v5932
        %v5948 = vmul.f32 %v5908, %v5934
        %v5949 = vmul.f32 %v5909, %v5936
        %v5950 = vmul.f32 %v5910, %v5938
        %v5951 = vmul.f32 %v5911, %v5940
        %v5952 = vmul.f32 %v5912, %v5942
        %v5953 = vmul.f32 %v5913, %v5944
        %v5954 = vmul.f32 %v5914, %v5946
        %v5955 = vsub.f32 1.0, %v5947
        %v5956 = vsub.f32 1.0, %v5948
        %v5957 = vsub.f32 1.0, %v5949
        %v5958 = vsub.f32 1.0, %v5950
        %v5959 = vsub.f32 1.0, %v5951
        %v5960 = vsub.f32 1.0, %v5952
        %v5961 = vsub.f32 1.0, %v5953
        %v5962 = vsub.f32 1.0, %v5954
        %vm5963 = vcmp.ge.f32.partialorder %v5691, 0.0
        %vm5964 = vcmp.ge.f32.partialorder %v5692, 0.0
        %vm5965 = vcmp.ge.f32.partialorder %v5693, 0.0
        %vm5966 = vcmp.ge.f32.partialorder %v5694, 0.0
        %vm5967 = vcmp.ge.f32.partialorder %v5695, 0.0
        %vm5968 = vcmp.ge.f32.partialorder %v5696, 0.0
        %vm5969 = vcmp.ge.f32.partialorder %v5697, 0.0
        %vm5970 = vcmp.ge.f32.partialorder %v5698, 0.0
        %v5971 = vsub.f32 0.0, %v5955
        %v5972 = vsub.f32 0.0, %v5956
        %v5973 = vsub.f32 0.0, %v5957
        %v5974 = vsub.f32 0.0, %v5958
        %v5975 = vsub.f32 0.0, %v5959
        %v5976 = vsub.f32 0.0, %v5960
        %v5977 = vsub.f32 0.0, %v5961
        %v5978 = vsub.f32 0.0, %v5962
        %v5979 = vsel %vm5963, %v5955, %v5971
        %v5980 = vsel %vm5964, %v5956, %v5972
        %v5981 = vsel %vm5965, %v5957, %v5973
        %v5982 = vsel %vm5966, %v5958, %v5974
        %v5983 = vsel %vm5967, %v5959, %v5975
        %v5984 = vsel %vm5968, %v5960, %v5976
        %v5985 = vsel %vm5969, %v5961, %v5977
        %v5986 = vsel %vm5970, %v5962, %v5978
        %v5987 = vadd.f32 %v5979, 1.0
        %v5988 = vadd.f32 %v5980, 1.0
        %v5989 = vadd.f32 %v5981, 1.0
        %v5990 = vadd.f32 %v5982, 1.0
        %v5991 = vadd.f32 %v5983, 1.0
        %v5992 = vadd.f32 %v5984, 1.0
        %v5993 = vadd.f32 %v5985, 1.0
        %v5994 = vadd.f32 %v5986, 1.0
        %v5995 = vmul.f32 %v5683, %v5987
        %v5996 = vmul.f32 %v5684, %v5988
        %v5997 = vmul.f32 %v5685, %v5989
        %v5998 = vmul.f32 %v5686, %v5990
        %v5999 = vmul.f32 %v5687, %v5991
        %v6000 = vmul.f32 %v5688, %v5992
        %v6001 = vmul.f32 %v5689, %v5993
        %v6002 = vmul.f32 %v5690, %v5994
        %v6003 = vld [vmem:[%s5] sm:$0xff]
        %v6004 = vld [vmem:[%s5 + $0x8] sm:$0xff]
        %v6005 = vld [vmem:[%s5 + $0x10] sm:$0xff]
        %v6006 = vld [vmem:[%s5 + $0x18] sm:$0xff]
        %v6015 = vrot.slane %v5996, 7
        %vm6016 = vcmask 1041409
        %v6017 = vsel %vm6016, %v6015, %v5995
        %v6018 = vrot.slane %v5997, 6
        %vm6019 = vcmask 1042434
        %v6020 = vsel %vm6019, %v6018, %v6017
        %v6021 = vrot.slane %v5998, 5
        %vm6022 = vcmask 1043459
        %v6023 = vsel %vm6022, %v6021, %v6020
        %v6024 = vrot.slane %v5999, 4
        %vm6025 = vcmask 1044484
        %v6026 = vsel %vm6025, %v6024, %v6023
        %v6027 = vrot.slane %v6000, 3
        %vm6028 = vcmask 1045509
        %v6029 = vsel %vm6028, %v6027, %v6026
        %v6030 = vrot.slane %v6001, 2
        %vm6031 = vcmask 1046534
        %v6032 = vsel %vm6031, %v6030, %v6029
        %v6033 = vrot.slane %v6002, 1
        %vm6034 = vcmask 1047559
        %v6035 = vsel %vm6034, %v6033, %v6032
        %v6036 = vsel %vm5192, %v6035, 0
        %6038 = vmatpush.msra.mxu0 0.0
        %6039 = vmatpush.msra.mxu0 0.0
        %6040 = vmatpush.msra.mxu0 0.0
        %6041 = vmatpush.msra.mxu0 0.0
        %6042 = vmatpush.msra.mxu0 0.0
        %6043 = vmatpush.msra.mxu0 0.0
        %6044 = vmatpush.msra.mxu0 0.0
        %6045 = vmatpush.msra.mxu0 0.0
        %6046 = vmatpush.msra.mxu0 0.0
        %6047 = vmatpush.msra.mxu0 0.0
        %6048 = vmatpush.msra.mxu0 0.0
        %6049 = vmatpush.msra.mxu0 0.0
        %6050 = vmatpush.msra.mxu0 0.0
        %6051 = vmatpush.msra.mxu0 0.0
        %6052 = vmatpush.msra.mxu0 %v6005
        %6053 = vmatpush.msra.mxu0 %v6003
        %6054 = vmatmul.f32.gmra.mxu0 %v6036
        %v6055 = vpop.f32.mrf.mxu0
        %v6056 = vadd.f32 0.0, %v6055
        %6057 = vdwg.mxu0
        %6058 = vmatpush.msra.mxu0 0.0
        %6059 = vmatpush.msra.mxu0 0.0
        %6060 = vmatpush.msra.mxu0 0.0
        %6061 = vmatpush.msra.mxu0 0.0
        %6062 = vmatpush.msra.mxu0 0.0
        %6063 = vmatpush.msra.mxu0 0.0
        %6064 = vmatpush.msra.mxu0 0.0
        %6065 = vmatpush.msra.mxu0 0.0
        %6066 = vmatpush.msra.mxu0 0.0
        %6067 = vmatpush.msra.mxu0 0.0
        %6068 = vmatpush.msra.mxu0 0.0
        %6069 = vmatpush.msra.mxu0 0.0
        %6070 = vmatpush.msra.mxu0 0.0
        %6071 = vmatpush.msra.mxu0 0.0
        %6072 = vmatpush.msra.mxu0 %v6006
        %6073 = vmatpush.msra.mxu0 %v6004
        %6074 = vmatmul.f32.gmra.mxu0 %v6036
        %v6075 = vpop.f32.mrf.mxu0
        %v6076 = vadd.f32 0.0, %v6075
        %6077 = vdwg.mxu0
        %6079 = vrot.lane.b32.xlu0 %v6056, 64
        %v6080 = vpop.permute.xlu0 %6079
        %vm6081 = vcmask 261120
        %v6082 = vsel %vm6081, %v6056, 0
        %v6084 = vsel %vm6081, %v6080, 0
        %6086 = vmatpush.xpose.msra.mxu0 0.0
        %6087 = vmatpush.xpose.msra.mxu0 0.0
        %6088 = vmatpush.xpose.msra.mxu0 0.0
        %6089 = vmatpush.xpose.msra.mxu0 0.0
        %6090 = vmatpush.xpose.msra.mxu0 0.0
        %6091 = vmatpush.xpose.msra.mxu0 0.0
        %6092 = vmatpush.xpose.msra.mxu0 0.0
        %6093 = vmatpush.xpose.msra.mxu0 0.0
        %6094 = vmatpush.xpose.msra.mxu0 0.0
        %6095 = vmatpush.xpose.msra.mxu0 0.0
        %6096 = vmatpush.xpose.msra.mxu0 0.0
        %6097 = vmatpush.xpose.msra.mxu0 0.0
        %6098 = vmatpush.xpose.msra.mxu0 0.0
        %6099 = vmatpush.xpose.msra.mxu0 0.0
        %6100 = vmatpush.xpose.msra.mxu0 0.0
        %6101 = vmatpush.xpose.msra.mxu0 %v6084
        %6102 = vmatmul.f32.gmra.mxu0 %v6082
        %v6103 = vpop.f32.mrf.mxu0
        %v6104 = vadd.f32 0.0, %v6103
        %6105 = vdwg.mxu0
        %v6106 = vmul.f32 %v6104, 0.17677669
        %vm6107 = vcmask 64512
        %v6108 = vsel %vm6107, %v6106, -inf
        %6109 = vmax.xlane.f32.xlu0 %v6108
        %v6110 = vpop.xlane.xlu0 %6109
        %v6111 = vsub.f32 %v6106, %v6110
        %v6112 = vmul.f32 %v6111, 1.442695
        %v6113 = vpow.pop %v6112
        %v6114 = vsel %vm6107, %v6113, 0.0
        %6115 = vadd.xlane.f32.xlu0 %v6114
        %v6116 = vpop.xlane.xlu0 %6115
        %v6117 = vrcp.pop %v6116
        %v6118 = vmul.f32 %v6113, %v6117
        %v6120 = vsel %vm6107, %v6118, 0
        %6122 = vmatpush.msra.mxu0 0.0
        %6123 = vmatpush.msra.mxu0 0.0
        %6124 = vmatpush.msra.mxu0 0.0
        %6125 = vmatpush.msra.mxu0 0.0
        %6126 = vmatpush.msra.mxu0 0.0
        %6127 = vmatpush.msra.mxu0 0.0
        %6128 = vmatpush.msra.mxu0 0.0
        %6129 = vmatpush.msra.mxu0 0.0
        %6130 = vmatpush.msra.mxu0 0.0
        %6131 = vmatpush.msra.mxu0 0.0
        %6132 = vmatpush.msra.mxu0 0.0
        %6133 = vmatpush.msra.mxu0 0.0
        %6134 = vmatpush.msra.mxu0 0.0
        %6135 = vmatpush.msra.mxu0 0.0
        %6136 = vmatpush.msra.mxu0 0.0
        %6137 = vmatpush.msra.mxu0 %v6076
        %6138 = vmatmul.f32.gmra.mxu0 %v6120
        %v6139 = vpop.f32.mrf.mxu0
        %v6140 = vadd.f32 0.0, %v6139
        %6141 = vdwg.mxu0
        %6142 = vrot.lane.b32.xlu0 %v6056, 96
        %v6143 = vpop.permute.xlu0 %6142
        %6144 = vrot.lane.b32.xlu0 %v6056, 32
        %v6145 = vpop.permute.xlu0 %6144
        %v6146 = vsel %vm6081, %v6143, 0
        %v6148 = vsel %vm6081, %v6145, 0
        %6150 = vmatpush.xpose.msra.mxu0 0.0
        %6151 = vmatpush.xpose.msra.mxu0 0.0
        %6152 = vmatpush.xpose.msra.mxu0 0.0
        %6153 = vmatpush.xpose.msra.mxu0 0.0
        %6154 = vmatpush.xpose.msra.mxu0 0.0
        %6155 = vmatpush.xpose.msra.mxu0 0.0
        %6156 = vmatpush.xpose.msra.mxu0 0.0
        %6157 = vmatpush.xpose.msra.mxu0 0.0
        %6158 = vmatpush.xpose.msra.mxu0 0.0
        %6159 = vmatpush.xpose.msra.mxu0 0.0
        %6160 = vmatpush.xpose.msra.mxu0 0.0
        %6161 = vmatpush.xpose.msra.mxu0 0.0
        %6162 = vmatpush.xpose.msra.mxu0 0.0
        %6163 = vmatpush.xpose.msra.mxu0 0.0
        %6164 = vmatpush.xpose.msra.mxu0 0.0
        %6165 = vmatpush.xpose.msra.mxu0 %v6148
        %6166 = vmatmul.f32.gmra.mxu0 %v6146
        %v6167 = vpop.f32.mrf.mxu0
        %v6168 = vadd.f32 0.0, %v6167
        %6169 = vdwg.mxu0
        %v6170 = vmul.f32 %v6168, 0.17677669
        %v6171 = vsel %vm6107, %v6170, -inf
        %6172 = vmax.xlane.f32.xlu0 %v6171
        %v6173 = vpop.xlane.xlu0 %6172
        %v6174 = vsub.f32 %v6170, %v6173
        %v6175 = vmul.f32 %v6174, 1.442695
        %v6176 = vpow.pop %v6175
        %v6177 = vsel %vm6107, %v6176, 0.0
        %6178 = vadd.xlane.f32.xlu0 %v6177
        %v6179 = vpop.xlane.xlu0 %6178
        %v6180 = vrcp.pop %v6179
        %v6181 = vmul.f32 %v6176, %v6180
        %6183 = vrot.lane.b32.xlu0 %v6076, 96
        %v6184 = vpop.permute.xlu0 %6183
        %v6187 = vsel %vm6107, %v6181, 0
        %6189 = vmatpush.msra.mxu0 0.0
        %6190 = vmatpush.msra.mxu0 0.0
        %6191 = vmatpush.msra.mxu0 0.0
        %6192 = vmatpush.msra.mxu0 0.0
        %6193 = vmatpush.msra.mxu0 0.0
        %6194 = vmatpush.msra.mxu0 0.0
        %6195 = vmatpush.msra.mxu0 0.0
        %6196 = vmatpush.msra.mxu0 0.0
        %6197 = vmatpush.msra.mxu0 0.0
        %6198 = vmatpush.msra.mxu0 0.0
        %6199 = vmatpush.msra.mxu0 0.0
        %6200 = vmatpush.msra.mxu0 0.0
        %6201 = vmatpush.msra.mxu0 0.0
        %6202 = vmatpush.msra.mxu0 0.0
        %6203 = vmatpush.msra.mxu0 0.0
        %6204 = vmatpush.msra.mxu0 %v6184
        %6205 = vmatmul.f32.gmra.mxu0 %v6187
        %v6206 = vpop.f32.mrf.mxu0
        %v6207 = vadd.f32 0.0, %v6206
        %6208 = vdwg.mxu0
        %6210 = vrot.lane.b32.xlu0 %v6207, 32
        %v6211 = vpop.permute.xlu0 %6210
        %v6213 = vsel %vm6081, %v6140, %v6211
        %v6214 = vld [vmem:[%s6] sm:$0xff]
        %v6215 = vld [vmem:[%s6 + $0x8] sm:$0xff]
        %v6216 = vld [vmem:[%s6 + $0x10] sm:$0xff]
        %v6217 = vld [vmem:[%s6 + $0x18] sm:$0xff]
        %v6218 = vld [vmem:[%s6 + $0x20] sm:$0xff]
        %v6219 = vld [vmem:[%s6 + $0x28] sm:$0xff]
        %v6220 = vld [vmem:[%s6 + $0x30] sm:$0xff]
        %v6221 = vld [vmem:[%s6 + $0x38] sm:$0xff]
        %v6222 = vld [vmem:[%s7] sm:$0x1]
        %v6224 = vperm.slane %v6222, 0
        %vm6226 = vcmask 523264
        %v6228 = vsel %vm6226, %v6213, 0
        %6230 = vmatpush.msra.mxu0 0.0
        %6231 = vmatpush.msra.mxu0 0.0
        %6232 = vmatpush.msra.mxu0 0.0
        %6233 = vmatpush.msra.mxu0 0.0
        %6234 = vmatpush.msra.mxu0 0.0
        %6235 = vmatpush.msra.mxu0 0.0
        %6236 = vmatpush.msra.mxu0 0.0
        %6237 = vmatpush.msra.mxu0 0.0
        %6238 = vmatpush.msra.mxu0 %v6221
        %6239 = vmatpush.msra.mxu0 %v6220
        %6240 = vmatpush.msra.mxu0 %v6219
        %6241 = vmatpush.msra.mxu0 %v6218
        %6242 = vmatpush.msra.mxu0 %v6217
        %6243 = vmatpush.msra.mxu0 %v6216
        %6244 = vmatpush.msra.mxu0 %v6215
        %6245 = vmatpush.msra.mxu0 %v6214
        %6246 = vmatmul.f32.gmra.mxu0 %v6228
        %v6247 = vpop.f32.mrf.mxu0
        %v6248 = vadd.f32 %v6224, %v6247
        %6249 = vdwg.mxu0
        %v6251 = vrot.slane %v6248, 1
        %v6252 = vrot.slane %v6248, 2
        %v6253 = vrot.slane %v6248, 3
        %v6254 = vrot.slane %v6248, 4
        %v6255 = vrot.slane %v6248, 5
        %v6256 = vrot.slane %v6248, 6
        %v6257 = vrot.slane %v6248, 7
        %v6266 = vadd.f32 %v5995, %v6248
        %v6267 = vadd.f32 %v5996, %v6251
        %v6268 = vadd.f32 %v5997, %v6252
        %v6269 = vadd.f32 %v5998, %v6253
        %v6270 = vadd.f32 %v5999, %v6254
        %v6271 = vadd.f32 %v6000, %v6255
        %v6272 = vadd.f32 %v6001, %v6256
        %v6273 = vadd.f32 %v6002, %v6257
        %v6274 = vld [vmem:[%s8] sm:$0x1]
        %v6275 = vld [vmem:[%s9] sm:$0x1]
        %v6284 = vrot.slane %v6267, 7
        %v6285 = vsel %vm6016, %v6284, %v6266
        %v6286 = vrot.slane %v6268, 6
        %v6287 = vsel %vm6019, %v6286, %v6285
        %v6288 = vrot.slane %v6269, 5
        %v6289 = vsel %vm6022, %v6288, %v6287
        %v6290 = vrot.slane %v6270, 4
        %v6291 = vsel %vm6025, %v6290, %v6289
        %v6292 = vrot.slane %v6271, 3
        %v6293 = vsel %vm6028, %v6292, %v6291
        %v6294 = vrot.slane %v6272, 2
        %v6295 = vsel %vm6031, %v6294, %v6293
        %v6296 = vrot.slane %v6273, 1
        %v6297 = vsel %vm6034, %v6296, %v6295
        %v6299 = vsel %vm5192, %v6297, 0.0
        %6300 = vadd.xlane.f32.xlu0 %v6299
        %v6301 = vpop.xlane.xlu0 %6300
        %v6302 = vrcp.pop 16.0
        %v6303 = vmul.f32 16.0, %v6302
        %v6304 = vsub.f32 1.0, %v6303
        %v6305 = vmul.f32 %v6302, %v6304
        %v6306 = vadd.f32 %v6302, %v6305
        %vm6307 = vweird.f32 %v6302
        %v6308 = vsel %vm6307, %v6302, %v6306
        %v6309 = vmul.f32 %v6301, %v6308
        %v6311 = vrot.slane %v6309, 1
        %v6312 = vrot.slane %v6309, 2
        %v6313 = vrot.slane %v6309, 3
        %v6314 = vrot.slane %v6309, 4
        %v6315 = vrot.slane %v6309, 5
        %v6316 = vrot.slane %v6309, 6
        %v6317 = vrot.slane %v6309, 7
        %v6326 = vsub.f32 %v6266, %v6309
        %v6327 = vsub.f32 %v6267, %v6311
        %v6328 = vsub.f32 %v6268, %v6312
        %v6329 = vsub.f32 %v6269, %v6313
        %v6330 = vsub.f32 %v6270, %v6314
        %v6331 = vsub.f32 %v6271, %v6315
        %v6332 = vsub.f32 %v6272, %v6316
        %v6333 = vsub.f32 %v6273, %v6317
        %v6334 = vmul.f32 %v6326, %v6326
        %v6335 = vmul.f32 %v6327, %v6327
        %v6336 = vmul.f32 %v6328, %v6328
        %v6337 = vmul.f32 %v6329, %v6329
        %v6338 = vmul.f32 %v6330, %v6330
        %v6339 = vmul.f32 %v6331, %v6331
        %v6340 = vmul.f32 %v6332, %v6332
        %v6341 = vmul.f32 %v6333, %v6333
        %v6350 = vrot.slane %v6335, 7
        %v6351 = vsel %vm6016, %v6350, %v6334
        %v6352 = vrot.slane %v6336, 6
        %v6353 = vsel %vm6019, %v6352, %v6351
        %v6354 = vrot.slane %v6337, 5
        %v6355 = vsel %vm6022, %v6354, %v6353
        %v6356 = vrot.slane %v6338, 4
        %v6357 = vsel %vm6025, %v6356, %v6355
        %v6358 = vrot.slane %v6339, 3
        %v6359 = vsel %vm6028, %v6358, %v6357
        %v6360 = vrot.slane %v6340, 2
        %v6361 = vsel %vm6031, %v6360, %v6359
        %v6362 = vrot.slane %v6341, 1
        %v6363 = vsel %vm6034, %v6362, %v6361
        %v6365 = vsel %vm5192, %v6363, 0.0
        %6366 = vadd.xlane.f32.xlu0 %v6365
        %v6367 = vpop.xlane.xlu0 %6366
        %v6368 = vmul.f32 %v6367, %v6308
        %v6369 = vadd.f32 %v6368, 1e-05
        %v6370 = vrsqrt.pop %v6369
        %v6371 = vmul.f32 %v6370, %v6369
        %v6372 = vmul.f32 %v6371, %v6370
        %v6373 = vmul.f32 0.5, %v6372
        %v6374 = vsub.f32 1.5, %v6373
        %v6375 = vmul.f32 %v6370, %v6374
        %vm6376 = vweird.f32 %v6369
        %vm6377 = vweird.f32 %v6370
        %vm6378 = vmor %vm6376, %vm6377
        %v6379 = vsel %vm6378, %v6370, %v6375
        %v6381 = vrot.slane %v6379, 1
        %v6382 = vrot.slane %v6379, 2
        %v6383 = vrot.slane %v6379, 3
        %v6384 = vrot.slane %v6379, 4
        %v6385 = vrot.slane %v6379, 5
        %v6386 = vrot.slane %v6379, 6
        %v6387 = vrot.slane %v6379, 7
        %v6396 = vmul.f32 %v6326, %v6379
        %v6397 = vmul.f32 %v6327, %v6381
        %v6398 = vmul.f32 %v6328, %v6382
        %v6399 = vmul.f32 %v6329, %v6383
        %v6400 = vmul.f32 %v6330, %v6384
        %v6401 = vmul.f32 %v6331, %v6385
        %v6402 = vmul.f32 %v6332, %v6386
        %v6403 = vmul.f32 %v6333, %v6387
        %v6405 = vperm.slane %v6274, 0
        %v6407 = vmul.f32 %v6396, %v6405
        %v6408 = vmul.f32 %v6397, %v6405
        %v6409 = vmul.f32 %v6398, %v6405
        %v6410 = vmul.f32 %v6399, %v6405
        %v6411 = vmul.f32 %v6400, %v6405
        %v6412 = vmul.f32 %v6401, %v6405
        %v6413 = vmul.f32 %v6402, %v6405
        %v6414 = vmul.f32 %v6403, %v6405
        %v6416 = vperm.slane %v6275, 0
        %v6418 = vadd.f32 %v6407, %v6416
        %v6419 = vadd.f32 %v6408, %v6416
        %v6420 = vadd.f32 %v6409, %v6416
        %v6421 = vadd.f32 %v6410, %v6416
        %v6422 = vadd.f32 %v6411, %v6416
        %v6423 = vadd.f32 %v6412, %v6416
        %v6424 = vadd.f32 %v6413, %v6416
        %v6425 = vadd.f32 %v6414, %v6416
        %v6426 = vld [vmem:[%s10] sm:$0xff]
        %v6427 = vld [vmem:[%s10 + $0x8] sm:$0xff]
        %v6428 = vld [vmem:[%s11] sm:$0x1]
        %v6430 = vperm.slane %v6428, 0
        %v6440 = vrot.slane %v6419, 7
        %v6441 = vsel %vm6016, %v6440, %v6418
        %v6442 = vrot.slane %v6420, 6
        %v6443 = vsel %vm6019, %v6442, %v6441
        %v6444 = vrot.slane %v6421, 5
        %v6445 = vsel %vm6022, %v6444, %v6443
        %v6446 = vrot.slane %v6422, 4
        %v6447 = vsel %vm6025, %v6446, %v6445
        %v6448 = vrot.slane %v6423, 3
        %v6449 = vsel %vm6028, %v6448, %v6447
        %v6450 = vrot.slane %v6424, 2
        %v6451 = vsel %vm6031, %v6450, %v6449
        %v6452 = vrot.slane %v6425, 1
        %v6453 = vsel %vm6034, %v6452, %v6451
        %v6454 = vsel %vm5192, %v6453, 0
        %6456 = vmatpush.msra.mxu0 0.0
        %6457 = vmatpush.msra.mxu0 0.0
        %6458 = vmatpush.msra.mxu0 0.0
        %6459 = vmatpush.msra.mxu0 0.0
        %6460 = vmatpush.msra.mxu0 0.0
        %6461 = vmatpush.msra.mxu0 0.0
        %6462 = vmatpush.msra.mxu0 0.0
        %6463 = vmatpush.msra.mxu0 0.0
        %6464 = vmatpush.msra.mxu0 0.0
        %6465 = vmatpush.msra.mxu0 0.0
        %6466 = vmatpush.msra.mxu0 0.0
        %6467 = vmatpush.msra.mxu0 0.0
        %6468 = vmatpush.msra.mxu0 0.0
        %6469 = vmatpush.msra.mxu0 0.0
        %6470 = vmatpush.msra.mxu0 %v6427
        %6471 = vmatpush.msra.mxu0 %v6426
        %6472 = vmatmul.f32.gmra.mxu0 %v6454
        %v6473 = vpop.f32.mrf.mxu0
        %v6474 = vadd.f32 %v6430, %v6473
        %6475 = vdwg.mxu0
        %v6476 = vmax.f32 %v6474, 0.0
        %v6477 = vld [vmem:[%s12] sm:$0xff]
        %v6478 = vld [vmem:[%s12 + $0x8] sm:$0xff]
        %v6479 = vld [vmem:[%s12 + $0x10] sm:$0xff]
        %v6480 = vld [vmem:[%s12 + $0x18] sm:$0xff]
        %v6481 = vld [vmem:[%s13] sm:$0x1]
        %v6483 = vperm.slane %v6481, 0
        %v6486 = vsel %vm6081, %v6476, 0
        %6488 = vmatpush.msra.mxu0 0.0
        %6489 = vmatpush.msra.mxu0 0.0
        %6490 = vmatpush.msra.mxu0 0.0
        %6491 = vmatpush.msra.mxu0 0.0
        %6492 = vmatpush.msra.mxu0 0.0
        %6493 = vmatpush.msra.mxu0 0.0
        %6494 = vmatpush.msra.mxu0 0.0
        %6495 = vmatpush.msra.mxu0 0.0
        %6496 = vmatpush.msra.mxu0 0.0
        %6497 = vmatpush.msra.mxu0 0.0
        %6498 = vmatpush.msra.mxu0 0.0
        %6499 = vmatpush.msra.mxu0 0.0
        %6500 = vmatpush.msra.mxu0 %v6480
        %6501 = vmatpush.msra.mxu0 %v6479
        %6502 = vmatpush.msra.mxu0 %v6478
        %6503 = vmatpush.msra.mxu0 %v6477
        %6504 = vmatmul.f32.gmra.mxu0 %v6486
        %v6505 = vpop.f32.mrf.mxu0
        %v6506 = vadd.f32 %v6483, %v6505
        %6507 = vdwg.mxu0
        %v6509 = vrot.slane %v6506, 1
        %v6510 = vrot.slane %v6506, 2
        %v6511 = vrot.slane %v6506, 3
        %v6512 = vrot.slane %v6506, 4
        %v6513 = vrot.slane %v6506, 5
        %v6514 = vrot.slane %v6506, 6
        %v6515 = vrot.slane %v6506, 7
        %v6524 = vadd.f32 %v6418, %v6506
        %v6525 = vadd.f32 %v6419, %v6509
        %v6526 = vadd.f32 %v6420, %v6510
        %v6527 = vadd.f32 %v6421, %v6511
        %v6528 = vadd.f32 %v6422, %v6512
        %v6529 = vadd.f32 %v6423, %v6513
        %v6530 = vadd.f32 %v6424, %v6514
        %v6531 = vadd.f32 %v6425, %v6515
        %v6532 = vld [vmem:[%s14] sm:$0x1]
        %v6533 = vld [vmem:[%s15] sm:$0x1]
        %v6542 = vrot.slane %v6525, 7
        %v6543 = vsel %vm6016, %v6542, %v6524
        %v6544 = vrot.slane %v6526, 6
        %v6545 = vsel %vm6019, %v6544, %v6543
        %v6546 = vrot.slane %v6527, 5
        %v6547 = vsel %vm6022, %v6546, %v6545
        %v6548 = vrot.slane %v6528, 4
        %v6549 = vsel %vm6025, %v6548, %v6547
        %v6550 = vrot.slane %v6529, 3
        %v6551 = vsel %vm6028, %v6550, %v6549
        %v6552 = vrot.slane %v6530, 2
        %v6553 = vsel %vm6031, %v6552, %v6551
        %v6554 = vrot.slane %v6531, 1
        %v6555 = vsel %vm6034, %v6554, %v6553
        %v6557 = vsel %vm5192, %v6555, 0.0
        %6558 = vadd.xlane.f32.xlu0 %v6557
        %v6559 = vpop.xlane.xlu0 %6558
        %v6560 = vmul.f32 %v6559, %v6308
        %v6562 = vrot.slane %v6560, 1
        %v6563 = vrot.slane %v6560, 2
        %v6564 = vrot.slane %v6560, 3
        %v6565 = vrot.slane %v6560, 4
        %v6566 = vrot.slane %v6560, 5
        %v6567 = vrot.slane %v6560, 6
        %v6568 = vrot.slane %v6560, 7
        %v6577 = vsub.f32 %v6524, %v6560
        %v6578 = vsub.f32 %v6525, %v6562
        %v6579 = vsub.f32 %v6526, %v6563
        %v6580 = vsub.f32 %v6527, %v6564
        %v6581 = vsub.f32 %v6528, %v6565
        %v6582 = vsub.f32 %v6529, %v6566
        %v6583 = vsub.f32 %v6530, %v6567
        %v6584 = vsub.f32 %v6531, %v6568
        %v6585 = vmul.f32 %v6577, %v6577
        %v6586 = vmul.f32 %v6578, %v6578
        %v6587 = vmul.f32 %v6579, %v6579
        %v6588 = vmul.f32 %v6580, %v6580
        %v6589 = vmul.f32 %v6581, %v6581
        %v6590 = vmul.f32 %v6582, %v6582
        %v6591 = vmul.f32 %v6583, %v6583
        %v6592 = vmul.f32 %v6584, %v6584
        %v6601 = vrot.slane %v6586, 7
        %v6602 = vsel %vm6016, %v6601, %v6585
        %v6603 = vrot.slane %v6587, 6
        %v6604 = vsel %vm6019, %v6603, %v6602
        %v6605 = vrot.slane %v6588, 5
        %v6606 = vsel %vm6022, %v6605, %v6604
        %v6607 = vrot.slane %v6589, 4
        %v6608 = vsel %vm6025, %v6607, %v6606
        %v6609 = vrot.slane %v6590, 3
        %v6610 = vsel %vm6028, %v6609, %v6608
        %v6611 = vrot.slane %v6591, 2
        %v6612 = vsel %vm6031, %v6611, %v6610
        %v6613 = vrot.slane %v6592, 1
        %v6614 = vsel %vm6034, %v6613, %v6612
        %v6616 = vsel %vm5192, %v6614, 0.0
        %6617 = vadd.xlane.f32.xlu0 %v6616
        %v6618 = vpop.xlane.xlu0 %6617
        %v6619 = vmul.f32 %v6618, %v6308
        %v6620 = vadd.f32 %v6619, 1e-05
        %v6621 = vrsqrt.pop %v6620
        %v6622 = vmul.f32 %v6621, %v6620
        %v6623 = vmul.f32 %v6622, %v6621
        %v6624 = vmul.f32 0.5, %v6623
        %v6625 = vsub.f32 1.5, %v6624
        %v6626 = vmul.f32 %v6621, %v6625
        %vm6627 = vweird.f32 %v6620
        %vm6628 = vweird.f32 %v6621
        %vm6629 = vmor %vm6627, %vm6628
        %v6630 = vsel %vm6629, %v6621, %v6626
        %v6632 = vrot.slane %v6630, 1
        %v6633 = vrot.slane %v6630, 2
        %v6634 = vrot.slane %v6630, 3
        %v6635 = vrot.slane %v6630, 4
        %v6636 = vrot.slane %v6630, 5
        %v6637 = vrot.slane %v6630, 6
        %v6638 = vrot.slane %v6630, 7
        %v6647 = vmul.f32 %v6577, %v6630
        %v6648 = vmul.f32 %v6578, %v6632
        %v6649 = vmul.f32 %v6579, %v6633
        %v6650 = vmul.f32 %v6580, %v6634
        %v6651 = vmul.f32 %v6581, %v6635
        %v6652 = vmul.f32 %v6582, %v6636
        %v6653 = vmul.f32 %v6583, %v6637
        %v6654 = vmul.f32 %v6584, %v6638
        %v6656 = vperm.slane %v6532, 0
        %v6658 = vmul.f32 %v6647, %v6656
        %v6659 = vmul.f32 %v6648, %v6656
        %v6660 = vmul.f32 %v6649, %v6656
        %v6661 = vmul.f32 %v6650, %v6656
        %v6662 = vmul.f32 %v6651, %v6656
        %v6663 = vmul.f32 %v6652, %v6656
        %v6664 = vmul.f32 %v6653, %v6656
        %v6665 = vmul.f32 %v6654, %v6656
        %v6667 = vperm.slane %v6533, 0
        %v6669 = vadd.f32 %v6658, %v6667
        %v6670 = vadd.f32 %v6659, %v6667
        %v6671 = vadd.f32 %v6660, %v6667
        %v6672 = vadd.f32 %v6661, %v6667
        %v6673 = vadd.f32 %v6662, %v6667
        %v6674 = vadd.f32 %v6663, %v6667
        %v6675 = vadd.f32 %v6664, %v6667
        %v6676 = vadd.f32 %v6665, %v6667
        %v6685 = vrot.slane %v6670, 7
        %v6686 = vsel %vm6016, %v6685, %v6669
        %v6687 = vrot.slane %v6671, 6
        %v6688 = vsel %vm6019, %v6687, %v6686
        %v6689 = vrot.slane %v6672, 5
        %v6690 = vsel %vm6022, %v6689, %v6688
        %v6691 = vrot.slane %v6673, 4
        %v6692 = vsel %vm6025, %v6691, %v6690
        %v6693 = vrot.slane %v6674, 3
        %v6694 = vsel %vm6028, %v6693, %v6692
        %v6695 = vrot.slane %v6675, 2
        %v6696 = vsel %vm6031, %v6695, %v6694
        %v6697 = vrot.slane %v6676, 1
        %v6698 = vsel %vm6034, %v6697, %v6696
        %v6700 = vsel %vm5192, %v6698, 0.0
        %v6701 = vrot.slane %v6700, 4
        %v6702 = vadd.f32 %v6700, %v6701
        %v6703 = vrot.slane %v6702, 2
        %v6704 = vadd.f32 %v6702, %v6703
        %v6705 = vrot.slane %v6704, 1
        %v6706 = vadd.f32 %v6704, %v6705
        %v6707 = vrcp.pop 8.0
        %v6708 = vmul.f32 8.0, %v6707
        %v6709 = vsub.f32 1.0, %v6708
        %v6710 = vmul.f32 %v6707, %v6709
        %v6711 = vadd.f32 %v6707, %v6710
        %vm6712 = vweird.f32 %v6707
        %v6713 = vsel %vm6712, %v6707, %v6711
        %v6714 = vmul.f32 %v6706, %v6713
        %v6715 = vld [vmem:[%s16] sm:$0xff]
        %v6716 = vld [vmem:[%s16 + $0x8] sm:$0xff]
        %v6717 = vld [vmem:[%s17] sm:$0x1]
        %v6719 = vsel %vm5192, %v6714, 0
        %6721 = vmatpush.msra.mxu0 0.0
        %6722 = vmatpush.msra.mxu0 0.0
        %6723 = vmatpush.msra.mxu0 0.0
        %6724 = vmatpush.msra.mxu0 0.0
        %6725 = vmatpush.msra.mxu0 0.0
        %6726 = vmatpush.msra.mxu0 0.0
        %6727 = vmatpush.msra.mxu0 0.0
        %6728 = vmatpush.msra.mxu0 0.0
        %6729 = vmatpush.msra.mxu0 0.0
        %6730 = vmatpush.msra.mxu0 0.0
        %6731 = vmatpush.msra.mxu0 0.0
        %6732 = vmatpush.msra.mxu0 0.0
        %6733 = vmatpush.msra.mxu0 0.0
        %6734 = vmatpush.msra.mxu0 0.0
        %6735 = vmatpush.msra.mxu0 %v6716
        %6736 = vmatpush.msra.mxu0 %v6715
        %6737 = vmatmul.f32.gmra.mxu0 %v6719
        %v6738 = vpop.f32.mrf.mxu0
        %v6739 = vadd.f32 %v6717, %v6738
        %6740 = vdwg.mxu0
        %v6741 = vsub.f32 0.0, %v6739
        %v6742 = vmul.f32 %v6741, 1.442695
        %v6743 = vpow.pop %v6742
        %v6744 = vadd.f32 %v6743, 1.0
        %v6745 = vrcp.pop %v6744
        %v6746 = vmul.f32 %v6744, %v6745
        %v6747 = vsub.f32 1.0, %v6746
        %v6748 = vmul.f32 %v6745, %v6747
        %v6749 = vadd.f32 %v6745, %v6748
        %vm6750 = vweird.f32 %v6744
        %vm6751 = vweird.f32 %v6745
        %vm6752 = vmor %vm6750, %vm6751
        %v6753 = vsel %vm6752, %v6745, %v6749
        %v6754 = vand.u32 2147483647, %v6744
        %vm6755 = vcmp.eq.f32.partialorder %v6754, 8.507059e+37
        %v6756 = vand.u32 %v6744, 2147483648
        %v6757 = vor.u32 1.1754944e-38, %v6756
        %v6758 = vsel %vm6755, %v6757, %v6753
        %v6759 = vmul.f32 1.0, %v6758
        %vm6760 = vcmask 122880
        %6761 = vst.msk [vmem:[%s578] sm:$0x1] %vm6760, %v6759
        %s6762 = sand.u32 %s428, 1
        %s6763 = scalar_lea.sflag [#allocation3], %s6762
        %s6764 = sand.u32 %s428, 1
        %s6765 = scalar_lea.vmem [#allocation2], %s6764
        // Predicated region
        $region93: #{tpu_custom_call.1} parent=91 // pred_check
          %p6766 = pneg %p438
        $region94: #{tpu_custom_call.1} parent=91 // pred_check_branch
          %6768 = sbr.rel (%p6766) target = $region96
        $region95: #{tpu_custom_call.1} parent=91 // pred_region
          %6770 = vsyncadd %s6763, 0
          %s6771 = scalar_lea.hbm %s18, %s32
          %s6773 = sshll.u32 %s6765, 4
          %s6774 = int_to_ptr.vmem [resolvable:$true] %s6773
          %s6775 = sshll.u32 %s6771, 4
          %s6776 = int_to_ptr.hbm [resolvable:$true] %s6775
          %6778 = dma.vmem_to_hbm [thread:$0]  %s6774, 16, %s6776, %s6763
        $region96: #{tpu_custom_call.1} parent=91 // pred_fallthru
          _
      $region92: #{tpu_custom_call.1} parent=5 // pred_fallthru
        _
      %p6779 = scmp.le.s32.totalorder 2, %s27
      // Predicated region
      $region97: #{tpu_custom_call.1} parent=5 // pred_check
        %p6780 = pneg %p6779
      $region98: #{tpu_custom_call.1} parent=5 // pred_check_branch
        %6782 = sbr.rel (%p6780) target = $region100
      $region99: #{tpu_custom_call.1} parent=5 // pred_region
        %s6783 = ssub.s32 %s27, 2
        // Predicated region
        $region101: #{tpu_custom_call.1} parent=99 // pred_check
          %p6784 = pneg %p444
        $region102: #{tpu_custom_call.1} parent=99 // pred_check_branch
          %6786 = sbr.rel (%p6784) target = $region104
        $region103: #{tpu_custom_call.1} parent=99 // pred_region
          %s6787 = sand.u32 %s429, 1
          %s6788 = scalar_lea.sflag [#allocation3], %s6787
          %s6789 = sand.u32 %s429, 1
          %s6790 = scalar_lea.vmem [#allocation2], %s6789
          %6792 = dma.done %s6788, 16
        $region104: #{tpu_custom_call.1} parent=99 // pred_fallthru
          _
      $region100: #{tpu_custom_call.1} parent=5 // pred_fallthru
        _
    $region6: #{tpu_custom_call.1} parent=1 // loop_footer
      %s31 = sadd.s32 1, %s27
    $region7: #{tpu_custom_call.1} parent=1 // loop_footer_branch
      %26 = sbr.rel target = $region3
    $region8: #{tpu_custom_call.1} parent=1 // loop_exit
      _
    %6793 = vsyncpa [#allocation3], 1
    %s6794 = scalar_lea.sflag [#allocation3], 1
    %6795 = vsyncpa %s6794, 1

</llo_original>
